<compile_context>
chip_gen: v6e
topology: v6e:2x2x1
jax: 0.10.0
libtpu: 0.0.40
codegen_flags: <defaults>
</compile_context>

<pallas_src>
import functools

import jax
import jax.numpy as jnp
from jax.experimental import pallas as pl
from jax.experimental.pallas import tpu as pltpu

EPS = 1e-5

# Matmul feed dtype. f32 keeps the correctness check tight at toy sizes; flip
# to jnp.bfloat16 on v6e/v7x to feed the MXU at full rate (BN stays f32).
MATMUL_DTYPE = jnp.float32


def _shift_lanes(x, off):
    """x: (C, HW). Returns y with y[:, p] = x[:, p + off], zero-filled OOB."""
    if off == 0:
        return x
    c, hw = x.shape
    fill = jnp.zeros((c, abs(off)), x.dtype)
    if off > 0:
        return jnp.concatenate([x[:, off:], fill], axis=1)
    return jnp.concatenate([fill, x[:, :hw + off]], axis=1)


def _fill_patches(slabs, patch_ref, not_left, not_right, C, W):
    """Build the (27*Cin, H*W) im2col slab for one output depth slice.

    slabs: (prev, cur, next) activation planes, each (Cin, H*W), already
           zeroed when the depth neighbour is outside the volume.
    Row order is tap*Cin + ci with tap = kd*9 + kh*3 + kw (matches the
    weight matrix built in the wrapper).
    """
    t = 0
    for kd in range(3):
        slab = slabs[kd]
        for kh in range(3):
            for kw in range(3):
                piece = _shift_lanes(slab, (kh - 1) * W + (kw - 1))
                if kw == 0:          # source column w-1 must exist
                    piece = jnp.where(not_left, piece, 0.0)
                elif kw == 2:        # source column w+1 must exist
                    piece = jnp.where(not_right, piece, 0.0)
                patch_ref[t * C:(t + 1) * C, :] = piece
                t += 1


def _conv_block(prev_ref, cur_ref, next_ref, p_ref, w_ref,
                z_ref, st_ref, patch_ref, *, C, H, W, Td):
    """Shared conv body: 3x3x3 'same' conv for Td depth slices + BN partials.

    If p_ref is not None, bn+relu (y = relu(x*scale + shift)) is fused into the
    load path (used by the second conv so y1 never hits HBM).
    """
    HW = H * W
    d = pl.program_id(1)
    is_first = d == 0
    is_last = d == pl.num_programs(1) - 1

    if p_ref is None:
        act = lambda v: v
    else:
        scale = p_ref[0]                      # (C, 1), broadcast over lanes
        shift = p_ref[1]
        act = lambda v: jnp.maximum(v * scale + shift, 0.0)

    # Depth slices d*Td-1 .. d*Td+Td; zero outside the volume ("same" conv).
    slabs = ([jnp.where(is_first, 0.0, act(prev_ref[0, 0]))]
             + [act(cur_ref[0, k]) for k in range(Td)]
             + [jnp.where(is_last, 0.0, act(next_ref[0, 0]))])

    # Column masks for the W edges of the flattened spatial (lane) axis.
    # Hoisted out of the tap loop (JAX does not CSE broadcasts).
    col = jax.lax.broadcasted_iota(jnp.int32, (1, HW), 1) % W
    not_left = col >= 1
    not_right = col <= W - 2
    wmat = w_ref[...].astype(MATMUL_DTYPE)    # (Cout, 27*Cin), hoisted

    for j in range(Td):
        _fill_patches((slabs[j], slabs[j + 1], slabs[j + 2]), patch_ref,
                      not_left, not_right, C, W)
        # Single MXU matmul per slice: (Cout, 27*Cin) x (27*Cin, HW).
        z = jnp.dot(wmat, patch_ref[...].astype(MATMUL_DTYPE),
                    preferred_element_type=jnp.float32)   # (Cout, HW)
        z_ref[0, j] = z                                    # lane-dense store

        # Per-slice BN partials: per-channel sum and M2 (sum of squared
        # deviations from the slice mean) -> robust cross-block combine later.
        s = jnp.sum(z, axis=1, keepdims=True)              # (C, 1)
        mu = s * (1.0 / HW)
        dz = z - mu
        m2 = jnp.sum(dz * dz, axis=1, keepdims=True)
        st_ref[0, 0, j, :, 0:1] = s
        st_ref[0, 0, j, :, 1:2] = m2


def _conv1_stats_kernel(prev_ref, cur_ref, next_ref, w_ref,
                        z_ref, st_ref, patch_ref, *, C, H, W, Td):
    _conv_block(prev_ref, cur_ref, next_ref, None, w_ref,
                z_ref, st_ref, patch_ref, C=C, H=H, W=W, Td=Td)


def _conv2_stats_kernel(prev_ref, cur_ref, next_ref, p_ref, w_ref,
                        z_ref, st_ref, patch_ref, *, C, H, W, Td):
    _conv_block(prev_ref, cur_ref, next_ref, p_ref, w_ref,
                z_ref, st_ref, patch_ref, C=C, H=H, W=W, Td=Td)


def _bn_residual_kernel(z_ref, p_ref, x_ref, out_ref):
    """out = relu(x + bn2(z2)), all in the lane-dense (.., C, HW) layout."""
    scale = p_ref[0]
    shift = p_ref[1]
    out_ref[...] = jnp.maximum(x_ref[...] + z_ref[...] * scale + shift, 0.0)


def _finalize_bn(stats, gamma, beta, n_per_row):
    """Combine per-slice partial stats into BN scale/shift (pure JAX, tiny).

    stats: (N, DB, Td, C, 2) with [...,0] = sum over H*W elements and
    [...,1] = sum of squared deviations from the slice mean.  Combined with
    Chan's parallel-variance formula (avoids E[x^2]-mean^2 cancellation).
    Training-mode BN: biased variance, eps = 1e-5.
    """
    s = stats[..., 0]
    m2 = stats[..., 1]
    rows = s.shape[0] * s.shape[1] * s.shape[2]
    total = rows * n_per_row
    mean = jnp.sum(s, axis=(0, 1, 2)) / total                       # (C,)
    row_mean = s / n_per_row
    var = (jnp.sum(m2, axis=(0, 1, 2))
           + n_per_row * jnp.sum((row_mean - mean) ** 2, axis=(0, 1, 2))) / total
    inv = jax.lax.rsqrt(var + EPS)
    scale = gamma * inv
    shift = beta - mean * scale
    return jnp.stack([scale, shift], axis=0).reshape(2, -1, 1).astype(jnp.float32)


def simple_rb_pallas(x, w1, g1, b1, w2, g2, b2, *, d_tile=None):
    """x: (N, C, D, H, W); conv weights in PyTorch layout (Cout, Cin, 3, 3, 3)."""
    N, C, D, H, W = x.shape
    HW = H * W
    f32 = jnp.float32

    if d_tile is None:
        d_tile = next(t for t in (4, 2, 1) if D % t == 0)
    Td = d_tile
    assert D % Td == 0
    DB = D // Td

    # One layout pass: NCDHW -> (N, D, C, H*W) so the spatial extent is the
    # lane dim inside every kernel.
    # TODO(synk): accept channels-last / pre-flattened activations at the API
    # boundary to drop this transpose and the inverse one on the output.
    xt = jnp.transpose(x.astype(f32), (0, 2, 1, 3, 4)).reshape(N, D, C, HW)

    # (Cout, Cin, 3,3,3) -> (Cout, 27*Cin), column = tap*Cin + ci,
    # tap = kd*9 + kh*3 + kw (matches the in-kernel im2col row order).
    w1m = jnp.transpose(w1.astype(f32), (0, 2, 3, 4, 1)).reshape(C, 27 * C)
    w2m = jnp.transpose(w2.astype(f32), (0, 2, 3, 4, 1)).reshape(C, 27 * C)

    grid = (N, DB)
    cparams = pltpu.CompilerParams(
        dimension_semantics=("parallel", "parallel"),
        vmem_limit_bytes=32 * 1024 * 1024)

    # BlockSpecs (last two dims of every block equal the full array dims).
    blk_cur = pl.BlockSpec((1, Td, C, HW), lambda n, d: (n, d, 0, 0))
    blk_prev = pl.BlockSpec(
        (1, 1, C, HW), lambda n, d: (n, jnp.maximum(d * Td - 1, 0), 0, 0))
    blk_next = pl.BlockSpec(
        (1, 1, C, HW), lambda n, d: (n, jnp.minimum(d * Td + Td, D - 1), 0, 0))
    blk_w = pl.BlockSpec((C, 27 * C), lambda n, d: (0, 0))
    blk_p = pl.BlockSpec((2, C, 1), lambda n, d: (0, 0, 0))
    blk_st = pl.BlockSpec((1, 1, Td, C, 2), lambda n, d: (n, d, 0, 0, 0))

    z_shape = jax.ShapeDtypeStruct((N, D, C, HW), f32)
    st_shape = jax.ShapeDtypeStruct((N, DB, Td, C, 2), f32)

    # Pass 1: z1 = conv1(x) (pre-BN) + per-slice BN1 partial stats.
    z1, st1 = pl.pallas_call(
        functools.partial(_conv1_stats_kernel, C=C, H=H, W=W, Td=Td),
        grid=grid,
        in_specs=[blk_prev, blk_cur, blk_next, blk_w],
        out_specs=[blk_cur, blk_st],
        out_shape=[z_shape, st_shape],
        scratch_shapes=[pltpu.VMEM((27 * C, HW), f32)],
        compiler_params=cparams,
    )(xt, xt, xt, w1m)

    bn1 = _finalize_bn(st1, g1.astype(f32), b1.astype(f32), HW)

    # Pass 2: z2 = conv2(relu(bn1(z1))) + BN2 partials; bn1+relu fused into
    # the load path so y1 never touches HBM.
    z2, st2 = pl.pallas_call(
        functools.partial(_conv2_stats_kernel, C=C, H=H, W=W, Td=Td),
        grid=grid,
        in_specs=[blk_prev, blk_cur, blk_next, blk_p, blk_w],
        out_specs=[blk_cur, blk_st],
        out_shape=[z_shape, st_shape],
        scratch_shapes=[pltpu.VMEM((27 * C, HW), f32)],
        compiler_params=cparams,
    )(z1, z1, z1, bn1, w2m)

    bn2 = _finalize_bn(st2, g2.astype(f32), b2.astype(f32), HW)

    # Pass 3: out = relu(x + bn2(z2)).
    out_flat = pl.pallas_call(
        _bn_residual_kernel,
        grid=grid,
        in_specs=[blk_cur, blk_p, blk_cur],
        out_specs=blk_cur,
        out_shape=z_shape,
        compiler_params=cparams,
    )(z2, bn2, xt)

    # Back to the PyTorch NCDHW layout (single XLA transpose).
    return jnp.transpose(out_flat.reshape(N, D, C, H, W), (0, 2, 1, 3, 4))


def simple_rb_reference(x, w1, g1, b1, w2, g2, b2):
    """Pure-JAX reference, NCDHW throughout (mirrors the PyTorch module)."""
    def conv(y, w):
        return jax.lax.conv_general_dilated(
            y, w, window_strides=(1, 1, 1),
            padding=((1, 1), (1, 1), (1, 1)),
            dimension_numbers=("NCDHW", "OIDHW", "NCDHW"))

    def bn(y, g, b):
        mean = jnp.mean(y, axis=(0, 2, 3, 4), keepdims=True)
        var = jnp.mean((y - mean) ** 2, axis=(0, 2, 3, 4), keepdims=True)
        return ((y - mean) * jax.lax.rsqrt(var + EPS)
                * g.reshape(1, -1, 1, 1, 1) + b.reshape(1, -1, 1, 1, 1))

    y = jax.nn.relu(bn(conv(x, w1), g1, b1))
    y = bn(conv(y, w2), g2, b2)
    return jax.nn.relu(x + y)


if __name__ == "__main__":
    N, C, D, H, W = 2, 4, 8, 16, 16

    key = jax.random.PRNGKey(0)
    ks = jax.random.split(key, 7)
    x = jax.random.normal(ks[0], (N, C, D, H, W), jnp.float32)
    w1 = 0.1 * jax.random.normal(ks[1], (C, C, 3, 3, 3), jnp.float32)
    w2 = 0.1 * jax.random.normal(ks[2], (C, C, 3, 3, 3), jnp.float32)
    g1 = 1.0 + 0.1 * jax.random.normal(ks[3], (C,), jnp.float32)
    b1 = 0.1 * jax.random.normal(ks[4], (C,), jnp.float32)
    g2 = 1.0 + 0.1 * jax.random.normal(ks[5], (C,), jnp.float32)
    b2 = 0.1 * jax.random.normal(ks[6], (C,), jnp.float32)

    out = jax.block_until_ready(
        jax.jit(simple_rb_pallas)(x, w1, g1, b1, w2, g2, b2))
    ref = simple_rb_reference(x, w1, g1, b1, w2, g2, b2)

    assert out.shape == (N, C, D, H, W)
    max_err = float(jnp.max(jnp.abs(out - ref)))
    assert jnp.allclose(out, ref, atol=1e-3, rtol=1e-3), f"max_err={max_err}"

    # TODO(synk): BatchNorm running-stat (momentum) updates are a training-time
    # side effect of the PyTorch module and are not reproduced (they do not
    # affect the forward output).
    print("KERNEL_OK")
</pallas_src>

<mosaic_0001>
module attributes {stable_mosaic.version = 11 : i64} {
  func.func @_bn_residual_kernel(%arg0: i32, %arg1: i32, %arg2: memref<1x4x4x256xf32, #tpu.memory_space<vmem>>, %arg3: memref<2x4x1xf32, #tpu.memory_space<vmem>>, %arg4: memref<1x4x4x256xf32, #tpu.memory_space<vmem>>, %arg5: memref<1x4x4x256xf32, #tpu.memory_space<vmem>>) attributes {dimension_semantics = [#tpu.dimension_semantics<parallel>, #tpu.dimension_semantics<parallel>], iteration_bounds = array<i64: 2, 2>, scalar_prefetch = 0 : i64, scratch_operands = 0 : i64, tpu.core_type = #tpu.core_type<tc>, window_params = [{transform_indices = @transform_0, window_bounds = array<i64: 1, 4, 4, 256>}, {pipeline_mode = #tpu.pipeline_mode<synchronous>, transform_indices = @transform_1, window_bounds = array<i64: 2, 4, 1>}, {transform_indices = @transform_2, window_bounds = array<i64: 1, 4, 4, 256>}, {transform_indices = @transform_3, window_bounds = array<i64: 1, 4, 4, 256>}]} {
    %c0 = arith.constant 0 : index
    %c0_0 = arith.constant 0 : index
    %c0_1 = arith.constant 0 : index
    %0 = vector.load %arg3[%c0, %c0_0, %c0_1] : memref<2x4x1xf32, #tpu.memory_space<vmem>>, vector<1x4x1xf32>
    %1 = vector.shape_cast %0 : vector<1x4x1xf32> to vector<4x1xf32>
    %c1 = arith.constant 1 : index
    %c0_2 = arith.constant 0 : index
    %c0_3 = arith.constant 0 : index
    %2 = vector.load %arg3[%c1, %c0_2, %c0_3] : memref<2x4x1xf32, #tpu.memory_space<vmem>>, vector<1x4x1xf32>
    %3 = vector.shape_cast %2 : vector<1x4x1xf32> to vector<4x1xf32>
    %c0_4 = arith.constant 0 : index
    %c0_5 = arith.constant 0 : index
    %c0_6 = arith.constant 0 : index
    %c0_7 = arith.constant 0 : index
    %4 = vector.load %arg4[%c0_4, %c0_5, %c0_6, %c0_7] : memref<1x4x4x256xf32, #tpu.memory_space<vmem>>, vector<1x4x4x256xf32>
    %c0_8 = arith.constant 0 : index
    %c0_9 = arith.constant 0 : index
    %c0_10 = arith.constant 0 : index
    %c0_11 = arith.constant 0 : index
    %5 = vector.load %arg2[%c0_8, %c0_9, %c0_10, %c0_11] : memref<1x4x4x256xf32, #tpu.memory_space<vmem>>, vector<1x4x4x256xf32>
    %6 = vector.shape_cast %1 : vector<4x1xf32> to vector<1x1x4x1xf32>
    %7 = vector.broadcast %6 : vector<1x1x4x1xf32> to vector<1x4x4x256xf32>
    %8 = arith.mulf %5, %7 : vector<1x4x4x256xf32>
    %9 = arith.addf %4, %8 : vector<1x4x4x256xf32>
    %10 = vector.shape_cast %3 : vector<4x1xf32> to vector<1x1x4x1xf32>
    %11 = vector.broadcast %10 : vector<1x1x4x1xf32> to vector<1x4x4x256xf32>
    %12 = arith.addf %9, %11 : vector<1x4x4x256xf32>
    %cst = arith.constant 0.000000e+00 : f32
    %13 = vector.broadcast %cst : f32 to vector<1x4x4x256xf32>
    %14 = arith.maximumf %12, %13 : vector<1x4x4x256xf32>
    %c0_12 = arith.constant 0 : index
    %c0_13 = arith.constant 0 : index
    %c0_14 = arith.constant 0 : index
    %c0_15 = arith.constant 0 : index
    %15 = vector.load %arg5[%c0_12, %c0_13, %c0_14, %c0_15] : memref<1x4x4x256xf32, #tpu.memory_space<vmem>>, vector<1x4x4x256xf32>
    tpu.vector_store %arg5[%c0_12, %c0_13, %c0_14, %c0_15], %14 {strides = array<i32>} : memref<1x4x4x256xf32, #tpu.memory_space<vmem>>, vector<1x4x4x256xf32>,
    return
  }
  func.func @transform_0(%arg0: i32, %arg1: i32) -> (i32, i32, i32, i32) {
    %c0_i32 = arith.constant 0 : i32
    %c0_i32_0 = arith.constant 0 : i32
    %c0_i32_1 = arith.constant 0 : i32
    return %arg0, %arg1, %c0_i32, %c0_i32_0 : i32, i32, i32, i32
  }
  func.func @transform_1(%arg0: i32, %arg1: i32) -> (i32, i32, i32) {
    %c0_i32 = arith.constant 0 : i32
    %c0_i32_0 = arith.constant 0 : i32
    %c0_i32_1 = arith.constant 0 : i32
    %c0_i32_2 = arith.constant 0 : i32
    return %c0_i32, %c0_i32_0, %c0_i32_1 : i32, i32, i32
  }
  func.func @transform_2(%arg0: i32, %arg1: i32) -> (i32, i32, i32, i32) {
    %c0_i32 = arith.constant 0 : i32
    %c0_i32_0 = arith.constant 0 : i32
    %c0_i32_1 = arith.constant 0 : i32
    return %arg0, %arg1, %c0_i32, %c0_i32_0 : i32, i32, i32, i32
  }
  func.func @transform_3(%arg0: i32, %arg1: i32) -> (i32, i32, i32, i32) {
    %c0_i32 = arith.constant 0 : i32
    %c0_i32_0 = arith.constant 0 : i32
    %c0_i32_1 = arith.constant 0 : i32
    return %arg0, %arg1, %c0_i32, %c0_i32_0 : i32, i32, i32, i32
  }
}

module attributes {stable_mosaic.version = 11 : i64} {
  func.func @_conv1_stats_kernel(%arg0: i32, %arg1: i32, %arg2: memref<1x1x4x256xf32, #tpu.memory_space<vmem>>, %arg3: memref<1x4x4x256xf32, #tpu.memory_space<vmem>>, %arg4: memref<1x1x4x256xf32, #tpu.memory_space<vmem>>, %arg5: memref<4x108xf32, #tpu.memory_space<vmem>>, %arg6: memref<1x4x4x256xf32, #tpu.memory_space<vmem>>, %arg7: memref<1x1x4x4x2xf32, #tpu.memory_space<vmem>>, %arg8: memref<108x256xf32, #tpu.memory_space<vmem>>) attributes {dimension_semantics = [#tpu.dimension_semantics<parallel>, #tpu.dimension_semantics<parallel>], iteration_bounds = array<i64: 2, 2>, scalar_prefetch = 0 : i64, scratch_operands = 1 : i64, tpu.core_type = #tpu.core_type<tc>, window_params = [{transform_indices = @transform_0, window_bounds = array<i64: 1, 1, 4, 256>}, {transform_indices = @transform_1, window_bounds = array<i64: 1, 4, 4, 256>}, {transform_indices = @transform_2, window_bounds = array<i64: 1, 1, 4, 256>}, {pipeline_mode = #tpu.pipeline_mode<synchronous>, transform_indices = @transform_3, window_bounds = array<i64: 4, 108>}, {transform_indices = @transform_4, window_bounds = array<i64: 1, 4, 4, 256>}, {transform_indices = @transform_5, window_bounds = array<i64: 1, 1, 4, 4, 2>}]} {
    %c0_i32 = arith.constant 0 : i32
    %0 = arith.cmpi eq, %arg1, %c0_i32 : i32
    %c1_i32 = arith.constant 1 : i32
    %1 = arith.cmpi eq, %arg1, %c1_i32 : i32
    %c0 = arith.constant 0 : index
    %c0_0 = arith.constant 0 : index
    %c0_1 = arith.constant 0 : index
    %c0_2 = arith.constant 0 : index
    %2 = vector.load %arg2[%c0, %c0_0, %c0_1, %c0_2] : memref<1x1x4x256xf32, #tpu.memory_space<vmem>>, vector<1x1x4x256xf32>
    %3 = vector.shape_cast %2 : vector<1x1x4x256xf32> to vector<4x256xf32>
    %cst = arith.constant 0.000000e+00 : f32
    %4 = vector.broadcast %cst : f32 to vector<4x256xf32>
    %5 = arith.select %0, %4, %3 : vector<4x256xf32>
    %c0_3 = arith.constant 0 : index
    %c0_4 = arith.constant 0 : index
    %c0_5 = arith.constant 0 : index
    %c0_6 = arith.constant 0 : index
    %6 = vector.load %arg3[%c0_3, %c0_4, %c0_5, %c0_6] : memref<1x4x4x256xf32, #tpu.memory_space<vmem>>, vector<1x1x4x256xf32>
    %7 = vector.shape_cast %6 : vector<1x1x4x256xf32> to vector<4x256xf32>
    %c0_7 = arith.constant 0 : index
    %c1 = arith.constant 1 : index
    %c0_8 = arith.constant 0 : index
    %c0_9 = arith.constant 0 : index
    %8 = vector.load %arg3[%c0_7, %c1, %c0_8, %c0_9] : memref<1x4x4x256xf32, #tpu.memory_space<vmem>>, vector<1x1x4x256xf32>
    %9 = vector.shape_cast %8 : vector<1x1x4x256xf32> to vector<4x256xf32>
    %c0_10 = arith.constant 0 : index
    %c2 = arith.constant 2 : index
    %c0_11 = arith.constant 0 : index
    %c0_12 = arith.constant 0 : index
    %10 = vector.load %arg3[%c0_10, %c2, %c0_11, %c0_12] : memref<1x4x4x256xf32, #tpu.memory_space<vmem>>, vector<1x1x4x256xf32>
    %11 = vector.shape_cast %10 : vector<1x1x4x256xf32> to vector<4x256xf32>
    %c0_13 = arith.constant 0 : index
    %c3 = arith.constant 3 : index
    %c0_14 = arith.constant 0 : index
    %c0_15 = arith.constant 0 : index
    %12 = vector.load %arg3[%c0_13, %c3, %c0_14, %c0_15] : memref<1x4x4x256xf32, #tpu.memory_space<vmem>>, vector<1x1x4x256xf32>
    %13 = vector.shape_cast %12 : vector<1x1x4x256xf32> to vector<4x256xf32>
    %c0_16 = arith.constant 0 : index
    %c0_17 = arith.constant 0 : index
    %c0_18 = arith.constant 0 : index
    %c0_19 = arith.constant 0 : index
    %14 = vector.load %arg4[%c0_16, %c0_17, %c0_18, %c0_19] : memref<1x1x4x256xf32, #tpu.memory_space<vmem>>, vector<1x1x4x256xf32>
    %15 = vector.shape_cast %14 : vector<1x1x4x256xf32> to vector<4x256xf32>
    %cst_20 = arith.constant 0.000000e+00 : f32
    %16 = vector.broadcast %cst_20 : f32 to vector<4x256xf32>
    %17 = arith.select %1, %16, %15 : vector<4x256xf32>
    %18 = tpu.iota {dimensions = array<i32: 1>} : vector<1x256xi32>
    %c16_i32 = arith.constant 16 : i32
    %c0_i32_21 = arith.constant 0 : i32
    %19 = arith.cmpi eq, %c16_i32, %c0_i32_21 : i32
    %c1_i32_22 = arith.constant 1 : i32
    %20 = arith.select %19, %c1_i32_22, %c16_i32 : i32
    %21 = vector.broadcast %20 : i32 to vector<1x256xi32>
    %22 = arith.remsi %18, %21 : vector<1x256xi32>
    %c0_i32_23 = arith.constant 0 : i32
    %23 = vector.broadcast %c0_i32_23 : i32 to vector<1x256xi32>
    %24 = arith.cmpi ne, %22, %23 : vector<1x256xi32>
    %c0_i32_24 = arith.constant 0 : i32
    %25 = vector.broadcast %c0_i32_24 : i32 to vector<1x256xi32>
    %26 = arith.cmpi slt, %22, %25 : vector<1x256xi32>
    %c0_i32_25 = arith.constant 0 : i32
    %27 = arith.cmpi slt, %20, %c0_i32_25 : i32
    %28 = vector.broadcast %27 : i1 to vector<1x256xi1>
    %29 = vector.broadcast %28 : vector<1x256xi1> to vector<1x256xi1>
    %30 = arith.xori %26, %29 : vector<1x256xi1>
    %31 = arith.andi %30, %24 : vector<1x256xi1>
    %32 = vector.broadcast %20 : i32 to vector<1x256xi32>
    %33 = arith.addi %22, %32 : vector<1x256xi32>
    %34 = arith.select %31, %33, %22 : vector<1x256xi1>, vector<1x256xi32>
    %c1_i32_26 = arith.constant 1 : i32
    %35 = vector.broadcast %c1_i32_26 : i32 to vector<1x256xi32>
    %36 = arith.cmpi sge, %34, %35 : vector<1x256xi32>
    %c14_i32 = arith.constant 14 : i32
    %37 = vector.broadcast %c14_i32 : i32 to vector<1x256xi32>
    %38 = arith.cmpi sle, %34, %37 : vector<1x256xi32>
    %c0_27 = arith.constant 0 : index
    %c0_28 = arith.constant 0 : index
    %39 = vector.load %arg5[%c0_27, %c0_28] : memref<4x108xf32, #tpu.memory_space<vmem>>, vector<4x108xf32>
    %cst_29 = arith.constant 0.000000e+00 : f32
    %40 = vector.broadcast %cst_29 : f32 to vector<4x17xf32>
    %41 = vector.extract_strided_slice %5 {offsets = [0, 0], sizes = [4, 239], strides = [1, 1]} : vector<4x256xf32> to vector<4x239xf32>
    %42 = tpu.concatenate %40, %41 in 1 : vector<4x17xf32>, vector<4x239xf32> -> vector<4x256xf32>
    %cst_30 = arith.constant 0.000000e+00 : f32
    %43 = vector.shape_cast %36 : vector<1x256xi1> to vector<1x256xi1>
    %44 = vector.broadcast %43 : vector<1x256xi1> to vector<4x256xi1>
    %45 = vector.broadcast %cst_30 : f32 to vector<4x256xf32>
    %46 = arith.select %44, %42, %45 : vector<4x256xi1>, vector<4x256xf32>
    %c0_31 = arith.constant 0 : index
    %c0_32 = arith.constant 0 : index
    %47 = vector.load %arg8[%c0_31, %c0_32] : memref<108x256xf32, #tpu.memory_space<vmem>>, vector<4x256xf32>
    tpu.vector_store %arg8[%c0_31, %c0_32], %46 {strides = array<i32>} : memref<108x256xf32, #tpu.memory_space<vmem>>, vector<4x256xf32>,
    %cst_33 = arith.constant 0.000000e+00 : f32
    %48 = vector.broadcast %cst_33 : f32 to vector<4x16xf32>
    %49 = vector.extract_strided_slice %5 {offsets = [0, 0], sizes = [4, 240], strides = [1, 1]} : vector<4x256xf32> to vector<4x240xf32>
    %50 = tpu.concatenate %48, %49 in 1 : vector<4x16xf32>, vector<4x240xf32> -> vector<4x256xf32>
    %c4 = arith.constant 4 : index
    %c0_34 = arith.constant 0 : index
    %51 = vector.load %arg8[%c4, %c0_34] : memref<108x256xf32, #tpu.memory_space<vmem>>, vector<4x256xf32>
    tpu.vector_store %arg8[%c4, %c0_34], %50 {strides = array<i32>} : memref<108x256xf32, #tpu.memory_space<vmem>>, vector<4x256xf32>,
    %cst_35 = arith.constant 0.000000e+00 : f32
    %52 = vector.broadcast %cst_35 : f32 to vector<4x15xf32>
    %53 = vector.extract_strided_slice %5 {offsets = [0, 0], sizes = [4, 241], strides = [1, 1]} : vector<4x256xf32> to vector<4x241xf32>
    %54 = tpu.concatenate %52, %53 in 1 : vector<4x15xf32>, vector<4x241xf32> -> vector<4x256xf32>
    %cst_36 = arith.constant 0.000000e+00 : f32
    %55 = vector.shape_cast %38 : vector<1x256xi1> to vector<1x256xi1>
    %56 = vector.broadcast %55 : vector<1x256xi1> to vector<4x256xi1>
    %57 = vector.broadcast %cst_36 : f32 to vector<4x256xf32>
    %58 = arith.select %56, %54, %57 : vector<4x256xi1>, vector<4x256xf32>
    %c8 = arith.constant 8 : index
    %c0_37 = arith.constant 0 : index
    %59 = vector.load %arg8[%c8, %c0_37] : memref<108x256xf32, #tpu.memory_space<vmem>>, vector<4x256xf32>
    tpu.vector_store %arg8[%c8, %c0_37], %58 {strides = array<i32>} : memref<108x256xf32, #tpu.memory_space<vmem>>, vector<4x256xf32>,
    %cst_38 = arith.constant 0.000000e+00 : f32
    %60 = vector.broadcast %cst_38 : f32 to vector<4x1xf32>
    %61 = vector.extract_strided_slice %5 {offsets = [0, 0], sizes = [4, 255], strides = [1, 1]} : vector<4x256xf32> to vector<4x255xf32>
    %62 = tpu.concatenate %60, %61 in 1 : vector<4x1xf32>, vector<4x255xf32> -> vector<4x256xf32>
    %cst_39 = arith.constant 0.000000e+00 : f32
    %63 = vector.shape_cast %36 : vector<1x256xi1> to vector<1x256xi1>
    %64 = vector.broadcast %63 : vector<1x256xi1> to vector<4x256xi1>
    %65 = vector.broadcast %cst_39 : f32 to vector<4x256xf32>
    %66 = arith.select %64, %62, %65 : vector<4x256xi1>, vector<4x256xf32>
    %c12 = arith.constant 12 : index
    %c0_40 = arith.constant 0 : index
    %67 = vector.load %arg8[%c12, %c0_40] : memref<108x256xf32, #tpu.memory_space<vmem>>, vector<4x256xf32>
    tpu.vector_store %arg8[%c12, %c0_40], %66 {strides = array<i32>} : memref<108x256xf32, #tpu.memory_space<vmem>>, vector<4x256xf32>,
    %c16 = arith.constant 16 : index
    %c0_41 = arith.constant 0 : index
    %68 = vector.load %arg8[%c16, %c0_41] : memref<108x256xf32, #tpu.memory_space<vmem>>, vector<4x256xf32>
    tpu.vector_store %arg8[%c16, %c0_41], %5 {strides = array<i32>} : memref<108x256xf32, #tpu.memory_space<vmem>>, vector<4x256xf32>,
    %cst_42 = arith.constant 0.000000e+00 : f32
    %69 = vector.broadcast %cst_42 : f32 to vector<4x1xf32>
    %70 = vector.extract_strided_slice %5 {offsets = [0, 1], sizes = [4, 255], strides = [1, 1]} : vector<4x256xf32> to vector<4x255xf32>
    %71 = tpu.concatenate %70, %69 in 1 : vector<4x255xf32>, vector<4x1xf32> -> vector<4x256xf32>
    %cst_43 = arith.constant 0.000000e+00 : f32
    %72 = vector.shape_cast %38 : vector<1x256xi1> to vector<1x256xi1>
    %73 = vector.broadcast %72 : vector<1x256xi1> to vector<4x256xi1>
    %74 = vector.broadcast %cst_43 : f32 to vector<4x256xf32>
    %75 = arith.select %73, %71, %74 : vector<4x256xi1>, vector<4x256xf32>
    %c20 = arith.constant 20 : index
    %c0_44 = arith.constant 0 : index
    %76 = vector.load %arg8[%c20, %c0_44] : memref<108x256xf32, #tpu.memory_space<vmem>>, vector<4x256xf32>
    tpu.vector_store %arg8[%c20, %c0_44], %75 {strides = array<i32>} : memref<108x256xf32, #tpu.memory_space<vmem>>, vector<4x256xf32>,
    %cst_45 = arith.constant 0.000000e+00 : f32
    %77 = vector.broadcast %cst_45 : f32 to vector<4x15xf32>
    %78 = vector.extract_strided_slice %5 {offsets = [0, 15], sizes = [4, 241], strides = [1, 1]} : vector<4x256xf32> to vector<4x241xf32>
    %79 = tpu.concatenate %78, %77 in 1 : vector<4x241xf32>, vector<4x15xf32> -> vector<4x256xf32>
    %cst_46 = arith.constant 0.000000e+00 : f32
    %80 = vector.shape_cast %36 : vector<1x256xi1> to vector<1x256xi1>
    %81 = vector.broadcast %80 : vector<1x256xi1> to vector<4x256xi1>
    %82 = vector.broadcast %cst_46 : f32 to vector<4x256xf32>
    %83 = arith.select %81, %79, %82 : vector<4x256xi1>, vector<4x256xf32>
    %c24 = arith.constant 24 : index
    %c0_47 = arith.constant 0 : index
    %84 = vector.load %arg8[%c24, %c0_47] : memref<108x256xf32, #tpu.memory_space<vmem>>, vector<4x256xf32>
    tpu.vector_store %arg8[%c24, %c0_47], %83 {strides = array<i32>} : memref<108x256xf32, #tpu.memory_space<vmem>>, vector<4x256xf32>,
    %cst_48 = arith.constant 0.000000e+00 : f32
    %85 = vector.broadcast %cst_48 : f32 to vector<4x16xf32>
    %86 = vector.extract_strided_slice %5 {offsets = [0, 16], sizes = [4, 240], strides = [1, 1]} : vector<4x256xf32> to vector<4x240xf32>
    %87 = tpu.concatenate %86, %85 in 1 : vector<4x240xf32>, vector<4x16xf32> -> vector<4x256xf32>
    %c28 = arith.constant 28 : index
    %c0_49 = arith.constant 0 : index
    %88 = vector.load %arg8[%c28, %c0_49] : memref<108x256xf32, #tpu.memory_space<vmem>>, vector<4x256xf32>
    tpu.vector_store %arg8[%c28, %c0_49], %87 {strides = array<i32>} : memref<108x256xf32, #tpu.memory_space<vmem>>, vector<4x256xf32>,
    %cst_50 = arith.constant 0.000000e+00 : f32
    %89 = vector.broadcast %cst_50 : f32 to vector<4x17xf32>
    %90 = vector.extract_strided_slice %5 {offsets = [0, 17], sizes = [4, 239], strides = [1, 1]} : vector<4x256xf32> to vector<4x239xf32>
    %91 = tpu.concatenate %90, %89 in 1 : vector<4x239xf32>, vector<4x17xf32> -> vector<4x256xf32>
    %cst_51 = arith.constant 0.000000e+00 : f32
    %92 = vector.shape_cast %38 : vector<1x256xi1> to vector<1x256xi1>
    %93 = vector.broadcast %92 : vector<1x256xi1> to vector<4x256xi1>
    %94 = vector.broadcast %cst_51 : f32 to vector<4x256xf32>
    %95 = arith.select %93, %91, %94 : vector<4x256xi1>, vector<4x256xf32>
    %c32 = arith.constant 32 : index
    %c0_52 = arith.constant 0 : index
    %96 = vector.load %arg8[%c32, %c0_52] : memref<108x256xf32, #tpu.memory_space<vmem>>, vector<4x256xf32>
    tpu.vector_store %arg8[%c32, %c0_52], %95 {strides = array<i32>} : memref<108x256xf32, #tpu.memory_space<vmem>>, vector<4x256xf32>,
    %cst_53 = arith.constant 0.000000e+00 : f32
    %97 = vector.broadcast %cst_53 : f32 to vector<4x17xf32>
    %98 = vector.extract_strided_slice %7 {offsets = [0, 0], sizes = [4, 239], strides = [1, 1]} : vector<4x256xf32> to vector<4x239xf32>
    %99 = tpu.concatenate %97, %98 in 1 : vector<4x17xf32>, vector<4x239xf32> -> vector<4x256xf32>
    %cst_54 = arith.constant 0.000000e+00 : f32
    %100 = vector.shape_cast %36 : vector<1x256xi1> to vector<1x256xi1>
    %101 = vector.broadcast %100 : vector<1x256xi1> to vector<4x256xi1>
    %102 = vector.broadcast %cst_54 : f32 to vector<4x256xf32>
    %103 = arith.select %101, %99, %102 : vector<4x256xi1>, vector<4x256xf32>
    %c36 = arith.constant 36 : index
    %c0_55 = arith.constant 0 : index
    %104 = vector.load %arg8[%c36, %c0_55] : memref<108x256xf32, #tpu.memory_space<vmem>>, vector<4x256xf32>
    tpu.vector_store %arg8[%c36, %c0_55], %103 {strides = array<i32>} : memref<108x256xf32, #tpu.memory_space<vmem>>, vector<4x256xf32>,
    %cst_56 = arith.constant 0.000000e+00 : f32
    %105 = vector.broadcast %cst_56 : f32 to vector<4x16xf32>
    %106 = vector.extract_strided_slice %7 {offsets = [0, 0], sizes = [4, 240], strides = [1, 1]} : vector<4x256xf32> to vector<4x240xf32>
    %107 = tpu.concatenate %105, %106 in 1 : vector<4x16xf32>, vector<4x240xf32> -> vector<4x256xf32>
    %c40 = arith.constant 40 : index
    %c0_57 = arith.constant 0 : index
    %108 = vector.load %arg8[%c40, %c0_57] : memref<108x256xf32, #tpu.memory_space<vmem>>, vector<4x256xf32>
    tpu.vector_store %arg8[%c40, %c0_57], %107 {strides = array<i32>} : memref<108x256xf32, #tpu.memory_space<vmem>>, vector<4x256xf32>,
    %cst_58 = arith.constant 0.000000e+00 : f32
    %109 = vector.broadcast %cst_58 : f32 to vector<4x15xf32>
    %110 = vector.extract_strided_slice %7 {offsets = [0, 0], sizes = [4, 241], strides = [1, 1]} : vector<4x256xf32> to vector<4x241xf32>
    %111 = tpu.concatenate %109, %110 in 1 : vector<4x15xf32>, vector<4x241xf32> -> vector<4x256xf32>
    %cst_59 = arith.constant 0.000000e+00 : f32
    %112 = vector.shape_cast %38 : vector<1x256xi1> to vector<1x256xi1>
    %113 = vector.broadcast %112 : vector<1x256xi1> to vector<4x256xi1>
    %114 = vector.broadcast %cst_59 : f32 to vector<4x256xf32>
    %115 = arith.select %113, %111, %114 : vector<4x256xi1>, vector<4x256xf32>
    %c44 = arith.constant 44 : index
    %c0_60 = arith.constant 0 : index
    %116 = vector.load %arg8[%c44, %c0_60] : memref<108x256xf32, #tpu.memory_space<vmem>>, vector<4x256xf32>
    tpu.vector_store %arg8[%c44, %c0_60], %115 {strides = array<i32>} : memref<108x256xf32, #tpu.memory_space<vmem>>, vector<4x256xf32>,
    %cst_61 = arith.constant 0.000000e+00 : f32
    %117 = vector.broadcast %cst_61 : f32 to vector<4x1xf32>
    %118 = vector.extract_strided_slice %7 {offsets = [0, 0], sizes = [4, 255], strides = [1, 1]} : vector<4x256xf32> to vector<4x255xf32>
    %119 = tpu.concatenate %117, %118 in 1 : vector<4x1xf32>, vector<4x255xf32> -> vector<4x256xf32>
    %cst_62 = arith.constant 0.000000e+00 : f32
    %120 = vector.shape_cast %36 : vector<1x256xi1> to vector<1x256xi1>
    %121 = vector.broadcast %120 : vector<1x256xi1> to vector<4x256xi1>
    %122 = vector.broadcast %cst_62 : f32 to vector<4x256xf32>
    %123 = arith.select %121, %119, %122 : vector<4x256xi1>, vector<4x256xf32>
    %c48 = arith.constant 48 : index
    %c0_63 = arith.constant 0 : index
    %124 = vector.load %arg8[%c48, %c0_63] : memref<108x256xf32, #tpu.memory_space<vmem>>, vector<4x256xf32>
    tpu.vector_store %arg8[%c48, %c0_63], %123 {strides = array<i32>} : memref<108x256xf32, #tpu.memory_space<vmem>>, vector<4x256xf32>,
    %c52 = arith.constant 52 : index
    %c0_64 = arith.constant 0 : index
    %125 = vector.load %arg8[%c52, %c0_64] : memref<108x256xf32, #tpu.memory_space<vmem>>, vector<4x256xf32>
    tpu.vector_store %arg8[%c52, %c0_64], %7 {strides = array<i32>} : memref<108x256xf32, #tpu.memory_space<vmem>>, vector<4x256xf32>,
    %cst_65 = arith.constant 0.000000e+00 : f32
    %126 = vector.broadcast %cst_65 : f32 to vector<4x1xf32>
    %127 = vector.extract_strided_slice %7 {offsets = [0, 1], sizes = [4, 255], strides = [1, 1]} : vector<4x256xf32> to vector<4x255xf32>
    %128 = tpu.concatenate %127, %126 in 1 : vector<4x255xf32>, vector<4x1xf32> -> vector<4x256xf32>
    %cst_66 = arith.constant 0.000000e+00 : f32
    %129 = vector.shape_cast %38 : vector<1x256xi1> to vector<1x256xi1>
    %130 = vector.broadcast %129 : vector<1x256xi1> to vector<4x256xi1>
    %131 = vector.broadcast %cst_66 : f32 to vector<4x256xf32>
    %132 = arith.select %130, %128, %131 : vector<4x256xi1>, vector<4x256xf32>
    %c56 = arith.constant 56 : index
    %c0_67 = arith.constant 0 : index
    %133 = vector.load %arg8[%c56, %c0_67] : memref<108x256xf32, #tpu.memory_space<vmem>>, vector<4x256xf32>
    tpu.vector_store %arg8[%c56, %c0_67], %132 {strides = array<i32>} : memref<108x256xf32, #tpu.memory_space<vmem>>, vector<4x256xf32>,
    %cst_68 = arith.constant 0.000000e+00 : f32
    %134 = vector.broadcast %cst_68 : f32 to vector<4x15xf32>
    %135 = vector.extract_strided_slice %7 {offsets = [0, 15], sizes = [4, 241], strides = [1, 1]} : vector<4x256xf32> to vector<4x241xf32>
    %136 = tpu.concatenate %135, %134 in 1 : vector<4x241xf32>, vector<4x15xf32> -> vector<4x256xf32>
    %cst_69 = arith.constant 0.000000e+00 : f32
    %137 = vector.shape_cast %36 : vector<1x256xi1> to vector<1x256xi1>
    %138 = vector.broadcast %137 : vector<1x256xi1> to vector<4x256xi1>
    %139 = vector.broadcast %cst_69 : f32 to vector<4x256xf32>
    %140 = arith.select %138, %136, %139 : vector<4x256xi1>, vector<4x256xf32>
    %c60 = arith.constant 60 : index
    %c0_70 = arith.constant 0 : index
    %141 = vector.load %arg8[%c60, %c0_70] : memref<108x256xf32, #tpu.memory_space<vmem>>, vector<4x256xf32>
    tpu.vector_store %arg8[%c60, %c0_70], %140 {strides = array<i32>} : memref<108x256xf32, #tpu.memory_space<vmem>>, vector<4x256xf32>,
    %cst_71 = arith.constant 0.000000e+00 : f32
    %142 = vector.broadcast %cst_71 : f32 to vector<4x16xf32>
    %143 = vector.extract_strided_slice %7 {offsets = [0, 16], sizes = [4, 240], strides = [1, 1]} : vector<4x256xf32> to vector<4x240xf32>
    %144 = tpu.concatenate %143, %142 in 1 : vector<4x240xf32>, vector<4x16xf32> -> vector<4x256xf32>
    %c64 = arith.constant 64 : index
    %c0_72 = arith.constant 0 : index
    %145 = vector.load %arg8[%c64, %c0_72] : memref<108x256xf32, #tpu.memory_space<vmem>>, vector<4x256xf32>
    tpu.vector_store %arg8[%c64, %c0_72], %144 {strides = array<i32>} : memref<108x256xf32, #tpu.memory_space<vmem>>, vector<4x256xf32>,
    %cst_73 = arith.constant 0.000000e+00 : f32
    %146 = vector.broadcast %cst_73 : f32 to vector<4x17xf32>
    %147 = vector.extract_strided_slice %7 {offsets = [0, 17], sizes = [4, 239], strides = [1, 1]} : vector<4x256xf32> to vector<4x239xf32>
    %148 = tpu.concatenate %147, %146 in 1 : vector<4x239xf32>, vector<4x17xf32> -> vector<4x256xf32>
    %cst_74 = arith.constant 0.000000e+00 : f32
    %149 = vector.shape_cast %38 : vector<1x256xi1> to vector<1x256xi1>
    %150 = vector.broadcast %149 : vector<1x256xi1> to vector<4x256xi1>
    %151 = vector.broadcast %cst_74 : f32 to vector<4x256xf32>
    %152 = arith.select %150, %148, %151 : vector<4x256xi1>, vector<4x256xf32>
    %c68 = arith.constant 68 : index
    %c0_75 = arith.constant 0 : index
    %153 = vector.load %arg8[%c68, %c0_75] : memref<108x256xf32, #tpu.memory_space<vmem>>, vector<4x256xf32>
    tpu.vector_store %arg8[%c68, %c0_75], %152 {strides = array<i32>} : memref<108x256xf32, #tpu.memory_space<vmem>>, vector<4x256xf32>,
    %cst_76 = arith.constant 0.000000e+00 : f32
    %154 = vector.broadcast %cst_76 : f32 to vector<4x17xf32>
    %155 = vector.extract_strided_slice %9 {offsets = [0, 0], sizes = [4, 239], strides = [1, 1]} : vector<4x256xf32> to vector<4x239xf32>
    %156 = tpu.concatenate %154, %155 in 1 : vector<4x17xf32>, vector<4x239xf32> -> vector<4x256xf32>
    %cst_77 = arith.constant 0.000000e+00 : f32
    %157 = vector.shape_cast %36 : vector<1x256xi1> to vector<1x256xi1>
    %158 = vector.broadcast %157 : vector<1x256xi1> to vector<4x256xi1>
    %159 = vector.broadcast %cst_77 : f32 to vector<4x256xf32>
    %160 = arith.select %158, %156, %159 : vector<4x256xi1>, vector<4x256xf32>
    %c72 = arith.constant 72 : index
    %c0_78 = arith.constant 0 : index
    %161 = vector.load %arg8[%c72, %c0_78] : memref<108x256xf32, #tpu.memory_space<vmem>>, vector<4x256xf32>
    tpu.vector_store %arg8[%c72, %c0_78], %160 {strides = array<i32>} : memref<108x256xf32, #tpu.memory_space<vmem>>, vector<4x256xf32>,
    %cst_79 = arith.constant 0.000000e+00 : f32
    %162 = vector.broadcast %cst_79 : f32 to vector<4x16xf32>
    %163 = vector.extract_strided_slice %9 {offsets = [0, 0], sizes = [4, 240], strides = [1, 1]} : vector<4x256xf32> to vector<4x240xf32>
    %164 = tpu.concatenate %162, %163 in 1 : vector<4x16xf32>, vector<4x240xf32> -> vector<4x256xf32>
    %c76 = arith.constant 76 : index
    %c0_80 = arith.constant 0 : index
    %165 = vector.load %arg8[%c76, %c0_80] : memref<108x256xf32, #tpu.memory_space<vmem>>, vector<4x256xf32>
    tpu.vector_store %arg8[%c76, %c0_80], %164 {strides = array<i32>} : memref<108x256xf32, #tpu.memory_space<vmem>>, vector<4x256xf32>,
    %cst_81 = arith.constant 0.000000e+00 : f32
    %166 = vector.broadcast %cst_81 : f32 to vector<4x15xf32>
    %167 = vector.extract_strided_slice %9 {offsets = [0, 0], sizes = [4, 241], strides = [1, 1]} : vector<4x256xf32> to vector<4x241xf32>
    %168 = tpu.concatenate %166, %167 in 1 : vector<4x15xf32>, vector<4x241xf32> -> vector<4x256xf32>
    %cst_82 = arith.constant 0.000000e+00 : f32
    %169 = vector.shape_cast %38 : vector<1x256xi1> to vector<1x256xi1>
    %170 = vector.broadcast %169 : vector<1x256xi1> to vector<4x256xi1>
    %171 = vector.broadcast %cst_82 : f32 to vector<4x256xf32>
    %172 = arith.select %170, %168, %171 : vector<4x256xi1>, vector<4x256xf32>
    %c80 = arith.constant 80 : index
    %c0_83 = arith.constant 0 : index
    %173 = vector.load %arg8[%c80, %c0_83] : memref<108x256xf32, #tpu.memory_space<vmem>>, vector<4x256xf32>
    tpu.vector_store %arg8[%c80, %c0_83], %172 {strides = array<i32>} : memref<108x256xf32, #tpu.memory_space<vmem>>, vector<4x256xf32>,
    %cst_84 = arith.constant 0.000000e+00 : f32
    %174 = vector.broadcast %cst_84 : f32 to vector<4x1xf32>
    %175 = vector.extract_strided_slice %9 {offsets = [0, 0], sizes = [4, 255], strides = [1, 1]} : vector<4x256xf32> to vector<4x255xf32>
    %176 = tpu.concatenate %174, %175 in 1 : vector<4x1xf32>, vector<4x255xf32> -> vector<4x256xf32>
    %cst_85 = arith.constant 0.000000e+00 : f32
    %177 = vector.shape_cast %36 : vector<1x256xi1> to vector<1x256xi1>
    %178 = vector.broadcast %177 : vector<1x256xi1> to vector<4x256xi1>
    %179 = vector.broadcast %cst_85 : f32 to vector<4x256xf32>
    %180 = arith.select %178, %176, %179 : vector<4x256xi1>, vector<4x256xf32>
    %c84 = arith.constant 84 : index
    %c0_86 = arith.constant 0 : index
    %181 = vector.load %arg8[%c84, %c0_86] : memref<108x256xf32, #tpu.memory_space<vmem>>, vector<4x256xf32>
    tpu.vector_store %arg8[%c84, %c0_86], %180 {strides = array<i32>} : memref<108x256xf32, #tpu.memory_space<vmem>>, vector<4x256xf32>,
    %c88 = arith.constant 88 : index
    %c0_87 = arith.constant 0 : index
    %182 = vector.load %arg8[%c88, %c0_87] : memref<108x256xf32, #tpu.memory_space<vmem>>, vector<4x256xf32>
    tpu.vector_store %arg8[%c88, %c0_87], %9 {strides = array<i32>} : memref<108x256xf32, #tpu.memory_space<vmem>>, vector<4x256xf32>,
    %cst_88 = arith.constant 0.000000e+00 : f32
    %183 = vector.broadcast %cst_88 : f32 to vector<4x1xf32>
    %184 = vector.extract_strided_slice %9 {offsets = [0, 1], sizes = [4, 255], strides = [1, 1]} : vector<4x256xf32> to vector<4x255xf32>
    %185 = tpu.concatenate %184, %183 in 1 : vector<4x255xf32>, vector<4x1xf32> -> vector<4x256xf32>
    %cst_89 = arith.constant 0.000000e+00 : f32
    %186 = vector.shape_cast %38 : vector<1x256xi1> to vector<1x256xi1>
    %187 = vector.broadcast %186 : vector<1x256xi1> to vector<4x256xi1>
    %188 = vector.broadcast %cst_89 : f32 to vector<4x256xf32>
    %189 = arith.select %187, %185, %188 : vector<4x256xi1>, vector<4x256xf32>
    %c92 = arith.constant 92 : index
    %c0_90 = arith.constant 0 : index
    %190 = vector.load %arg8[%c92, %c0_90] : memref<108x256xf32, #tpu.memory_space<vmem>>, vector<4x256xf32>
    tpu.vector_store %arg8[%c92, %c0_90], %189 {strides = array<i32>} : memref<108x256xf32, #tpu.memory_space<vmem>>, vector<4x256xf32>,
    %cst_91 = arith.constant 0.000000e+00 : f32
    %191 = vector.broadcast %cst_91 : f32 to vector<4x15xf32>
    %192 = vector.extract_strided_slice %9 {offsets = [0, 15], sizes = [4, 241], strides = [1, 1]} : vector<4x256xf32> to vector<4x241xf32>
    %193 = tpu.concatenate %192, %191 in 1 : vector<4x241xf32>, vector<4x15xf32> -> vector<4x256xf32>
    %cst_92 = arith.constant 0.000000e+00 : f32
    %194 = vector.shape_cast %36 : vector<1x256xi1> to vector<1x256xi1>
    %195 = vector.broadcast %194 : vector<1x256xi1> to vector<4x256xi1>
    %196 = vector.broadcast %cst_92 : f32 to vector<4x256xf32>
    %197 = arith.select %195, %193, %196 : vector<4x256xi1>, vector<4x256xf32>
    %c96 = arith.constant 96 : index
    %c0_93 = arith.constant 0 : index
    %198 = vector.load %arg8[%c96, %c0_93] : memref<108x256xf32, #tpu.memory_space<vmem>>, vector<4x256xf32>
    tpu.vector_store %arg8[%c96, %c0_93], %197 {strides = array<i32>} : memref<108x256xf32, #tpu.memory_space<vmem>>, vector<4x256xf32>,
    %cst_94 = arith.constant 0.000000e+00 : f32
    %199 = vector.broadcast %cst_94 : f32 to vector<4x16xf32>
    %200 = vector.extract_strided_slice %9 {offsets = [0, 16], sizes = [4, 240], strides = [1, 1]} : vector<4x256xf32> to vector<4x240xf32>
    %201 = tpu.concatenate %200, %199 in 1 : vector<4x240xf32>, vector<4x16xf32> -> vector<4x256xf32>
    %c100 = arith.constant 100 : index
    %c0_95 = arith.constant 0 : index
    %202 = vector.load %arg8[%c100, %c0_95] : memref<108x256xf32, #tpu.memory_space<vmem>>, vector<4x256xf32>
    tpu.vector_store %arg8[%c100, %c0_95], %201 {strides = array<i32>} : memref<108x256xf32, #tpu.memory_space<vmem>>, vector<4x256xf32>,
    %cst_96 = arith.constant 0.000000e+00 : f32
    %203 = vector.broadcast %cst_96 : f32 to vector<4x17xf32>
    %204 = vector.extract_strided_slice %9 {offsets = [0, 17], sizes = [4, 239], strides = [1, 1]} : vector<4x256xf32> to vector<4x239xf32>
    %205 = tpu.concatenate %204, %203 in 1 : vector<4x239xf32>, vector<4x17xf32> -> vector<4x256xf32>
    %cst_97 = arith.constant 0.000000e+00 : f32
    %206 = vector.shape_cast %38 : vector<1x256xi1> to vector<1x256xi1>
    %207 = vector.broadcast %206 : vector<1x256xi1> to vector<4x256xi1>
    %208 = vector.broadcast %cst_97 : f32 to vector<4x256xf32>
    %209 = arith.select %207, %205, %208 : vector<4x256xi1>, vector<4x256xf32>
    %c104 = arith.constant 104 : index
    %c0_98 = arith.constant 0 : index
    %210 = vector.load %arg8[%c104, %c0_98] : memref<108x256xf32, #tpu.memory_space<vmem>>, vector<4x256xf32>
    tpu.vector_store %arg8[%c104, %c0_98], %209 {strides = array<i32>} : memref<108x256xf32, #tpu.memory_space<vmem>>, vector<4x256xf32>,
    %c0_99 = arith.constant 0 : index
    %c0_100 = arith.constant 0 : index
    %211 = vector.load %arg8[%c0_99, %c0_100] : memref<108x256xf32, #tpu.memory_space<vmem>>, vector<108x256xf32>
    %cst_101 = arith.constant dense<0.000000e+00> : vector<4x256xf32>
    %212 = tpu.matmul %39, %211, %cst_101 {dimension_numbers = #tpu.dot_dimension_numbers<[1], [0], [0], [1], [0, 0, 1, 1], [], []>} : vector<4x108xf32>, vector<108x256xf32>, vector<4x256xf32> -> vector<4x256xf32>
    %c0_102 = arith.constant 0 : index
    %c0_103 = arith.constant 0 : index
    %c0_104 = arith.constant 0 : index
    %c0_105 = arith.constant 0 : index
    %213 = vector.load %arg6[%c0_102, %c0_103, %c0_104, %c0_105] : memref<1x4x4x256xf32, #tpu.memory_space<vmem>>, vector<1x1x4x256xf32>
    %214 = vector.shape_cast %213 : vector<1x1x4x256xf32> to vector<4x256xf32>
    %215 = vector.shape_cast %212 : vector<4x256xf32> to vector<1x1x4x256xf32>
    tpu.vector_store %arg6[%c0_102, %c0_103, %c0_104, %c0_105], %215 {strides = array<i32>} : memref<1x4x4x256xf32, #tpu.memory_space<vmem>>, vector<1x1x4x256xf32>,
    %cst_106 = arith.constant dense<0.000000e+00> : vector<4xf32>
    %216 = vector.multi_reduction <add>, %212, %cst_106 [1] : vector<4x256xf32> to vector<4xf32>
    %217 = vector.shape_cast %216 : vector<4xf32> to vector<4x1xf32>
    %cst_107 = arith.constant 3.906250e-03 : f32
    %218 = vector.broadcast %cst_107 : f32 to vector<4x1xf32>
    %219 = arith.mulf %217, %218 : vector<4x1xf32>
    %220 = vector.broadcast %219 : vector<4x1xf32> to vector<4x256xf32>
    %221 = arith.subf %212, %220 : vector<4x256xf32>
    %222 = arith.mulf %221, %221 : vector<4x256xf32>
    %cst_108 = arith.constant dense<0.000000e+00> : vector<4xf32>
    %223 = vector.multi_reduction <add>, %222, %cst_108 [1] : vector<4x256xf32> to vector<4xf32>
    %224 = vector.shape_cast %223 : vector<4xf32> to vector<4x1xf32>
    %c0_109 = arith.constant 0 : index
    %c0_110 = arith.constant 0 : index
    %c0_111 = arith.constant 0 : index
    %c0_112 = arith.constant 0 : index
    %c0_113 = arith.constant 0 : index
    %225 = vector.load %arg7[%c0_109, %c0_110, %c0_111, %c0_112, %c0_113] : memref<1x1x4x4x2xf32, #tpu.memory_space<vmem>>, vector<1x1x1x4x1xf32>
    %226 = vector.shape_cast %225 : vector<1x1x1x4x1xf32> to vector<4x1xf32>
    %227 = vector.shape_cast %217 : vector<4x1xf32> to vector<1x1x1x4x1xf32>
    tpu.vector_store %arg7[%c0_109, %c0_110, %c0_111, %c0_112, %c0_113], %227 {strides = array<i32>} : memref<1x1x4x4x2xf32, #tpu.memory_space<vmem>>, vector<1x1x1x4x1xf32>,
    %c0_114 = arith.constant 0 : index
    %c0_115 = arith.constant 0 : index
    %c0_116 = arith.constant 0 : index
    %c0_117 = arith.constant 0 : index
    %c1_118 = arith.constant 1 : index
    %228 = vector.load %arg7[%c0_114, %c0_115, %c0_116, %c0_117, %c1_118] : memref<1x1x4x4x2xf32, #tpu.memory_space<vmem>>, vector<1x1x1x4x1xf32>
    %229 = vector.shape_cast %228 : vector<1x1x1x4x1xf32> to vector<4x1xf32>
    %230 = vector.shape_cast %224 : vector<4x1xf32> to vector<1x1x1x4x1xf32>
    tpu.vector_store %arg7[%c0_114, %c0_115, %c0_116, %c0_117, %c1_118], %230 {strides = array<i32>} : memref<1x1x4x4x2xf32, #tpu.memory_space<vmem>>, vector<1x1x1x4x1xf32>,
    %cst_119 = arith.constant 0.000000e+00 : f32
    %231 = vector.broadcast %cst_119 : f32 to vector<4x17xf32>
    %232 = vector.extract_strided_slice %7 {offsets = [0, 0], sizes = [4, 239], strides = [1, 1]} : vector<4x256xf32> to vector<4x239xf32>
    %233 = tpu.concatenate %231, %232 in 1 : vector<4x17xf32>, vector<4x239xf32> -> vector<4x256xf32>
    %cst_120 = arith.constant 0.000000e+00 : f32
    %234 = vector.shape_cast %36 : vector<1x256xi1> to vector<1x256xi1>
    %235 = vector.broadcast %234 : vector<1x256xi1> to vector<4x256xi1>
    %236 = vector.broadcast %cst_120 : f32 to vector<4x256xf32>
    %237 = arith.select %235, %233, %236 : vector<4x256xi1>, vector<4x256xf32>
    %c0_121 = arith.constant 0 : index
    %c0_122 = arith.constant 0 : index
    %238 = vector.load %arg8[%c0_121, %c0_122] : memref<108x256xf32, #tpu.memory_space<vmem>>, vector<4x256xf32>
    tpu.vector_store %arg8[%c0_121, %c0_122], %237 {strides = array<i32>} : memref<108x256xf32, #tpu.memory_space<vmem>>, vector<4x256xf32>,
    %cst_123 = arith.constant 0.000000e+00 : f32
    %239 = vector.broadcast %cst_123 : f32 to vector<4x16xf32>
    %240 = vector.extract_strided_slice %7 {offsets = [0, 0], sizes = [4, 240], strides = [1, 1]} : vector<4x256xf32> to vector<4x240xf32>
    %241 = tpu.concatenate %239, %240 in 1 : vector<4x16xf32>, vector<4x240xf32> -> vector<4x256xf32>
    %c4_124 = arith.constant 4 : index
    %c0_125 = arith.constant 0 : index
    %242 = vector.load %arg8[%c4_124, %c0_125] : memref<108x256xf32, #tpu.memory_space<vmem>>, vector<4x256xf32>
    tpu.vector_store %arg8[%c4_124, %c0_125], %241 {strides = array<i32>} : memref<108x256xf32, #tpu.memory_space<vmem>>, vector<4x256xf32>,
    %cst_126 = arith.constant 0.000000e+00 : f32
    %243 = vector.broadcast %cst_126 : f32 to vector<4x15xf32>
    %244 = vector.extract_strided_slice %7 {offsets = [0, 0], sizes = [4, 241], strides = [1, 1]} : vector<4x256xf32> to vector<4x241xf32>
    %245 = tpu.concatenate %243, %244 in 1 : vector<4x15xf32>, vector<4x241xf32> -> vector<4x256xf32>
    %cst_127 = arith.constant 0.000000e+00 : f32
    %246 = vector.shape_cast %38 : vector<1x256xi1> to vector<1x256xi1>
    %247 = vector.broadcast %246 : vector<1x256xi1> to vector<4x256xi1>
    %248 = vector.broadcast %cst_127 : f32 to vector<4x256xf32>
    %249 = arith.select %247, %245, %248 : vector<4x256xi1>, vector<4x256xf32>
    %c8_128 = arith.constant 8 : index
    %c0_129 = arith.constant 0 : index
    %250 = vector.load %arg8[%c8_128, %c0_129] : memref<108x256xf32, #tpu.memory_space<vmem>>, vector<4x256xf32>
    tpu.vector_store %arg8[%c8_128, %c0_129], %249 {strides = array<i32>} : memref<108x256xf32, #tpu.memory_space<vmem>>, vector<4x256xf32>,
    %cst_130 = arith.constant 0.000000e+00 : f32
    %251 = vector.broadcast %cst_130 : f32 to vector<4x1xf32>
    %252 = vector.extract_strided_slice %7 {offsets = [0, 0], sizes = [4, 255], strides = [1, 1]} : vector<4x256xf32> to vector<4x255xf32>
    %253 = tpu.concatenate %251, %252 in 1 : vector<4x1xf32>, vector<4x255xf32> -> vector<4x256xf32>
    %cst_131 = arith.constant 0.000000e+00 : f32
    %254 = vector.shape_cast %36 : vector<1x256xi1> to vector<1x256xi1>
    %255 = vector.broadcast %254 : vector<1x256xi1> to vector<4x256xi1>
    %256 = vector.broadcast %cst_131 : f32 to vector<4x256xf32>
    %257 = arith.select %255, %253, %256 : vector<4x256xi1>, vector<4x256xf32>
    %c12_132 = arith.constant 12 : index
    %c0_133 = arith.constant 0 : index
    %258 = vector.load %arg8[%c12_132, %c0_133] : memref<108x256xf32, #tpu.memory_space<vmem>>, vector<4x256xf32>
    tpu.vector_store %arg8[%c12_132, %c0_133], %257 {strides = array<i32>} : memref<108x256xf32, #tpu.memory_space<vmem>>, vector<4x256xf32>,
    %c16_134 = arith.constant 16 : index
    %c0_135 = arith.constant 0 : index
    %259 = vector.load %arg8[%c16_134, %c0_135] : memref<108x256xf32, #tpu.memory_space<vmem>>, vector<4x256xf32>
    tpu.vector_store %arg8[%c16_134, %c0_135], %7 {strides = array<i32>} : memref<108x256xf32, #tpu.memory_space<vmem>>, vector<4x256xf32>,
    %cst_136 = arith.constant 0.000000e+00 : f32
    %260 = vector.broadcast %cst_136 : f32 to vector<4x1xf32>
    %261 = vector.extract_strided_slice %7 {offsets = [0, 1], sizes = [4, 255], strides = [1, 1]} : vector<4x256xf32> to vector<4x255xf32>
    %262 = tpu.concatenate %261, %260 in 1 : vector<4x255xf32>, vector<4x1xf32> -> vector<4x256xf32>
    %cst_137 = arith.constant 0.000000e+00 : f32
    %263 = vector.shape_cast %38 : vector<1x256xi1> to vector<1x256xi1>
    %264 = vector.broadcast %263 : vector<1x256xi1> to vector<4x256xi1>
    %265 = vector.broadcast %cst_137 : f32 to vector<4x256xf32>
    %266 = arith.select %264, %262, %265 : vector<4x256xi1>, vector<4x256xf32>
    %c20_138 = arith.constant 20 : index
    %c0_139 = arith.constant 0 : index
    %267 = vector.load %arg8[%c20_138, %c0_139] : memref<108x256xf32, #tpu.memory_space<vmem>>, vector<4x256xf32>
    tpu.vector_store %arg8[%c20_138, %c0_139], %266 {strides = array<i32>} : memref<108x256xf32, #tpu.memory_space<vmem>>, vector<4x256xf32>,
    %cst_140 = arith.constant 0.000000e+00 : f32
    %268 = vector.broadcast %cst_140 : f32 to vector<4x15xf32>
    %269 = vector.extract_strided_slice %7 {offsets = [0, 15], sizes = [4, 241], strides = [1, 1]} : vector<4x256xf32> to vector<4x241xf32>
    %270 = tpu.concatenate %269, %268 in 1 : vector<4x241xf32>, vector<4x15xf32> -> vector<4x256xf32>
    %cst_141 = arith.constant 0.000000e+00 : f32
    %271 = vector.shape_cast %36 : vector<1x256xi1> to vector<1x256xi1>
    %272 = vector.broadcast %271 : vector<1x256xi1> to vector<4x256xi1>
    %273 = vector.broadcast %cst_141 : f32 to vector<4x256xf32>
    %274 = arith.select %272, %270, %273 : vector<4x256xi1>, vector<4x256xf32>
    %c24_142 = arith.constant 24 : index
    %c0_143 = arith.constant 0 : index
    %275 = vector.load %arg8[%c24_142, %c0_143] : memref<108x256xf32, #tpu.memory_space<vmem>>, vector<4x256xf32>
    tpu.vector_store %arg8[%c24_142, %c0_143], %274 {strides = array<i32>} : memref<108x256xf32, #tpu.memory_space<vmem>>, vector<4x256xf32>,
    %cst_144 = arith.constant 0.000000e+00 : f32
    %276 = vector.broadcast %cst_144 : f32 to vector<4x16xf32>
    %277 = vector.extract_strided_slice %7 {offsets = [0, 16], sizes = [4, 240], strides = [1, 1]} : vector<4x256xf32> to vector<4x240xf32>
    %278 = tpu.concatenate %277, %276 in 1 : vector<4x240xf32>, vector<4x16xf32> -> vector<4x256xf32>
    %c28_145 = arith.constant 28 : index
    %c0_146 = arith.constant 0 : index
    %279 = vector.load %arg8[%c28_145, %c0_146] : memref<108x256xf32, #tpu.memory_space<vmem>>, vector<4x256xf32>
    tpu.vector_store %arg8[%c28_145, %c0_146], %278 {strides = array<i32>} : memref<108x256xf32, #tpu.memory_space<vmem>>, vector<4x256xf32>,
    %cst_147 = arith.constant 0.000000e+00 : f32
    %280 = vector.broadcast %cst_147 : f32 to vector<4x17xf32>
    %281 = vector.extract_strided_slice %7 {offsets = [0, 17], sizes = [4, 239], strides = [1, 1]} : vector<4x256xf32> to vector<4x239xf32>
    %282 = tpu.concatenate %281, %280 in 1 : vector<4x239xf32>, vector<4x17xf32> -> vector<4x256xf32>
    %cst_148 = arith.constant 0.000000e+00 : f32
    %283 = vector.shape_cast %38 : vector<1x256xi1> to vector<1x256xi1>
    %284 = vector.broadcast %283 : vector<1x256xi1> to vector<4x256xi1>
    %285 = vector.broadcast %cst_148 : f32 to vector<4x256xf32>
    %286 = arith.select %284, %282, %285 : vector<4x256xi1>, vector<4x256xf32>
    %c32_149 = arith.constant 32 : index
    %c0_150 = arith.constant 0 : index
    %287 = vector.load %arg8[%c32_149, %c0_150] : memref<108x256xf32, #tpu.memory_space<vmem>>, vector<4x256xf32>
    tpu.vector_store %arg8[%c32_149, %c0_150], %286 {strides = array<i32>} : memref<108x256xf32, #tpu.memory_space<vmem>>, vector<4x256xf32>,
    %cst_151 = arith.constant 0.000000e+00 : f32
    %288 = vector.broadcast %cst_151 : f32 to vector<4x17xf32>
    %289 = vector.extract_strided_slice %9 {offsets = [0, 0], sizes = [4, 239], strides = [1, 1]} : vector<4x256xf32> to vector<4x239xf32>
    %290 = tpu.concatenate %288, %289 in 1 : vector<4x17xf32>, vector<4x239xf32> -> vector<4x256xf32>
    %cst_152 = arith.constant 0.000000e+00 : f32
    %291 = vector.shape_cast %36 : vector<1x256xi1> to vector<1x256xi1>
    %292 = vector.broadcast %291 : vector<1x256xi1> to vector<4x256xi1>
    %293 = vector.broadcast %cst_152 : f32 to vector<4x256xf32>
    %294 = arith.select %292, %290, %293 : vector<4x256xi1>, vector<4x256xf32>
    %c36_153 = arith.constant 36 : index
    %c0_154 = arith.constant 0 : index
    %295 = vector.load %arg8[%c36_153, %c0_154] : memref<108x256xf32, #tpu.memory_space<vmem>>, vector<4x256xf32>
    tpu.vector_store %arg8[%c36_153, %c0_154], %294 {strides = array<i32>} : memref<108x256xf32, #tpu.memory_space<vmem>>, vector<4x256xf32>,
    %cst_155 = arith.constant 0.000000e+00 : f32
    %296 = vector.broadcast %cst_155 : f32 to vector<4x16xf32>
    %297 = vector.extract_strided_slice %9 {offsets = [0, 0], sizes = [4, 240], strides = [1, 1]} : vector<4x256xf32> to vector<4x240xf32>
    %298 = tpu.concatenate %296, %297 in 1 : vector<4x16xf32>, vector<4x240xf32> -> vector<4x256xf32>
    %c40_156 = arith.constant 40 : index
    %c0_157 = arith.constant 0 : index
    %299 = vector.load %arg8[%c40_156, %c0_157] : memref<108x256xf32, #tpu.memory_space<vmem>>, vector<4x256xf32>
    tpu.vector_store %arg8[%c40_156, %c0_157], %298 {strides = array<i32>} : memref<108x256xf32, #tpu.memory_space<vmem>>, vector<4x256xf32>,
    %cst_158 = arith.constant 0.000000e+00 : f32
    %300 = vector.broadcast %cst_158 : f32 to vector<4x15xf32>
    %301 = vector.extract_strided_slice %9 {offsets = [0, 0], sizes = [4, 241], strides = [1, 1]} : vector<4x256xf32> to vector<4x241xf32>
    %302 = tpu.concatenate %300, %301 in 1 : vector<4x15xf32>, vector<4x241xf32> -> vector<4x256xf32>
    %cst_159 = arith.constant 0.000000e+00 : f32
    %303 = vector.shape_cast %38 : vector<1x256xi1> to vector<1x256xi1>
    %304 = vector.broadcast %303 : vector<1x256xi1> to vector<4x256xi1>
    %305 = vector.broadcast %cst_159 : f32 to vector<4x256xf32>
    %306 = arith.select %304, %302, %305 : vector<4x256xi1>, vector<4x256xf32>
    %c44_160 = arith.constant 44 : index
    %c0_161 = arith.constant 0 : index
    %307 = vector.load %arg8[%c44_160, %c0_161] : memref<108x256xf32, #tpu.memory_space<vmem>>, vector<4x256xf32>
    tpu.vector_store %arg8[%c44_160, %c0_161], %306 {strides = array<i32>} : memref<108x256xf32, #tpu.memory_space<vmem>>, vector<4x256xf32>,
    %cst_162 = arith.constant 0.000000e+00 : f32
    %308 = vector.broadcast %cst_162 : f32 to vector<4x1xf32>
    %309 = vector.extract_strided_slice %9 {offsets = [0, 0], sizes = [4, 255], strides = [1, 1]} : vector<4x256xf32> to vector<4x255xf32>
    %310 = tpu.concatenate %308, %309 in 1 : vector<4x1xf32>, vector<4x255xf32> -> vector<4x256xf32>
    %cst_163 = arith.constant 0.000000e+00 : f32
    %311 = vector.shape_cast %36 : vector<1x256xi1> to vector<1x256xi1>
    %312 = vector.broadcast %311 : vector<1x256xi1> to vector<4x256xi1>
    %313 = vector.broadcast %cst_163 : f32 to vector<4x256xf32>
    %314 = arith.select %312, %310, %313 : vector<4x256xi1>, vector<4x256xf32>
    %c48_164 = arith.constant 48 : index
    %c0_165 = arith.constant 0 : index
    %315 = vector.load %arg8[%c48_164, %c0_165] : memref<108x256xf32, #tpu.memory_space<vmem>>, vector<4x256xf32>
    tpu.vector_store %arg8[%c48_164, %c0_165], %314 {strides = array<i32>} : memref<108x256xf32, #tpu.memory_space<vmem>>, vector<4x256xf32>,
    %c52_166 = arith.constant 52 : index
    %c0_167 = arith.constant 0 : index
    %316 = vector.load %arg8[%c52_166, %c0_167] : memref<108x256xf32, #tpu.memory_space<vmem>>, vector<4x256xf32>
    tpu.vector_store %arg8[%c52_166, %c0_167], %9 {strides = array<i32>} : memref<108x256xf32, #tpu.memory_space<vmem>>, vector<4x256xf32>,
    %cst_168 = arith.constant 0.000000e+00 : f32
    %317 = vector.broadcast %cst_168 : f32 to vector<4x1xf32>
    %318 = vector.extract_strided_slice %9 {offsets = [0, 1], sizes = [4, 255], strides = [1, 1]} : vector<4x256xf32> to vector<4x255xf32>
    %319 = tpu.concatenate %318, %317 in 1 : vector<4x255xf32>, vector<4x1xf32> -> vector<4x256xf32>
    %cst_169 = arith.constant 0.000000e+00 : f32
    %320 = vector.shape_cast %38 : vector<1x256xi1> to vector<1x256xi1>
    %321 = vector.broadcast %320 : vector<1x256xi1> to vector<4x256xi1>
    %322 = vector.broadcast %cst_169 : f32 to vector<4x256xf32>
    %323 = arith.select %321, %319, %322 : vector<4x256xi1>, vector<4x256xf32>
    %c56_170 = arith.constant 56 : index
    %c0_171 = arith.constant 0 : index
    %324 = vector.load %arg8[%c56_170, %c0_171] : memref<108x256xf32, #tpu.memory_space<vmem>>, vector<4x256xf32>
    tpu.vector_store %arg8[%c56_170, %c0_171], %323 {strides = array<i32>} : memref<108x256xf32, #tpu.memory_space<vmem>>, vector<4x256xf32>,
    %cst_172 = arith.constant 0.000000e+00 : f32
    %325 = vector.broadcast %cst_172 : f32 to vector<4x15xf32>
    %326 = vector.extract_strided_slice %9 {offsets = [0, 15], sizes = [4, 241], strides = [1, 1]} : vector<4x256xf32> to vector<4x241xf32>
    %327 = tpu.concatenate %326, %325 in 1 : vector<4x241xf32>, vector<4x15xf32> -> vector<4x256xf32>
    %cst_173 = arith.constant 0.000000e+00 : f32
    %328 = vector.shape_cast %36 : vector<1x256xi1> to vector<1x256xi1>
    %329 = vector.broadcast %328 : vector<1x256xi1> to vector<4x256xi1>
    %330 = vector.broadcast %cst_173 : f32 to vector<4x256xf32>
    %331 = arith.select %329, %327, %330 : vector<4x256xi1>, vector<4x256xf32>
    %c60_174 = arith.constant 60 : index
    %c0_175 = arith.constant 0 : index
    %332 = vector.load %arg8[%c60_174, %c0_175] : memref<108x256xf32, #tpu.memory_space<vmem>>, vector<4x256xf32>
    tpu.vector_store %arg8[%c60_174, %c0_175], %331 {strides = array<i32>} : memref<108x256xf32, #tpu.memory_space<vmem>>, vector<4x256xf32>,
    %cst_176 = arith.constant 0.000000e+00 : f32
    %333 = vector.broadcast %cst_176 : f32 to vector<4x16xf32>
    %334 = vector.extract_strided_slice %9 {offsets = [0, 16], sizes = [4, 240], strides = [1, 1]} : vector<4x256xf32> to vector<4x240xf32>
    %335 = tpu.concatenate %334, %333 in 1 : vector<4x240xf32>, vector<4x16xf32> -> vector<4x256xf32>
    %c64_177 = arith.constant 64 : index
    %c0_178 = arith.constant 0 : index
    %336 = vector.load %arg8[%c64_177, %c0_178] : memref<108x256xf32, #tpu.memory_space<vmem>>, vector<4x256xf32>
    tpu.vector_store %arg8[%c64_177, %c0_178], %335 {strides = array<i32>} : memref<108x256xf32, #tpu.memory_space<vmem>>, vector<4x256xf32>,
    %cst_179 = arith.constant 0.000000e+00 : f32
    %337 = vector.broadcast %cst_179 : f32 to vector<4x17xf32>
    %338 = vector.extract_strided_slice %9 {offsets = [0, 17], sizes = [4, 239], strides = [1, 1]} : vector<4x256xf32> to vector<4x239xf32>
    %339 = tpu.concatenate %338, %337 in 1 : vector<4x239xf32>, vector<4x17xf32> -> vector<4x256xf32>
    %cst_180 = arith.constant 0.000000e+00 : f32
    %340 = vector.shape_cast %38 : vector<1x256xi1> to vector<1x256xi1>
    %341 = vector.broadcast %340 : vector<1x256xi1> to vector<4x256xi1>
    %342 = vector.broadcast %cst_180 : f32 to vector<4x256xf32>
    %343 = arith.select %341, %339, %342 : vector<4x256xi1>, vector<4x256xf32>
    %c68_181 = arith.constant 68 : index
    %c0_182 = arith.constant 0 : index
    %344 = vector.load %arg8[%c68_181, %c0_182] : memref<108x256xf32, #tpu.memory_space<vmem>>, vector<4x256xf32>
    tpu.vector_store %arg8[%c68_181, %c0_182], %343 {strides = array<i32>} : memref<108x256xf32, #tpu.memory_space<vmem>>, vector<4x256xf32>,
    %cst_183 = arith.constant 0.000000e+00 : f32
    %345 = vector.broadcast %cst_183 : f32 to vector<4x17xf32>
    %346 = vector.extract_strided_slice %11 {offsets = [0, 0], sizes = [4, 239], strides = [1, 1]} : vector<4x256xf32> to vector<4x239xf32>
    %347 = tpu.concatenate %345, %346 in 1 : vector<4x17xf32>, vector<4x239xf32> -> vector<4x256xf32>
    %cst_184 = arith.constant 0.000000e+00 : f32
    %348 = vector.shape_cast %36 : vector<1x256xi1> to vector<1x256xi1>
    %349 = vector.broadcast %348 : vector<1x256xi1> to vector<4x256xi1>
    %350 = vector.broadcast %cst_184 : f32 to vector<4x256xf32>
    %351 = arith.select %349, %347, %350 : vector<4x256xi1>, vector<4x256xf32>
    %c72_185 = arith.constant 72 : index
    %c0_186 = arith.constant 0 : index
    %352 = vector.load %arg8[%c72_185, %c0_186] : memref<108x256xf32, #tpu.memory_space<vmem>>, vector<4x256xf32>
    tpu.vector_store %arg8[%c72_185, %c0_186], %351 {strides = array<i32>} : memref<108x256xf32, #tpu.memory_space<vmem>>, vector<4x256xf32>,
    %cst_187 = arith.constant 0.000000e+00 : f32
    %353 = vector.broadcast %cst_187 : f32 to vector<4x16xf32>
    %354 = vector.extract_strided_slice %11 {offsets = [0, 0], sizes = [4, 240], strides = [1, 1]} : vector<4x256xf32> to vector<4x240xf32>
    %355 = tpu.concatenate %353, %354 in 1 : vector<4x16xf32>, vector<4x240xf32> -> vector<4x256xf32>
    %c76_188 = arith.constant 76 : index
    %c0_189 = arith.constant 0 : index
    %356 = vector.load %arg8[%c76_188, %c0_189] : memref<108x256xf32, #tpu.memory_space<vmem>>, vector<4x256xf32>
    tpu.vector_store %arg8[%c76_188, %c0_189], %355 {strides = array<i32>} : memref<108x256xf32, #tpu.memory_space<vmem>>, vector<4x256xf32>,
    %cst_190 = arith.constant 0.000000e+00 : f32
    %357 = vector.broadcast %cst_190 : f32 to vector<4x15xf32>
    %358 = vector.extract_strided_slice %11 {offsets = [0, 0], sizes = [4, 241], strides = [1, 1]} : vector<4x256xf32> to vector<4x241xf32>
    %359 = tpu.concatenate %357, %358 in 1 : vector<4x15xf32>, vector<4x241xf32> -> vector<4x256xf32>
    %cst_191 = arith.constant 0.000000e+00 : f32
    %360 = vector.shape_cast %38 : vector<1x256xi1> to vector<1x256xi1>
    %361 = vector.broadcast %360 : vector<1x256xi1> to vector<4x256xi1>
    %362 = vector.broadcast %cst_191 : f32 to vector<4x256xf32>
    %363 = arith.select %361, %359, %362 : vector<4x256xi1>, vector<4x256xf32>
    %c80_192 = arith.constant 80 : index
    %c0_193 = arith.constant 0 : index
    %364 = vector.load %arg8[%c80_192, %c0_193] : memref<108x256xf32, #tpu.memory_space<vmem>>, vector<4x256xf32>
    tpu.vector_store %arg8[%c80_192, %c0_193], %363 {strides = array<i32>} : memref<108x256xf32, #tpu.memory_space<vmem>>, vector<4x256xf32>,
    %cst_194 = arith.constant 0.000000e+00 : f32
    %365 = vector.broadcast %cst_194 : f32 to vector<4x1xf32>
    %366 = vector.extract_strided_slice %11 {offsets = [0, 0], sizes = [4, 255], strides = [1, 1]} : vector<4x256xf32> to vector<4x255xf32>
    %367 = tpu.concatenate %365, %366 in 1 : vector<4x1xf32>, vector<4x255xf32> -> vector<4x256xf32>
    %cst_195 = arith.constant 0.000000e+00 : f32
    %368 = vector.shape_cast %36 : vector<1x256xi1> to vector<1x256xi1>
    %369 = vector.broadcast %368 : vector<1x256xi1> to vector<4x256xi1>
    %370 = vector.broadcast %cst_195 : f32 to vector<4x256xf32>
    %371 = arith.select %369, %367, %370 : vector<4x256xi1>, vector<4x256xf32>
    %c84_196 = arith.constant 84 : index
    %c0_197 = arith.constant 0 : index
    %372 = vector.load %arg8[%c84_196, %c0_197] : memref<108x256xf32, #tpu.memory_space<vmem>>, vector<4x256xf32>
    tpu.vector_store %arg8[%c84_196, %c0_197], %371 {strides = array<i32>} : memref<108x256xf32, #tpu.memory_space<vmem>>, vector<4x256xf32>,
    %c88_198 = arith.constant 88 : index
    %c0_199 = arith.constant 0 : index
    %373 = vector.load %arg8[%c88_198, %c0_199] : memref<108x256xf32, #tpu.memory_space<vmem>>, vector<4x256xf32>
    tpu.vector_store %arg8[%c88_198, %c0_199], %11 {strides = array<i32>} : memref<108x256xf32, #tpu.memory_space<vmem>>, vector<4x256xf32>,
    %cst_200 = arith.constant 0.000000e+00 : f32
    %374 = vector.broadcast %cst_200 : f32 to vector<4x1xf32>
    %375 = vector.extract_strided_slice %11 {offsets = [0, 1], sizes = [4, 255], strides = [1, 1]} : vector<4x256xf32> to vector<4x255xf32>
    %376 = tpu.concatenate %375, %374 in 1 : vector<4x255xf32>, vector<4x1xf32> -> vector<4x256xf32>
    %cst_201 = arith.constant 0.000000e+00 : f32
    %377 = vector.shape_cast %38 : vector<1x256xi1> to vector<1x256xi1>
    %378 = vector.broadcast %377 : vector<1x256xi1> to vector<4x256xi1>
    %379 = vector.broadcast %cst_201 : f32 to vector<4x256xf32>
    %380 = arith.select %378, %376, %379 : vector<4x256xi1>, vector<4x256xf32>
    %c92_202 = arith.constant 92 : index
    %c0_203 = arith.constant 0 : index
    %381 = vector.load %arg8[%c92_202, %c0_203] : memref<108x256xf32, #tpu.memory_space<vmem>>, vector<4x256xf32>
    tpu.vector_store %arg8[%c92_202, %c0_203], %380 {strides = array<i32>} : memref<108x256xf32, #tpu.memory_space<vmem>>, vector<4x256xf32>,
    %cst_204 = arith.constant 0.000000e+00 : f32
    %382 = vector.broadcast %cst_204 : f32 to vector<4x15xf32>
    %383 = vector.extract_strided_slice %11 {offsets = [0, 15], sizes = [4, 241], strides = [1, 1]} : vector<4x256xf32> to vector<4x241xf32>
    %384 = tpu.concatenate %383, %382 in 1 : vector<4x241xf32>, vector<4x15xf32> -> vector<4x256xf32>
    %cst_205 = arith.constant 0.000000e+00 : f32
    %385 = vector.shape_cast %36 : vector<1x256xi1> to vector<1x256xi1>
    %386 = vector.broadcast %385 : vector<1x256xi1> to vector<4x256xi1>
    %387 = vector.broadcast %cst_205 : f32 to vector<4x256xf32>
    %388 = arith.select %386, %384, %387 : vector<4x256xi1>, vector<4x256xf32>
    %c96_206 = arith.constant 96 : index
    %c0_207 = arith.constant 0 : index
    %389 = vector.load %arg8[%c96_206, %c0_207] : memref<108x256xf32, #tpu.memory_space<vmem>>, vector<4x256xf32>
    tpu.vector_store %arg8[%c96_206, %c0_207], %388 {strides = array<i32>} : memref<108x256xf32, #tpu.memory_space<vmem>>, vector<4x256xf32>,
    %cst_208 = arith.constant 0.000000e+00 : f32
    %390 = vector.broadcast %cst_208 : f32 to vector<4x16xf32>
    %391 = vector.extract_strided_slice %11 {offsets = [0, 16], sizes = [4, 240], strides = [1, 1]} : vector<4x256xf32> to vector<4x240xf32>
    %392 = tpu.concatenate %391, %390 in 1 : vector<4x240xf32>, vector<4x16xf32> -> vector<4x256xf32>
    %c100_209 = arith.constant 100 : index
    %c0_210 = arith.constant 0 : index
    %393 = vector.load %arg8[%c100_209, %c0_210] : memref<108x256xf32, #tpu.memory_space<vmem>>, vector<4x256xf32>
    tpu.vector_store %arg8[%c100_209, %c0_210], %392 {strides = array<i32>} : memref<108x256xf32, #tpu.memory_space<vmem>>, vector<4x256xf32>,
    %cst_211 = arith.constant 0.000000e+00 : f32
    %394 = vector.broadcast %cst_211 : f32 to vector<4x17xf32>
    %395 = vector.extract_strided_slice %11 {offsets = [0, 17], sizes = [4, 239], strides = [1, 1]} : vector<4x256xf32> to vector<4x239xf32>
    %396 = tpu.concatenate %395, %394 in 1 : vector<4x239xf32>, vector<4x17xf32> -> vector<4x256xf32>
    %cst_212 = arith.constant 0.000000e+00 : f32
    %397 = vector.shape_cast %38 : vector<1x256xi1> to vector<1x256xi1>
    %398 = vector.broadcast %397 : vector<1x256xi1> to vector<4x256xi1>
    %399 = vector.broadcast %cst_212 : f32 to vector<4x256xf32>
    %400 = arith.select %398, %396, %399 : vector<4x256xi1>, vector<4x256xf32>
    %c104_213 = arith.constant 104 : index
    %c0_214 = arith.constant 0 : index
    %401 = vector.load %arg8[%c104_213, %c0_214] : memref<108x256xf32, #tpu.memory_space<vmem>>, vector<4x256xf32>
    tpu.vector_store %arg8[%c104_213, %c0_214], %400 {strides = array<i32>} : memref<108x256xf32, #tpu.memory_space<vmem>>, vector<4x256xf32>,
    %c0_215 = arith.constant 0 : index
    %c0_216 = arith.constant 0 : index
    %402 = vector.load %arg8[%c0_215, %c0_216] : memref<108x256xf32, #tpu.memory_space<vmem>>, vector<108x256xf32>
    %cst_217 = arith.constant dense<0.000000e+00> : vector<4x256xf32>
    %403 = tpu.matmul %39, %402, %cst_217 {dimension_numbers = #tpu.dot_dimension_numbers<[1], [0], [0], [1], [0, 0, 1, 1], [], []>} : vector<4x108xf32>, vector<108x256xf32>, vector<4x256xf32> -> vector<4x256xf32>
    %c0_218 = arith.constant 0 : index
    %c1_219 = arith.constant 1 : index
    %c0_220 = arith.constant 0 : index
    %c0_221 = arith.constant 0 : index
    %404 = vector.load %arg6[%c0_218, %c1_219, %c0_220, %c0_221] : memref<1x4x4x256xf32, #tpu.memory_space<vmem>>, vector<1x1x4x256xf32>
    %405 = vector.shape_cast %404 : vector<1x1x4x256xf32> to vector<4x256xf32>
    %406 = vector.shape_cast %403 : vector<4x256xf32> to vector<1x1x4x256xf32>
    tpu.vector_store %arg6[%c0_218, %c1_219, %c0_220, %c0_221], %406 {strides = array<i32>} : memref<1x4x4x256xf32, #tpu.memory_space<vmem>>, vector<1x1x4x256xf32>,
    %cst_222 = arith.constant dense<0.000000e+00> : vector<4xf32>
    %407 = vector.multi_reduction <add>, %403, %cst_222 [1] : vector<4x256xf32> to vector<4xf32>
    %408 = vector.shape_cast %407 : vector<4xf32> to vector<4x1xf32>
    %cst_223 = arith.constant 3.906250e-03 : f32
    %409 = vector.broadcast %cst_223 : f32 to vector<4x1xf32>
    %410 = arith.mulf %408, %409 : vector<4x1xf32>
    %411 = vector.broadcast %410 : vector<4x1xf32> to vector<4x256xf32>
    %412 = arith.subf %403, %411 : vector<4x256xf32>
    %413 = arith.mulf %412, %412 : vector<4x256xf32>
    %cst_224 = arith.constant dense<0.000000e+00> : vector<4xf32>
    %414 = vector.multi_reduction <add>, %413, %cst_224 [1] : vector<4x256xf32> to vector<4xf32>
    %415 = vector.shape_cast %414 : vector<4xf32> to vector<4x1xf32>
    %c0_225 = arith.constant 0 : index
    %c0_226 = arith.constant 0 : index
    %c1_227 = arith.constant 1 : index
    %c0_228 = arith.constant 0 : index
    %c0_229 = arith.constant 0 : index
    %416 = vector.load %arg7[%c0_225, %c0_226, %c1_227, %c0_228, %c0_229] : memref<1x1x4x4x2xf32, #tpu.memory_space<vmem>>, vector<1x1x1x4x1xf32>
    %417 = vector.shape_cast %416 : vector<1x1x1x4x1xf32> to vector<4x1xf32>
    %418 = vector.shape_cast %408 : vector<4x1xf32> to vector<1x1x1x4x1xf32>
    tpu.vector_store %arg7[%c0_225, %c0_226, %c1_227, %c0_228, %c0_229], %418 {strides = array<i32>} : memref<1x1x4x4x2xf32, #tpu.memory_space<vmem>>, vector<1x1x1x4x1xf32>,
    %c0_230 = arith.constant 0 : index
    %c0_231 = arith.constant 0 : index
    %c1_232 = arith.constant 1 : index
    %c0_233 = arith.constant 0 : index
    %c1_234 = arith.constant 1 : index
    %419 = vector.load %arg7[%c0_230, %c0_231, %c1_232, %c0_233, %c1_234] : memref<1x1x4x4x2xf32, #tpu.memory_space<vmem>>, vector<1x1x1x4x1xf32>
    %420 = vector.shape_cast %419 : vector<1x1x1x4x1xf32> to vector<4x1xf32>
    %421 = vector.shape_cast %415 : vector<4x1xf32> to vector<1x1x1x4x1xf32>
    tpu.vector_store %arg7[%c0_230, %c0_231, %c1_232, %c0_233, %c1_234], %421 {strides = array<i32>} : memref<1x1x4x4x2xf32, #tpu.memory_space<vmem>>, vector<1x1x1x4x1xf32>,
    %cst_235 = arith.constant 0.000000e+00 : f32
    %422 = vector.broadcast %cst_235 : f32 to vector<4x17xf32>
    %423 = vector.extract_strided_slice %9 {offsets = [0, 0], sizes = [4, 239], strides = [1, 1]} : vector<4x256xf32> to vector<4x239xf32>
    %424 = tpu.concatenate %422, %423 in 1 : vector<4x17xf32>, vector<4x239xf32> -> vector<4x256xf32>
    %cst_236 = arith.constant 0.000000e+00 : f32
    %425 = vector.shape_cast %36 : vector<1x256xi1> to vector<1x256xi1>
    %426 = vector.broadcast %425 : vector<1x256xi1> to vector<4x256xi1>
    %427 = vector.broadcast %cst_236 : f32 to vector<4x256xf32>
    %428 = arith.select %426, %424, %427 : vector<4x256xi1>, vector<4x256xf32>
    %c0_237 = arith.constant 0 : index
    %c0_238 = arith.constant 0 : index
    %429 = vector.load %arg8[%c0_237, %c0_238] : memref<108x256xf32, #tpu.memory_space<vmem>>, vector<4x256xf32>
    tpu.vector_store %arg8[%c0_237, %c0_238], %428 {strides = array<i32>} : memref<108x256xf32, #tpu.memory_space<vmem>>, vector<4x256xf32>,
    %cst_239 = arith.constant 0.000000e+00 : f32
    %430 = vector.broadcast %cst_239 : f32 to vector<4x16xf32>
    %431 = vector.extract_strided_slice %9 {offsets = [0, 0], sizes = [4, 240], strides = [1, 1]} : vector<4x256xf32> to vector<4x240xf32>
    %432 = tpu.concatenate %430, %431 in 1 : vector<4x16xf32>, vector<4x240xf32> -> vector<4x256xf32>
    %c4_240 = arith.constant 4 : index
    %c0_241 = arith.constant 0 : index
    %433 = vector.load %arg8[%c4_240, %c0_241] : memref<108x256xf32, #tpu.memory_space<vmem>>, vector<4x256xf32>
    tpu.vector_store %arg8[%c4_240, %c0_241], %432 {strides = array<i32>} : memref<108x256xf32, #tpu.memory_space<vmem>>, vector<4x256xf32>,
    %cst_242 = arith.constant 0.000000e+00 : f32
    %434 = vector.broadcast %cst_242 : f32 to vector<4x15xf32>
    %435 = vector.extract_strided_slice %9 {offsets = [0, 0], sizes = [4, 241], strides = [1, 1]} : vector<4x256xf32> to vector<4x241xf32>
    %436 = tpu.concatenate %434, %435 in 1 : vector<4x15xf32>, vector<4x241xf32> -> vector<4x256xf32>
    %cst_243 = arith.constant 0.000000e+00 : f32
    %437 = vector.shape_cast %38 : vector<1x256xi1> to vector<1x256xi1>
    %438 = vector.broadcast %437 : vector<1x256xi1> to vector<4x256xi1>
    %439 = vector.broadcast %cst_243 : f32 to vector<4x256xf32>
    %440 = arith.select %438, %436, %439 : vector<4x256xi1>, vector<4x256xf32>
    %c8_244 = arith.constant 8 : index
    %c0_245 = arith.constant 0 : index
    %441 = vector.load %arg8[%c8_244, %c0_245] : memref<108x256xf32, #tpu.memory_space<vmem>>, vector<4x256xf32>
    tpu.vector_store %arg8[%c8_244, %c0_245], %440 {strides = array<i32>} : memref<108x256xf32, #tpu.memory_space<vmem>>, vector<4x256xf32>,
    %cst_246 = arith.constant 0.000000e+00 : f32
    %442 = vector.broadcast %cst_246 : f32 to vector<4x1xf32>
    %443 = vector.extract_strided_slice %9 {offsets = [0, 0], sizes = [4, 255], strides = [1, 1]} : vector<4x256xf32> to vector<4x255xf32>
    %444 = tpu.concatenate %442, %443 in 1 : vector<4x1xf32>, vector<4x255xf32> -> vector<4x256xf32>
    %cst_247 = arith.constant 0.000000e+00 : f32
    %445 = vector.shape_cast %36 : vector<1x256xi1> to vector<1x256xi1>
    %446 = vector.broadcast %445 : vector<1x256xi1> to vector<4x256xi1>
    %447 = vector.broadcast %cst_247 : f32 to vector<4x256xf32>
    %448 = arith.select %446, %444, %447 : vector<4x256xi1>, vector<4x256xf32>
    %c12_248 = arith.constant 12 : index
    %c0_249 = arith.constant 0 : index
    %449 = vector.load %arg8[%c12_248, %c0_249] : memref<108x256xf32, #tpu.memory_space<vmem>>, vector<4x256xf32>
    tpu.vector_store %arg8[%c12_248, %c0_249], %448 {strides = array<i32>} : memref<108x256xf32, #tpu.memory_space<vmem>>, vector<4x256xf32>,
    %c16_250 = arith.constant 16 : index
    %c0_251 = arith.constant 0 : index
    %450 = vector.load %arg8[%c16_250, %c0_251] : memref<108x256xf32, #tpu.memory_space<vmem>>, vector<4x256xf32>
    tpu.vector_store %arg8[%c16_250, %c0_251], %9 {strides = array<i32>} : memref<108x256xf32, #tpu.memory_space<vmem>>, vector<4x256xf32>,
    %cst_252 = arith.constant 0.000000e+00 : f32
    %451 = vector.broadcast %cst_252 : f32 to vector<4x1xf32>
    %452 = vector.extract_strided_slice %9 {offsets = [0, 1], sizes = [4, 255], strides = [1, 1]} : vector<4x256xf32> to vector<4x255xf32>
    %453 = tpu.concatenate %452, %451 in 1 : vector<4x255xf32>, vector<4x1xf32> -> vector<4x256xf32>
    %cst_253 = arith.constant 0.000000e+00 : f32
    %454 = vector.shape_cast %38 : vector<1x256xi1> to vector<1x256xi1>
    %455 = vector.broadcast %454 : vector<1x256xi1> to vector<4x256xi1>
    %456 = vector.broadcast %cst_253 : f32 to vector<4x256xf32>
    %457 = arith.select %455, %453, %456 : vector<4x256xi1>, vector<4x256xf32>
    %c20_254 = arith.constant 20 : index
    %c0_255 = arith.constant 0 : index
    %458 = vector.load %arg8[%c20_254, %c0_255] : memref<108x256xf32, #tpu.memory_space<vmem>>, vector<4x256xf32>
    tpu.vector_store %arg8[%c20_254, %c0_255], %457 {strides = array<i32>} : memref<108x256xf32, #tpu.memory_space<vmem>>, vector<4x256xf32>,
    %cst_256 = arith.constant 0.000000e+00 : f32
    %459 = vector.broadcast %cst_256 : f32 to vector<4x15xf32>
    %460 = vector.extract_strided_slice %9 {offsets = [0, 15], sizes = [4, 241], strides = [1, 1]} : vector<4x256xf32> to vector<4x241xf32>
    %461 = tpu.concatenate %460, %459 in 1 : vector<4x241xf32>, vector<4x15xf32> -> vector<4x256xf32>
    %cst_257 = arith.constant 0.000000e+00 : f32
    %462 = vector.shape_cast %36 : vector<1x256xi1> to vector<1x256xi1>
    %463 = vector.broadcast %462 : vector<1x256xi1> to vector<4x256xi1>
    %464 = vector.broadcast %cst_257 : f32 to vector<4x256xf32>
    %465 = arith.select %463, %461, %464 : vector<4x256xi1>, vector<4x256xf32>
    %c24_258 = arith.constant 24 : index
    %c0_259 = arith.constant 0 : index
    %466 = vector.load %arg8[%c24_258, %c0_259] : memref<108x256xf32, #tpu.memory_space<vmem>>, vector<4x256xf32>
    tpu.vector_store %arg8[%c24_258, %c0_259], %465 {strides = array<i32>} : memref<108x256xf32, #tpu.memory_space<vmem>>, vector<4x256xf32>,
    %cst_260 = arith.constant 0.000000e+00 : f32
    %467 = vector.broadcast %cst_260 : f32 to vector<4x16xf32>
    %468 = vector.extract_strided_slice %9 {offsets = [0, 16], sizes = [4, 240], strides = [1, 1]} : vector<4x256xf32> to vector<4x240xf32>
    %469 = tpu.concatenate %468, %467 in 1 : vector<4x240xf32>, vector<4x16xf32> -> vector<4x256xf32>
    %c28_261 = arith.constant 28 : index
    %c0_262 = arith.constant 0 : index
    %470 = vector.load %arg8[%c28_261, %c0_262] : memref<108x256xf32, #tpu.memory_space<vmem>>, vector<4x256xf32>
    tpu.vector_store %arg8[%c28_261, %c0_262], %469 {strides = array<i32>} : memref<108x256xf32, #tpu.memory_space<vmem>>, vector<4x256xf32>,
    %cst_263 = arith.constant 0.000000e+00 : f32
    %471 = vector.broadcast %cst_263 : f32 to vector<4x17xf32>
    %472 = vector.extract_strided_slice %9 {offsets = [0, 17], sizes = [4, 239], strides = [1, 1]} : vector<4x256xf32> to vector<4x239xf32>
    %473 = tpu.concatenate %472, %471 in 1 : vector<4x239xf32>, vector<4x17xf32> -> vector<4x256xf32>
    %cst_264 = arith.constant 0.000000e+00 : f32
    %474 = vector.shape_cast %38 : vector<1x256xi1> to vector<1x256xi1>
    %475 = vector.broadcast %474 : vector<1x256xi1> to vector<4x256xi1>
    %476 = vector.broadcast %cst_264 : f32 to vector<4x256xf32>
    %477 = arith.select %475, %473, %476 : vector<4x256xi1>, vector<4x256xf32>
    %c32_265 = arith.constant 32 : index
    %c0_266 = arith.constant 0 : index
    %478 = vector.load %arg8[%c32_265, %c0_266] : memref<108x256xf32, #tpu.memory_space<vmem>>, vector<4x256xf32>
    tpu.vector_store %arg8[%c32_265, %c0_266], %477 {strides = array<i32>} : memref<108x256xf32, #tpu.memory_space<vmem>>, vector<4x256xf32>,
    %cst_267 = arith.constant 0.000000e+00 : f32
    %479 = vector.broadcast %cst_267 : f32 to vector<4x17xf32>
    %480 = vector.extract_strided_slice %11 {offsets = [0, 0], sizes = [4, 239], strides = [1, 1]} : vector<4x256xf32> to vector<4x239xf32>
    %481 = tpu.concatenate %479, %480 in 1 : vector<4x17xf32>, vector<4x239xf32> -> vector<4x256xf32>
    %cst_268 = arith.constant 0.000000e+00 : f32
    %482 = vector.shape_cast %36 : vector<1x256xi1> to vector<1x256xi1>
    %483 = vector.broadcast %482 : vector<1x256xi1> to vector<4x256xi1>
    %484 = vector.broadcast %cst_268 : f32 to vector<4x256xf32>
    %485 = arith.select %483, %481, %484 : vector<4x256xi1>, vector<4x256xf32>
    %c36_269 = arith.constant 36 : index
    %c0_270 = arith.constant 0 : index
    %486 = vector.load %arg8[%c36_269, %c0_270] : memref<108x256xf32, #tpu.memory_space<vmem>>, vector<4x256xf32>
    tpu.vector_store %arg8[%c36_269, %c0_270], %485 {strides = array<i32>} : memref<108x256xf32, #tpu.memory_space<vmem>>, vector<4x256xf32>,
    %cst_271 = arith.constant 0.000000e+00 : f32
    %487 = vector.broadcast %cst_271 : f32 to vector<4x16xf32>
    %488 = vector.extract_strided_slice %11 {offsets = [0, 0], sizes = [4, 240], strides = [1, 1]} : vector<4x256xf32> to vector<4x240xf32>
    %489 = tpu.concatenate %487, %488 in 1 : vector<4x16xf32>, vector<4x240xf32> -> vector<4x256xf32>
    %c40_272 = arith.constant 40 : index
    %c0_273 = arith.constant 0 : index
    %490 = vector.load %arg8[%c40_272, %c0_273] : memref<108x256xf32, #tpu.memory_space<vmem>>, vector<4x256xf32>
    tpu.vector_store %arg8[%c40_272, %c0_273], %489 {strides = array<i32>} : memref<108x256xf32, #tpu.memory_space<vmem>>, vector<4x256xf32>,
    %cst_274 = arith.constant 0.000000e+00 : f32
    %491 = vector.broadcast %cst_274 : f32 to vector<4x15xf32>
    %492 = vector.extract_strided_slice %11 {offsets = [0, 0], sizes = [4, 241], strides = [1, 1]} : vector<4x256xf32> to vector<4x241xf32>
    %493 = tpu.concatenate %491, %492 in 1 : vector<4x15xf32>, vector<4x241xf32> -> vector<4x256xf32>
    %cst_275 = arith.constant 0.000000e+00 : f32
    %494 = vector.shape_cast %38 : vector<1x256xi1> to vector<1x256xi1>
    %495 = vector.broadcast %494 : vector<1x256xi1> to vector<4x256xi1>
    %496 = vector.broadcast %cst_275 : f32 to vector<4x256xf32>
    %497 = arith.select %495, %493, %496 : vector<4x256xi1>, vector<4x256xf32>
    %c44_276 = arith.constant 44 : index
    %c0_277 = arith.constant 0 : index
    %498 = vector.load %arg8[%c44_276, %c0_277] : memref<108x256xf32, #tpu.memory_space<vmem>>, vector<4x256xf32>
    tpu.vector_store %arg8[%c44_276, %c0_277], %497 {strides = array<i32>} : memref<108x256xf32, #tpu.memory_space<vmem>>, vector<4x256xf32>,
    %cst_278 = arith.constant 0.000000e+00 : f32
    %499 = vector.broadcast %cst_278 : f32 to vector<4x1xf32>
    %500 = vector.extract_strided_slice %11 {offsets = [0, 0], sizes = [4, 255], strides = [1, 1]} : vector<4x256xf32> to vector<4x255xf32>
    %501 = tpu.concatenate %499, %500 in 1 : vector<4x1xf32>, vector<4x255xf32> -> vector<4x256xf32>
    %cst_279 = arith.constant 0.000000e+00 : f32
    %502 = vector.shape_cast %36 : vector<1x256xi1> to vector<1x256xi1>
    %503 = vector.broadcast %502 : vector<1x256xi1> to vector<4x256xi1>
    %504 = vector.broadcast %cst_279 : f32 to vector<4x256xf32>
    %505 = arith.select %503, %501, %504 : vector<4x256xi1>, vector<4x256xf32>
    %c48_280 = arith.constant 48 : index
    %c0_281 = arith.constant 0 : index
    %506 = vector.load %arg8[%c48_280, %c0_281] : memref<108x256xf32, #tpu.memory_space<vmem>>, vector<4x256xf32>
    tpu.vector_store %arg8[%c48_280, %c0_281], %505 {strides = array<i32>} : memref<108x256xf32, #tpu.memory_space<vmem>>, vector<4x256xf32>,
    %c52_282 = arith.constant 52 : index
    %c0_283 = arith.constant 0 : index
    %507 = vector.load %arg8[%c52_282, %c0_283] : memref<108x256xf32, #tpu.memory_space<vmem>>, vector<4x256xf32>
    tpu.vector_store %arg8[%c52_282, %c0_283], %11 {strides = array<i32>} : memref<108x256xf32, #tpu.memory_space<vmem>>, vector<4x256xf32>,
    %cst_284 = arith.constant 0.000000e+00 : f32
    %508 = vector.broadcast %cst_284 : f32 to vector<4x1xf32>
    %509 = vector.extract_strided_slice %11 {offsets = [0, 1], sizes = [4, 255], strides = [1, 1]} : vector<4x256xf32> to vector<4x255xf32>
    %510 = tpu.concatenate %509, %508 in 1 : vector<4x255xf32>, vector<4x1xf32> -> vector<4x256xf32>
    %cst_285 = arith.constant 0.000000e+00 : f32
    %511 = vector.shape_cast %38 : vector<1x256xi1> to vector<1x256xi1>
    %512 = vector.broadcast %511 : vector<1x256xi1> to vector<4x256xi1>
    %513 = vector.broadcast %cst_285 : f32 to vector<4x256xf32>
    %514 = arith.select %512, %510, %513 : vector<4x256xi1>, vector<4x256xf32>
    %c56_286 = arith.constant 56 : index
    %c0_287 = arith.constant 0 : index
    %515 = vector.load %arg8[%c56_286, %c0_287] : memref<108x256xf32, #tpu.memory_space<vmem>>, vector<4x256xf32>
    tpu.vector_store %arg8[%c56_286, %c0_287], %514 {strides = array<i32>} : memref<108x256xf32, #tpu.memory_space<vmem>>, vector<4x256xf32>,
    %cst_288 = arith.constant 0.000000e+00 : f32
    %516 = vector.broadcast %cst_288 : f32 to vector<4x15xf32>
    %517 = vector.extract_strided_slice %11 {offsets = [0, 15], sizes = [4, 241], strides = [1, 1]} : vector<4x256xf32> to vector<4x241xf32>
    %518 = tpu.concatenate %517, %516 in 1 : vector<4x241xf32>, vector<4x15xf32> -> vector<4x256xf32>
    %cst_289 = arith.constant 0.000000e+00 : f32
    %519 = vector.shape_cast %36 : vector<1x256xi1> to vector<1x256xi1>
    %520 = vector.broadcast %519 : vector<1x256xi1> to vector<4x256xi1>
    %521 = vector.broadcast %cst_289 : f32 to vector<4x256xf32>
    %522 = arith.select %520, %518, %521 : vector<4x256xi1>, vector<4x256xf32>
    %c60_290 = arith.constant 60 : index
    %c0_291 = arith.constant 0 : index
    %523 = vector.load %arg8[%c60_290, %c0_291] : memref<108x256xf32, #tpu.memory_space<vmem>>, vector<4x256xf32>
    tpu.vector_store %arg8[%c60_290, %c0_291], %522 {strides = array<i32>} : memref<108x256xf32, #tpu.memory_space<vmem>>, vector<4x256xf32>,
    %cst_292 = arith.constant 0.000000e+00 : f32
    %524 = vector.broadcast %cst_292 : f32 to vector<4x16xf32>
    %525 = vector.extract_strided_slice %11 {offsets = [0, 16], sizes = [4, 240], strides = [1, 1]} : vector<4x256xf32> to vector<4x240xf32>
    %526 = tpu.concatenate %525, %524 in 1 : vector<4x240xf32>, vector<4x16xf32> -> vector<4x256xf32>
    %c64_293 = arith.constant 64 : index
    %c0_294 = arith.constant 0 : index
    %527 = vector.load %arg8[%c64_293, %c0_294] : memref<108x256xf32, #tpu.memory_space<vmem>>, vector<4x256xf32>
    tpu.vector_store %arg8[%c64_293, %c0_294], %526 {strides = array<i32>} : memref<108x256xf32, #tpu.memory_space<vmem>>, vector<4x256xf32>,
    %cst_295 = arith.constant 0.000000e+00 : f32
    %528 = vector.broadcast %cst_295 : f32 to vector<4x17xf32>
    %529 = vector.extract_strided_slice %11 {offsets = [0, 17], sizes = [4, 239], strides = [1, 1]} : vector<4x256xf32> to vector<4x239xf32>
    %530 = tpu.concatenate %529, %528 in 1 : vector<4x239xf32>, vector<4x17xf32> -> vector<4x256xf32>
    %cst_296 = arith.constant 0.000000e+00 : f32
    %531 = vector.shape_cast %38 : vector<1x256xi1> to vector<1x256xi1>
    %532 = vector.broadcast %531 : vector<1x256xi1> to vector<4x256xi1>
    %533 = vector.broadcast %cst_296 : f32 to vector<4x256xf32>
    %534 = arith.select %532, %530, %533 : vector<4x256xi1>, vector<4x256xf32>
    %c68_297 = arith.constant 68 : index
    %c0_298 = arith.constant 0 : index
    %535 = vector.load %arg8[%c68_297, %c0_298] : memref<108x256xf32, #tpu.memory_space<vmem>>, vector<4x256xf32>
    tpu.vector_store %arg8[%c68_297, %c0_298], %534 {strides = array<i32>} : memref<108x256xf32, #tpu.memory_space<vmem>>, vector<4x256xf32>,
    %cst_299 = arith.constant 0.000000e+00 : f32
    %536 = vector.broadcast %cst_299 : f32 to vector<4x17xf32>
    %537 = vector.extract_strided_slice %13 {offsets = [0, 0], sizes = [4, 239], strides = [1, 1]} : vector<4x256xf32> to vector<4x239xf32>
    %538 = tpu.concatenate %536, %537 in 1 : vector<4x17xf32>, vector<4x239xf32> -> vector<4x256xf32>
    %cst_300 = arith.constant 0.000000e+00 : f32
    %539 = vector.shape_cast %36 : vector<1x256xi1> to vector<1x256xi1>
    %540 = vector.broadcast %539 : vector<1x256xi1> to vector<4x256xi1>
    %541 = vector.broadcast %cst_300 : f32 to vector<4x256xf32>
    %542 = arith.select %540, %538, %541 : vector<4x256xi1>, vector<4x256xf32>
    %c72_301 = arith.constant 72 : index
    %c0_302 = arith.constant 0 : index
    %543 = vector.load %arg8[%c72_301, %c0_302] : memref<108x256xf32, #tpu.memory_space<vmem>>, vector<4x256xf32>
    tpu.vector_store %arg8[%c72_301, %c0_302], %542 {strides = array<i32>} : memref<108x256xf32, #tpu.memory_space<vmem>>, vector<4x256xf32>,
    %cst_303 = arith.constant 0.000000e+00 : f32
    %544 = vector.broadcast %cst_303 : f32 to vector<4x16xf32>
    %545 = vector.extract_strided_slice %13 {offsets = [0, 0], sizes = [4, 240], strides = [1, 1]} : vector<4x256xf32> to vector<4x240xf32>
    %546 = tpu.concatenate %544, %545 in 1 : vector<4x16xf32>, vector<4x240xf32> -> vector<4x256xf32>
    %c76_304 = arith.constant 76 : index
    %c0_305 = arith.constant 0 : index
    %547 = vector.load %arg8[%c76_304, %c0_305] : memref<108x256xf32, #tpu.memory_space<vmem>>, vector<4x256xf32>
    tpu.vector_store %arg8[%c76_304, %c0_305], %546 {strides = array<i32>} : memref<108x256xf32, #tpu.memory_space<vmem>>, vector<4x256xf32>,
    %cst_306 = arith.constant 0.000000e+00 : f32
    %548 = vector.broadcast %cst_306 : f32 to vector<4x15xf32>
    %549 = vector.extract_strided_slice %13 {offsets = [0, 0], sizes = [4, 241], strides = [1, 1]} : vector<4x256xf32> to vector<4x241xf32>
    %550 = tpu.concatenate %548, %549 in 1 : vector<4x15xf32>, vector<4x241xf32> -> vector<4x256xf32>
    %cst_307 = arith.constant 0.000000e+00 : f32
    %551 = vector.shape_cast %38 : vector<1x256xi1> to vector<1x256xi1>
    %552 = vector.broadcast %551 : vector<1x256xi1> to vector<4x256xi1>
    %553 = vector.broadcast %cst_307 : f32 to vector<4x256xf32>
    %554 = arith.select %552, %550, %553 : vector<4x256xi1>, vector<4x256xf32>
    %c80_308 = arith.constant 80 : index
    %c0_309 = arith.constant 0 : index
    %555 = vector.load %arg8[%c80_308, %c0_309] : memref<108x256xf32, #tpu.memory_space<vmem>>, vector<4x256xf32>
    tpu.vector_store %arg8[%c80_308, %c0_309], %554 {strides = array<i32>} : memref<108x256xf32, #tpu.memory_space<vmem>>, vector<4x256xf32>,
    %cst_310 = arith.constant 0.000000e+00 : f32
    %556 = vector.broadcast %cst_310 : f32 to vector<4x1xf32>
    %557 = vector.extract_strided_slice %13 {offsets = [0, 0], sizes = [4, 255], strides = [1, 1]} : vector<4x256xf32> to vector<4x255xf32>
    %558 = tpu.concatenate %556, %557 in 1 : vector<4x1xf32>, vector<4x255xf32> -> vector<4x256xf32>
    %cst_311 = arith.constant 0.000000e+00 : f32
    %559 = vector.shape_cast %36 : vector<1x256xi1> to vector<1x256xi1>
    %560 = vector.broadcast %559 : vector<1x256xi1> to vector<4x256xi1>
    %561 = vector.broadcast %cst_311 : f32 to vector<4x256xf32>
    %562 = arith.select %560, %558, %561 : vector<4x256xi1>, vector<4x256xf32>
    %c84_312 = arith.constant 84 : index
    %c0_313 = arith.constant 0 : index
    %563 = vector.load %arg8[%c84_312, %c0_313] : memref<108x256xf32, #tpu.memory_space<vmem>>, vector<4x256xf32>
    tpu.vector_store %arg8[%c84_312, %c0_313], %562 {strides = array<i32>} : memref<108x256xf32, #tpu.memory_space<vmem>>, vector<4x256xf32>,
    %c88_314 = arith.constant 88 : index
    %c0_315 = arith.constant 0 : index
    %564 = vector.load %arg8[%c88_314, %c0_315] : memref<108x256xf32, #tpu.memory_space<vmem>>, vector<4x256xf32>
    tpu.vector_store %arg8[%c88_314, %c0_315], %13 {strides = array<i32>} : memref<108x256xf32, #tpu.memory_space<vmem>>, vector<4x256xf32>,
    %cst_316 = arith.constant 0.000000e+00 : f32
    %565 = vector.broadcast %cst_316 : f32 to vector<4x1xf32>
    %566 = vector.extract_strided_slice %13 {offsets = [0, 1], sizes = [4, 255], strides = [1, 1]} : vector<4x256xf32> to vector<4x255xf32>
    %567 = tpu.concatenate %566, %565 in 1 : vector<4x255xf32>, vector<4x1xf32> -> vector<4x256xf32>
    %cst_317 = arith.constant 0.000000e+00 : f32
    %568 = vector.shape_cast %38 : vector<1x256xi1> to vector<1x256xi1>
    %569 = vector.broadcast %568 : vector<1x256xi1> to vector<4x256xi1>
    %570 = vector.broadcast %cst_317 : f32 to vector<4x256xf32>
    %571 = arith.select %569, %567, %570 : vector<4x256xi1>, vector<4x256xf32>
    %c92_318 = arith.constant 92 : index
    %c0_319 = arith.constant 0 : index
    %572 = vector.load %arg8[%c92_318, %c0_319] : memref<108x256xf32, #tpu.memory_space<vmem>>, vector<4x256xf32>
    tpu.vector_store %arg8[%c92_318, %c0_319], %571 {strides = array<i32>} : memref<108x256xf32, #tpu.memory_space<vmem>>, vector<4x256xf32>,
    %cst_320 = arith.constant 0.000000e+00 : f32
    %573 = vector.broadcast %cst_320 : f32 to vector<4x15xf32>
    %574 = vector.extract_strided_slice %13 {offsets = [0, 15], sizes = [4, 241], strides = [1, 1]} : vector<4x256xf32> to vector<4x241xf32>
    %575 = tpu.concatenate %574, %573 in 1 : vector<4x241xf32>, vector<4x15xf32> -> vector<4x256xf32>
    %cst_321 = arith.constant 0.000000e+00 : f32
    %576 = vector.shape_cast %36 : vector<1x256xi1> to vector<1x256xi1>
    %577 = vector.broadcast %576 : vector<1x256xi1> to vector<4x256xi1>
    %578 = vector.broadcast %cst_321 : f32 to vector<4x256xf32>
    %579 = arith.select %577, %575, %578 : vector<4x256xi1>, vector<4x256xf32>
    %c96_322 = arith.constant 96 : index
    %c0_323 = arith.constant 0 : index
    %580 = vector.load %arg8[%c96_322, %c0_323] : memref<108x256xf32, #tpu.memory_space<vmem>>, vector<4x256xf32>
    tpu.vector_store %arg8[%c96_322, %c0_323], %579 {strides = array<i32>} : memref<108x256xf32, #tpu.memory_space<vmem>>, vector<4x256xf32>,
    %cst_324 = arith.constant 0.000000e+00 : f32
    %581 = vector.broadcast %cst_324 : f32 to vector<4x16xf32>
    %582 = vector.extract_strided_slice %13 {offsets = [0, 16], sizes = [4, 240], strides = [1, 1]} : vector<4x256xf32> to vector<4x240xf32>
    %583 = tpu.concatenate %582, %581 in 1 : vector<4x240xf32>, vector<4x16xf32> -> vector<4x256xf32>
    %c100_325 = arith.constant 100 : index
    %c0_326 = arith.constant 0 : index
    %584 = vector.load %arg8[%c100_325, %c0_326] : memref<108x256xf32, #tpu.memory_space<vmem>>, vector<4x256xf32>
    tpu.vector_store %arg8[%c100_325, %c0_326], %583 {strides = array<i32>} : memref<108x256xf32, #tpu.memory_space<vmem>>, vector<4x256xf32>,
    %cst_327 = arith.constant 0.000000e+00 : f32
    %585 = vector.broadcast %cst_327 : f32 to vector<4x17xf32>
    %586 = vector.extract_strided_slice %13 {offsets = [0, 17], sizes = [4, 239], strides = [1, 1]} : vector<4x256xf32> to vector<4x239xf32>
    %587 = tpu.concatenate %586, %585 in 1 : vector<4x239xf32>, vector<4x17xf32> -> vector<4x256xf32>
    %cst_328 = arith.constant 0.000000e+00 : f32
    %588 = vector.shape_cast %38 : vector<1x256xi1> to vector<1x256xi1>
    %589 = vector.broadcast %588 : vector<1x256xi1> to vector<4x256xi1>
    %590 = vector.broadcast %cst_328 : f32 to vector<4x256xf32>
    %591 = arith.select %589, %587, %590 : vector<4x256xi1>, vector<4x256xf32>
    %c104_329 = arith.constant 104 : index
    %c0_330 = arith.constant 0 : index
    %592 = vector.load %arg8[%c104_329, %c0_330] : memref<108x256xf32, #tpu.memory_space<vmem>>, vector<4x256xf32>
    tpu.vector_store %arg8[%c104_329, %c0_330], %591 {strides = array<i32>} : memref<108x256xf32, #tpu.memory_space<vmem>>, vector<4x256xf32>,
    %c0_331 = arith.constant 0 : index
    %c0_332 = arith.constant 0 : index
    %593 = vector.load %arg8[%c0_331, %c0_332] : memref<108x256xf32, #tpu.memory_space<vmem>>, vector<108x256xf32>
    %cst_333 = arith.constant dense<0.000000e+00> : vector<4x256xf32>
    %594 = tpu.matmul %39, %593, %cst_333 {dimension_numbers = #tpu.dot_dimension_numbers<[1], [0], [0], [1], [0, 0, 1, 1], [], []>} : vector<4x108xf32>, vector<108x256xf32>, vector<4x256xf32> -> vector<4x256xf32>
    %c0_334 = arith.constant 0 : index
    %c2_335 = arith.constant 2 : index
    %c0_336 = arith.constant 0 : index
    %c0_337 = arith.constant 0 : index
    %595 = vector.load %arg6[%c0_334, %c2_335, %c0_336, %c0_337] : memref<1x4x4x256xf32, #tpu.memory_space<vmem>>, vector<1x1x4x256xf32>
    %596 = vector.shape_cast %595 : vector<1x1x4x256xf32> to vector<4x256xf32>
    %597 = vector.shape_cast %594 : vector<4x256xf32> to vector<1x1x4x256xf32>
    tpu.vector_store %arg6[%c0_334, %c2_335, %c0_336, %c0_337], %597 {strides = array<i32>} : memref<1x4x4x256xf32, #tpu.memory_space<vmem>>, vector<1x1x4x256xf32>,
    %cst_338 = arith.constant dense<0.000000e+00> : vector<4xf32>
    %598 = vector.multi_reduction <add>, %594, %cst_338 [1] : vector<4x256xf32> to vector<4xf32>
    %599 = vector.shape_cast %598 : vector<4xf32> to vector<4x1xf32>
    %cst_339 = arith.constant 3.906250e-03 : f32
    %600 = vector.broadcast %cst_339 : f32 to vector<4x1xf32>
    %601 = arith.mulf %599, %600 : vector<4x1xf32>
    %602 = vector.broadcast %601 : vector<4x1xf32> to vector<4x256xf32>
    %603 = arith.subf %594, %602 : vector<4x256xf32>
    %604 = arith.mulf %603, %603 : vector<4x256xf32>
    %cst_340 = arith.constant dense<0.000000e+00> : vector<4xf32>
    %605 = vector.multi_reduction <add>, %604, %cst_340 [1] : vector<4x256xf32> to vector<4xf32>
    %606 = vector.shape_cast %605 : vector<4xf32> to vector<4x1xf32>
    %c0_341 = arith.constant 0 : index
    %c0_342 = arith.constant 0 : index
    %c2_343 = arith.constant 2 : index
    %c0_344 = arith.constant 0 : index
    %c0_345 = arith.constant 0 : index
    %607 = vector.load %arg7[%c0_341, %c0_342, %c2_343, %c0_344, %c0_345] : memref<1x1x4x4x2xf32, #tpu.memory_space<vmem>>, vector<1x1x1x4x1xf32>
    %608 = vector.shape_cast %607 : vector<1x1x1x4x1xf32> to vector<4x1xf32>
    %609 = vector.shape_cast %599 : vector<4x1xf32> to vector<1x1x1x4x1xf32>
    tpu.vector_store %arg7[%c0_341, %c0_342, %c2_343, %c0_344, %c0_345], %609 {strides = array<i32>} : memref<1x1x4x4x2xf32, #tpu.memory_space<vmem>>, vector<1x1x1x4x1xf32>,
    %c0_346 = arith.constant 0 : index
    %c0_347 = arith.constant 0 : index
    %c2_348 = arith.constant 2 : index
    %c0_349 = arith.constant 0 : index
    %c1_350 = arith.constant 1 : index
    %610 = vector.load %arg7[%c0_346, %c0_347, %c2_348, %c0_349, %c1_350] : memref<1x1x4x4x2xf32, #tpu.memory_space<vmem>>, vector<1x1x1x4x1xf32>
    %611 = vector.shape_cast %610 : vector<1x1x1x4x1xf32> to vector<4x1xf32>
    %612 = vector.shape_cast %606 : vector<4x1xf32> to vector<1x1x1x4x1xf32>
    tpu.vector_store %arg7[%c0_346, %c0_347, %c2_348, %c0_349, %c1_350], %612 {strides = array<i32>} : memref<1x1x4x4x2xf32, #tpu.memory_space<vmem>>, vector<1x1x1x4x1xf32>,
    %cst_351 = arith.constant 0.000000e+00 : f32
    %613 = vector.broadcast %cst_351 : f32 to vector<4x17xf32>
    %614 = vector.extract_strided_slice %11 {offsets = [0, 0], sizes = [4, 239], strides = [1, 1]} : vector<4x256xf32> to vector<4x239xf32>
    %615 = tpu.concatenate %613, %614 in 1 : vector<4x17xf32>, vector<4x239xf32> -> vector<4x256xf32>
    %cst_352 = arith.constant 0.000000e+00 : f32
    %616 = vector.shape_cast %36 : vector<1x256xi1> to vector<1x256xi1>
    %617 = vector.broadcast %616 : vector<1x256xi1> to vector<4x256xi1>
    %618 = vector.broadcast %cst_352 : f32 to vector<4x256xf32>
    %619 = arith.select %617, %615, %618 : vector<4x256xi1>, vector<4x256xf32>
    %c0_353 = arith.constant 0 : index
    %c0_354 = arith.constant 0 : index
    %620 = vector.load %arg8[%c0_353, %c0_354] : memref<108x256xf32, #tpu.memory_space<vmem>>, vector<4x256xf32>
    tpu.vector_store %arg8[%c0_353, %c0_354], %619 {strides = array<i32>} : memref<108x256xf32, #tpu.memory_space<vmem>>, vector<4x256xf32>,
    %cst_355 = arith.constant 0.000000e+00 : f32
    %621 = vector.broadcast %cst_355 : f32 to vector<4x16xf32>
    %622 = vector.extract_strided_slice %11 {offsets = [0, 0], sizes = [4, 240], strides = [1, 1]} : vector<4x256xf32> to vector<4x240xf32>
    %623 = tpu.concatenate %621, %622 in 1 : vector<4x16xf32>, vector<4x240xf32> -> vector<4x256xf32>
    %c4_356 = arith.constant 4 : index
    %c0_357 = arith.constant 0 : index
    %624 = vector.load %arg8[%c4_356, %c0_357] : memref<108x256xf32, #tpu.memory_space<vmem>>, vector<4x256xf32>
    tpu.vector_store %arg8[%c4_356, %c0_357], %623 {strides = array<i32>} : memref<108x256xf32, #tpu.memory_space<vmem>>, vector<4x256xf32>,
    %cst_358 = arith.constant 0.000000e+00 : f32
    %625 = vector.broadcast %cst_358 : f32 to vector<4x15xf32>
    %626 = vector.extract_strided_slice %11 {offsets = [0, 0], sizes = [4, 241], strides = [1, 1]} : vector<4x256xf32> to vector<4x241xf32>
    %627 = tpu.concatenate %625, %626 in 1 : vector<4x15xf32>, vector<4x241xf32> -> vector<4x256xf32>
    %cst_359 = arith.constant 0.000000e+00 : f32
    %628 = vector.shape_cast %38 : vector<1x256xi1> to vector<1x256xi1>
    %629 = vector.broadcast %628 : vector<1x256xi1> to vector<4x256xi1>
    %630 = vector.broadcast %cst_359 : f32 to vector<4x256xf32>
    %631 = arith.select %629, %627, %630 : vector<4x256xi1>, vector<4x256xf32>
    %c8_360 = arith.constant 8 : index
    %c0_361 = arith.constant 0 : index
    %632 = vector.load %arg8[%c8_360, %c0_361] : memref<108x256xf32, #tpu.memory_space<vmem>>, vector<4x256xf32>
    tpu.vector_store %arg8[%c8_360, %c0_361], %631 {strides = array<i32>} : memref<108x256xf32, #tpu.memory_space<vmem>>, vector<4x256xf32>,
    %cst_362 = arith.constant 0.000000e+00 : f32
    %633 = vector.broadcast %cst_362 : f32 to vector<4x1xf32>
    %634 = vector.extract_strided_slice %11 {offsets = [0, 0], sizes = [4, 255], strides = [1, 1]} : vector<4x256xf32> to vector<4x255xf32>
    %635 = tpu.concatenate %633, %634 in 1 : vector<4x1xf32>, vector<4x255xf32> -> vector<4x256xf32>
    %cst_363 = arith.constant 0.000000e+00 : f32
    %636 = vector.shape_cast %36 : vector<1x256xi1> to vector<1x256xi1>
    %637 = vector.broadcast %636 : vector<1x256xi1> to vector<4x256xi1>
    %638 = vector.broadcast %cst_363 : f32 to vector<4x256xf32>
    %639 = arith.select %637, %635, %638 : vector<4x256xi1>, vector<4x256xf32>
    %c12_364 = arith.constant 12 : index
    %c0_365 = arith.constant 0 : index
    %640 = vector.load %arg8[%c12_364, %c0_365] : memref<108x256xf32, #tpu.memory_space<vmem>>, vector<4x256xf32>
    tpu.vector_store %arg8[%c12_364, %c0_365], %639 {strides = array<i32>} : memref<108x256xf32, #tpu.memory_space<vmem>>, vector<4x256xf32>,
    %c16_366 = arith.constant 16 : index
    %c0_367 = arith.constant 0 : index
    %641 = vector.load %arg8[%c16_366, %c0_367] : memref<108x256xf32, #tpu.memory_space<vmem>>, vector<4x256xf32>
    tpu.vector_store %arg8[%c16_366, %c0_367], %11 {strides = array<i32>} : memref<108x256xf32, #tpu.memory_space<vmem>>, vector<4x256xf32>,
    %cst_368 = arith.constant 0.000000e+00 : f32
    %642 = vector.broadcast %cst_368 : f32 to vector<4x1xf32>
    %643 = vector.extract_strided_slice %11 {offsets = [0, 1], sizes = [4, 255], strides = [1, 1]} : vector<4x256xf32> to vector<4x255xf32>
    %644 = tpu.concatenate %643, %642 in 1 : vector<4x255xf32>, vector<4x1xf32> -> vector<4x256xf32>
    %cst_369 = arith.constant 0.000000e+00 : f32
    %645 = vector.shape_cast %38 : vector<1x256xi1> to vector<1x256xi1>
    %646 = vector.broadcast %645 : vector<1x256xi1> to vector<4x256xi1>
    %647 = vector.broadcast %cst_369 : f32 to vector<4x256xf32>
    %648 = arith.select %646, %644, %647 : vector<4x256xi1>, vector<4x256xf32>
    %c20_370 = arith.constant 20 : index
    %c0_371 = arith.constant 0 : index
    %649 = vector.load %arg8[%c20_370, %c0_371] : memref<108x256xf32, #tpu.memory_space<vmem>>, vector<4x256xf32>
    tpu.vector_store %arg8[%c20_370, %c0_371], %648 {strides = array<i32>} : memref<108x256xf32, #tpu.memory_space<vmem>>, vector<4x256xf32>,
    %cst_372 = arith.constant 0.000000e+00 : f32
    %650 = vector.broadcast %cst_372 : f32 to vector<4x15xf32>
    %651 = vector.extract_strided_slice %11 {offsets = [0, 15], sizes = [4, 241], strides = [1, 1]} : vector<4x256xf32> to vector<4x241xf32>
    %652 = tpu.concatenate %651, %650 in 1 : vector<4x241xf32>, vector<4x15xf32> -> vector<4x256xf32>
    %cst_373 = arith.constant 0.000000e+00 : f32
    %653 = vector.shape_cast %36 : vector<1x256xi1> to vector<1x256xi1>
    %654 = vector.broadcast %653 : vector<1x256xi1> to vector<4x256xi1>
    %655 = vector.broadcast %cst_373 : f32 to vector<4x256xf32>
    %656 = arith.select %654, %652, %655 : vector<4x256xi1>, vector<4x256xf32>
    %c24_374 = arith.constant 24 : index
    %c0_375 = arith.constant 0 : index
    %657 = vector.load %arg8[%c24_374, %c0_375] : memref<108x256xf32, #tpu.memory_space<vmem>>, vector<4x256xf32>
    tpu.vector_store %arg8[%c24_374, %c0_375], %656 {strides = array<i32>} : memref<108x256xf32, #tpu.memory_space<vmem>>, vector<4x256xf32>,
    %cst_376 = arith.constant 0.000000e+00 : f32
    %658 = vector.broadcast %cst_376 : f32 to vector<4x16xf32>
    %659 = vector.extract_strided_slice %11 {offsets = [0, 16], sizes = [4, 240], strides = [1, 1]} : vector<4x256xf32> to vector<4x240xf32>
    %660 = tpu.concatenate %659, %658 in 1 : vector<4x240xf32>, vector<4x16xf32> -> vector<4x256xf32>
    %c28_377 = arith.constant 28 : index
    %c0_378 = arith.constant 0 : index
    %661 = vector.load %arg8[%c28_377, %c0_378] : memref<108x256xf32, #tpu.memory_space<vmem>>, vector<4x256xf32>
    tpu.vector_store %arg8[%c28_377, %c0_378], %660 {strides = array<i32>} : memref<108x256xf32, #tpu.memory_space<vmem>>, vector<4x256xf32>,
    %cst_379 = arith.constant 0.000000e+00 : f32
    %662 = vector.broadcast %cst_379 : f32 to vector<4x17xf32>
    %663 = vector.extract_strided_slice %11 {offsets = [0, 17], sizes = [4, 239], strides = [1, 1]} : vector<4x256xf32> to vector<4x239xf32>
    %664 = tpu.concatenate %663, %662 in 1 : vector<4x239xf32>, vector<4x17xf32> -> vector<4x256xf32>
    %cst_380 = arith.constant 0.000000e+00 : f32
    %665 = vector.shape_cast %38 : vector<1x256xi1> to vector<1x256xi1>
    %666 = vector.broadcast %665 : vector<1x256xi1> to vector<4x256xi1>
    %667 = vector.broadcast %cst_380 : f32 to vector<4x256xf32>
    %668 = arith.select %666, %664, %667 : vector<4x256xi1>, vector<4x256xf32>
    %c32_381 = arith.constant 32 : index
    %c0_382 = arith.constant 0 : index
    %669 = vector.load %arg8[%c32_381, %c0_382] : memref<108x256xf32, #tpu.memory_space<vmem>>, vector<4x256xf32>
    tpu.vector_store %arg8[%c32_381, %c0_382], %668 {strides = array<i32>} : memref<108x256xf32, #tpu.memory_space<vmem>>, vector<4x256xf32>,
    %cst_383 = arith.constant 0.000000e+00 : f32
    %670 = vector.broadcast %cst_383 : f32 to vector<4x17xf32>
    %671 = vector.extract_strided_slice %13 {offsets = [0, 0], sizes = [4, 239], strides = [1, 1]} : vector<4x256xf32> to vector<4x239xf32>
    %672 = tpu.concatenate %670, %671 in 1 : vector<4x17xf32>, vector<4x239xf32> -> vector<4x256xf32>
    %cst_384 = arith.constant 0.000000e+00 : f32
    %673 = vector.shape_cast %36 : vector<1x256xi1> to vector<1x256xi1>
    %674 = vector.broadcast %673 : vector<1x256xi1> to vector<4x256xi1>
    %675 = vector.broadcast %cst_384 : f32 to vector<4x256xf32>
    %676 = arith.select %674, %672, %675 : vector<4x256xi1>, vector<4x256xf32>
    %c36_385 = arith.constant 36 : index
    %c0_386 = arith.constant 0 : index
    %677 = vector.load %arg8[%c36_385, %c0_386] : memref<108x256xf32, #tpu.memory_space<vmem>>, vector<4x256xf32>
    tpu.vector_store %arg8[%c36_385, %c0_386], %676 {strides = array<i32>} : memref<108x256xf32, #tpu.memory_space<vmem>>, vector<4x256xf32>,
    %cst_387 = arith.constant 0.000000e+00 : f32
    %678 = vector.broadcast %cst_387 : f32 to vector<4x16xf32>
    %679 = vector.extract_strided_slice %13 {offsets = [0, 0], sizes = [4, 240], strides = [1, 1]} : vector<4x256xf32> to vector<4x240xf32>
    %680 = tpu.concatenate %678, %679 in 1 : vector<4x16xf32>, vector<4x240xf32> -> vector<4x256xf32>
    %c40_388 = arith.constant 40 : index
    %c0_389 = arith.constant 0 : index
    %681 = vector.load %arg8[%c40_388, %c0_389] : memref<108x256xf32, #tpu.memory_space<vmem>>, vector<4x256xf32>
    tpu.vector_store %arg8[%c40_388, %c0_389], %680 {strides = array<i32>} : memref<108x256xf32, #tpu.memory_space<vmem>>, vector<4x256xf32>,
    %cst_390 = arith.constant 0.000000e+00 : f32
    %682 = vector.broadcast %cst_390 : f32 to vector<4x15xf32>
    %683 = vector.extract_strided_slice %13 {offsets = [0, 0], sizes = [4, 241], strides = [1, 1]} : vector<4x256xf32> to vector<4x241xf32>
    %684 = tpu.concatenate %682, %683 in 1 : vector<4x15xf32>, vector<4x241xf32> -> vector<4x256xf32>
    %cst_391 = arith.constant 0.000000e+00 : f32
    %685 = vector.shape_cast %38 : vector<1x256xi1> to vector<1x256xi1>
    %686 = vector.broadcast %685 : vector<1x256xi1> to vector<4x256xi1>
    %687 = vector.broadcast %cst_391 : f32 to vector<4x256xf32>
    %688 = arith.select %686, %684, %687 : vector<4x256xi1>, vector<4x256xf32>
    %c44_392 = arith.constant 44 : index
    %c0_393 = arith.constant 0 : index
    %689 = vector.load %arg8[%c44_392, %c0_393] : memref<108x256xf32, #tpu.memory_space<vmem>>, vector<4x256xf32>
    tpu.vector_store %arg8[%c44_392, %c0_393], %688 {strides = array<i32>} : memref<108x256xf32, #tpu.memory_space<vmem>>, vector<4x256xf32>,
    %cst_394 = arith.constant 0.000000e+00 : f32
    %690 = vector.broadcast %cst_394 : f32 to vector<4x1xf32>
    %691 = vector.extract_strided_slice %13 {offsets = [0, 0], sizes = [4, 255], strides = [1, 1]} : vector<4x256xf32> to vector<4x255xf32>
    %692 = tpu.concatenate %690, %691 in 1 : vector<4x1xf32>, vector<4x255xf32> -> vector<4x256xf32>
    %cst_395 = arith.constant 0.000000e+00 : f32
    %693 = vector.shape_cast %36 : vector<1x256xi1> to vector<1x256xi1>
    %694 = vector.broadcast %693 : vector<1x256xi1> to vector<4x256xi1>
    %695 = vector.broadcast %cst_395 : f32 to vector<4x256xf32>
    %696 = arith.select %694, %692, %695 : vector<4x256xi1>, vector<4x256xf32>
    %c48_396 = arith.constant 48 : index
    %c0_397 = arith.constant 0 : index
    %697 = vector.load %arg8[%c48_396, %c0_397] : memref<108x256xf32, #tpu.memory_space<vmem>>, vector<4x256xf32>
    tpu.vector_store %arg8[%c48_396, %c0_397], %696 {strides = array<i32>} : memref<108x256xf32, #tpu.memory_space<vmem>>, vector<4x256xf32>,
    %c52_398 = arith.constant 52 : index
    %c0_399 = arith.constant 0 : index
    %698 = vector.load %arg8[%c52_398, %c0_399] : memref<108x256xf32, #tpu.memory_space<vmem>>, vector<4x256xf32>
    tpu.vector_store %arg8[%c52_398, %c0_399], %13 {strides = array<i32>} : memref<108x256xf32, #tpu.memory_space<vmem>>, vector<4x256xf32>,
    %cst_400 = arith.constant 0.000000e+00 : f32
    %699 = vector.broadcast %cst_400 : f32 to vector<4x1xf32>
    %700 = vector.extract_strided_slice %13 {offsets = [0, 1], sizes = [4, 255], strides = [1, 1]} : vector<4x256xf32> to vector<4x255xf32>
    %701 = tpu.concatenate %700, %699 in 1 : vector<4x255xf32>, vector<4x1xf32> -> vector<4x256xf32>
    %cst_401 = arith.constant 0.000000e+00 : f32
    %702 = vector.shape_cast %38 : vector<1x256xi1> to vector<1x256xi1>
    %703 = vector.broadcast %702 : vector<1x256xi1> to vector<4x256xi1>
    %704 = vector.broadcast %cst_401 : f32 to vector<4x256xf32>
    %705 = arith.select %703, %701, %704 : vector<4x256xi1>, vector<4x256xf32>
    %c56_402 = arith.constant 56 : index
    %c0_403 = arith.constant 0 : index
    %706 = vector.load %arg8[%c56_402, %c0_403] : memref<108x256xf32, #tpu.memory_space<vmem>>, vector<4x256xf32>
    tpu.vector_store %arg8[%c56_402, %c0_403], %705 {strides = array<i32>} : memref<108x256xf32, #tpu.memory_space<vmem>>, vector<4x256xf32>,
    %cst_404 = arith.constant 0.000000e+00 : f32
    %707 = vector.broadcast %cst_404 : f32 to vector<4x15xf32>
    %708 = vector.extract_strided_slice %13 {offsets = [0, 15], sizes = [4, 241], strides = [1, 1]} : vector<4x256xf32> to vector<4x241xf32>
    %709 = tpu.concatenate %708, %707 in 1 : vector<4x241xf32>, vector<4x15xf32> -> vector<4x256xf32>
    %cst_405 = arith.constant 0.000000e+00 : f32
    %710 = vector.shape_cast %36 : vector<1x256xi1> to vector<1x256xi1>
    %711 = vector.broadcast %710 : vector<1x256xi1> to vector<4x256xi1>
    %712 = vector.broadcast %cst_405 : f32 to vector<4x256xf32>
    %713 = arith.select %711, %709, %712 : vector<4x256xi1>, vector<4x256xf32>
    %c60_406 = arith.constant 60 : index
    %c0_407 = arith.constant 0 : index
    %714 = vector.load %arg8[%c60_406, %c0_407] : memref<108x256xf32, #tpu.memory_space<vmem>>, vector<4x256xf32>
    tpu.vector_store %arg8[%c60_406, %c0_407], %713 {strides = array<i32>} : memref<108x256xf32, #tpu.memory_space<vmem>>, vector<4x256xf32>,
    %cst_408 = arith.constant 0.000000e+00 : f32
    %715 = vector.broadcast %cst_408 : f32 to vector<4x16xf32>
    %716 = vector.extract_strided_slice %13 {offsets = [0, 16], sizes = [4, 240], strides = [1, 1]} : vector<4x256xf32> to vector<4x240xf32>
    %717 = tpu.concatenate %716, %715 in 1 : vector<4x240xf32>, vector<4x16xf32> -> vector<4x256xf32>
    %c64_409 = arith.constant 64 : index
    %c0_410 = arith.constant 0 : index
    %718 = vector.load %arg8[%c64_409, %c0_410] : memref<108x256xf32, #tpu.memory_space<vmem>>, vector<4x256xf32>
    tpu.vector_store %arg8[%c64_409, %c0_410], %717 {strides = array<i32>} : memref<108x256xf32, #tpu.memory_space<vmem>>, vector<4x256xf32>,
    %cst_411 = arith.constant 0.000000e+00 : f32
    %719 = vector.broadcast %cst_411 : f32 to vector<4x17xf32>
    %720 = vector.extract_strided_slice %13 {offsets = [0, 17], sizes = [4, 239], strides = [1, 1]} : vector<4x256xf32> to vector<4x239xf32>
    %721 = tpu.concatenate %720, %719 in 1 : vector<4x239xf32>, vector<4x17xf32> -> vector<4x256xf32>
    %cst_412 = arith.constant 0.000000e+00 : f32
    %722 = vector.shape_cast %38 : vector<1x256xi1> to vector<1x256xi1>
    %723 = vector.broadcast %722 : vector<1x256xi1> to vector<4x256xi1>
    %724 = vector.broadcast %cst_412 : f32 to vector<4x256xf32>
    %725 = arith.select %723, %721, %724 : vector<4x256xi1>, vector<4x256xf32>
    %c68_413 = arith.constant 68 : index
    %c0_414 = arith.constant 0 : index
    %726 = vector.load %arg8[%c68_413, %c0_414] : memref<108x256xf32, #tpu.memory_space<vmem>>, vector<4x256xf32>
    tpu.vector_store %arg8[%c68_413, %c0_414], %725 {strides = array<i32>} : memref<108x256xf32, #tpu.memory_space<vmem>>, vector<4x256xf32>,
    %cst_415 = arith.constant 0.000000e+00 : f32
    %727 = vector.broadcast %cst_415 : f32 to vector<4x17xf32>
    %728 = vector.extract_strided_slice %17 {offsets = [0, 0], sizes = [4, 239], strides = [1, 1]} : vector<4x256xf32> to vector<4x239xf32>
    %729 = tpu.concatenate %727, %728 in 1 : vector<4x17xf32>, vector<4x239xf32> -> vector<4x256xf32>
    %cst_416 = arith.constant 0.000000e+00 : f32
    %730 = vector.shape_cast %36 : vector<1x256xi1> to vector<1x256xi1>
    %731 = vector.broadcast %730 : vector<1x256xi1> to vector<4x256xi1>
    %732 = vector.broadcast %cst_416 : f32 to vector<4x256xf32>
    %733 = arith.select %731, %729, %732 : vector<4x256xi1>, vector<4x256xf32>
    %c72_417 = arith.constant 72 : index
    %c0_418 = arith.constant 0 : index
    %734 = vector.load %arg8[%c72_417, %c0_418] : memref<108x256xf32, #tpu.memory_space<vmem>>, vector<4x256xf32>
    tpu.vector_store %arg8[%c72_417, %c0_418], %733 {strides = array<i32>} : memref<108x256xf32, #tpu.memory_space<vmem>>, vector<4x256xf32>,
    %cst_419 = arith.constant 0.000000e+00 : f32
    %735 = vector.broadcast %cst_419 : f32 to vector<4x16xf32>
    %736 = vector.extract_strided_slice %17 {offsets = [0, 0], sizes = [4, 240], strides = [1, 1]} : vector<4x256xf32> to vector<4x240xf32>
    %737 = tpu.concatenate %735, %736 in 1 : vector<4x16xf32>, vector<4x240xf32> -> vector<4x256xf32>
    %c76_420 = arith.constant 76 : index
    %c0_421 = arith.constant 0 : index
    %738 = vector.load %arg8[%c76_420, %c0_421] : memref<108x256xf32, #tpu.memory_space<vmem>>, vector<4x256xf32>
    tpu.vector_store %arg8[%c76_420, %c0_421], %737 {strides = array<i32>} : memref<108x256xf32, #tpu.memory_space<vmem>>, vector<4x256xf32>,
    %cst_422 = arith.constant 0.000000e+00 : f32
    %739 = vector.broadcast %cst_422 : f32 to vector<4x15xf32>
    %740 = vector.extract_strided_slice %17 {offsets = [0, 0], sizes = [4, 241], strides = [1, 1]} : vector<4x256xf32> to vector<4x241xf32>
    %741 = tpu.concatenate %739, %740 in 1 : vector<4x15xf32>, vector<4x241xf32> -> vector<4x256xf32>
    %cst_423 = arith.constant 0.000000e+00 : f32
    %742 = vector.shape_cast %38 : vector<1x256xi1> to vector<1x256xi1>
    %743 = vector.broadcast %742 : vector<1x256xi1> to vector<4x256xi1>
    %744 = vector.broadcast %cst_423 : f32 to vector<4x256xf32>
    %745 = arith.select %743, %741, %744 : vector<4x256xi1>, vector<4x256xf32>
    %c80_424 = arith.constant 80 : index
    %c0_425 = arith.constant 0 : index
    %746 = vector.load %arg8[%c80_424, %c0_425] : memref<108x256xf32, #tpu.memory_space<vmem>>, vector<4x256xf32>
    tpu.vector_store %arg8[%c80_424, %c0_425], %745 {strides = array<i32>} : memref<108x256xf32, #tpu.memory_space<vmem>>, vector<4x256xf32>,
    %cst_426 = arith.constant 0.000000e+00 : f32
    %747 = vector.broadcast %cst_426 : f32 to vector<4x1xf32>
    %748 = vector.extract_strided_slice %17 {offsets = [0, 0], sizes = [4, 255], strides = [1, 1]} : vector<4x256xf32> to vector<4x255xf32>
    %749 = tpu.concatenate %747, %748 in 1 : vector<4x1xf32>, vector<4x255xf32> -> vector<4x256xf32>
    %cst_427 = arith.constant 0.000000e+00 : f32
    %750 = vector.shape_cast %36 : vector<1x256xi1> to vector<1x256xi1>
    %751 = vector.broadcast %750 : vector<1x256xi1> to vector<4x256xi1>
    %752 = vector.broadcast %cst_427 : f32 to vector<4x256xf32>
    %753 = arith.select %751, %749, %752 : vector<4x256xi1>, vector<4x256xf32>
    %c84_428 = arith.constant 84 : index
    %c0_429 = arith.constant 0 : index
    %754 = vector.load %arg8[%c84_428, %c0_429] : memref<108x256xf32, #tpu.memory_space<vmem>>, vector<4x256xf32>
    tpu.vector_store %arg8[%c84_428, %c0_429], %753 {strides = array<i32>} : memref<108x256xf32, #tpu.memory_space<vmem>>, vector<4x256xf32>,
    %c88_430 = arith.constant 88 : index
    %c0_431 = arith.constant 0 : index
    %755 = vector.load %arg8[%c88_430, %c0_431] : memref<108x256xf32, #tpu.memory_space<vmem>>, vector<4x256xf32>
    tpu.vector_store %arg8[%c88_430, %c0_431], %17 {strides = array<i32>} : memref<108x256xf32, #tpu.memory_space<vmem>>, vector<4x256xf32>,
    %cst_432 = arith.constant 0.000000e+00 : f32
    %756 = vector.broadcast %cst_432 : f32 to vector<4x1xf32>
    %757 = vector.extract_strided_slice %17 {offsets = [0, 1], sizes = [4, 255], strides = [1, 1]} : vector<4x256xf32> to vector<4x255xf32>
    %758 = tpu.concatenate %757, %756 in 1 : vector<4x255xf32>, vector<4x1xf32> -> vector<4x256xf32>
    %cst_433 = arith.constant 0.000000e+00 : f32
    %759 = vector.shape_cast %38 : vector<1x256xi1> to vector<1x256xi1>
    %760 = vector.broadcast %759 : vector<1x256xi1> to vector<4x256xi1>
    %761 = vector.broadcast %cst_433 : f32 to vector<4x256xf32>
    %762 = arith.select %760, %758, %761 : vector<4x256xi1>, vector<4x256xf32>
    %c92_434 = arith.constant 92 : index
    %c0_435 = arith.constant 0 : index
    %763 = vector.load %arg8[%c92_434, %c0_435] : memref<108x256xf32, #tpu.memory_space<vmem>>, vector<4x256xf32>
    tpu.vector_store %arg8[%c92_434, %c0_435], %762 {strides = array<i32>} : memref<108x256xf32, #tpu.memory_space<vmem>>, vector<4x256xf32>,
    %cst_436 = arith.constant 0.000000e+00 : f32
    %764 = vector.broadcast %cst_436 : f32 to vector<4x15xf32>
    %765 = vector.extract_strided_slice %17 {offsets = [0, 15], sizes = [4, 241], strides = [1, 1]} : vector<4x256xf32> to vector<4x241xf32>
    %766 = tpu.concatenate %765, %764 in 1 : vector<4x241xf32>, vector<4x15xf32> -> vector<4x256xf32>
    %cst_437 = arith.constant 0.000000e+00 : f32
    %767 = vector.shape_cast %36 : vector<1x256xi1> to vector<1x256xi1>
    %768 = vector.broadcast %767 : vector<1x256xi1> to vector<4x256xi1>
    %769 = vector.broadcast %cst_437 : f32 to vector<4x256xf32>
    %770 = arith.select %768, %766, %769 : vector<4x256xi1>, vector<4x256xf32>
    %c96_438 = arith.constant 96 : index
    %c0_439 = arith.constant 0 : index
    %771 = vector.load %arg8[%c96_438, %c0_439] : memref<108x256xf32, #tpu.memory_space<vmem>>, vector<4x256xf32>
    tpu.vector_store %arg8[%c96_438, %c0_439], %770 {strides = array<i32>} : memref<108x256xf32, #tpu.memory_space<vmem>>, vector<4x256xf32>,
    %cst_440 = arith.constant 0.000000e+00 : f32
    %772 = vector.broadcast %cst_440 : f32 to vector<4x16xf32>
    %773 = vector.extract_strided_slice %17 {offsets = [0, 16], sizes = [4, 240], strides = [1, 1]} : vector<4x256xf32> to vector<4x240xf32>
    %774 = tpu.concatenate %773, %772 in 1 : vector<4x240xf32>, vector<4x16xf32> -> vector<4x256xf32>
    %c100_441 = arith.constant 100 : index
    %c0_442 = arith.constant 0 : index
    %775 = vector.load %arg8[%c100_441, %c0_442] : memref<108x256xf32, #tpu.memory_space<vmem>>, vector<4x256xf32>
    tpu.vector_store %arg8[%c100_441, %c0_442], %774 {strides = array<i32>} : memref<108x256xf32, #tpu.memory_space<vmem>>, vector<4x256xf32>,
    %cst_443 = arith.constant 0.000000e+00 : f32
    %776 = vector.broadcast %cst_443 : f32 to vector<4x17xf32>
    %777 = vector.extract_strided_slice %17 {offsets = [0, 17], sizes = [4, 239], strides = [1, 1]} : vector<4x256xf32> to vector<4x239xf32>
    %778 = tpu.concatenate %777, %776 in 1 : vector<4x239xf32>, vector<4x17xf32> -> vector<4x256xf32>
    %cst_444 = arith.constant 0.000000e+00 : f32
    %779 = vector.shape_cast %38 : vector<1x256xi1> to vector<1x256xi1>
    %780 = vector.broadcast %779 : vector<1x256xi1> to vector<4x256xi1>
    %781 = vector.broadcast %cst_444 : f32 to vector<4x256xf32>
    %782 = arith.select %780, %778, %781 : vector<4x256xi1>, vector<4x256xf32>
    %c104_445 = arith.constant 104 : index
    %c0_446 = arith.constant 0 : index
    %783 = vector.load %arg8[%c104_445, %c0_446] : memref<108x256xf32, #tpu.memory_space<vmem>>, vector<4x256xf32>
    tpu.vector_store %arg8[%c104_445, %c0_446], %782 {strides = array<i32>} : memref<108x256xf32, #tpu.memory_space<vmem>>, vector<4x256xf32>,
    %c0_447 = arith.constant 0 : index
    %c0_448 = arith.constant 0 : index
    %784 = vector.load %arg8[%c0_447, %c0_448] : memref<108x256xf32, #tpu.memory_space<vmem>>, vector<108x256xf32>
    %cst_449 = arith.constant dense<0.000000e+00> : vector<4x256xf32>
    %785 = tpu.matmul %39, %784, %cst_449 {dimension_numbers = #tpu.dot_dimension_numbers<[1], [0], [0], [1], [0, 0, 1, 1], [], []>} : vector<4x108xf32>, vector<108x256xf32>, vector<4x256xf32> -> vector<4x256xf32>
    %c0_450 = arith.constant 0 : index
    %c3_451 = arith.constant 3 : index
    %c0_452 = arith.constant 0 : index
    %c0_453 = arith.constant 0 : index
    %786 = vector.load %arg6[%c0_450, %c3_451, %c0_452, %c0_453] : memref<1x4x4x256xf32, #tpu.memory_space<vmem>>, vector<1x1x4x256xf32>
    %787 = vector.shape_cast %786 : vector<1x1x4x256xf32> to vector<4x256xf32>
    %788 = vector.shape_cast %785 : vector<4x256xf32> to vector<1x1x4x256xf32>
    tpu.vector_store %arg6[%c0_450, %c3_451, %c0_452, %c0_453], %788 {strides = array<i32>} : memref<1x4x4x256xf32, #tpu.memory_space<vmem>>, vector<1x1x4x256xf32>,
    %cst_454 = arith.constant dense<0.000000e+00> : vector<4xf32>
    %789 = vector.multi_reduction <add>, %785, %cst_454 [1] : vector<4x256xf32> to vector<4xf32>
    %790 = vector.shape_cast %789 : vector<4xf32> to vector<4x1xf32>
    %cst_455 = arith.constant 3.906250e-03 : f32
    %791 = vector.broadcast %cst_455 : f32 to vector<4x1xf32>
    %792 = arith.mulf %790, %791 : vector<4x1xf32>
    %793 = vector.broadcast %792 : vector<4x1xf32> to vector<4x256xf32>
    %794 = arith.subf %785, %793 : vector<4x256xf32>
    %795 = arith.mulf %794, %794 : vector<4x256xf32>
    %cst_456 = arith.constant dense<0.000000e+00> : vector<4xf32>
    %796 = vector.multi_reduction <add>, %795, %cst_456 [1] : vector<4x256xf32> to vector<4xf32>
    %797 = vector.shape_cast %796 : vector<4xf32> to vector<4x1xf32>
    %c0_457 = arith.constant 0 : index
    %c0_458 = arith.constant 0 : index
    %c3_459 = arith.constant 3 : index
    %c0_460 = arith.constant 0 : index
    %c0_461 = arith.constant 0 : index
    %798 = vector.load %arg7[%c0_457, %c0_458, %c3_459, %c0_460, %c0_461] : memref<1x1x4x4x2xf32, #tpu.memory_space<vmem>>, vector<1x1x1x4x1xf32>
    %799 = vector.shape_cast %798 : vector<1x1x1x4x1xf32> to vector<4x1xf32>
    %800 = vector.shape_cast %790 : vector<4x1xf32> to vector<1x1x1x4x1xf32>
    tpu.vector_store %arg7[%c0_457, %c0_458, %c3_459, %c0_460, %c0_461], %800 {strides = array<i32>} : memref<1x1x4x4x2xf32, #tpu.memory_space<vmem>>, vector<1x1x1x4x1xf32>,
    %c0_462 = arith.constant 0 : index
    %c0_463 = arith.constant 0 : index
    %c3_464 = arith.constant 3 : index
    %c0_465 = arith.constant 0 : index
    %c1_466 = arith.constant 1 : index
    %801 = vector.load %arg7[%c0_462, %c0_463, %c3_464, %c0_465, %c1_466] : memref<1x1x4x4x2xf32, #tpu.memory_space<vmem>>, vector<1x1x1x4x1xf32>
    %802 = vector.shape_cast %801 : vector<1x1x1x4x1xf32> to vector<4x1xf32>
    %803 = vector.shape_cast %797 : vector<4x1xf32> to vector<1x1x1x4x1xf32>
    tpu.vector_store %arg7[%c0_462, %c0_463, %c3_464, %c0_465, %c1_466], %803 {strides = array<i32>} : memref<1x1x4x4x2xf32, #tpu.memory_space<vmem>>, vector<1x1x1x4x1xf32>,
    return
  }
  func.func @transform_0(%arg0: i32, %arg1: i32) -> (i32, i32, i32, i32) {
    %c4_i32 = arith.constant 4 : i32
    %0 = arith.muli %arg1, %c4_i32 : i32
    %c1_i32 = arith.constant 1 : i32
    %1 = arith.subi %0, %c1_i32 : i32
    %c0_i32 = arith.constant 0 : i32
    %2 = arith.maxsi %1, %c0_i32 : i32
    %c0_i32_0 = arith.constant 0 : i32
    %c0_i32_1 = arith.constant 0 : i32
    %c0_i32_2 = arith.constant 0 : i32
    return %arg0, %2, %c0_i32_0, %c0_i32_1 : i32, i32, i32, i32
  }
  func.func @transform_1(%arg0: i32, %arg1: i32) -> (i32, i32, i32, i32) {
    %c0_i32 = arith.constant 0 : i32
    %c0_i32_0 = arith.constant 0 : i32
    %c0_i32_1 = arith.constant 0 : i32
    return %arg0, %arg1, %c0_i32, %c0_i32_0 : i32, i32, i32, i32
  }
  func.func @transform_2(%arg0: i32, %arg1: i32) -> (i32, i32, i32, i32) {
    %c4_i32 = arith.constant 4 : i32
    %0 = arith.muli %arg1, %c4_i32 : i32
    %c4_i32_0 = arith.constant 4 : i32
    %1 = arith.addi %0, %c4_i32_0 : i32
    %c7_i32 = arith.constant 7 : i32
    %2 = arith.minsi %1, %c7_i32 : i32
    %c0_i32 = arith.constant 0 : i32
    %c0_i32_1 = arith.constant 0 : i32
    %c0_i32_2 = arith.constant 0 : i32
    return %arg0, %2, %c0_i32, %c0_i32_1 : i32, i32, i32, i32
  }
  func.func @transform_3(%arg0: i32, %arg1: i32) -> (i32, i32) {
    %c0_i32 = arith.constant 0 : i32
    %c0_i32_0 = arith.constant 0 : i32
    %c0_i32_1 = arith.constant 0 : i32
    return %c0_i32, %c0_i32_0 : i32, i32
  }
  func.func @transform_4(%arg0: i32, %arg1: i32) -> (i32, i32, i32, i32) {
    %c0_i32 = arith.constant 0 : i32
    %c0_i32_0 = arith.constant 0 : i32
    %c0_i32_1 = arith.constant 0 : i32
    return %arg0, %arg1, %c0_i32, %c0_i32_0 : i32, i32, i32, i32
  }
  func.func @transform_5(%arg0: i32, %arg1: i32) -> (i32, i32, i32, i32, i32) {
    %c0_i32 = arith.constant 0 : i32
    %c0_i32_0 = arith.constant 0 : i32
    %c0_i32_1 = arith.constant 0 : i32
    %c0_i32_2 = arith.constant 0 : i32
    return %arg0, %arg1, %c0_i32, %c0_i32_0, %c0_i32_1 : i32, i32, i32, i32, i32
  }
}

module attributes {stable_mosaic.version = 11 : i64} {
  func.func @_conv2_stats_kernel(%arg0: i32, %arg1: i32, %arg2: memref<1x1x4x256xf32, #tpu.memory_space<vmem>>, %arg3: memref<1x4x4x256xf32, #tpu.memory_space<vmem>>, %arg4: memref<1x1x4x256xf32, #tpu.memory_space<vmem>>, %arg5: memref<2x4x1xf32, #tpu.memory_space<vmem>>, %arg6: memref<4x108xf32, #tpu.memory_space<vmem>>, %arg7: memref<1x4x4x256xf32, #tpu.memory_space<vmem>>, %arg8: memref<1x1x4x4x2xf32, #tpu.memory_space<vmem>>, %arg9: memref<108x256xf32, #tpu.memory_space<vmem>>) attributes {dimension_semantics = [#tpu.dimension_semantics<parallel>, #tpu.dimension_semantics<parallel>], iteration_bounds = array<i64: 2, 2>, scalar_prefetch = 0 : i64, scratch_operands = 1 : i64, tpu.core_type = #tpu.core_type<tc>, window_params = [{transform_indices = @transform_0, window_bounds = array<i64: 1, 1, 4, 256>}, {transform_indices = @transform_1, window_bounds = array<i64: 1, 4, 4, 256>}, {transform_indices = @transform_2, window_bounds = array<i64: 1, 1, 4, 256>}, {pipeline_mode = #tpu.pipeline_mode<synchronous>, transform_indices = @transform_3, window_bounds = array<i64: 2, 4, 1>}, {pipeline_mode = #tpu.pipeline_mode<synchronous>, transform_indices = @transform_4, window_bounds = array<i64: 4, 108>}, {transform_indices = @transform_5, window_bounds = array<i64: 1, 4, 4, 256>}, {transform_indices = @transform_6, window_bounds = array<i64: 1, 1, 4, 4, 2>}]} {
    %c0_i32 = arith.constant 0 : i32
    %0 = arith.cmpi eq, %arg1, %c0_i32 : i32
    %c1_i32 = arith.constant 1 : i32
    %1 = arith.cmpi eq, %arg1, %c1_i32 : i32
    %c0 = arith.constant 0 : index
    %c0_0 = arith.constant 0 : index
    %c0_1 = arith.constant 0 : index
    %2 = vector.load %arg5[%c0, %c0_0, %c0_1] : memref<2x4x1xf32, #tpu.memory_space<vmem>>, vector<1x4x1xf32>
    %3 = vector.shape_cast %2 : vector<1x4x1xf32> to vector<4x1xf32>
    %c1 = arith.constant 1 : index
    %c0_2 = arith.constant 0 : index
    %c0_3 = arith.constant 0 : index
    %4 = vector.load %arg5[%c1, %c0_2, %c0_3] : memref<2x4x1xf32, #tpu.memory_space<vmem>>, vector<1x4x1xf32>
    %5 = vector.shape_cast %4 : vector<1x4x1xf32> to vector<4x1xf32>
    %c0_4 = arith.constant 0 : index
    %c0_5 = arith.constant 0 : index
    %c0_6 = arith.constant 0 : index
    %c0_7 = arith.constant 0 : index
    %6 = vector.load %arg2[%c0_4, %c0_5, %c0_6, %c0_7] : memref<1x1x4x256xf32, #tpu.memory_space<vmem>>, vector<1x1x4x256xf32>
    %7 = vector.shape_cast %6 : vector<1x1x4x256xf32> to vector<4x256xf32>
    %8 = vector.broadcast %3 : vector<4x1xf32> to vector<4x256xf32>
    %9 = arith.mulf %7, %8 : vector<4x256xf32>
    %10 = vector.broadcast %5 : vector<4x1xf32> to vector<4x256xf32>
    %11 = arith.addf %9, %10 : vector<4x256xf32>
    %cst = arith.constant 0.000000e+00 : f32
    %12 = vector.broadcast %cst : f32 to vector<4x256xf32>
    %13 = arith.maximumf %11, %12 : vector<4x256xf32>
    %cst_8 = arith.constant 0.000000e+00 : f32
    %14 = vector.broadcast %cst_8 : f32 to vector<4x256xf32>
    %15 = arith.select %0, %14, %13 : vector<4x256xf32>
    %c0_9 = arith.constant 0 : index
    %c0_10 = arith.constant 0 : index
    %c0_11 = arith.constant 0 : index
    %c0_12 = arith.constant 0 : index
    %16 = vector.load %arg3[%c0_9, %c0_10, %c0_11, %c0_12] : memref<1x4x4x256xf32, #tpu.memory_space<vmem>>, vector<1x1x4x256xf32>
    %17 = vector.shape_cast %16 : vector<1x1x4x256xf32> to vector<4x256xf32>
    %18 = vector.broadcast %3 : vector<4x1xf32> to vector<4x256xf32>
    %19 = arith.mulf %17, %18 : vector<4x256xf32>
    %20 = vector.broadcast %5 : vector<4x1xf32> to vector<4x256xf32>
    %21 = arith.addf %19, %20 : vector<4x256xf32>
    %cst_13 = arith.constant 0.000000e+00 : f32
    %22 = vector.broadcast %cst_13 : f32 to vector<4x256xf32>
    %23 = arith.maximumf %21, %22 : vector<4x256xf32>
    %c0_14 = arith.constant 0 : index
    %c1_15 = arith.constant 1 : index
    %c0_16 = arith.constant 0 : index
    %c0_17 = arith.constant 0 : index
    %24 = vector.load %arg3[%c0_14, %c1_15, %c0_16, %c0_17] : memref<1x4x4x256xf32, #tpu.memory_space<vmem>>, vector<1x1x4x256xf32>
    %25 = vector.shape_cast %24 : vector<1x1x4x256xf32> to vector<4x256xf32>
    %26 = vector.broadcast %3 : vector<4x1xf32> to vector<4x256xf32>
    %27 = arith.mulf %25, %26 : vector<4x256xf32>
    %28 = vector.broadcast %5 : vector<4x1xf32> to vector<4x256xf32>
    %29 = arith.addf %27, %28 : vector<4x256xf32>
    %cst_18 = arith.constant 0.000000e+00 : f32
    %30 = vector.broadcast %cst_18 : f32 to vector<4x256xf32>
    %31 = arith.maximumf %29, %30 : vector<4x256xf32>
    %c0_19 = arith.constant 0 : index
    %c2 = arith.constant 2 : index
    %c0_20 = arith.constant 0 : index
    %c0_21 = arith.constant 0 : index
    %32 = vector.load %arg3[%c0_19, %c2, %c0_20, %c0_21] : memref<1x4x4x256xf32, #tpu.memory_space<vmem>>, vector<1x1x4x256xf32>
    %33 = vector.shape_cast %32 : vector<1x1x4x256xf32> to vector<4x256xf32>
    %34 = vector.broadcast %3 : vector<4x1xf32> to vector<4x256xf32>
    %35 = arith.mulf %33, %34 : vector<4x256xf32>
    %36 = vector.broadcast %5 : vector<4x1xf32> to vector<4x256xf32>
    %37 = arith.addf %35, %36 : vector<4x256xf32>
    %cst_22 = arith.constant 0.000000e+00 : f32
    %38 = vector.broadcast %cst_22 : f32 to vector<4x256xf32>
    %39 = arith.maximumf %37, %38 : vector<4x256xf32>
    %c0_23 = arith.constant 0 : index
    %c3 = arith.constant 3 : index
    %c0_24 = arith.constant 0 : index
    %c0_25 = arith.constant 0 : index
    %40 = vector.load %arg3[%c0_23, %c3, %c0_24, %c0_25] : memref<1x4x4x256xf32, #tpu.memory_space<vmem>>, vector<1x1x4x256xf32>
    %41 = vector.shape_cast %40 : vector<1x1x4x256xf32> to vector<4x256xf32>
    %42 = vector.broadcast %3 : vector<4x1xf32> to vector<4x256xf32>
    %43 = arith.mulf %41, %42 : vector<4x256xf32>
    %44 = vector.broadcast %5 : vector<4x1xf32> to vector<4x256xf32>
    %45 = arith.addf %43, %44 : vector<4x256xf32>
    %cst_26 = arith.constant 0.000000e+00 : f32
    %46 = vector.broadcast %cst_26 : f32 to vector<4x256xf32>
    %47 = arith.maximumf %45, %46 : vector<4x256xf32>
    %c0_27 = arith.constant 0 : index
    %c0_28 = arith.constant 0 : index
    %c0_29 = arith.constant 0 : index
    %c0_30 = arith.constant 0 : index
    %48 = vector.load %arg4[%c0_27, %c0_28, %c0_29, %c0_30] : memref<1x1x4x256xf32, #tpu.memory_space<vmem>>, vector<1x1x4x256xf32>
    %49 = vector.shape_cast %48 : vector<1x1x4x256xf32> to vector<4x256xf32>
    %50 = vector.broadcast %3 : vector<4x1xf32> to vector<4x256xf32>
    %51 = arith.mulf %49, %50 : vector<4x256xf32>
    %52 = vector.broadcast %5 : vector<4x1xf32> to vector<4x256xf32>
    %53 = arith.addf %51, %52 : vector<4x256xf32>
    %cst_31 = arith.constant 0.000000e+00 : f32
    %54 = vector.broadcast %cst_31 : f32 to vector<4x256xf32>
    %55 = arith.maximumf %53, %54 : vector<4x256xf32>
    %cst_32 = arith.constant 0.000000e+00 : f32
    %56 = vector.broadcast %cst_32 : f32 to vector<4x256xf32>
    %57 = arith.select %1, %56, %55 : vector<4x256xf32>
    %58 = tpu.iota {dimensions = array<i32: 1>} : vector<1x256xi32>
    %c16_i32 = arith.constant 16 : i32
    %c0_i32_33 = arith.constant 0 : i32
    %59 = arith.cmpi eq, %c16_i32, %c0_i32_33 : i32
    %c1_i32_34 = arith.constant 1 : i32
    %60 = arith.select %59, %c1_i32_34, %c16_i32 : i32
    %61 = vector.broadcast %60 : i32 to vector<1x256xi32>
    %62 = arith.remsi %58, %61 : vector<1x256xi32>
    %c0_i32_35 = arith.constant 0 : i32
    %63 = vector.broadcast %c0_i32_35 : i32 to vector<1x256xi32>
    %64 = arith.cmpi ne, %62, %63 : vector<1x256xi32>
    %c0_i32_36 = arith.constant 0 : i32
    %65 = vector.broadcast %c0_i32_36 : i32 to vector<1x256xi32>
    %66 = arith.cmpi slt, %62, %65 : vector<1x256xi32>
    %c0_i32_37 = arith.constant 0 : i32
    %67 = arith.cmpi slt, %60, %c0_i32_37 : i32
    %68 = vector.broadcast %67 : i1 to vector<1x256xi1>
    %69 = vector.broadcast %68 : vector<1x256xi1> to vector<1x256xi1>
    %70 = arith.xori %66, %69 : vector<1x256xi1>
    %71 = arith.andi %70, %64 : vector<1x256xi1>
    %72 = vector.broadcast %60 : i32 to vector<1x256xi32>
    %73 = arith.addi %62, %72 : vector<1x256xi32>
    %74 = arith.select %71, %73, %62 : vector<1x256xi1>, vector<1x256xi32>
    %c1_i32_38 = arith.constant 1 : i32
    %75 = vector.broadcast %c1_i32_38 : i32 to vector<1x256xi32>
    %76 = arith.cmpi sge, %74, %75 : vector<1x256xi32>
    %c14_i32 = arith.constant 14 : i32
    %77 = vector.broadcast %c14_i32 : i32 to vector<1x256xi32>
    %78 = arith.cmpi sle, %74, %77 : vector<1x256xi32>
    %c0_39 = arith.constant 0 : index
    %c0_40 = arith.constant 0 : index
    %79 = vector.load %arg6[%c0_39, %c0_40] : memref<4x108xf32, #tpu.memory_space<vmem>>, vector<4x108xf32>
    %cst_41 = arith.constant 0.000000e+00 : f32
    %80 = vector.broadcast %cst_41 : f32 to vector<4x17xf32>
    %81 = vector.extract_strided_slice %15 {offsets = [0, 0], sizes = [4, 239], strides = [1, 1]} : vector<4x256xf32> to vector<4x239xf32>
    %82 = tpu.concatenate %80, %81 in 1 : vector<4x17xf32>, vector<4x239xf32> -> vector<4x256xf32>
    %cst_42 = arith.constant 0.000000e+00 : f32
    %83 = vector.shape_cast %76 : vector<1x256xi1> to vector<1x256xi1>
    %84 = vector.broadcast %83 : vector<1x256xi1> to vector<4x256xi1>
    %85 = vector.broadcast %cst_42 : f32 to vector<4x256xf32>
    %86 = arith.select %84, %82, %85 : vector<4x256xi1>, vector<4x256xf32>
    %c0_43 = arith.constant 0 : index
    %c0_44 = arith.constant 0 : index
    %87 = vector.load %arg9[%c0_43, %c0_44] : memref<108x256xf32, #tpu.memory_space<vmem>>, vector<4x256xf32>
    tpu.vector_store %arg9[%c0_43, %c0_44], %86 {strides = array<i32>} : memref<108x256xf32, #tpu.memory_space<vmem>>, vector<4x256xf32>,
    %cst_45 = arith.constant 0.000000e+00 : f32
    %88 = vector.broadcast %cst_45 : f32 to vector<4x16xf32>
    %89 = vector.extract_strided_slice %15 {offsets = [0, 0], sizes = [4, 240], strides = [1, 1]} : vector<4x256xf32> to vector<4x240xf32>
    %90 = tpu.concatenate %88, %89 in 1 : vector<4x16xf32>, vector<4x240xf32> -> vector<4x256xf32>
    %c4 = arith.constant 4 : index
    %c0_46 = arith.constant 0 : index
    %91 = vector.load %arg9[%c4, %c0_46] : memref<108x256xf32, #tpu.memory_space<vmem>>, vector<4x256xf32>
    tpu.vector_store %arg9[%c4, %c0_46], %90 {strides = array<i32>} : memref<108x256xf32, #tpu.memory_space<vmem>>, vector<4x256xf32>,
    %cst_47 = arith.constant 0.000000e+00 : f32
    %92 = vector.broadcast %cst_47 : f32 to vector<4x15xf32>
    %93 = vector.extract_strided_slice %15 {offsets = [0, 0], sizes = [4, 241], strides = [1, 1]} : vector<4x256xf32> to vector<4x241xf32>
    %94 = tpu.concatenate %92, %93 in 1 : vector<4x15xf32>, vector<4x241xf32> -> vector<4x256xf32>
    %cst_48 = arith.constant 0.000000e+00 : f32
    %95 = vector.shape_cast %78 : vector<1x256xi1> to vector<1x256xi1>
    %96 = vector.broadcast %95 : vector<1x256xi1> to vector<4x256xi1>
    %97 = vector.broadcast %cst_48 : f32 to vector<4x256xf32>
    %98 = arith.select %96, %94, %97 : vector<4x256xi1>, vector<4x256xf32>
    %c8 = arith.constant 8 : index
    %c0_49 = arith.constant 0 : index
    %99 = vector.load %arg9[%c8, %c0_49] : memref<108x256xf32, #tpu.memory_space<vmem>>, vector<4x256xf32>
    tpu.vector_store %arg9[%c8, %c0_49], %98 {strides = array<i32>} : memref<108x256xf32, #tpu.memory_space<vmem>>, vector<4x256xf32>,
    %cst_50 = arith.constant 0.000000e+00 : f32
    %100 = vector.broadcast %cst_50 : f32 to vector<4x1xf32>
    %101 = vector.extract_strided_slice %15 {offsets = [0, 0], sizes = [4, 255], strides = [1, 1]} : vector<4x256xf32> to vector<4x255xf32>
    %102 = tpu.concatenate %100, %101 in 1 : vector<4x1xf32>, vector<4x255xf32> -> vector<4x256xf32>
    %cst_51 = arith.constant 0.000000e+00 : f32
    %103 = vector.shape_cast %76 : vector<1x256xi1> to vector<1x256xi1>
    %104 = vector.broadcast %103 : vector<1x256xi1> to vector<4x256xi1>
    %105 = vector.broadcast %cst_51 : f32 to vector<4x256xf32>
    %106 = arith.select %104, %102, %105 : vector<4x256xi1>, vector<4x256xf32>
    %c12 = arith.constant 12 : index
    %c0_52 = arith.constant 0 : index
    %107 = vector.load %arg9[%c12, %c0_52] : memref<108x256xf32, #tpu.memory_space<vmem>>, vector<4x256xf32>
    tpu.vector_store %arg9[%c12, %c0_52], %106 {strides = array<i32>} : memref<108x256xf32, #tpu.memory_space<vmem>>, vector<4x256xf32>,
    %c16 = arith.constant 16 : index
    %c0_53 = arith.constant 0 : index
    %108 = vector.load %arg9[%c16, %c0_53] : memref<108x256xf32, #tpu.memory_space<vmem>>, vector<4x256xf32>
    tpu.vector_store %arg9[%c16, %c0_53], %15 {strides = array<i32>} : memref<108x256xf32, #tpu.memory_space<vmem>>, vector<4x256xf32>,
    %cst_54 = arith.constant 0.000000e+00 : f32
    %109 = vector.broadcast %cst_54 : f32 to vector<4x1xf32>
    %110 = vector.extract_strided_slice %15 {offsets = [0, 1], sizes = [4, 255], strides = [1, 1]} : vector<4x256xf32> to vector<4x255xf32>
    %111 = tpu.concatenate %110, %109 in 1 : vector<4x255xf32>, vector<4x1xf32> -> vector<4x256xf32>
    %cst_55 = arith.constant 0.000000e+00 : f32
    %112 = vector.shape_cast %78 : vector<1x256xi1> to vector<1x256xi1>
    %113 = vector.broadcast %112 : vector<1x256xi1> to vector<4x256xi1>
    %114 = vector.broadcast %cst_55 : f32 to vector<4x256xf32>
    %115 = arith.select %113, %111, %114 : vector<4x256xi1>, vector<4x256xf32>
    %c20 = arith.constant 20 : index
    %c0_56 = arith.constant 0 : index
    %116 = vector.load %arg9[%c20, %c0_56] : memref<108x256xf32, #tpu.memory_space<vmem>>, vector<4x256xf32>
    tpu.vector_store %arg9[%c20, %c0_56], %115 {strides = array<i32>} : memref<108x256xf32, #tpu.memory_space<vmem>>, vector<4x256xf32>,
    %cst_57 = arith.constant 0.000000e+00 : f32
    %117 = vector.broadcast %cst_57 : f32 to vector<4x15xf32>
    %118 = vector.extract_strided_slice %15 {offsets = [0, 15], sizes = [4, 241], strides = [1, 1]} : vector<4x256xf32> to vector<4x241xf32>
    %119 = tpu.concatenate %118, %117 in 1 : vector<4x241xf32>, vector<4x15xf32> -> vector<4x256xf32>
    %cst_58 = arith.constant 0.000000e+00 : f32
    %120 = vector.shape_cast %76 : vector<1x256xi1> to vector<1x256xi1>
    %121 = vector.broadcast %120 : vector<1x256xi1> to vector<4x256xi1>
    %122 = vector.broadcast %cst_58 : f32 to vector<4x256xf32>
    %123 = arith.select %121, %119, %122 : vector<4x256xi1>, vector<4x256xf32>
    %c24 = arith.constant 24 : index
    %c0_59 = arith.constant 0 : index
    %124 = vector.load %arg9[%c24, %c0_59] : memref<108x256xf32, #tpu.memory_space<vmem>>, vector<4x256xf32>
    tpu.vector_store %arg9[%c24, %c0_59], %123 {strides = array<i32>} : memref<108x256xf32, #tpu.memory_space<vmem>>, vector<4x256xf32>,
    %cst_60 = arith.constant 0.000000e+00 : f32
    %125 = vector.broadcast %cst_60 : f32 to vector<4x16xf32>
    %126 = vector.extract_strided_slice %15 {offsets = [0, 16], sizes = [4, 240], strides = [1, 1]} : vector<4x256xf32> to vector<4x240xf32>
    %127 = tpu.concatenate %126, %125 in 1 : vector<4x240xf32>, vector<4x16xf32> -> vector<4x256xf32>
    %c28 = arith.constant 28 : index
    %c0_61 = arith.constant 0 : index
    %128 = vector.load %arg9[%c28, %c0_61] : memref<108x256xf32, #tpu.memory_space<vmem>>, vector<4x256xf32>
    tpu.vector_store %arg9[%c28, %c0_61], %127 {strides = array<i32>} : memref<108x256xf32, #tpu.memory_space<vmem>>, vector<4x256xf32>,
    %cst_62 = arith.constant 0.000000e+00 : f32
    %129 = vector.broadcast %cst_62 : f32 to vector<4x17xf32>
    %130 = vector.extract_strided_slice %15 {offsets = [0, 17], sizes = [4, 239], strides = [1, 1]} : vector<4x256xf32> to vector<4x239xf32>
    %131 = tpu.concatenate %130, %129 in 1 : vector<4x239xf32>, vector<4x17xf32> -> vector<4x256xf32>
    %cst_63 = arith.constant 0.000000e+00 : f32
    %132 = vector.shape_cast %78 : vector<1x256xi1> to vector<1x256xi1>
    %133 = vector.broadcast %132 : vector<1x256xi1> to vector<4x256xi1>
    %134 = vector.broadcast %cst_63 : f32 to vector<4x256xf32>
    %135 = arith.select %133, %131, %134 : vector<4x256xi1>, vector<4x256xf32>
    %c32 = arith.constant 32 : index
    %c0_64 = arith.constant 0 : index
    %136 = vector.load %arg9[%c32, %c0_64] : memref<108x256xf32, #tpu.memory_space<vmem>>, vector<4x256xf32>
    tpu.vector_store %arg9[%c32, %c0_64], %135 {strides = array<i32>} : memref<108x256xf32, #tpu.memory_space<vmem>>, vector<4x256xf32>,
    %cst_65 = arith.constant 0.000000e+00 : f32
    %137 = vector.broadcast %cst_65 : f32 to vector<4x17xf32>
    %138 = vector.extract_strided_slice %23 {offsets = [0, 0], sizes = [4, 239], strides = [1, 1]} : vector<4x256xf32> to vector<4x239xf32>
    %139 = tpu.concatenate %137, %138 in 1 : vector<4x17xf32>, vector<4x239xf32> -> vector<4x256xf32>
    %cst_66 = arith.constant 0.000000e+00 : f32
    %140 = vector.shape_cast %76 : vector<1x256xi1> to vector<1x256xi1>
    %141 = vector.broadcast %140 : vector<1x256xi1> to vector<4x256xi1>
    %142 = vector.broadcast %cst_66 : f32 to vector<4x256xf32>
    %143 = arith.select %141, %139, %142 : vector<4x256xi1>, vector<4x256xf32>
    %c36 = arith.constant 36 : index
    %c0_67 = arith.constant 0 : index
    %144 = vector.load %arg9[%c36, %c0_67] : memref<108x256xf32, #tpu.memory_space<vmem>>, vector<4x256xf32>
    tpu.vector_store %arg9[%c36, %c0_67], %143 {strides = array<i32>} : memref<108x256xf32, #tpu.memory_space<vmem>>, vector<4x256xf32>,
    %cst_68 = arith.constant 0.000000e+00 : f32
    %145 = vector.broadcast %cst_68 : f32 to vector<4x16xf32>
    %146 = vector.extract_strided_slice %23 {offsets = [0, 0], sizes = [4, 240], strides = [1, 1]} : vector<4x256xf32> to vector<4x240xf32>
    %147 = tpu.concatenate %145, %146 in 1 : vector<4x16xf32>, vector<4x240xf32> -> vector<4x256xf32>
    %c40 = arith.constant 40 : index
    %c0_69 = arith.constant 0 : index
    %148 = vector.load %arg9[%c40, %c0_69] : memref<108x256xf32, #tpu.memory_space<vmem>>, vector<4x256xf32>
    tpu.vector_store %arg9[%c40, %c0_69], %147 {strides = array<i32>} : memref<108x256xf32, #tpu.memory_space<vmem>>, vector<4x256xf32>,
    %cst_70 = arith.constant 0.000000e+00 : f32
    %149 = vector.broadcast %cst_70 : f32 to vector<4x15xf32>
    %150 = vector.extract_strided_slice %23 {offsets = [0, 0], sizes = [4, 241], strides = [1, 1]} : vector<4x256xf32> to vector<4x241xf32>
    %151 = tpu.concatenate %149, %150 in 1 : vector<4x15xf32>, vector<4x241xf32> -> vector<4x256xf32>
    %cst_71 = arith.constant 0.000000e+00 : f32
    %152 = vector.shape_cast %78 : vector<1x256xi1> to vector<1x256xi1>
    %153 = vector.broadcast %152 : vector<1x256xi1> to vector<4x256xi1>
    %154 = vector.broadcast %cst_71 : f32 to vector<4x256xf32>
    %155 = arith.select %153, %151, %154 : vector<4x256xi1>, vector<4x256xf32>
    %c44 = arith.constant 44 : index
    %c0_72 = arith.constant 0 : index
    %156 = vector.load %arg9[%c44, %c0_72] : memref<108x256xf32, #tpu.memory_space<vmem>>, vector<4x256xf32>
    tpu.vector_store %arg9[%c44, %c0_72], %155 {strides = array<i32>} : memref<108x256xf32, #tpu.memory_space<vmem>>, vector<4x256xf32>,
    %cst_73 = arith.constant 0.000000e+00 : f32
    %157 = vector.broadcast %cst_73 : f32 to vector<4x1xf32>
    %158 = vector.extract_strided_slice %23 {offsets = [0, 0], sizes = [4, 255], strides = [1, 1]} : vector<4x256xf32> to vector<4x255xf32>
    %159 = tpu.concatenate %157, %158 in 1 : vector<4x1xf32>, vector<4x255xf32> -> vector<4x256xf32>
    %cst_74 = arith.constant 0.000000e+00 : f32
    %160 = vector.shape_cast %76 : vector<1x256xi1> to vector<1x256xi1>
    %161 = vector.broadcast %160 : vector<1x256xi1> to vector<4x256xi1>
    %162 = vector.broadcast %cst_74 : f32 to vector<4x256xf32>
    %163 = arith.select %161, %159, %162 : vector<4x256xi1>, vector<4x256xf32>
    %c48 = arith.constant 48 : index
    %c0_75 = arith.constant 0 : index
    %164 = vector.load %arg9[%c48, %c0_75] : memref<108x256xf32, #tpu.memory_space<vmem>>, vector<4x256xf32>
    tpu.vector_store %arg9[%c48, %c0_75], %163 {strides = array<i32>} : memref<108x256xf32, #tpu.memory_space<vmem>>, vector<4x256xf32>,
    %c52 = arith.constant 52 : index
    %c0_76 = arith.constant 0 : index
    %165 = vector.load %arg9[%c52, %c0_76] : memref<108x256xf32, #tpu.memory_space<vmem>>, vector<4x256xf32>
    tpu.vector_store %arg9[%c52, %c0_76], %23 {strides = array<i32>} : memref<108x256xf32, #tpu.memory_space<vmem>>, vector<4x256xf32>,
    %cst_77 = arith.constant 0.000000e+00 : f32
    %166 = vector.broadcast %cst_77 : f32 to vector<4x1xf32>
    %167 = vector.extract_strided_slice %23 {offsets = [0, 1], sizes = [4, 255], strides = [1, 1]} : vector<4x256xf32> to vector<4x255xf32>
    %168 = tpu.concatenate %167, %166 in 1 : vector<4x255xf32>, vector<4x1xf32> -> vector<4x256xf32>
    %cst_78 = arith.constant 0.000000e+00 : f32
    %169 = vector.shape_cast %78 : vector<1x256xi1> to vector<1x256xi1>
    %170 = vector.broadcast %169 : vector<1x256xi1> to vector<4x256xi1>
    %171 = vector.broadcast %cst_78 : f32 to vector<4x256xf32>
    %172 = arith.select %170, %168, %171 : vector<4x256xi1>, vector<4x256xf32>
    %c56 = arith.constant 56 : index
    %c0_79 = arith.constant 0 : index
    %173 = vector.load %arg9[%c56, %c0_79] : memref<108x256xf32, #tpu.memory_space<vmem>>, vector<4x256xf32>
    tpu.vector_store %arg9[%c56, %c0_79], %172 {strides = array<i32>} : memref<108x256xf32, #tpu.memory_space<vmem>>, vector<4x256xf32>,
    %cst_80 = arith.constant 0.000000e+00 : f32
    %174 = vector.broadcast %cst_80 : f32 to vector<4x15xf32>
    %175 = vector.extract_strided_slice %23 {offsets = [0, 15], sizes = [4, 241], strides = [1, 1]} : vector<4x256xf32> to vector<4x241xf32>
    %176 = tpu.concatenate %175, %174 in 1 : vector<4x241xf32>, vector<4x15xf32> -> vector<4x256xf32>
    %cst_81 = arith.constant 0.000000e+00 : f32
    %177 = vector.shape_cast %76 : vector<1x256xi1> to vector<1x256xi1>
    %178 = vector.broadcast %177 : vector<1x256xi1> to vector<4x256xi1>
    %179 = vector.broadcast %cst_81 : f32 to vector<4x256xf32>
    %180 = arith.select %178, %176, %179 : vector<4x256xi1>, vector<4x256xf32>
    %c60 = arith.constant 60 : index
    %c0_82 = arith.constant 0 : index
    %181 = vector.load %arg9[%c60, %c0_82] : memref<108x256xf32, #tpu.memory_space<vmem>>, vector<4x256xf32>
    tpu.vector_store %arg9[%c60, %c0_82], %180 {strides = array<i32>} : memref<108x256xf32, #tpu.memory_space<vmem>>, vector<4x256xf32>,
    %cst_83 = arith.constant 0.000000e+00 : f32
    %182 = vector.broadcast %cst_83 : f32 to vector<4x16xf32>
    %183 = vector.extract_strided_slice %23 {offsets = [0, 16], sizes = [4, 240], strides = [1, 1]} : vector<4x256xf32> to vector<4x240xf32>
    %184 = tpu.concatenate %183, %182 in 1 : vector<4x240xf32>, vector<4x16xf32> -> vector<4x256xf32>
    %c64 = arith.constant 64 : index
    %c0_84 = arith.constant 0 : index
    %185 = vector.load %arg9[%c64, %c0_84] : memref<108x256xf32, #tpu.memory_space<vmem>>, vector<4x256xf32>
    tpu.vector_store %arg9[%c64, %c0_84], %184 {strides = array<i32>} : memref<108x256xf32, #tpu.memory_space<vmem>>, vector<4x256xf32>,
    %cst_85 = arith.constant 0.000000e+00 : f32
    %186 = vector.broadcast %cst_85 : f32 to vector<4x17xf32>
    %187 = vector.extract_strided_slice %23 {offsets = [0, 17], sizes = [4, 239], strides = [1, 1]} : vector<4x256xf32> to vector<4x239xf32>
    %188 = tpu.concatenate %187, %186 in 1 : vector<4x239xf32>, vector<4x17xf32> -> vector<4x256xf32>
    %cst_86 = arith.constant 0.000000e+00 : f32
    %189 = vector.shape_cast %78 : vector<1x256xi1> to vector<1x256xi1>
    %190 = vector.broadcast %189 : vector<1x256xi1> to vector<4x256xi1>
    %191 = vector.broadcast %cst_86 : f32 to vector<4x256xf32>
    %192 = arith.select %190, %188, %191 : vector<4x256xi1>, vector<4x256xf32>
    %c68 = arith.constant 68 : index
    %c0_87 = arith.constant 0 : index
    %193 = vector.load %arg9[%c68, %c0_87] : memref<108x256xf32, #tpu.memory_space<vmem>>, vector<4x256xf32>
    tpu.vector_store %arg9[%c68, %c0_87], %192 {strides = array<i32>} : memref<108x256xf32, #tpu.memory_space<vmem>>, vector<4x256xf32>,
    %cst_88 = arith.constant 0.000000e+00 : f32
    %194 = vector.broadcast %cst_88 : f32 to vector<4x17xf32>
    %195 = vector.extract_strided_slice %31 {offsets = [0, 0], sizes = [4, 239], strides = [1, 1]} : vector<4x256xf32> to vector<4x239xf32>
    %196 = tpu.concatenate %194, %195 in 1 : vector<4x17xf32>, vector<4x239xf32> -> vector<4x256xf32>
    %cst_89 = arith.constant 0.000000e+00 : f32
    %197 = vector.shape_cast %76 : vector<1x256xi1> to vector<1x256xi1>
    %198 = vector.broadcast %197 : vector<1x256xi1> to vector<4x256xi1>
    %199 = vector.broadcast %cst_89 : f32 to vector<4x256xf32>
    %200 = arith.select %198, %196, %199 : vector<4x256xi1>, vector<4x256xf32>
    %c72 = arith.constant 72 : index
    %c0_90 = arith.constant 0 : index
    %201 = vector.load %arg9[%c72, %c0_90] : memref<108x256xf32, #tpu.memory_space<vmem>>, vector<4x256xf32>
    tpu.vector_store %arg9[%c72, %c0_90], %200 {strides = array<i32>} : memref<108x256xf32, #tpu.memory_space<vmem>>, vector<4x256xf32>,
    %cst_91 = arith.constant 0.000000e+00 : f32
    %202 = vector.broadcast %cst_91 : f32 to vector<4x16xf32>
    %203 = vector.extract_strided_slice %31 {offsets = [0, 0], sizes = [4, 240], strides = [1, 1]} : vector<4x256xf32> to vector<4x240xf32>
    %204 = tpu.concatenate %202, %203 in 1 : vector<4x16xf32>, vector<4x240xf32> -> vector<4x256xf32>
    %c76 = arith.constant 76 : index
    %c0_92 = arith.constant 0 : index
    %205 = vector.load %arg9[%c76, %c0_92] : memref<108x256xf32, #tpu.memory_space<vmem>>, vector<4x256xf32>
    tpu.vector_store %arg9[%c76, %c0_92], %204 {strides = array<i32>} : memref<108x256xf32, #tpu.memory_space<vmem>>, vector<4x256xf32>,
    %cst_93 = arith.constant 0.000000e+00 : f32
    %206 = vector.broadcast %cst_93 : f32 to vector<4x15xf32>
    %207 = vector.extract_strided_slice %31 {offsets = [0, 0], sizes = [4, 241], strides = [1, 1]} : vector<4x256xf32> to vector<4x241xf32>
    %208 = tpu.concatenate %206, %207 in 1 : vector<4x15xf32>, vector<4x241xf32> -> vector<4x256xf32>
    %cst_94 = arith.constant 0.000000e+00 : f32
    %209 = vector.shape_cast %78 : vector<1x256xi1> to vector<1x256xi1>
    %210 = vector.broadcast %209 : vector<1x256xi1> to vector<4x256xi1>
    %211 = vector.broadcast %cst_94 : f32 to vector<4x256xf32>
    %212 = arith.select %210, %208, %211 : vector<4x256xi1>, vector<4x256xf32>
    %c80 = arith.constant 80 : index
    %c0_95 = arith.constant 0 : index
    %213 = vector.load %arg9[%c80, %c0_95] : memref<108x256xf32, #tpu.memory_space<vmem>>, vector<4x256xf32>
    tpu.vector_store %arg9[%c80, %c0_95], %212 {strides = array<i32>} : memref<108x256xf32, #tpu.memory_space<vmem>>, vector<4x256xf32>,
    %cst_96 = arith.constant 0.000000e+00 : f32
    %214 = vector.broadcast %cst_96 : f32 to vector<4x1xf32>
    %215 = vector.extract_strided_slice %31 {offsets = [0, 0], sizes = [4, 255], strides = [1, 1]} : vector<4x256xf32> to vector<4x255xf32>
    %216 = tpu.concatenate %214, %215 in 1 : vector<4x1xf32>, vector<4x255xf32> -> vector<4x256xf32>
    %cst_97 = arith.constant 0.000000e+00 : f32
    %217 = vector.shape_cast %76 : vector<1x256xi1> to vector<1x256xi1>
    %218 = vector.broadcast %217 : vector<1x256xi1> to vector<4x256xi1>
    %219 = vector.broadcast %cst_97 : f32 to vector<4x256xf32>
    %220 = arith.select %218, %216, %219 : vector<4x256xi1>, vector<4x256xf32>
    %c84 = arith.constant 84 : index
    %c0_98 = arith.constant 0 : index
    %221 = vector.load %arg9[%c84, %c0_98] : memref<108x256xf32, #tpu.memory_space<vmem>>, vector<4x256xf32>
    tpu.vector_store %arg9[%c84, %c0_98], %220 {strides = array<i32>} : memref<108x256xf32, #tpu.memory_space<vmem>>, vector<4x256xf32>,
    %c88 = arith.constant 88 : index
    %c0_99 = arith.constant 0 : index
    %222 = vector.load %arg9[%c88, %c0_99] : memref<108x256xf32, #tpu.memory_space<vmem>>, vector<4x256xf32>
    tpu.vector_store %arg9[%c88, %c0_99], %31 {strides = array<i32>} : memref<108x256xf32, #tpu.memory_space<vmem>>, vector<4x256xf32>,
    %cst_100 = arith.constant 0.000000e+00 : f32
    %223 = vector.broadcast %cst_100 : f32 to vector<4x1xf32>
    %224 = vector.extract_strided_slice %31 {offsets = [0, 1], sizes = [4, 255], strides = [1, 1]} : vector<4x256xf32> to vector<4x255xf32>
    %225 = tpu.concatenate %224, %223 in 1 : vector<4x255xf32>, vector<4x1xf32> -> vector<4x256xf32>
    %cst_101 = arith.constant 0.000000e+00 : f32
    %226 = vector.shape_cast %78 : vector<1x256xi1> to vector<1x256xi1>
    %227 = vector.broadcast %226 : vector<1x256xi1> to vector<4x256xi1>
    %228 = vector.broadcast %cst_101 : f32 to vector<4x256xf32>
    %229 = arith.select %227, %225, %228 : vector<4x256xi1>, vector<4x256xf32>
    %c92 = arith.constant 92 : index
    %c0_102 = arith.constant 0 : index
    %230 = vector.load %arg9[%c92, %c0_102] : memref<108x256xf32, #tpu.memory_space<vmem>>, vector<4x256xf32>
    tpu.vector_store %arg9[%c92, %c0_102], %229 {strides = array<i32>} : memref<108x256xf32, #tpu.memory_space<vmem>>, vector<4x256xf32>,
    %cst_103 = arith.constant 0.000000e+00 : f32
    %231 = vector.broadcast %cst_103 : f32 to vector<4x15xf32>
    %232 = vector.extract_strided_slice %31 {offsets = [0, 15], sizes = [4, 241], strides = [1, 1]} : vector<4x256xf32> to vector<4x241xf32>
    %233 = tpu.concatenate %232, %231 in 1 : vector<4x241xf32>, vector<4x15xf32> -> vector<4x256xf32>
    %cst_104 = arith.constant 0.000000e+00 : f32
    %234 = vector.shape_cast %76 : vector<1x256xi1> to vector<1x256xi1>
    %235 = vector.broadcast %234 : vector<1x256xi1> to vector<4x256xi1>
    %236 = vector.broadcast %cst_104 : f32 to vector<4x256xf32>
    %237 = arith.select %235, %233, %236 : vector<4x256xi1>, vector<4x256xf32>
    %c96 = arith.constant 96 : index
    %c0_105 = arith.constant 0 : index
    %238 = vector.load %arg9[%c96, %c0_105] : memref<108x256xf32, #tpu.memory_space<vmem>>, vector<4x256xf32>
    tpu.vector_store %arg9[%c96, %c0_105], %237 {strides = array<i32>} : memref<108x256xf32, #tpu.memory_space<vmem>>, vector<4x256xf32>,
    %cst_106 = arith.constant 0.000000e+00 : f32
    %239 = vector.broadcast %cst_106 : f32 to vector<4x16xf32>
    %240 = vector.extract_strided_slice %31 {offsets = [0, 16], sizes = [4, 240], strides = [1, 1]} : vector<4x256xf32> to vector<4x240xf32>
    %241 = tpu.concatenate %240, %239 in 1 : vector<4x240xf32>, vector<4x16xf32> -> vector<4x256xf32>
    %c100 = arith.constant 100 : index
    %c0_107 = arith.constant 0 : index
    %242 = vector.load %arg9[%c100, %c0_107] : memref<108x256xf32, #tpu.memory_space<vmem>>, vector<4x256xf32>
    tpu.vector_store %arg9[%c100, %c0_107], %241 {strides = array<i32>} : memref<108x256xf32, #tpu.memory_space<vmem>>, vector<4x256xf32>,
    %cst_108 = arith.constant 0.000000e+00 : f32
    %243 = vector.broadcast %cst_108 : f32 to vector<4x17xf32>
    %244 = vector.extract_strided_slice %31 {offsets = [0, 17], sizes = [4, 239], strides = [1, 1]} : vector<4x256xf32> to vector<4x239xf32>
    %245 = tpu.concatenate %244, %243 in 1 : vector<4x239xf32>, vector<4x17xf32> -> vector<4x256xf32>
    %cst_109 = arith.constant 0.000000e+00 : f32
    %246 = vector.shape_cast %78 : vector<1x256xi1> to vector<1x256xi1>
    %247 = vector.broadcast %246 : vector<1x256xi1> to vector<4x256xi1>
    %248 = vector.broadcast %cst_109 : f32 to vector<4x256xf32>
    %249 = arith.select %247, %245, %248 : vector<4x256xi1>, vector<4x256xf32>
    %c104 = arith.constant 104 : index
    %c0_110 = arith.constant 0 : index
    %250 = vector.load %arg9[%c104, %c0_110] : memref<108x256xf32, #tpu.memory_space<vmem>>, vector<4x256xf32>
    tpu.vector_store %arg9[%c104, %c0_110], %249 {strides = array<i32>} : memref<108x256xf32, #tpu.memory_space<vmem>>, vector<4x256xf32>,
    %c0_111 = arith.constant 0 : index
    %c0_112 = arith.constant 0 : index
    %251 = vector.load %arg9[%c0_111, %c0_112] : memref<108x256xf32, #tpu.memory_space<vmem>>, vector<108x256xf32>
    %cst_113 = arith.constant dense<0.000000e+00> : vector<4x256xf32>
    %252 = tpu.matmul %79, %251, %cst_113 {dimension_numbers = #tpu.dot_dimension_numbers<[1], [0], [0], [1], [0, 0, 1, 1], [], []>} : vector<4x108xf32>, vector<108x256xf32>, vector<4x256xf32> -> vector<4x256xf32>
    %c0_114 = arith.constant 0 : index
    %c0_115 = arith.constant 0 : index
    %c0_116 = arith.constant 0 : index
    %c0_117 = arith.constant 0 : index
    %253 = vector.load %arg7[%c0_114, %c0_115, %c0_116, %c0_117] : memref<1x4x4x256xf32, #tpu.memory_space<vmem>>, vector<1x1x4x256xf32>
    %254 = vector.shape_cast %253 : vector<1x1x4x256xf32> to vector<4x256xf32>
    %255 = vector.shape_cast %252 : vector<4x256xf32> to vector<1x1x4x256xf32>
    tpu.vector_store %arg7[%c0_114, %c0_115, %c0_116, %c0_117], %255 {strides = array<i32>} : memref<1x4x4x256xf32, #tpu.memory_space<vmem>>, vector<1x1x4x256xf32>,
    %cst_118 = arith.constant dense<0.000000e+00> : vector<4xf32>
    %256 = vector.multi_reduction <add>, %252, %cst_118 [1] : vector<4x256xf32> to vector<4xf32>
    %257 = vector.shape_cast %256 : vector<4xf32> to vector<4x1xf32>
    %cst_119 = arith.constant 3.906250e-03 : f32
    %258 = vector.broadcast %cst_119 : f32 to vector<4x1xf32>
    %259 = arith.mulf %257, %258 : vector<4x1xf32>
    %260 = vector.broadcast %259 : vector<4x1xf32> to vector<4x256xf32>
    %261 = arith.subf %252, %260 : vector<4x256xf32>
    %262 = arith.mulf %261, %261 : vector<4x256xf32>
    %cst_120 = arith.constant dense<0.000000e+00> : vector<4xf32>
    %263 = vector.multi_reduction <add>, %262, %cst_120 [1] : vector<4x256xf32> to vector<4xf32>
    %264 = vector.shape_cast %263 : vector<4xf32> to vector<4x1xf32>
    %c0_121 = arith.constant 0 : index
    %c0_122 = arith.constant 0 : index
    %c0_123 = arith.constant 0 : index
    %c0_124 = arith.constant 0 : index
    %c0_125 = arith.constant 0 : index
    %265 = vector.load %arg8[%c0_121, %c0_122, %c0_123, %c0_124, %c0_125] : memref<1x1x4x4x2xf32, #tpu.memory_space<vmem>>, vector<1x1x1x4x1xf32>
    %266 = vector.shape_cast %265 : vector<1x1x1x4x1xf32> to vector<4x1xf32>
    %267 = vector.shape_cast %257 : vector<4x1xf32> to vector<1x1x1x4x1xf32>
    tpu.vector_store %arg8[%c0_121, %c0_122, %c0_123, %c0_124, %c0_125], %267 {strides = array<i32>} : memref<1x1x4x4x2xf32, #tpu.memory_space<vmem>>, vector<1x1x1x4x1xf32>,
    %c0_126 = arith.constant 0 : index
    %c0_127 = arith.constant 0 : index
    %c0_128 = arith.constant 0 : index
    %c0_129 = arith.constant 0 : index
    %c1_130 = arith.constant 1 : index
    %268 = vector.load %arg8[%c0_126, %c0_127, %c0_128, %c0_129, %c1_130] : memref<1x1x4x4x2xf32, #tpu.memory_space<vmem>>, vector<1x1x1x4x1xf32>
    %269 = vector.shape_cast %268 : vector<1x1x1x4x1xf32> to vector<4x1xf32>
    %270 = vector.shape_cast %264 : vector<4x1xf32> to vector<1x1x1x4x1xf32>
    tpu.vector_store %arg8[%c0_126, %c0_127, %c0_128, %c0_129, %c1_130], %270 {strides = array<i32>} : memref<1x1x4x4x2xf32, #tpu.memory_space<vmem>>, vector<1x1x1x4x1xf32>,
    %cst_131 = arith.constant 0.000000e+00 : f32
    %271 = vector.broadcast %cst_131 : f32 to vector<4x17xf32>
    %272 = vector.extract_strided_slice %23 {offsets = [0, 0], sizes = [4, 239], strides = [1, 1]} : vector<4x256xf32> to vector<4x239xf32>
    %273 = tpu.concatenate %271, %272 in 1 : vector<4x17xf32>, vector<4x239xf32> -> vector<4x256xf32>
    %cst_132 = arith.constant 0.000000e+00 : f32
    %274 = vector.shape_cast %76 : vector<1x256xi1> to vector<1x256xi1>
    %275 = vector.broadcast %274 : vector<1x256xi1> to vector<4x256xi1>
    %276 = vector.broadcast %cst_132 : f32 to vector<4x256xf32>
    %277 = arith.select %275, %273, %276 : vector<4x256xi1>, vector<4x256xf32>
    %c0_133 = arith.constant 0 : index
    %c0_134 = arith.constant 0 : index
    %278 = vector.load %arg9[%c0_133, %c0_134] : memref<108x256xf32, #tpu.memory_space<vmem>>, vector<4x256xf32>
    tpu.vector_store %arg9[%c0_133, %c0_134], %277 {strides = array<i32>} : memref<108x256xf32, #tpu.memory_space<vmem>>, vector<4x256xf32>,
    %cst_135 = arith.constant 0.000000e+00 : f32
    %279 = vector.broadcast %cst_135 : f32 to vector<4x16xf32>
    %280 = vector.extract_strided_slice %23 {offsets = [0, 0], sizes = [4, 240], strides = [1, 1]} : vector<4x256xf32> to vector<4x240xf32>
    %281 = tpu.concatenate %279, %280 in 1 : vector<4x16xf32>, vector<4x240xf32> -> vector<4x256xf32>
    %c4_136 = arith.constant 4 : index
    %c0_137 = arith.constant 0 : index
    %282 = vector.load %arg9[%c4_136, %c0_137] : memref<108x256xf32, #tpu.memory_space<vmem>>, vector<4x256xf32>
    tpu.vector_store %arg9[%c4_136, %c0_137], %281 {strides = array<i32>} : memref<108x256xf32, #tpu.memory_space<vmem>>, vector<4x256xf32>,
    %cst_138 = arith.constant 0.000000e+00 : f32
    %283 = vector.broadcast %cst_138 : f32 to vector<4x15xf32>
    %284 = vector.extract_strided_slice %23 {offsets = [0, 0], sizes = [4, 241], strides = [1, 1]} : vector<4x256xf32> to vector<4x241xf32>
    %285 = tpu.concatenate %283, %284 in 1 : vector<4x15xf32>, vector<4x241xf32> -> vector<4x256xf32>
    %cst_139 = arith.constant 0.000000e+00 : f32
    %286 = vector.shape_cast %78 : vector<1x256xi1> to vector<1x256xi1>
    %287 = vector.broadcast %286 : vector<1x256xi1> to vector<4x256xi1>
    %288 = vector.broadcast %cst_139 : f32 to vector<4x256xf32>
    %289 = arith.select %287, %285, %288 : vector<4x256xi1>, vector<4x256xf32>
    %c8_140 = arith.constant 8 : index
    %c0_141 = arith.constant 0 : index
    %290 = vector.load %arg9[%c8_140, %c0_141] : memref<108x256xf32, #tpu.memory_space<vmem>>, vector<4x256xf32>
    tpu.vector_store %arg9[%c8_140, %c0_141], %289 {strides = array<i32>} : memref<108x256xf32, #tpu.memory_space<vmem>>, vector<4x256xf32>,
    %cst_142 = arith.constant 0.000000e+00 : f32
    %291 = vector.broadcast %cst_142 : f32 to vector<4x1xf32>
    %292 = vector.extract_strided_slice %23 {offsets = [0, 0], sizes = [4, 255], strides = [1, 1]} : vector<4x256xf32> to vector<4x255xf32>
    %293 = tpu.concatenate %291, %292 in 1 : vector<4x1xf32>, vector<4x255xf32> -> vector<4x256xf32>
    %cst_143 = arith.constant 0.000000e+00 : f32
    %294 = vector.shape_cast %76 : vector<1x256xi1> to vector<1x256xi1>
    %295 = vector.broadcast %294 : vector<1x256xi1> to vector<4x256xi1>
    %296 = vector.broadcast %cst_143 : f32 to vector<4x256xf32>
    %297 = arith.select %295, %293, %296 : vector<4x256xi1>, vector<4x256xf32>
    %c12_144 = arith.constant 12 : index
    %c0_145 = arith.constant 0 : index
    %298 = vector.load %arg9[%c12_144, %c0_145] : memref<108x256xf32, #tpu.memory_space<vmem>>, vector<4x256xf32>
    tpu.vector_store %arg9[%c12_144, %c0_145], %297 {strides = array<i32>} : memref<108x256xf32, #tpu.memory_space<vmem>>, vector<4x256xf32>,
    %c16_146 = arith.constant 16 : index
    %c0_147 = arith.constant 0 : index
    %299 = vector.load %arg9[%c16_146, %c0_147] : memref<108x256xf32, #tpu.memory_space<vmem>>, vector<4x256xf32>
    tpu.vector_store %arg9[%c16_146, %c0_147], %23 {strides = array<i32>} : memref<108x256xf32, #tpu.memory_space<vmem>>, vector<4x256xf32>,
    %cst_148 = arith.constant 0.000000e+00 : f32
    %300 = vector.broadcast %cst_148 : f32 to vector<4x1xf32>
    %301 = vector.extract_strided_slice %23 {offsets = [0, 1], sizes = [4, 255], strides = [1, 1]} : vector<4x256xf32> to vector<4x255xf32>
    %302 = tpu.concatenate %301, %300 in 1 : vector<4x255xf32>, vector<4x1xf32> -> vector<4x256xf32>
    %cst_149 = arith.constant 0.000000e+00 : f32
    %303 = vector.shape_cast %78 : vector<1x256xi1> to vector<1x256xi1>
    %304 = vector.broadcast %303 : vector<1x256xi1> to vector<4x256xi1>
    %305 = vector.broadcast %cst_149 : f32 to vector<4x256xf32>
    %306 = arith.select %304, %302, %305 : vector<4x256xi1>, vector<4x256xf32>
    %c20_150 = arith.constant 20 : index
    %c0_151 = arith.constant 0 : index
    %307 = vector.load %arg9[%c20_150, %c0_151] : memref<108x256xf32, #tpu.memory_space<vmem>>, vector<4x256xf32>
    tpu.vector_store %arg9[%c20_150, %c0_151], %306 {strides = array<i32>} : memref<108x256xf32, #tpu.memory_space<vmem>>, vector<4x256xf32>,
    %cst_152 = arith.constant 0.000000e+00 : f32
    %308 = vector.broadcast %cst_152 : f32 to vector<4x15xf32>
    %309 = vector.extract_strided_slice %23 {offsets = [0, 15], sizes = [4, 241], strides = [1, 1]} : vector<4x256xf32> to vector<4x241xf32>
    %310 = tpu.concatenate %309, %308 in 1 : vector<4x241xf32>, vector<4x15xf32> -> vector<4x256xf32>
    %cst_153 = arith.constant 0.000000e+00 : f32
    %311 = vector.shape_cast %76 : vector<1x256xi1> to vector<1x256xi1>
    %312 = vector.broadcast %311 : vector<1x256xi1> to vector<4x256xi1>
    %313 = vector.broadcast %cst_153 : f32 to vector<4x256xf32>
    %314 = arith.select %312, %310, %313 : vector<4x256xi1>, vector<4x256xf32>
    %c24_154 = arith.constant 24 : index
    %c0_155 = arith.constant 0 : index
    %315 = vector.load %arg9[%c24_154, %c0_155] : memref<108x256xf32, #tpu.memory_space<vmem>>, vector<4x256xf32>
    tpu.vector_store %arg9[%c24_154, %c0_155], %314 {strides = array<i32>} : memref<108x256xf32, #tpu.memory_space<vmem>>, vector<4x256xf32>,
    %cst_156 = arith.constant 0.000000e+00 : f32
    %316 = vector.broadcast %cst_156 : f32 to vector<4x16xf32>
    %317 = vector.extract_strided_slice %23 {offsets = [0, 16], sizes = [4, 240], strides = [1, 1]} : vector<4x256xf32> to vector<4x240xf32>
    %318 = tpu.concatenate %317, %316 in 1 : vector<4x240xf32>, vector<4x16xf32> -> vector<4x256xf32>
    %c28_157 = arith.constant 28 : index
    %c0_158 = arith.constant 0 : index
    %319 = vector.load %arg9[%c28_157, %c0_158] : memref<108x256xf32, #tpu.memory_space<vmem>>, vector<4x256xf32>
    tpu.vector_store %arg9[%c28_157, %c0_158], %318 {strides = array<i32>} : memref<108x256xf32, #tpu.memory_space<vmem>>, vector<4x256xf32>,
    %cst_159 = arith.constant 0.000000e+00 : f32
    %320 = vector.broadcast %cst_159 : f32 to vector<4x17xf32>
    %321 = vector.extract_strided_slice %23 {offsets = [0, 17], sizes = [4, 239], strides = [1, 1]} : vector<4x256xf32> to vector<4x239xf32>
    %322 = tpu.concatenate %321, %320 in 1 : vector<4x239xf32>, vector<4x17xf32> -> vector<4x256xf32>
    %cst_160 = arith.constant 0.000000e+00 : f32
    %323 = vector.shape_cast %78 : vector<1x256xi1> to vector<1x256xi1>
    %324 = vector.broadcast %323 : vector<1x256xi1> to vector<4x256xi1>
    %325 = vector.broadcast %cst_160 : f32 to vector<4x256xf32>
    %326 = arith.select %324, %322, %325 : vector<4x256xi1>, vector<4x256xf32>
    %c32_161 = arith.constant 32 : index
    %c0_162 = arith.constant 0 : index
    %327 = vector.load %arg9[%c32_161, %c0_162] : memref<108x256xf32, #tpu.memory_space<vmem>>, vector<4x256xf32>
    tpu.vector_store %arg9[%c32_161, %c0_162], %326 {strides = array<i32>} : memref<108x256xf32, #tpu.memory_space<vmem>>, vector<4x256xf32>,
    %cst_163 = arith.constant 0.000000e+00 : f32
    %328 = vector.broadcast %cst_163 : f32 to vector<4x17xf32>
    %329 = vector.extract_strided_slice %31 {offsets = [0, 0], sizes = [4, 239], strides = [1, 1]} : vector<4x256xf32> to vector<4x239xf32>
    %330 = tpu.concatenate %328, %329 in 1 : vector<4x17xf32>, vector<4x239xf32> -> vector<4x256xf32>
    %cst_164 = arith.constant 0.000000e+00 : f32
    %331 = vector.shape_cast %76 : vector<1x256xi1> to vector<1x256xi1>
    %332 = vector.broadcast %331 : vector<1x256xi1> to vector<4x256xi1>
    %333 = vector.broadcast %cst_164 : f32 to vector<4x256xf32>
    %334 = arith.select %332, %330, %333 : vector<4x256xi1>, vector<4x256xf32>
    %c36_165 = arith.constant 36 : index
    %c0_166 = arith.constant 0 : index
    %335 = vector.load %arg9[%c36_165, %c0_166] : memref<108x256xf32, #tpu.memory_space<vmem>>, vector<4x256xf32>
    tpu.vector_store %arg9[%c36_165, %c0_166], %334 {strides = array<i32>} : memref<108x256xf32, #tpu.memory_space<vmem>>, vector<4x256xf32>,
    %cst_167 = arith.constant 0.000000e+00 : f32
    %336 = vector.broadcast %cst_167 : f32 to vector<4x16xf32>
    %337 = vector.extract_strided_slice %31 {offsets = [0, 0], sizes = [4, 240], strides = [1, 1]} : vector<4x256xf32> to vector<4x240xf32>
    %338 = tpu.concatenate %336, %337 in 1 : vector<4x16xf32>, vector<4x240xf32> -> vector<4x256xf32>
    %c40_168 = arith.constant 40 : index
    %c0_169 = arith.constant 0 : index
    %339 = vector.load %arg9[%c40_168, %c0_169] : memref<108x256xf32, #tpu.memory_space<vmem>>, vector<4x256xf32>
    tpu.vector_store %arg9[%c40_168, %c0_169], %338 {strides = array<i32>} : memref<108x256xf32, #tpu.memory_space<vmem>>, vector<4x256xf32>,
    %cst_170 = arith.constant 0.000000e+00 : f32
    %340 = vector.broadcast %cst_170 : f32 to vector<4x15xf32>
    %341 = vector.extract_strided_slice %31 {offsets = [0, 0], sizes = [4, 241], strides = [1, 1]} : vector<4x256xf32> to vector<4x241xf32>
    %342 = tpu.concatenate %340, %341 in 1 : vector<4x15xf32>, vector<4x241xf32> -> vector<4x256xf32>
    %cst_171 = arith.constant 0.000000e+00 : f32
    %343 = vector.shape_cast %78 : vector<1x256xi1> to vector<1x256xi1>
    %344 = vector.broadcast %343 : vector<1x256xi1> to vector<4x256xi1>
    %345 = vector.broadcast %cst_171 : f32 to vector<4x256xf32>
    %346 = arith.select %344, %342, %345 : vector<4x256xi1>, vector<4x256xf32>
    %c44_172 = arith.constant 44 : index
    %c0_173 = arith.constant 0 : index
    %347 = vector.load %arg9[%c44_172, %c0_173] : memref<108x256xf32, #tpu.memory_space<vmem>>, vector<4x256xf32>
    tpu.vector_store %arg9[%c44_172, %c0_173], %346 {strides = array<i32>} : memref<108x256xf32, #tpu.memory_space<vmem>>, vector<4x256xf32>,
    %cst_174 = arith.constant 0.000000e+00 : f32
    %348 = vector.broadcast %cst_174 : f32 to vector<4x1xf32>
    %349 = vector.extract_strided_slice %31 {offsets = [0, 0], sizes = [4, 255], strides = [1, 1]} : vector<4x256xf32> to vector<4x255xf32>
    %350 = tpu.concatenate %348, %349 in 1 : vector<4x1xf32>, vector<4x255xf32> -> vector<4x256xf32>
    %cst_175 = arith.constant 0.000000e+00 : f32
    %351 = vector.shape_cast %76 : vector<1x256xi1> to vector<1x256xi1>
    %352 = vector.broadcast %351 : vector<1x256xi1> to vector<4x256xi1>
    %353 = vector.broadcast %cst_175 : f32 to vector<4x256xf32>
    %354 = arith.select %352, %350, %353 : vector<4x256xi1>, vector<4x256xf32>
    %c48_176 = arith.constant 48 : index
    %c0_177 = arith.constant 0 : index
    %355 = vector.load %arg9[%c48_176, %c0_177] : memref<108x256xf32, #tpu.memory_space<vmem>>, vector<4x256xf32>
    tpu.vector_store %arg9[%c48_176, %c0_177], %354 {strides = array<i32>} : memref<108x256xf32, #tpu.memory_space<vmem>>, vector<4x256xf32>,
    %c52_178 = arith.constant 52 : index
    %c0_179 = arith.constant 0 : index
    %356 = vector.load %arg9[%c52_178, %c0_179] : memref<108x256xf32, #tpu.memory_space<vmem>>, vector<4x256xf32>
    tpu.vector_store %arg9[%c52_178, %c0_179], %31 {strides = array<i32>} : memref<108x256xf32, #tpu.memory_space<vmem>>, vector<4x256xf32>,
    %cst_180 = arith.constant 0.000000e+00 : f32
    %357 = vector.broadcast %cst_180 : f32 to vector<4x1xf32>
    %358 = vector.extract_strided_slice %31 {offsets = [0, 1], sizes = [4, 255], strides = [1, 1]} : vector<4x256xf32> to vector<4x255xf32>
    %359 = tpu.concatenate %358, %357 in 1 : vector<4x255xf32>, vector<4x1xf32> -> vector<4x256xf32>
    %cst_181 = arith.constant 0.000000e+00 : f32
    %360 = vector.shape_cast %78 : vector<1x256xi1> to vector<1x256xi1>
    %361 = vector.broadcast %360 : vector<1x256xi1> to vector<4x256xi1>
    %362 = vector.broadcast %cst_181 : f32 to vector<4x256xf32>
    %363 = arith.select %361, %359, %362 : vector<4x256xi1>, vector<4x256xf32>
    %c56_182 = arith.constant 56 : index
    %c0_183 = arith.constant 0 : index
    %364 = vector.load %arg9[%c56_182, %c0_183] : memref<108x256xf32, #tpu.memory_space<vmem>>, vector<4x256xf32>
    tpu.vector_store %arg9[%c56_182, %c0_183], %363 {strides = array<i32>} : memref<108x256xf32, #tpu.memory_space<vmem>>, vector<4x256xf32>,
    %cst_184 = arith.constant 0.000000e+00 : f32
    %365 = vector.broadcast %cst_184 : f32 to vector<4x15xf32>
    %366 = vector.extract_strided_slice %31 {offsets = [0, 15], sizes = [4, 241], strides = [1, 1]} : vector<4x256xf32> to vector<4x241xf32>
    %367 = tpu.concatenate %366, %365 in 1 : vector<4x241xf32>, vector<4x15xf32> -> vector<4x256xf32>
    %cst_185 = arith.constant 0.000000e+00 : f32
    %368 = vector.shape_cast %76 : vector<1x256xi1> to vector<1x256xi1>
    %369 = vector.broadcast %368 : vector<1x256xi1> to vector<4x256xi1>
    %370 = vector.broadcast %cst_185 : f32 to vector<4x256xf32>
    %371 = arith.select %369, %367, %370 : vector<4x256xi1>, vector<4x256xf32>
    %c60_186 = arith.constant 60 : index
    %c0_187 = arith.constant 0 : index
    %372 = vector.load %arg9[%c60_186, %c0_187] : memref<108x256xf32, #tpu.memory_space<vmem>>, vector<4x256xf32>
    tpu.vector_store %arg9[%c60_186, %c0_187], %371 {strides = array<i32>} : memref<108x256xf32, #tpu.memory_space<vmem>>, vector<4x256xf32>,
    %cst_188 = arith.constant 0.000000e+00 : f32
    %373 = vector.broadcast %cst_188 : f32 to vector<4x16xf32>
    %374 = vector.extract_strided_slice %31 {offsets = [0, 16], sizes = [4, 240], strides = [1, 1]} : vector<4x256xf32> to vector<4x240xf32>
    %375 = tpu.concatenate %374, %373 in 1 : vector<4x240xf32>, vector<4x16xf32> -> vector<4x256xf32>
    %c64_189 = arith.constant 64 : index
    %c0_190 = arith.constant 0 : index
    %376 = vector.load %arg9[%c64_189, %c0_190] : memref<108x256xf32, #tpu.memory_space<vmem>>, vector<4x256xf32>
    tpu.vector_store %arg9[%c64_189, %c0_190], %375 {strides = array<i32>} : memref<108x256xf32, #tpu.memory_space<vmem>>, vector<4x256xf32>,
    %cst_191 = arith.constant 0.000000e+00 : f32
    %377 = vector.broadcast %cst_191 : f32 to vector<4x17xf32>
    %378 = vector.extract_strided_slice %31 {offsets = [0, 17], sizes = [4, 239], strides = [1, 1]} : vector<4x256xf32> to vector<4x239xf32>
    %379 = tpu.concatenate %378, %377 in 1 : vector<4x239xf32>, vector<4x17xf32> -> vector<4x256xf32>
    %cst_192 = arith.constant 0.000000e+00 : f32
    %380 = vector.shape_cast %78 : vector<1x256xi1> to vector<1x256xi1>
    %381 = vector.broadcast %380 : vector<1x256xi1> to vector<4x256xi1>
    %382 = vector.broadcast %cst_192 : f32 to vector<4x256xf32>
    %383 = arith.select %381, %379, %382 : vector<4x256xi1>, vector<4x256xf32>
    %c68_193 = arith.constant 68 : index
    %c0_194 = arith.constant 0 : index
    %384 = vector.load %arg9[%c68_193, %c0_194] : memref<108x256xf32, #tpu.memory_space<vmem>>, vector<4x256xf32>
    tpu.vector_store %arg9[%c68_193, %c0_194], %383 {strides = array<i32>} : memref<108x256xf32, #tpu.memory_space<vmem>>, vector<4x256xf32>,
    %cst_195 = arith.constant 0.000000e+00 : f32
    %385 = vector.broadcast %cst_195 : f32 to vector<4x17xf32>
    %386 = vector.extract_strided_slice %39 {offsets = [0, 0], sizes = [4, 239], strides = [1, 1]} : vector<4x256xf32> to vector<4x239xf32>
    %387 = tpu.concatenate %385, %386 in 1 : vector<4x17xf32>, vector<4x239xf32> -> vector<4x256xf32>
    %cst_196 = arith.constant 0.000000e+00 : f32
    %388 = vector.shape_cast %76 : vector<1x256xi1> to vector<1x256xi1>
    %389 = vector.broadcast %388 : vector<1x256xi1> to vector<4x256xi1>
    %390 = vector.broadcast %cst_196 : f32 to vector<4x256xf32>
    %391 = arith.select %389, %387, %390 : vector<4x256xi1>, vector<4x256xf32>
    %c72_197 = arith.constant 72 : index
    %c0_198 = arith.constant 0 : index
    %392 = vector.load %arg9[%c72_197, %c0_198] : memref<108x256xf32, #tpu.memory_space<vmem>>, vector<4x256xf32>
    tpu.vector_store %arg9[%c72_197, %c0_198], %391 {strides = array<i32>} : memref<108x256xf32, #tpu.memory_space<vmem>>, vector<4x256xf32>,
    %cst_199 = arith.constant 0.000000e+00 : f32
    %393 = vector.broadcast %cst_199 : f32 to vector<4x16xf32>
    %394 = vector.extract_strided_slice %39 {offsets = [0, 0], sizes = [4, 240], strides = [1, 1]} : vector<4x256xf32> to vector<4x240xf32>
    %395 = tpu.concatenate %393, %394 in 1 : vector<4x16xf32>, vector<4x240xf32> -> vector<4x256xf32>
    %c76_200 = arith.constant 76 : index
    %c0_201 = arith.constant 0 : index
    %396 = vector.load %arg9[%c76_200, %c0_201] : memref<108x256xf32, #tpu.memory_space<vmem>>, vector<4x256xf32>
    tpu.vector_store %arg9[%c76_200, %c0_201], %395 {strides = array<i32>} : memref<108x256xf32, #tpu.memory_space<vmem>>, vector<4x256xf32>,
    %cst_202 = arith.constant 0.000000e+00 : f32
    %397 = vector.broadcast %cst_202 : f32 to vector<4x15xf32>
    %398 = vector.extract_strided_slice %39 {offsets = [0, 0], sizes = [4, 241], strides = [1, 1]} : vector<4x256xf32> to vector<4x241xf32>
    %399 = tpu.concatenate %397, %398 in 1 : vector<4x15xf32>, vector<4x241xf32> -> vector<4x256xf32>
    %cst_203 = arith.constant 0.000000e+00 : f32
    %400 = vector.shape_cast %78 : vector<1x256xi1> to vector<1x256xi1>
    %401 = vector.broadcast %400 : vector<1x256xi1> to vector<4x256xi1>
    %402 = vector.broadcast %cst_203 : f32 to vector<4x256xf32>
    %403 = arith.select %401, %399, %402 : vector<4x256xi1>, vector<4x256xf32>
    %c80_204 = arith.constant 80 : index
    %c0_205 = arith.constant 0 : index
    %404 = vector.load %arg9[%c80_204, %c0_205] : memref<108x256xf32, #tpu.memory_space<vmem>>, vector<4x256xf32>
    tpu.vector_store %arg9[%c80_204, %c0_205], %403 {strides = array<i32>} : memref<108x256xf32, #tpu.memory_space<vmem>>, vector<4x256xf32>,
    %cst_206 = arith.constant 0.000000e+00 : f32
    %405 = vector.broadcast %cst_206 : f32 to vector<4x1xf32>
    %406 = vector.extract_strided_slice %39 {offsets = [0, 0], sizes = [4, 255], strides = [1, 1]} : vector<4x256xf32> to vector<4x255xf32>
    %407 = tpu.concatenate %405, %406 in 1 : vector<4x1xf32>, vector<4x255xf32> -> vector<4x256xf32>
    %cst_207 = arith.constant 0.000000e+00 : f32
    %408 = vector.shape_cast %76 : vector<1x256xi1> to vector<1x256xi1>
    %409 = vector.broadcast %408 : vector<1x256xi1> to vector<4x256xi1>
    %410 = vector.broadcast %cst_207 : f32 to vector<4x256xf32>
    %411 = arith.select %409, %407, %410 : vector<4x256xi1>, vector<4x256xf32>
    %c84_208 = arith.constant 84 : index
    %c0_209 = arith.constant 0 : index
    %412 = vector.load %arg9[%c84_208, %c0_209] : memref<108x256xf32, #tpu.memory_space<vmem>>, vector<4x256xf32>
    tpu.vector_store %arg9[%c84_208, %c0_209], %411 {strides = array<i32>} : memref<108x256xf32, #tpu.memory_space<vmem>>, vector<4x256xf32>,
    %c88_210 = arith.constant 88 : index
    %c0_211 = arith.constant 0 : index
    %413 = vector.load %arg9[%c88_210, %c0_211] : memref<108x256xf32, #tpu.memory_space<vmem>>, vector<4x256xf32>
    tpu.vector_store %arg9[%c88_210, %c0_211], %39 {strides = array<i32>} : memref<108x256xf32, #tpu.memory_space<vmem>>, vector<4x256xf32>,
    %cst_212 = arith.constant 0.000000e+00 : f32
    %414 = vector.broadcast %cst_212 : f32 to vector<4x1xf32>
    %415 = vector.extract_strided_slice %39 {offsets = [0, 1], sizes = [4, 255], strides = [1, 1]} : vector<4x256xf32> to vector<4x255xf32>
    %416 = tpu.concatenate %415, %414 in 1 : vector<4x255xf32>, vector<4x1xf32> -> vector<4x256xf32>
    %cst_213 = arith.constant 0.000000e+00 : f32
    %417 = vector.shape_cast %78 : vector<1x256xi1> to vector<1x256xi1>
    %418 = vector.broadcast %417 : vector<1x256xi1> to vector<4x256xi1>
    %419 = vector.broadcast %cst_213 : f32 to vector<4x256xf32>
    %420 = arith.select %418, %416, %419 : vector<4x256xi1>, vector<4x256xf32>
    %c92_214 = arith.constant 92 : index
    %c0_215 = arith.constant 0 : index
    %421 = vector.load %arg9[%c92_214, %c0_215] : memref<108x256xf32, #tpu.memory_space<vmem>>, vector<4x256xf32>
    tpu.vector_store %arg9[%c92_214, %c0_215], %420 {strides = array<i32>} : memref<108x256xf32, #tpu.memory_space<vmem>>, vector<4x256xf32>,
    %cst_216 = arith.constant 0.000000e+00 : f32
    %422 = vector.broadcast %cst_216 : f32 to vector<4x15xf32>
    %423 = vector.extract_strided_slice %39 {offsets = [0, 15], sizes = [4, 241], strides = [1, 1]} : vector<4x256xf32> to vector<4x241xf32>
    %424 = tpu.concatenate %423, %422 in 1 : vector<4x241xf32>, vector<4x15xf32> -> vector<4x256xf32>
    %cst_217 = arith.constant 0.000000e+00 : f32
    %425 = vector.shape_cast %76 : vector<1x256xi1> to vector<1x256xi1>
    %426 = vector.broadcast %425 : vector<1x256xi1> to vector<4x256xi1>
    %427 = vector.broadcast %cst_217 : f32 to vector<4x256xf32>
    %428 = arith.select %426, %424, %427 : vector<4x256xi1>, vector<4x256xf32>
    %c96_218 = arith.constant 96 : index
    %c0_219 = arith.constant 0 : index
    %429 = vector.load %arg9[%c96_218, %c0_219] : memref<108x256xf32, #tpu.memory_space<vmem>>, vector<4x256xf32>
    tpu.vector_store %arg9[%c96_218, %c0_219], %428 {strides = array<i32>} : memref<108x256xf32, #tpu.memory_space<vmem>>, vector<4x256xf32>,
    %cst_220 = arith.constant 0.000000e+00 : f32
    %430 = vector.broadcast %cst_220 : f32 to vector<4x16xf32>
    %431 = vector.extract_strided_slice %39 {offsets = [0, 16], sizes = [4, 240], strides = [1, 1]} : vector<4x256xf32> to vector<4x240xf32>
    %432 = tpu.concatenate %431, %430 in 1 : vector<4x240xf32>, vector<4x16xf32> -> vector<4x256xf32>
    %c100_221 = arith.constant 100 : index
    %c0_222 = arith.constant 0 : index
    %433 = vector.load %arg9[%c100_221, %c0_222] : memref<108x256xf32, #tpu.memory_space<vmem>>, vector<4x256xf32>
    tpu.vector_store %arg9[%c100_221, %c0_222], %432 {strides = array<i32>} : memref<108x256xf32, #tpu.memory_space<vmem>>, vector<4x256xf32>,
    %cst_223 = arith.constant 0.000000e+00 : f32
    %434 = vector.broadcast %cst_223 : f32 to vector<4x17xf32>
    %435 = vector.extract_strided_slice %39 {offsets = [0, 17], sizes = [4, 239], strides = [1, 1]} : vector<4x256xf32> to vector<4x239xf32>
    %436 = tpu.concatenate %435, %434 in 1 : vector<4x239xf32>, vector<4x17xf32> -> vector<4x256xf32>
    %cst_224 = arith.constant 0.000000e+00 : f32
    %437 = vector.shape_cast %78 : vector<1x256xi1> to vector<1x256xi1>
    %438 = vector.broadcast %437 : vector<1x256xi1> to vector<4x256xi1>
    %439 = vector.broadcast %cst_224 : f32 to vector<4x256xf32>
    %440 = arith.select %438, %436, %439 : vector<4x256xi1>, vector<4x256xf32>
    %c104_225 = arith.constant 104 : index
    %c0_226 = arith.constant 0 : index
    %441 = vector.load %arg9[%c104_225, %c0_226] : memref<108x256xf32, #tpu.memory_space<vmem>>, vector<4x256xf32>
    tpu.vector_store %arg9[%c104_225, %c0_226], %440 {strides = array<i32>} : memref<108x256xf32, #tpu.memory_space<vmem>>, vector<4x256xf32>,
    %c0_227 = arith.constant 0 : index
    %c0_228 = arith.constant 0 : index
    %442 = vector.load %arg9[%c0_227, %c0_228] : memref<108x256xf32, #tpu.memory_space<vmem>>, vector<108x256xf32>
    %cst_229 = arith.constant dense<0.000000e+00> : vector<4x256xf32>
    %443 = tpu.matmul %79, %442, %cst_229 {dimension_numbers = #tpu.dot_dimension_numbers<[1], [0], [0], [1], [0, 0, 1, 1], [], []>} : vector<4x108xf32>, vector<108x256xf32>, vector<4x256xf32> -> vector<4x256xf32>
    %c0_230 = arith.constant 0 : index
    %c1_231 = arith.constant 1 : index
    %c0_232 = arith.constant 0 : index
    %c0_233 = arith.constant 0 : index
    %444 = vector.load %arg7[%c0_230, %c1_231, %c0_232, %c0_233] : memref<1x4x4x256xf32, #tpu.memory_space<vmem>>, vector<1x1x4x256xf32>
    %445 = vector.shape_cast %444 : vector<1x1x4x256xf32> to vector<4x256xf32>
    %446 = vector.shape_cast %443 : vector<4x256xf32> to vector<1x1x4x256xf32>
    tpu.vector_store %arg7[%c0_230, %c1_231, %c0_232, %c0_233], %446 {strides = array<i32>} : memref<1x4x4x256xf32, #tpu.memory_space<vmem>>, vector<1x1x4x256xf32>,
    %cst_234 = arith.constant dense<0.000000e+00> : vector<4xf32>
    %447 = vector.multi_reduction <add>, %443, %cst_234 [1] : vector<4x256xf32> to vector<4xf32>
    %448 = vector.shape_cast %447 : vector<4xf32> to vector<4x1xf32>
    %cst_235 = arith.constant 3.906250e-03 : f32
    %449 = vector.broadcast %cst_235 : f32 to vector<4x1xf32>
    %450 = arith.mulf %448, %449 : vector<4x1xf32>
    %451 = vector.broadcast %450 : vector<4x1xf32> to vector<4x256xf32>
    %452 = arith.subf %443, %451 : vector<4x256xf32>
    %453 = arith.mulf %452, %452 : vector<4x256xf32>
    %cst_236 = arith.constant dense<0.000000e+00> : vector<4xf32>
    %454 = vector.multi_reduction <add>, %453, %cst_236 [1] : vector<4x256xf32> to vector<4xf32>
    %455 = vector.shape_cast %454 : vector<4xf32> to vector<4x1xf32>
    %c0_237 = arith.constant 0 : index
    %c0_238 = arith.constant 0 : index
    %c1_239 = arith.constant 1 : index
    %c0_240 = arith.constant 0 : index
    %c0_241 = arith.constant 0 : index
    %456 = vector.load %arg8[%c0_237, %c0_238, %c1_239, %c0_240, %c0_241] : memref<1x1x4x4x2xf32, #tpu.memory_space<vmem>>, vector<1x1x1x4x1xf32>
    %457 = vector.shape_cast %456 : vector<1x1x1x4x1xf32> to vector<4x1xf32>
    %458 = vector.shape_cast %448 : vector<4x1xf32> to vector<1x1x1x4x1xf32>
    tpu.vector_store %arg8[%c0_237, %c0_238, %c1_239, %c0_240, %c0_241], %458 {strides = array<i32>} : memref<1x1x4x4x2xf32, #tpu.memory_space<vmem>>, vector<1x1x1x4x1xf32>,
    %c0_242 = arith.constant 0 : index
    %c0_243 = arith.constant 0 : index
    %c1_244 = arith.constant 1 : index
    %c0_245 = arith.constant 0 : index
    %c1_246 = arith.constant 1 : index
    %459 = vector.load %arg8[%c0_242, %c0_243, %c1_244, %c0_245, %c1_246] : memref<1x1x4x4x2xf32, #tpu.memory_space<vmem>>, vector<1x1x1x4x1xf32>
    %460 = vector.shape_cast %459 : vector<1x1x1x4x1xf32> to vector<4x1xf32>
    %461 = vector.shape_cast %455 : vector<4x1xf32> to vector<1x1x1x4x1xf32>
    tpu.vector_store %arg8[%c0_242, %c0_243, %c1_244, %c0_245, %c1_246], %461 {strides = array<i32>} : memref<1x1x4x4x2xf32, #tpu.memory_space<vmem>>, vector<1x1x1x4x1xf32>,
    %cst_247 = arith.constant 0.000000e+00 : f32
    %462 = vector.broadcast %cst_247 : f32 to vector<4x17xf32>
    %463 = vector.extract_strided_slice %31 {offsets = [0, 0], sizes = [4, 239], strides = [1, 1]} : vector<4x256xf32> to vector<4x239xf32>
    %464 = tpu.concatenate %462, %463 in 1 : vector<4x17xf32>, vector<4x239xf32> -> vector<4x256xf32>
    %cst_248 = arith.constant 0.000000e+00 : f32
    %465 = vector.shape_cast %76 : vector<1x256xi1> to vector<1x256xi1>
    %466 = vector.broadcast %465 : vector<1x256xi1> to vector<4x256xi1>
    %467 = vector.broadcast %cst_248 : f32 to vector<4x256xf32>
    %468 = arith.select %466, %464, %467 : vector<4x256xi1>, vector<4x256xf32>
    %c0_249 = arith.constant 0 : index
    %c0_250 = arith.constant 0 : index
    %469 = vector.load %arg9[%c0_249, %c0_250] : memref<108x256xf32, #tpu.memory_space<vmem>>, vector<4x256xf32>
    tpu.vector_store %arg9[%c0_249, %c0_250], %468 {strides = array<i32>} : memref<108x256xf32, #tpu.memory_space<vmem>>, vector<4x256xf32>,
    %cst_251 = arith.constant 0.000000e+00 : f32
    %470 = vector.broadcast %cst_251 : f32 to vector<4x16xf32>
    %471 = vector.extract_strided_slice %31 {offsets = [0, 0], sizes = [4, 240], strides = [1, 1]} : vector<4x256xf32> to vector<4x240xf32>
    %472 = tpu.concatenate %470, %471 in 1 : vector<4x16xf32>, vector<4x240xf32> -> vector<4x256xf32>
    %c4_252 = arith.constant 4 : index
    %c0_253 = arith.constant 0 : index
    %473 = vector.load %arg9[%c4_252, %c0_253] : memref<108x256xf32, #tpu.memory_space<vmem>>, vector<4x256xf32>
    tpu.vector_store %arg9[%c4_252, %c0_253], %472 {strides = array<i32>} : memref<108x256xf32, #tpu.memory_space<vmem>>, vector<4x256xf32>,
    %cst_254 = arith.constant 0.000000e+00 : f32
    %474 = vector.broadcast %cst_254 : f32 to vector<4x15xf32>
    %475 = vector.extract_strided_slice %31 {offsets = [0, 0], sizes = [4, 241], strides = [1, 1]} : vector<4x256xf32> to vector<4x241xf32>
    %476 = tpu.concatenate %474, %475 in 1 : vector<4x15xf32>, vector<4x241xf32> -> vector<4x256xf32>
    %cst_255 = arith.constant 0.000000e+00 : f32
    %477 = vector.shape_cast %78 : vector<1x256xi1> to vector<1x256xi1>
    %478 = vector.broadcast %477 : vector<1x256xi1> to vector<4x256xi1>
    %479 = vector.broadcast %cst_255 : f32 to vector<4x256xf32>
    %480 = arith.select %478, %476, %479 : vector<4x256xi1>, vector<4x256xf32>
    %c8_256 = arith.constant 8 : index
    %c0_257 = arith.constant 0 : index
    %481 = vector.load %arg9[%c8_256, %c0_257] : memref<108x256xf32, #tpu.memory_space<vmem>>, vector<4x256xf32>
    tpu.vector_store %arg9[%c8_256, %c0_257], %480 {strides = array<i32>} : memref<108x256xf32, #tpu.memory_space<vmem>>, vector<4x256xf32>,
    %cst_258 = arith.constant 0.000000e+00 : f32
    %482 = vector.broadcast %cst_258 : f32 to vector<4x1xf32>
    %483 = vector.extract_strided_slice %31 {offsets = [0, 0], sizes = [4, 255], strides = [1, 1]} : vector<4x256xf32> to vector<4x255xf32>
    %484 = tpu.concatenate %482, %483 in 1 : vector<4x1xf32>, vector<4x255xf32> -> vector<4x256xf32>
    %cst_259 = arith.constant 0.000000e+00 : f32
    %485 = vector.shape_cast %76 : vector<1x256xi1> to vector<1x256xi1>
    %486 = vector.broadcast %485 : vector<1x256xi1> to vector<4x256xi1>
    %487 = vector.broadcast %cst_259 : f32 to vector<4x256xf32>
    %488 = arith.select %486, %484, %487 : vector<4x256xi1>, vector<4x256xf32>
    %c12_260 = arith.constant 12 : index
    %c0_261 = arith.constant 0 : index
    %489 = vector.load %arg9[%c12_260, %c0_261] : memref<108x256xf32, #tpu.memory_space<vmem>>, vector<4x256xf32>
    tpu.vector_store %arg9[%c12_260, %c0_261], %488 {strides = array<i32>} : memref<108x256xf32, #tpu.memory_space<vmem>>, vector<4x256xf32>,
    %c16_262 = arith.constant 16 : index
    %c0_263 = arith.constant 0 : index
    %490 = vector.load %arg9[%c16_262, %c0_263] : memref<108x256xf32, #tpu.memory_space<vmem>>, vector<4x256xf32>
    tpu.vector_store %arg9[%c16_262, %c0_263], %31 {strides = array<i32>} : memref<108x256xf32, #tpu.memory_space<vmem>>, vector<4x256xf32>,
    %cst_264 = arith.constant 0.000000e+00 : f32
    %491 = vector.broadcast %cst_264 : f32 to vector<4x1xf32>
    %492 = vector.extract_strided_slice %31 {offsets = [0, 1], sizes = [4, 255], strides = [1, 1]} : vector<4x256xf32> to vector<4x255xf32>
    %493 = tpu.concatenate %492, %491 in 1 : vector<4x255xf32>, vector<4x1xf32> -> vector<4x256xf32>
    %cst_265 = arith.constant 0.000000e+00 : f32
    %494 = vector.shape_cast %78 : vector<1x256xi1> to vector<1x256xi1>
    %495 = vector.broadcast %494 : vector<1x256xi1> to vector<4x256xi1>
    %496 = vector.broadcast %cst_265 : f32 to vector<4x256xf32>
    %497 = arith.select %495, %493, %496 : vector<4x256xi1>, vector<4x256xf32>
    %c20_266 = arith.constant 20 : index
    %c0_267 = arith.constant 0 : index
    %498 = vector.load %arg9[%c20_266, %c0_267] : memref<108x256xf32, #tpu.memory_space<vmem>>, vector<4x256xf32>
    tpu.vector_store %arg9[%c20_266, %c0_267], %497 {strides = array<i32>} : memref<108x256xf32, #tpu.memory_space<vmem>>, vector<4x256xf32>,
    %cst_268 = arith.constant 0.000000e+00 : f32
    %499 = vector.broadcast %cst_268 : f32 to vector<4x15xf32>
    %500 = vector.extract_strided_slice %31 {offsets = [0, 15], sizes = [4, 241], strides = [1, 1]} : vector<4x256xf32> to vector<4x241xf32>
    %501 = tpu.concatenate %500, %499 in 1 : vector<4x241xf32>, vector<4x15xf32> -> vector<4x256xf32>
    %cst_269 = arith.constant 0.000000e+00 : f32
    %502 = vector.shape_cast %76 : vector<1x256xi1> to vector<1x256xi1>
    %503 = vector.broadcast %502 : vector<1x256xi1> to vector<4x256xi1>
    %504 = vector.broadcast %cst_269 : f32 to vector<4x256xf32>
    %505 = arith.select %503, %501, %504 : vector<4x256xi1>, vector<4x256xf32>
    %c24_270 = arith.constant 24 : index
    %c0_271 = arith.constant 0 : index
    %506 = vector.load %arg9[%c24_270, %c0_271] : memref<108x256xf32, #tpu.memory_space<vmem>>, vector<4x256xf32>
    tpu.vector_store %arg9[%c24_270, %c0_271], %505 {strides = array<i32>} : memref<108x256xf32, #tpu.memory_space<vmem>>, vector<4x256xf32>,
    %cst_272 = arith.constant 0.000000e+00 : f32
    %507 = vector.broadcast %cst_272 : f32 to vector<4x16xf32>
    %508 = vector.extract_strided_slice %31 {offsets = [0, 16], sizes = [4, 240], strides = [1, 1]} : vector<4x256xf32> to vector<4x240xf32>
    %509 = tpu.concatenate %508, %507 in 1 : vector<4x240xf32>, vector<4x16xf32> -> vector<4x256xf32>
    %c28_273 = arith.constant 28 : index
    %c0_274 = arith.constant 0 : index
    %510 = vector.load %arg9[%c28_273, %c0_274] : memref<108x256xf32, #tpu.memory_space<vmem>>, vector<4x256xf32>
    tpu.vector_store %arg9[%c28_273, %c0_274], %509 {strides = array<i32>} : memref<108x256xf32, #tpu.memory_space<vmem>>, vector<4x256xf32>,
    %cst_275 = arith.constant 0.000000e+00 : f32
    %511 = vector.broadcast %cst_275 : f32 to vector<4x17xf32>
    %512 = vector.extract_strided_slice %31 {offsets = [0, 17], sizes = [4, 239], strides = [1, 1]} : vector<4x256xf32> to vector<4x239xf32>
    %513 = tpu.concatenate %512, %511 in 1 : vector<4x239xf32>, vector<4x17xf32> -> vector<4x256xf32>
    %cst_276 = arith.constant 0.000000e+00 : f32
    %514 = vector.shape_cast %78 : vector<1x256xi1> to vector<1x256xi1>
    %515 = vector.broadcast %514 : vector<1x256xi1> to vector<4x256xi1>
    %516 = vector.broadcast %cst_276 : f32 to vector<4x256xf32>
    %517 = arith.select %515, %513, %516 : vector<4x256xi1>, vector<4x256xf32>
    %c32_277 = arith.constant 32 : index
    %c0_278 = arith.constant 0 : index
    %518 = vector.load %arg9[%c32_277, %c0_278] : memref<108x256xf32, #tpu.memory_space<vmem>>, vector<4x256xf32>
    tpu.vector_store %arg9[%c32_277, %c0_278], %517 {strides = array<i32>} : memref<108x256xf32, #tpu.memory_space<vmem>>, vector<4x256xf32>,
    %cst_279 = arith.constant 0.000000e+00 : f32
    %519 = vector.broadcast %cst_279 : f32 to vector<4x17xf32>
    %520 = vector.extract_strided_slice %39 {offsets = [0, 0], sizes = [4, 239], strides = [1, 1]} : vector<4x256xf32> to vector<4x239xf32>
    %521 = tpu.concatenate %519, %520 in 1 : vector<4x17xf32>, vector<4x239xf32> -> vector<4x256xf32>
    %cst_280 = arith.constant 0.000000e+00 : f32
    %522 = vector.shape_cast %76 : vector<1x256xi1> to vector<1x256xi1>
    %523 = vector.broadcast %522 : vector<1x256xi1> to vector<4x256xi1>
    %524 = vector.broadcast %cst_280 : f32 to vector<4x256xf32>
    %525 = arith.select %523, %521, %524 : vector<4x256xi1>, vector<4x256xf32>
    %c36_281 = arith.constant 36 : index
    %c0_282 = arith.constant 0 : index
    %526 = vector.load %arg9[%c36_281, %c0_282] : memref<108x256xf32, #tpu.memory_space<vmem>>, vector<4x256xf32>
    tpu.vector_store %arg9[%c36_281, %c0_282], %525 {strides = array<i32>} : memref<108x256xf32, #tpu.memory_space<vmem>>, vector<4x256xf32>,
    %cst_283 = arith.constant 0.000000e+00 : f32
    %527 = vector.broadcast %cst_283 : f32 to vector<4x16xf32>
    %528 = vector.extract_strided_slice %39 {offsets = [0, 0], sizes = [4, 240], strides = [1, 1]} : vector<4x256xf32> to vector<4x240xf32>
    %529 = tpu.concatenate %527, %528 in 1 : vector<4x16xf32>, vector<4x240xf32> -> vector<4x256xf32>
    %c40_284 = arith.constant 40 : index
    %c0_285 = arith.constant 0 : index
    %530 = vector.load %arg9[%c40_284, %c0_285] : memref<108x256xf32, #tpu.memory_space<vmem>>, vector<4x256xf32>
    tpu.vector_store %arg9[%c40_284, %c0_285], %529 {strides = array<i32>} : memref<108x256xf32, #tpu.memory_space<vmem>>, vector<4x256xf32>,
    %cst_286 = arith.constant 0.000000e+00 : f32
    %531 = vector.broadcast %cst_286 : f32 to vector<4x15xf32>
    %532 = vector.extract_strided_slice %39 {offsets = [0, 0], sizes = [4, 241], strides = [1, 1]} : vector<4x256xf32> to vector<4x241xf32>
    %533 = tpu.concatenate %531, %532 in 1 : vector<4x15xf32>, vector<4x241xf32> -> vector<4x256xf32>
    %cst_287 = arith.constant 0.000000e+00 : f32
    %534 = vector.shape_cast %78 : vector<1x256xi1> to vector<1x256xi1>
    %535 = vector.broadcast %534 : vector<1x256xi1> to vector<4x256xi1>
    %536 = vector.broadcast %cst_287 : f32 to vector<4x256xf32>
    %537 = arith.select %535, %533, %536 : vector<4x256xi1>, vector<4x256xf32>
    %c44_288 = arith.constant 44 : index
    %c0_289 = arith.constant 0 : index
    %538 = vector.load %arg9[%c44_288, %c0_289] : memref<108x256xf32, #tpu.memory_space<vmem>>, vector<4x256xf32>
    tpu.vector_store %arg9[%c44_288, %c0_289], %537 {strides = array<i32>} : memref<108x256xf32, #tpu.memory_space<vmem>>, vector<4x256xf32>,
    %cst_290 = arith.constant 0.000000e+00 : f32
    %539 = vector.broadcast %cst_290 : f32 to vector<4x1xf32>
    %540 = vector.extract_strided_slice %39 {offsets = [0, 0], sizes = [4, 255], strides = [1, 1]} : vector<4x256xf32> to vector<4x255xf32>
    %541 = tpu.concatenate %539, %540 in 1 : vector<4x1xf32>, vector<4x255xf32> -> vector<4x256xf32>
    %cst_291 = arith.constant 0.000000e+00 : f32
    %542 = vector.shape_cast %76 : vector<1x256xi1> to vector<1x256xi1>
    %543 = vector.broadcast %542 : vector<1x256xi1> to vector<4x256xi1>
    %544 = vector.broadcast %cst_291 : f32 to vector<4x256xf32>
    %545 = arith.select %543, %541, %544 : vector<4x256xi1>, vector<4x256xf32>
    %c48_292 = arith.constant 48 : index
    %c0_293 = arith.constant 0 : index
    %546 = vector.load %arg9[%c48_292, %c0_293] : memref<108x256xf32, #tpu.memory_space<vmem>>, vector<4x256xf32>
    tpu.vector_store %arg9[%c48_292, %c0_293], %545 {strides = array<i32>} : memref<108x256xf32, #tpu.memory_space<vmem>>, vector<4x256xf32>,
    %c52_294 = arith.constant 52 : index
    %c0_295 = arith.constant 0 : index
    %547 = vector.load %arg9[%c52_294, %c0_295] : memref<108x256xf32, #tpu.memory_space<vmem>>, vector<4x256xf32>
    tpu.vector_store %arg9[%c52_294, %c0_295], %39 {strides = array<i32>} : memref<108x256xf32, #tpu.memory_space<vmem>>, vector<4x256xf32>,
    %cst_296 = arith.constant 0.000000e+00 : f32
    %548 = vector.broadcast %cst_296 : f32 to vector<4x1xf32>
    %549 = vector.extract_strided_slice %39 {offsets = [0, 1], sizes = [4, 255], strides = [1, 1]} : vector<4x256xf32> to vector<4x255xf32>
    %550 = tpu.concatenate %549, %548 in 1 : vector<4x255xf32>, vector<4x1xf32> -> vector<4x256xf32>
    %cst_297 = arith.constant 0.000000e+00 : f32
    %551 = vector.shape_cast %78 : vector<1x256xi1> to vector<1x256xi1>
    %552 = vector.broadcast %551 : vector<1x256xi1> to vector<4x256xi1>
    %553 = vector.broadcast %cst_297 : f32 to vector<4x256xf32>
    %554 = arith.select %552, %550, %553 : vector<4x256xi1>, vector<4x256xf32>
    %c56_298 = arith.constant 56 : index
    %c0_299 = arith.constant 0 : index
    %555 = vector.load %arg9[%c56_298, %c0_299] : memref<108x256xf32, #tpu.memory_space<vmem>>, vector<4x256xf32>
    tpu.vector_store %arg9[%c56_298, %c0_299], %554 {strides = array<i32>} : memref<108x256xf32, #tpu.memory_space<vmem>>, vector<4x256xf32>,
    %cst_300 = arith.constant 0.000000e+00 : f32
    %556 = vector.broadcast %cst_300 : f32 to vector<4x15xf32>
    %557 = vector.extract_strided_slice %39 {offsets = [0, 15], sizes = [4, 241], strides = [1, 1]} : vector<4x256xf32> to vector<4x241xf32>
    %558 = tpu.concatenate %557, %556 in 1 : vector<4x241xf32>, vector<4x15xf32> -> vector<4x256xf32>
    %cst_301 = arith.constant 0.000000e+00 : f32
    %559 = vector.shape_cast %76 : vector<1x256xi1> to vector<1x256xi1>
    %560 = vector.broadcast %559 : vector<1x256xi1> to vector<4x256xi1>
    %561 = vector.broadcast %cst_301 : f32 to vector<4x256xf32>
    %562 = arith.select %560, %558, %561 : vector<4x256xi1>, vector<4x256xf32>
    %c60_302 = arith.constant 60 : index
    %c0_303 = arith.constant 0 : index
    %563 = vector.load %arg9[%c60_302, %c0_303] : memref<108x256xf32, #tpu.memory_space<vmem>>, vector<4x256xf32>
    tpu.vector_store %arg9[%c60_302, %c0_303], %562 {strides = array<i32>} : memref<108x256xf32, #tpu.memory_space<vmem>>, vector<4x256xf32>,
    %cst_304 = arith.constant 0.000000e+00 : f32
    %564 = vector.broadcast %cst_304 : f32 to vector<4x16xf32>
    %565 = vector.extract_strided_slice %39 {offsets = [0, 16], sizes = [4, 240], strides = [1, 1]} : vector<4x256xf32> to vector<4x240xf32>
    %566 = tpu.concatenate %565, %564 in 1 : vector<4x240xf32>, vector<4x16xf32> -> vector<4x256xf32>
    %c64_305 = arith.constant 64 : index
    %c0_306 = arith.constant 0 : index
    %567 = vector.load %arg9[%c64_305, %c0_306] : memref<108x256xf32, #tpu.memory_space<vmem>>, vector<4x256xf32>
    tpu.vector_store %arg9[%c64_305, %c0_306], %566 {strides = array<i32>} : memref<108x256xf32, #tpu.memory_space<vmem>>, vector<4x256xf32>,
    %cst_307 = arith.constant 0.000000e+00 : f32
    %568 = vector.broadcast %cst_307 : f32 to vector<4x17xf32>
    %569 = vector.extract_strided_slice %39 {offsets = [0, 17], sizes = [4, 239], strides = [1, 1]} : vector<4x256xf32> to vector<4x239xf32>
    %570 = tpu.concatenate %569, %568 in 1 : vector<4x239xf32>, vector<4x17xf32> -> vector<4x256xf32>
    %cst_308 = arith.constant 0.000000e+00 : f32
    %571 = vector.shape_cast %78 : vector<1x256xi1> to vector<1x256xi1>
    %572 = vector.broadcast %571 : vector<1x256xi1> to vector<4x256xi1>
    %573 = vector.broadcast %cst_308 : f32 to vector<4x256xf32>
    %574 = arith.select %572, %570, %573 : vector<4x256xi1>, vector<4x256xf32>
    %c68_309 = arith.constant 68 : index
    %c0_310 = arith.constant 0 : index
    %575 = vector.load %arg9[%c68_309, %c0_310] : memref<108x256xf32, #tpu.memory_space<vmem>>, vector<4x256xf32>
    tpu.vector_store %arg9[%c68_309, %c0_310], %574 {strides = array<i32>} : memref<108x256xf32, #tpu.memory_space<vmem>>, vector<4x256xf32>,
    %cst_311 = arith.constant 0.000000e+00 : f32
    %576 = vector.broadcast %cst_311 : f32 to vector<4x17xf32>
    %577 = vector.extract_strided_slice %47 {offsets = [0, 0], sizes = [4, 239], strides = [1, 1]} : vector<4x256xf32> to vector<4x239xf32>
    %578 = tpu.concatenate %576, %577 in 1 : vector<4x17xf32>, vector<4x239xf32> -> vector<4x256xf32>
    %cst_312 = arith.constant 0.000000e+00 : f32
    %579 = vector.shape_cast %76 : vector<1x256xi1> to vector<1x256xi1>
    %580 = vector.broadcast %579 : vector<1x256xi1> to vector<4x256xi1>
    %581 = vector.broadcast %cst_312 : f32 to vector<4x256xf32>
    %582 = arith.select %580, %578, %581 : vector<4x256xi1>, vector<4x256xf32>
    %c72_313 = arith.constant 72 : index
    %c0_314 = arith.constant 0 : index
    %583 = vector.load %arg9[%c72_313, %c0_314] : memref<108x256xf32, #tpu.memory_space<vmem>>, vector<4x256xf32>
    tpu.vector_store %arg9[%c72_313, %c0_314], %582 {strides = array<i32>} : memref<108x256xf32, #tpu.memory_space<vmem>>, vector<4x256xf32>,
    %cst_315 = arith.constant 0.000000e+00 : f32
    %584 = vector.broadcast %cst_315 : f32 to vector<4x16xf32>
    %585 = vector.extract_strided_slice %47 {offsets = [0, 0], sizes = [4, 240], strides = [1, 1]} : vector<4x256xf32> to vector<4x240xf32>
    %586 = tpu.concatenate %584, %585 in 1 : vector<4x16xf32>, vector<4x240xf32> -> vector<4x256xf32>
    %c76_316 = arith.constant 76 : index
    %c0_317 = arith.constant 0 : index
    %587 = vector.load %arg9[%c76_316, %c0_317] : memref<108x256xf32, #tpu.memory_space<vmem>>, vector<4x256xf32>
    tpu.vector_store %arg9[%c76_316, %c0_317], %586 {strides = array<i32>} : memref<108x256xf32, #tpu.memory_space<vmem>>, vector<4x256xf32>,
    %cst_318 = arith.constant 0.000000e+00 : f32
    %588 = vector.broadcast %cst_318 : f32 to vector<4x15xf32>
    %589 = vector.extract_strided_slice %47 {offsets = [0, 0], sizes = [4, 241], strides = [1, 1]} : vector<4x256xf32> to vector<4x241xf32>
    %590 = tpu.concatenate %588, %589 in 1 : vector<4x15xf32>, vector<4x241xf32> -> vector<4x256xf32>
    %cst_319 = arith.constant 0.000000e+00 : f32
    %591 = vector.shape_cast %78 : vector<1x256xi1> to vector<1x256xi1>
    %592 = vector.broadcast %591 : vector<1x256xi1> to vector<4x256xi1>
    %593 = vector.broadcast %cst_319 : f32 to vector<4x256xf32>
    %594 = arith.select %592, %590, %593 : vector<4x256xi1>, vector<4x256xf32>
    %c80_320 = arith.constant 80 : index
    %c0_321 = arith.constant 0 : index
    %595 = vector.load %arg9[%c80_320, %c0_321] : memref<108x256xf32, #tpu.memory_space<vmem>>, vector<4x256xf32>
    tpu.vector_store %arg9[%c80_320, %c0_321], %594 {strides = array<i32>} : memref<108x256xf32, #tpu.memory_space<vmem>>, vector<4x256xf32>,
    %cst_322 = arith.constant 0.000000e+00 : f32
    %596 = vector.broadcast %cst_322 : f32 to vector<4x1xf32>
    %597 = vector.extract_strided_slice %47 {offsets = [0, 0], sizes = [4, 255], strides = [1, 1]} : vector<4x256xf32> to vector<4x255xf32>
    %598 = tpu.concatenate %596, %597 in 1 : vector<4x1xf32>, vector<4x255xf32> -> vector<4x256xf32>
    %cst_323 = arith.constant 0.000000e+00 : f32
    %599 = vector.shape_cast %76 : vector<1x256xi1> to vector<1x256xi1>
    %600 = vector.broadcast %599 : vector<1x256xi1> to vector<4x256xi1>
    %601 = vector.broadcast %cst_323 : f32 to vector<4x256xf32>
    %602 = arith.select %600, %598, %601 : vector<4x256xi1>, vector<4x256xf32>
    %c84_324 = arith.constant 84 : index
    %c0_325 = arith.constant 0 : index
    %603 = vector.load %arg9[%c84_324, %c0_325] : memref<108x256xf32, #tpu.memory_space<vmem>>, vector<4x256xf32>
    tpu.vector_store %arg9[%c84_324, %c0_325], %602 {strides = array<i32>} : memref<108x256xf32, #tpu.memory_space<vmem>>, vector<4x256xf32>,
    %c88_326 = arith.constant 88 : index
    %c0_327 = arith.constant 0 : index
    %604 = vector.load %arg9[%c88_326, %c0_327] : memref<108x256xf32, #tpu.memory_space<vmem>>, vector<4x256xf32>
    tpu.vector_store %arg9[%c88_326, %c0_327], %47 {strides = array<i32>} : memref<108x256xf32, #tpu.memory_space<vmem>>, vector<4x256xf32>,
    %cst_328 = arith.constant 0.000000e+00 : f32
    %605 = vector.broadcast %cst_328 : f32 to vector<4x1xf32>
    %606 = vector.extract_strided_slice %47 {offsets = [0, 1], sizes = [4, 255], strides = [1, 1]} : vector<4x256xf32> to vector<4x255xf32>
    %607 = tpu.concatenate %606, %605 in 1 : vector<4x255xf32>, vector<4x1xf32> -> vector<4x256xf32>
    %cst_329 = arith.constant 0.000000e+00 : f32
    %608 = vector.shape_cast %78 : vector<1x256xi1> to vector<1x256xi1>
    %609 = vector.broadcast %608 : vector<1x256xi1> to vector<4x256xi1>
    %610 = vector.broadcast %cst_329 : f32 to vector<4x256xf32>
    %611 = arith.select %609, %607, %610 : vector<4x256xi1>, vector<4x256xf32>
    %c92_330 = arith.constant 92 : index
    %c0_331 = arith.constant 0 : index
    %612 = vector.load %arg9[%c92_330, %c0_331] : memref<108x256xf32, #tpu.memory_space<vmem>>, vector<4x256xf32>
    tpu.vector_store %arg9[%c92_330, %c0_331], %611 {strides = array<i32>} : memref<108x256xf32, #tpu.memory_space<vmem>>, vector<4x256xf32>,
    %cst_332 = arith.constant 0.000000e+00 : f32
    %613 = vector.broadcast %cst_332 : f32 to vector<4x15xf32>
    %614 = vector.extract_strided_slice %47 {offsets = [0, 15], sizes = [4, 241], strides = [1, 1]} : vector<4x256xf32> to vector<4x241xf32>
    %615 = tpu.concatenate %614, %613 in 1 : vector<4x241xf32>, vector<4x15xf32> -> vector<4x256xf32>
    %cst_333 = arith.constant 0.000000e+00 : f32
    %616 = vector.shape_cast %76 : vector<1x256xi1> to vector<1x256xi1>
    %617 = vector.broadcast %616 : vector<1x256xi1> to vector<4x256xi1>
    %618 = vector.broadcast %cst_333 : f32 to vector<4x256xf32>
    %619 = arith.select %617, %615, %618 : vector<4x256xi1>, vector<4x256xf32>
    %c96_334 = arith.constant 96 : index
    %c0_335 = arith.constant 0 : index
    %620 = vector.load %arg9[%c96_334, %c0_335] : memref<108x256xf32, #tpu.memory_space<vmem>>, vector<4x256xf32>
    tpu.vector_store %arg9[%c96_334, %c0_335], %619 {strides = array<i32>} : memref<108x256xf32, #tpu.memory_space<vmem>>, vector<4x256xf32>,
    %cst_336 = arith.constant 0.000000e+00 : f32
    %621 = vector.broadcast %cst_336 : f32 to vector<4x16xf32>
    %622 = vector.extract_strided_slice %47 {offsets = [0, 16], sizes = [4, 240], strides = [1, 1]} : vector<4x256xf32> to vector<4x240xf32>
    %623 = tpu.concatenate %622, %621 in 1 : vector<4x240xf32>, vector<4x16xf32> -> vector<4x256xf32>
    %c100_337 = arith.constant 100 : index
    %c0_338 = arith.constant 0 : index
    %624 = vector.load %arg9[%c100_337, %c0_338] : memref<108x256xf32, #tpu.memory_space<vmem>>, vector<4x256xf32>
    tpu.vector_store %arg9[%c100_337, %c0_338], %623 {strides = array<i32>} : memref<108x256xf32, #tpu.memory_space<vmem>>, vector<4x256xf32>,
    %cst_339 = arith.constant 0.000000e+00 : f32
    %625 = vector.broadcast %cst_339 : f32 to vector<4x17xf32>
    %626 = vector.extract_strided_slice %47 {offsets = [0, 17], sizes = [4, 239], strides = [1, 1]} : vector<4x256xf32> to vector<4x239xf32>
    %627 = tpu.concatenate %626, %625 in 1 : vector<4x239xf32>, vector<4x17xf32> -> vector<4x256xf32>
    %cst_340 = arith.constant 0.000000e+00 : f32
    %628 = vector.shape_cast %78 : vector<1x256xi1> to vector<1x256xi1>
    %629 = vector.broadcast %628 : vector<1x256xi1> to vector<4x256xi1>
    %630 = vector.broadcast %cst_340 : f32 to vector<4x256xf32>
    %631 = arith.select %629, %627, %630 : vector<4x256xi1>, vector<4x256xf32>
    %c104_341 = arith.constant 104 : index
    %c0_342 = arith.constant 0 : index
    %632 = vector.load %arg9[%c104_341, %c0_342] : memref<108x256xf32, #tpu.memory_space<vmem>>, vector<4x256xf32>
    tpu.vector_store %arg9[%c104_341, %c0_342], %631 {strides = array<i32>} : memref<108x256xf32, #tpu.memory_space<vmem>>, vector<4x256xf32>,
    %c0_343 = arith.constant 0 : index
    %c0_344 = arith.constant 0 : index
    %633 = vector.load %arg9[%c0_343, %c0_344] : memref<108x256xf32, #tpu.memory_space<vmem>>, vector<108x256xf32>
    %cst_345 = arith.constant dense<0.000000e+00> : vector<4x256xf32>
    %634 = tpu.matmul %79, %633, %cst_345 {dimension_numbers = #tpu.dot_dimension_numbers<[1], [0], [0], [1], [0, 0, 1, 1], [], []>} : vector<4x108xf32>, vector<108x256xf32>, vector<4x256xf32> -> vector<4x256xf32>
    %c0_346 = arith.constant 0 : index
    %c2_347 = arith.constant 2 : index
    %c0_348 = arith.constant 0 : index
    %c0_349 = arith.constant 0 : index
    %635 = vector.load %arg7[%c0_346, %c2_347, %c0_348, %c0_349] : memref<1x4x4x256xf32, #tpu.memory_space<vmem>>, vector<1x1x4x256xf32>
    %636 = vector.shape_cast %635 : vector<1x1x4x256xf32> to vector<4x256xf32>
    %637 = vector.shape_cast %634 : vector<4x256xf32> to vector<1x1x4x256xf32>
    tpu.vector_store %arg7[%c0_346, %c2_347, %c0_348, %c0_349], %637 {strides = array<i32>} : memref<1x4x4x256xf32, #tpu.memory_space<vmem>>, vector<1x1x4x256xf32>,
    %cst_350 = arith.constant dense<0.000000e+00> : vector<4xf32>
    %638 = vector.multi_reduction <add>, %634, %cst_350 [1] : vector<4x256xf32> to vector<4xf32>
    %639 = vector.shape_cast %638 : vector<4xf32> to vector<4x1xf32>
    %cst_351 = arith.constant 3.906250e-03 : f32
    %640 = vector.broadcast %cst_351 : f32 to vector<4x1xf32>
    %641 = arith.mulf %639, %640 : vector<4x1xf32>
    %642 = vector.broadcast %641 : vector<4x1xf32> to vector<4x256xf32>
    %643 = arith.subf %634, %642 : vector<4x256xf32>
    %644 = arith.mulf %643, %643 : vector<4x256xf32>
    %cst_352 = arith.constant dense<0.000000e+00> : vector<4xf32>
    %645 = vector.multi_reduction <add>, %644, %cst_352 [1] : vector<4x256xf32> to vector<4xf32>
    %646 = vector.shape_cast %645 : vector<4xf32> to vector<4x1xf32>
    %c0_353 = arith.constant 0 : index
    %c0_354 = arith.constant 0 : index
    %c2_355 = arith.constant 2 : index
    %c0_356 = arith.constant 0 : index
    %c0_357 = arith.constant 0 : index
    %647 = vector.load %arg8[%c0_353, %c0_354, %c2_355, %c0_356, %c0_357] : memref<1x1x4x4x2xf32, #tpu.memory_space<vmem>>, vector<1x1x1x4x1xf32>
    %648 = vector.shape_cast %647 : vector<1x1x1x4x1xf32> to vector<4x1xf32>
    %649 = vector.shape_cast %639 : vector<4x1xf32> to vector<1x1x1x4x1xf32>
    tpu.vector_store %arg8[%c0_353, %c0_354, %c2_355, %c0_356, %c0_357], %649 {strides = array<i32>} : memref<1x1x4x4x2xf32, #tpu.memory_space<vmem>>, vector<1x1x1x4x1xf32>,
    %c0_358 = arith.constant 0 : index
    %c0_359 = arith.constant 0 : index
    %c2_360 = arith.constant 2 : index
    %c0_361 = arith.constant 0 : index
    %c1_362 = arith.constant 1 : index
    %650 = vector.load %arg8[%c0_358, %c0_359, %c2_360, %c0_361, %c1_362] : memref<1x1x4x4x2xf32, #tpu.memory_space<vmem>>, vector<1x1x1x4x1xf32>
    %651 = vector.shape_cast %650 : vector<1x1x1x4x1xf32> to vector<4x1xf32>
    %652 = vector.shape_cast %646 : vector<4x1xf32> to vector<1x1x1x4x1xf32>
    tpu.vector_store %arg8[%c0_358, %c0_359, %c2_360, %c0_361, %c1_362], %652 {strides = array<i32>} : memref<1x1x4x4x2xf32, #tpu.memory_space<vmem>>, vector<1x1x1x4x1xf32>,
    %cst_363 = arith.constant 0.000000e+00 : f32
    %653 = vector.broadcast %cst_363 : f32 to vector<4x17xf32>
    %654 = vector.extract_strided_slice %39 {offsets = [0, 0], sizes = [4, 239], strides = [1, 1]} : vector<4x256xf32> to vector<4x239xf32>
    %655 = tpu.concatenate %653, %654 in 1 : vector<4x17xf32>, vector<4x239xf32> -> vector<4x256xf32>
    %cst_364 = arith.constant 0.000000e+00 : f32
    %656 = vector.shape_cast %76 : vector<1x256xi1> to vector<1x256xi1>
    %657 = vector.broadcast %656 : vector<1x256xi1> to vector<4x256xi1>
    %658 = vector.broadcast %cst_364 : f32 to vector<4x256xf32>
    %659 = arith.select %657, %655, %658 : vector<4x256xi1>, vector<4x256xf32>
    %c0_365 = arith.constant 0 : index
    %c0_366 = arith.constant 0 : index
    %660 = vector.load %arg9[%c0_365, %c0_366] : memref<108x256xf32, #tpu.memory_space<vmem>>, vector<4x256xf32>
    tpu.vector_store %arg9[%c0_365, %c0_366], %659 {strides = array<i32>} : memref<108x256xf32, #tpu.memory_space<vmem>>, vector<4x256xf32>,
    %cst_367 = arith.constant 0.000000e+00 : f32
    %661 = vector.broadcast %cst_367 : f32 to vector<4x16xf32>
    %662 = vector.extract_strided_slice %39 {offsets = [0, 0], sizes = [4, 240], strides = [1, 1]} : vector<4x256xf32> to vector<4x240xf32>
    %663 = tpu.concatenate %661, %662 in 1 : vector<4x16xf32>, vector<4x240xf32> -> vector<4x256xf32>
    %c4_368 = arith.constant 4 : index
    %c0_369 = arith.constant 0 : index
    %664 = vector.load %arg9[%c4_368, %c0_369] : memref<108x256xf32, #tpu.memory_space<vmem>>, vector<4x256xf32>
    tpu.vector_store %arg9[%c4_368, %c0_369], %663 {strides = array<i32>} : memref<108x256xf32, #tpu.memory_space<vmem>>, vector<4x256xf32>,
    %cst_370 = arith.constant 0.000000e+00 : f32
    %665 = vector.broadcast %cst_370 : f32 to vector<4x15xf32>
    %666 = vector.extract_strided_slice %39 {offsets = [0, 0], sizes = [4, 241], strides = [1, 1]} : vector<4x256xf32> to vector<4x241xf32>
    %667 = tpu.concatenate %665, %666 in 1 : vector<4x15xf32>, vector<4x241xf32> -> vector<4x256xf32>
    %cst_371 = arith.constant 0.000000e+00 : f32
    %668 = vector.shape_cast %78 : vector<1x256xi1> to vector<1x256xi1>
    %669 = vector.broadcast %668 : vector<1x256xi1> to vector<4x256xi1>
    %670 = vector.broadcast %cst_371 : f32 to vector<4x256xf32>
    %671 = arith.select %669, %667, %670 : vector<4x256xi1>, vector<4x256xf32>
    %c8_372 = arith.constant 8 : index
    %c0_373 = arith.constant 0 : index
    %672 = vector.load %arg9[%c8_372, %c0_373] : memref<108x256xf32, #tpu.memory_space<vmem>>, vector<4x256xf32>
    tpu.vector_store %arg9[%c8_372, %c0_373], %671 {strides = array<i32>} : memref<108x256xf32, #tpu.memory_space<vmem>>, vector<4x256xf32>,
    %cst_374 = arith.constant 0.000000e+00 : f32
    %673 = vector.broadcast %cst_374 : f32 to vector<4x1xf32>
    %674 = vector.extract_strided_slice %39 {offsets = [0, 0], sizes = [4, 255], strides = [1, 1]} : vector<4x256xf32> to vector<4x255xf32>
    %675 = tpu.concatenate %673, %674 in 1 : vector<4x1xf32>, vector<4x255xf32> -> vector<4x256xf32>
    %cst_375 = arith.constant 0.000000e+00 : f32
    %676 = vector.shape_cast %76 : vector<1x256xi1> to vector<1x256xi1>
    %677 = vector.broadcast %676 : vector<1x256xi1> to vector<4x256xi1>
    %678 = vector.broadcast %cst_375 : f32 to vector<4x256xf32>
    %679 = arith.select %677, %675, %678 : vector<4x256xi1>, vector<4x256xf32>
    %c12_376 = arith.constant 12 : index
    %c0_377 = arith.constant 0 : index
    %680 = vector.load %arg9[%c12_376, %c0_377] : memref<108x256xf32, #tpu.memory_space<vmem>>, vector<4x256xf32>
    tpu.vector_store %arg9[%c12_376, %c0_377], %679 {strides = array<i32>} : memref<108x256xf32, #tpu.memory_space<vmem>>, vector<4x256xf32>,
    %c16_378 = arith.constant 16 : index
    %c0_379 = arith.constant 0 : index
    %681 = vector.load %arg9[%c16_378, %c0_379] : memref<108x256xf32, #tpu.memory_space<vmem>>, vector<4x256xf32>
    tpu.vector_store %arg9[%c16_378, %c0_379], %39 {strides = array<i32>} : memref<108x256xf32, #tpu.memory_space<vmem>>, vector<4x256xf32>,
    %cst_380 = arith.constant 0.000000e+00 : f32
    %682 = vector.broadcast %cst_380 : f32 to vector<4x1xf32>
    %683 = vector.extract_strided_slice %39 {offsets = [0, 1], sizes = [4, 255], strides = [1, 1]} : vector<4x256xf32> to vector<4x255xf32>
    %684 = tpu.concatenate %683, %682 in 1 : vector<4x255xf32>, vector<4x1xf32> -> vector<4x256xf32>
    %cst_381 = arith.constant 0.000000e+00 : f32
    %685 = vector.shape_cast %78 : vector<1x256xi1> to vector<1x256xi1>
    %686 = vector.broadcast %685 : vector<1x256xi1> to vector<4x256xi1>
    %687 = vector.broadcast %cst_381 : f32 to vector<4x256xf32>
    %688 = arith.select %686, %684, %687 : vector<4x256xi1>, vector<4x256xf32>
    %c20_382 = arith.constant 20 : index
    %c0_383 = arith.constant 0 : index
    %689 = vector.load %arg9[%c20_382, %c0_383] : memref<108x256xf32, #tpu.memory_space<vmem>>, vector<4x256xf32>
    tpu.vector_store %arg9[%c20_382, %c0_383], %688 {strides = array<i32>} : memref<108x256xf32, #tpu.memory_space<vmem>>, vector<4x256xf32>,
    %cst_384 = arith.constant 0.000000e+00 : f32
    %690 = vector.broadcast %cst_384 : f32 to vector<4x15xf32>
    %691 = vector.extract_strided_slice %39 {offsets = [0, 15], sizes = [4, 241], strides = [1, 1]} : vector<4x256xf32> to vector<4x241xf32>
    %692 = tpu.concatenate %691, %690 in 1 : vector<4x241xf32>, vector<4x15xf32> -> vector<4x256xf32>
    %cst_385 = arith.constant 0.000000e+00 : f32
    %693 = vector.shape_cast %76 : vector<1x256xi1> to vector<1x256xi1>
    %694 = vector.broadcast %693 : vector<1x256xi1> to vector<4x256xi1>
    %695 = vector.broadcast %cst_385 : f32 to vector<4x256xf32>
    %696 = arith.select %694, %692, %695 : vector<4x256xi1>, vector<4x256xf32>
    %c24_386 = arith.constant 24 : index
    %c0_387 = arith.constant 0 : index
    %697 = vector.load %arg9[%c24_386, %c0_387] : memref<108x256xf32, #tpu.memory_space<vmem>>, vector<4x256xf32>
    tpu.vector_store %arg9[%c24_386, %c0_387], %696 {strides = array<i32>} : memref<108x256xf32, #tpu.memory_space<vmem>>, vector<4x256xf32>,
    %cst_388 = arith.constant 0.000000e+00 : f32
    %698 = vector.broadcast %cst_388 : f32 to vector<4x16xf32>
    %699 = vector.extract_strided_slice %39 {offsets = [0, 16], sizes = [4, 240], strides = [1, 1]} : vector<4x256xf32> to vector<4x240xf32>
    %700 = tpu.concatenate %699, %698 in 1 : vector<4x240xf32>, vector<4x16xf32> -> vector<4x256xf32>
    %c28_389 = arith.constant 28 : index
    %c0_390 = arith.constant 0 : index
    %701 = vector.load %arg9[%c28_389, %c0_390] : memref<108x256xf32, #tpu.memory_space<vmem>>, vector<4x256xf32>
    tpu.vector_store %arg9[%c28_389, %c0_390], %700 {strides = array<i32>} : memref<108x256xf32, #tpu.memory_space<vmem>>, vector<4x256xf32>,
    %cst_391 = arith.constant 0.000000e+00 : f32
    %702 = vector.broadcast %cst_391 : f32 to vector<4x17xf32>
    %703 = vector.extract_strided_slice %39 {offsets = [0, 17], sizes = [4, 239], strides = [1, 1]} : vector<4x256xf32> to vector<4x239xf32>
    %704 = tpu.concatenate %703, %702 in 1 : vector<4x239xf32>, vector<4x17xf32> -> vector<4x256xf32>
    %cst_392 = arith.constant 0.000000e+00 : f32
    %705 = vector.shape_cast %78 : vector<1x256xi1> to vector<1x256xi1>
    %706 = vector.broadcast %705 : vector<1x256xi1> to vector<4x256xi1>
    %707 = vector.broadcast %cst_392 : f32 to vector<4x256xf32>
    %708 = arith.select %706, %704, %707 : vector<4x256xi1>, vector<4x256xf32>
    %c32_393 = arith.constant 32 : index
    %c0_394 = arith.constant 0 : index
    %709 = vector.load %arg9[%c32_393, %c0_394] : memref<108x256xf32, #tpu.memory_space<vmem>>, vector<4x256xf32>
    tpu.vector_store %arg9[%c32_393, %c0_394], %708 {strides = array<i32>} : memref<108x256xf32, #tpu.memory_space<vmem>>, vector<4x256xf32>,
    %cst_395 = arith.constant 0.000000e+00 : f32
    %710 = vector.broadcast %cst_395 : f32 to vector<4x17xf32>
    %711 = vector.extract_strided_slice %47 {offsets = [0, 0], sizes = [4, 239], strides = [1, 1]} : vector<4x256xf32> to vector<4x239xf32>
    %712 = tpu.concatenate %710, %711 in 1 : vector<4x17xf32>, vector<4x239xf32> -> vector<4x256xf32>
    %cst_396 = arith.constant 0.000000e+00 : f32
    %713 = vector.shape_cast %76 : vector<1x256xi1> to vector<1x256xi1>
    %714 = vector.broadcast %713 : vector<1x256xi1> to vector<4x256xi1>
    %715 = vector.broadcast %cst_396 : f32 to vector<4x256xf32>
    %716 = arith.select %714, %712, %715 : vector<4x256xi1>, vector<4x256xf32>
    %c36_397 = arith.constant 36 : index
    %c0_398 = arith.constant 0 : index
    %717 = vector.load %arg9[%c36_397, %c0_398] : memref<108x256xf32, #tpu.memory_space<vmem>>, vector<4x256xf32>
    tpu.vector_store %arg9[%c36_397, %c0_398], %716 {strides = array<i32>} : memref<108x256xf32, #tpu.memory_space<vmem>>, vector<4x256xf32>,
    %cst_399 = arith.constant 0.000000e+00 : f32
    %718 = vector.broadcast %cst_399 : f32 to vector<4x16xf32>
    %719 = vector.extract_strided_slice %47 {offsets = [0, 0], sizes = [4, 240], strides = [1, 1]} : vector<4x256xf32> to vector<4x240xf32>
    %720 = tpu.concatenate %718, %719 in 1 : vector<4x16xf32>, vector<4x240xf32> -> vector<4x256xf32>
    %c40_400 = arith.constant 40 : index
    %c0_401 = arith.constant 0 : index
    %721 = vector.load %arg9[%c40_400, %c0_401] : memref<108x256xf32, #tpu.memory_space<vmem>>, vector<4x256xf32>
    tpu.vector_store %arg9[%c40_400, %c0_401], %720 {strides = array<i32>} : memref<108x256xf32, #tpu.memory_space<vmem>>, vector<4x256xf32>,
    %cst_402 = arith.constant 0.000000e+00 : f32
    %722 = vector.broadcast %cst_402 : f32 to vector<4x15xf32>
    %723 = vector.extract_strided_slice %47 {offsets = [0, 0], sizes = [4, 241], strides = [1, 1]} : vector<4x256xf32> to vector<4x241xf32>
    %724 = tpu.concatenate %722, %723 in 1 : vector<4x15xf32>, vector<4x241xf32> -> vector<4x256xf32>
    %cst_403 = arith.constant 0.000000e+00 : f32
    %725 = vector.shape_cast %78 : vector<1x256xi1> to vector<1x256xi1>
    %726 = vector.broadcast %725 : vector<1x256xi1> to vector<4x256xi1>
    %727 = vector.broadcast %cst_403 : f32 to vector<4x256xf32>
    %728 = arith.select %726, %724, %727 : vector<4x256xi1>, vector<4x256xf32>
    %c44_404 = arith.constant 44 : index
    %c0_405 = arith.constant 0 : index
    %729 = vector.load %arg9[%c44_404, %c0_405] : memref<108x256xf32, #tpu.memory_space<vmem>>, vector<4x256xf32>
    tpu.vector_store %arg9[%c44_404, %c0_405], %728 {strides = array<i32>} : memref<108x256xf32, #tpu.memory_space<vmem>>, vector<4x256xf32>,
    %cst_406 = arith.constant 0.000000e+00 : f32
    %730 = vector.broadcast %cst_406 : f32 to vector<4x1xf32>
    %731 = vector.extract_strided_slice %47 {offsets = [0, 0], sizes = [4, 255], strides = [1, 1]} : vector<4x256xf32> to vector<4x255xf32>
    %732 = tpu.concatenate %730, %731 in 1 : vector<4x1xf32>, vector<4x255xf32> -> vector<4x256xf32>
    %cst_407 = arith.constant 0.000000e+00 : f32
    %733 = vector.shape_cast %76 : vector<1x256xi1> to vector<1x256xi1>
    %734 = vector.broadcast %733 : vector<1x256xi1> to vector<4x256xi1>
    %735 = vector.broadcast %cst_407 : f32 to vector<4x256xf32>
    %736 = arith.select %734, %732, %735 : vector<4x256xi1>, vector<4x256xf32>
    %c48_408 = arith.constant 48 : index
    %c0_409 = arith.constant 0 : index
    %737 = vector.load %arg9[%c48_408, %c0_409] : memref<108x256xf32, #tpu.memory_space<vmem>>, vector<4x256xf32>
    tpu.vector_store %arg9[%c48_408, %c0_409], %736 {strides = array<i32>} : memref<108x256xf32, #tpu.memory_space<vmem>>, vector<4x256xf32>,
    %c52_410 = arith.constant 52 : index
    %c0_411 = arith.constant 0 : index
    %738 = vector.load %arg9[%c52_410, %c0_411] : memref<108x256xf32, #tpu.memory_space<vmem>>, vector<4x256xf32>
    tpu.vector_store %arg9[%c52_410, %c0_411], %47 {strides = array<i32>} : memref<108x256xf32, #tpu.memory_space<vmem>>, vector<4x256xf32>,
    %cst_412 = arith.constant 0.000000e+00 : f32
    %739 = vector.broadcast %cst_412 : f32 to vector<4x1xf32>
    %740 = vector.extract_strided_slice %47 {offsets = [0, 1], sizes = [4, 255], strides = [1, 1]} : vector<4x256xf32> to vector<4x255xf32>
    %741 = tpu.concatenate %740, %739 in 1 : vector<4x255xf32>, vector<4x1xf32> -> vector<4x256xf32>
    %cst_413 = arith.constant 0.000000e+00 : f32
    %742 = vector.shape_cast %78 : vector<1x256xi1> to vector<1x256xi1>
    %743 = vector.broadcast %742 : vector<1x256xi1> to vector<4x256xi1>
    %744 = vector.broadcast %cst_413 : f32 to vector<4x256xf32>
    %745 = arith.select %743, %741, %744 : vector<4x256xi1>, vector<4x256xf32>
    %c56_414 = arith.constant 56 : index
    %c0_415 = arith.constant 0 : index
    %746 = vector.load %arg9[%c56_414, %c0_415] : memref<108x256xf32, #tpu.memory_space<vmem>>, vector<4x256xf32>
    tpu.vector_store %arg9[%c56_414, %c0_415], %745 {strides = array<i32>} : memref<108x256xf32, #tpu.memory_space<vmem>>, vector<4x256xf32>,
    %cst_416 = arith.constant 0.000000e+00 : f32
    %747 = vector.broadcast %cst_416 : f32 to vector<4x15xf32>
    %748 = vector.extract_strided_slice %47 {offsets = [0, 15], sizes = [4, 241], strides = [1, 1]} : vector<4x256xf32> to vector<4x241xf32>
    %749 = tpu.concatenate %748, %747 in 1 : vector<4x241xf32>, vector<4x15xf32> -> vector<4x256xf32>
    %cst_417 = arith.constant 0.000000e+00 : f32
    %750 = vector.shape_cast %76 : vector<1x256xi1> to vector<1x256xi1>
    %751 = vector.broadcast %750 : vector<1x256xi1> to vector<4x256xi1>
    %752 = vector.broadcast %cst_417 : f32 to vector<4x256xf32>
    %753 = arith.select %751, %749, %752 : vector<4x256xi1>, vector<4x256xf32>
    %c60_418 = arith.constant 60 : index
    %c0_419 = arith.constant 0 : index
    %754 = vector.load %arg9[%c60_418, %c0_419] : memref<108x256xf32, #tpu.memory_space<vmem>>, vector<4x256xf32>
    tpu.vector_store %arg9[%c60_418, %c0_419], %753 {strides = array<i32>} : memref<108x256xf32, #tpu.memory_space<vmem>>, vector<4x256xf32>,
    %cst_420 = arith.constant 0.000000e+00 : f32
    %755 = vector.broadcast %cst_420 : f32 to vector<4x16xf32>
    %756 = vector.extract_strided_slice %47 {offsets = [0, 16], sizes = [4, 240], strides = [1, 1]} : vector<4x256xf32> to vector<4x240xf32>
    %757 = tpu.concatenate %756, %755 in 1 : vector<4x240xf32>, vector<4x16xf32> -> vector<4x256xf32>
    %c64_421 = arith.constant 64 : index
    %c0_422 = arith.constant 0 : index
    %758 = vector.load %arg9[%c64_421, %c0_422] : memref<108x256xf32, #tpu.memory_space<vmem>>, vector<4x256xf32>
    tpu.vector_store %arg9[%c64_421, %c0_422], %757 {strides = array<i32>} : memref<108x256xf32, #tpu.memory_space<vmem>>, vector<4x256xf32>,
    %cst_423 = arith.constant 0.000000e+00 : f32
    %759 = vector.broadcast %cst_423 : f32 to vector<4x17xf32>
    %760 = vector.extract_strided_slice %47 {offsets = [0, 17], sizes = [4, 239], strides = [1, 1]} : vector<4x256xf32> to vector<4x239xf32>
    %761 = tpu.concatenate %760, %759 in 1 : vector<4x239xf32>, vector<4x17xf32> -> vector<4x256xf32>
    %cst_424 = arith.constant 0.000000e+00 : f32
    %762 = vector.shape_cast %78 : vector<1x256xi1> to vector<1x256xi1>
    %763 = vector.broadcast %762 : vector<1x256xi1> to vector<4x256xi1>
    %764 = vector.broadcast %cst_424 : f32 to vector<4x256xf32>
    %765 = arith.select %763, %761, %764 : vector<4x256xi1>, vector<4x256xf32>
    %c68_425 = arith.constant 68 : index
    %c0_426 = arith.constant 0 : index
    %766 = vector.load %arg9[%c68_425, %c0_426] : memref<108x256xf32, #tpu.memory_space<vmem>>, vector<4x256xf32>
    tpu.vector_store %arg9[%c68_425, %c0_426], %765 {strides = array<i32>} : memref<108x256xf32, #tpu.memory_space<vmem>>, vector<4x256xf32>,
    %cst_427 = arith.constant 0.000000e+00 : f32
    %767 = vector.broadcast %cst_427 : f32 to vector<4x17xf32>
    %768 = vector.extract_strided_slice %57 {offsets = [0, 0], sizes = [4, 239], strides = [1, 1]} : vector<4x256xf32> to vector<4x239xf32>
    %769 = tpu.concatenate %767, %768 in 1 : vector<4x17xf32>, vector<4x239xf32> -> vector<4x256xf32>
    %cst_428 = arith.constant 0.000000e+00 : f32
    %770 = vector.shape_cast %76 : vector<1x256xi1> to vector<1x256xi1>
    %771 = vector.broadcast %770 : vector<1x256xi1> to vector<4x256xi1>
    %772 = vector.broadcast %cst_428 : f32 to vector<4x256xf32>
    %773 = arith.select %771, %769, %772 : vector<4x256xi1>, vector<4x256xf32>
    %c72_429 = arith.constant 72 : index
    %c0_430 = arith.constant 0 : index
    %774 = vector.load %arg9[%c72_429, %c0_430] : memref<108x256xf32, #tpu.memory_space<vmem>>, vector<4x256xf32>
    tpu.vector_store %arg9[%c72_429, %c0_430], %773 {strides = array<i32>} : memref<108x256xf32, #tpu.memory_space<vmem>>, vector<4x256xf32>,
    %cst_431 = arith.constant 0.000000e+00 : f32
    %775 = vector.broadcast %cst_431 : f32 to vector<4x16xf32>
    %776 = vector.extract_strided_slice %57 {offsets = [0, 0], sizes = [4, 240], strides = [1, 1]} : vector<4x256xf32> to vector<4x240xf32>
    %777 = tpu.concatenate %775, %776 in 1 : vector<4x16xf32>, vector<4x240xf32> -> vector<4x256xf32>
    %c76_432 = arith.constant 76 : index
    %c0_433 = arith.constant 0 : index
    %778 = vector.load %arg9[%c76_432, %c0_433] : memref<108x256xf32, #tpu.memory_space<vmem>>, vector<4x256xf32>
    tpu.vector_store %arg9[%c76_432, %c0_433], %777 {strides = array<i32>} : memref<108x256xf32, #tpu.memory_space<vmem>>, vector<4x256xf32>,
    %cst_434 = arith.constant 0.000000e+00 : f32
    %779 = vector.broadcast %cst_434 : f32 to vector<4x15xf32>
    %780 = vector.extract_strided_slice %57 {offsets = [0, 0], sizes = [4, 241], strides = [1, 1]} : vector<4x256xf32> to vector<4x241xf32>
    %781 = tpu.concatenate %779, %780 in 1 : vector<4x15xf32>, vector<4x241xf32> -> vector<4x256xf32>
    %cst_435 = arith.constant 0.000000e+00 : f32
    %782 = vector.shape_cast %78 : vector<1x256xi1> to vector<1x256xi1>
    %783 = vector.broadcast %782 : vector<1x256xi1> to vector<4x256xi1>
    %784 = vector.broadcast %cst_435 : f32 to vector<4x256xf32>
    %785 = arith.select %783, %781, %784 : vector<4x256xi1>, vector<4x256xf32>
    %c80_436 = arith.constant 80 : index
    %c0_437 = arith.constant 0 : index
    %786 = vector.load %arg9[%c80_436, %c0_437] : memref<108x256xf32, #tpu.memory_space<vmem>>, vector<4x256xf32>
    tpu.vector_store %arg9[%c80_436, %c0_437], %785 {strides = array<i32>} : memref<108x256xf32, #tpu.memory_space<vmem>>, vector<4x256xf32>,
    %cst_438 = arith.constant 0.000000e+00 : f32
    %787 = vector.broadcast %cst_438 : f32 to vector<4x1xf32>
    %788 = vector.extract_strided_slice %57 {offsets = [0, 0], sizes = [4, 255], strides = [1, 1]} : vector<4x256xf32> to vector<4x255xf32>
    %789 = tpu.concatenate %787, %788 in 1 : vector<4x1xf32>, vector<4x255xf32> -> vector<4x256xf32>
    %cst_439 = arith.constant 0.000000e+00 : f32
    %790 = vector.shape_cast %76 : vector<1x256xi1> to vector<1x256xi1>
    %791 = vector.broadcast %790 : vector<1x256xi1> to vector<4x256xi1>
    %792 = vector.broadcast %cst_439 : f32 to vector<4x256xf32>
    %793 = arith.select %791, %789, %792 : vector<4x256xi1>, vector<4x256xf32>
    %c84_440 = arith.constant 84 : index
    %c0_441 = arith.constant 0 : index
    %794 = vector.load %arg9[%c84_440, %c0_441] : memref<108x256xf32, #tpu.memory_space<vmem>>, vector<4x256xf32>
    tpu.vector_store %arg9[%c84_440, %c0_441], %793 {strides = array<i32>} : memref<108x256xf32, #tpu.memory_space<vmem>>, vector<4x256xf32>,
    %c88_442 = arith.constant 88 : index
    %c0_443 = arith.constant 0 : index
    %795 = vector.load %arg9[%c88_442, %c0_443] : memref<108x256xf32, #tpu.memory_space<vmem>>, vector<4x256xf32>
    tpu.vector_store %arg9[%c88_442, %c0_443], %57 {strides = array<i32>} : memref<108x256xf32, #tpu.memory_space<vmem>>, vector<4x256xf32>,
    %cst_444 = arith.constant 0.000000e+00 : f32
    %796 = vector.broadcast %cst_444 : f32 to vector<4x1xf32>
    %797 = vector.extract_strided_slice %57 {offsets = [0, 1], sizes = [4, 255], strides = [1, 1]} : vector<4x256xf32> to vector<4x255xf32>
    %798 = tpu.concatenate %797, %796 in 1 : vector<4x255xf32>, vector<4x1xf32> -> vector<4x256xf32>
    %cst_445 = arith.constant 0.000000e+00 : f32
    %799 = vector.shape_cast %78 : vector<1x256xi1> to vector<1x256xi1>
    %800 = vector.broadcast %799 : vector<1x256xi1> to vector<4x256xi1>
    %801 = vector.broadcast %cst_445 : f32 to vector<4x256xf32>
    %802 = arith.select %800, %798, %801 : vector<4x256xi1>, vector<4x256xf32>
    %c92_446 = arith.constant 92 : index
    %c0_447 = arith.constant 0 : index
    %803 = vector.load %arg9[%c92_446, %c0_447] : memref<108x256xf32, #tpu.memory_space<vmem>>, vector<4x256xf32>
    tpu.vector_store %arg9[%c92_446, %c0_447], %802 {strides = array<i32>} : memref<108x256xf32, #tpu.memory_space<vmem>>, vector<4x256xf32>,
    %cst_448 = arith.constant 0.000000e+00 : f32
    %804 = vector.broadcast %cst_448 : f32 to vector<4x15xf32>
    %805 = vector.extract_strided_slice %57 {offsets = [0, 15], sizes = [4, 241], strides = [1, 1]} : vector<4x256xf32> to vector<4x241xf32>
    %806 = tpu.concatenate %805, %804 in 1 : vector<4x241xf32>, vector<4x15xf32> -> vector<4x256xf32>
    %cst_449 = arith.constant 0.000000e+00 : f32
    %807 = vector.shape_cast %76 : vector<1x256xi1> to vector<1x256xi1>
    %808 = vector.broadcast %807 : vector<1x256xi1> to vector<4x256xi1>
    %809 = vector.broadcast %cst_449 : f32 to vector<4x256xf32>
    %810 = arith.select %808, %806, %809 : vector<4x256xi1>, vector<4x256xf32>
    %c96_450 = arith.constant 96 : index
    %c0_451 = arith.constant 0 : index
    %811 = vector.load %arg9[%c96_450, %c0_451] : memref<108x256xf32, #tpu.memory_space<vmem>>, vector<4x256xf32>
    tpu.vector_store %arg9[%c96_450, %c0_451], %810 {strides = array<i32>} : memref<108x256xf32, #tpu.memory_space<vmem>>, vector<4x256xf32>,
    %cst_452 = arith.constant 0.000000e+00 : f32
    %812 = vector.broadcast %cst_452 : f32 to vector<4x16xf32>
    %813 = vector.extract_strided_slice %57 {offsets = [0, 16], sizes = [4, 240], strides = [1, 1]} : vector<4x256xf32> to vector<4x240xf32>
    %814 = tpu.concatenate %813, %812 in 1 : vector<4x240xf32>, vector<4x16xf32> -> vector<4x256xf32>
    %c100_453 = arith.constant 100 : index
    %c0_454 = arith.constant 0 : index
    %815 = vector.load %arg9[%c100_453, %c0_454] : memref<108x256xf32, #tpu.memory_space<vmem>>, vector<4x256xf32>
    tpu.vector_store %arg9[%c100_453, %c0_454], %814 {strides = array<i32>} : memref<108x256xf32, #tpu.memory_space<vmem>>, vector<4x256xf32>,
    %cst_455 = arith.constant 0.000000e+00 : f32
    %816 = vector.broadcast %cst_455 : f32 to vector<4x17xf32>
    %817 = vector.extract_strided_slice %57 {offsets = [0, 17], sizes = [4, 239], strides = [1, 1]} : vector<4x256xf32> to vector<4x239xf32>
    %818 = tpu.concatenate %817, %816 in 1 : vector<4x239xf32>, vector<4x17xf32> -> vector<4x256xf32>
    %cst_456 = arith.constant 0.000000e+00 : f32
    %819 = vector.shape_cast %78 : vector<1x256xi1> to vector<1x256xi1>
    %820 = vector.broadcast %819 : vector<1x256xi1> to vector<4x256xi1>
    %821 = vector.broadcast %cst_456 : f32 to vector<4x256xf32>
    %822 = arith.select %820, %818, %821 : vector<4x256xi1>, vector<4x256xf32>
    %c104_457 = arith.constant 104 : index
    %c0_458 = arith.constant 0 : index
    %823 = vector.load %arg9[%c104_457, %c0_458] : memref<108x256xf32, #tpu.memory_space<vmem>>, vector<4x256xf32>
    tpu.vector_store %arg9[%c104_457, %c0_458], %822 {strides = array<i32>} : memref<108x256xf32, #tpu.memory_space<vmem>>, vector<4x256xf32>,
    %c0_459 = arith.constant 0 : index
    %c0_460 = arith.constant 0 : index
    %824 = vector.load %arg9[%c0_459, %c0_460] : memref<108x256xf32, #tpu.memory_space<vmem>>, vector<108x256xf32>
    %cst_461 = arith.constant dense<0.000000e+00> : vector<4x256xf32>
    %825 = tpu.matmul %79, %824, %cst_461 {dimension_numbers = #tpu.dot_dimension_numbers<[1], [0], [0], [1], [0, 0, 1, 1], [], []>} : vector<4x108xf32>, vector<108x256xf32>, vector<4x256xf32> -> vector<4x256xf32>
    %c0_462 = arith.constant 0 : index
    %c3_463 = arith.constant 3 : index
    %c0_464 = arith.constant 0 : index
    %c0_465 = arith.constant 0 : index
    %826 = vector.load %arg7[%c0_462, %c3_463, %c0_464, %c0_465] : memref<1x4x4x256xf32, #tpu.memory_space<vmem>>, vector<1x1x4x256xf32>
    %827 = vector.shape_cast %826 : vector<1x1x4x256xf32> to vector<4x256xf32>
    %828 = vector.shape_cast %825 : vector<4x256xf32> to vector<1x1x4x256xf32>
    tpu.vector_store %arg7[%c0_462, %c3_463, %c0_464, %c0_465], %828 {strides = array<i32>} : memref<1x4x4x256xf32, #tpu.memory_space<vmem>>, vector<1x1x4x256xf32>,
    %cst_466 = arith.constant dense<0.000000e+00> : vector<4xf32>
    %829 = vector.multi_reduction <add>, %825, %cst_466 [1] : vector<4x256xf32> to vector<4xf32>
    %830 = vector.shape_cast %829 : vector<4xf32> to vector<4x1xf32>
    %cst_467 = arith.constant 3.906250e-03 : f32
    %831 = vector.broadcast %cst_467 : f32 to vector<4x1xf32>
    %832 = arith.mulf %830, %831 : vector<4x1xf32>
    %833 = vector.broadcast %832 : vector<4x1xf32> to vector<4x256xf32>
    %834 = arith.subf %825, %833 : vector<4x256xf32>
    %835 = arith.mulf %834, %834 : vector<4x256xf32>
    %cst_468 = arith.constant dense<0.000000e+00> : vector<4xf32>
    %836 = vector.multi_reduction <add>, %835, %cst_468 [1] : vector<4x256xf32> to vector<4xf32>
    %837 = vector.shape_cast %836 : vector<4xf32> to vector<4x1xf32>
    %c0_469 = arith.constant 0 : index
    %c0_470 = arith.constant 0 : index
    %c3_471 = arith.constant 3 : index
    %c0_472 = arith.constant 0 : index
    %c0_473 = arith.constant 0 : index
    %838 = vector.load %arg8[%c0_469, %c0_470, %c3_471, %c0_472, %c0_473] : memref<1x1x4x4x2xf32, #tpu.memory_space<vmem>>, vector<1x1x1x4x1xf32>
    %839 = vector.shape_cast %838 : vector<1x1x1x4x1xf32> to vector<4x1xf32>
    %840 = vector.shape_cast %830 : vector<4x1xf32> to vector<1x1x1x4x1xf32>
    tpu.vector_store %arg8[%c0_469, %c0_470, %c3_471, %c0_472, %c0_473], %840 {strides = array<i32>} : memref<1x1x4x4x2xf32, #tpu.memory_space<vmem>>, vector<1x1x1x4x1xf32>,
    %c0_474 = arith.constant 0 : index
    %c0_475 = arith.constant 0 : index
    %c3_476 = arith.constant 3 : index
    %c0_477 = arith.constant 0 : index
    %c1_478 = arith.constant 1 : index
    %841 = vector.load %arg8[%c0_474, %c0_475, %c3_476, %c0_477, %c1_478] : memref<1x1x4x4x2xf32, #tpu.memory_space<vmem>>, vector<1x1x1x4x1xf32>
    %842 = vector.shape_cast %841 : vector<1x1x1x4x1xf32> to vector<4x1xf32>
    %843 = vector.shape_cast %837 : vector<4x1xf32> to vector<1x1x1x4x1xf32>
    tpu.vector_store %arg8[%c0_474, %c0_475, %c3_476, %c0_477, %c1_478], %843 {strides = array<i32>} : memref<1x1x4x4x2xf32, #tpu.memory_space<vmem>>, vector<1x1x1x4x1xf32>,
    return
  }
  func.func @transform_0(%arg0: i32, %arg1: i32) -> (i32, i32, i32, i32) {
    %c4_i32 = arith.constant 4 : i32
    %0 = arith.muli %arg1, %c4_i32 : i32
    %c1_i32 = arith.constant 1 : i32
    %1 = arith.subi %0, %c1_i32 : i32
    %c0_i32 = arith.constant 0 : i32
    %2 = arith.maxsi %1, %c0_i32 : i32
    %c0_i32_0 = arith.constant 0 : i32
    %c0_i32_1 = arith.constant 0 : i32
    %c0_i32_2 = arith.constant 0 : i32
    return %arg0, %2, %c0_i32_0, %c0_i32_1 : i32, i32, i32, i32
  }
  func.func @transform_1(%arg0: i32, %arg1: i32) -> (i32, i32, i32, i32) {
    %c0_i32 = arith.constant 0 : i32
    %c0_i32_0 = arith.constant 0 : i32
    %c0_i32_1 = arith.constant 0 : i32
    return %arg0, %arg1, %c0_i32, %c0_i32_0 : i32, i32, i32, i32
  }
  func.func @transform_2(%arg0: i32, %arg1: i32) -> (i32, i32, i32, i32) {
    %c4_i32 = arith.constant 4 : i32
    %0 = arith.muli %arg1, %c4_i32 : i32
    %c4_i32_0 = arith.constant 4 : i32
    %1 = arith.addi %0, %c4_i32_0 : i32
    %c7_i32 = arith.constant 7 : i32
    %2 = arith.minsi %1, %c7_i32 : i32
    %c0_i32 = arith.constant 0 : i32
    %c0_i32_1 = arith.constant 0 : i32
    %c0_i32_2 = arith.constant 0 : i32
    return %arg0, %2, %c0_i32, %c0_i32_1 : i32, i32, i32, i32
  }
  func.func @transform_3(%arg0: i32, %arg1: i32) -> (i32, i32, i32) {
    %c0_i32 = arith.constant 0 : i32
    %c0_i32_0 = arith.constant 0 : i32
    %c0_i32_1 = arith.constant 0 : i32
    %c0_i32_2 = arith.constant 0 : i32
    return %c0_i32, %c0_i32_0, %c0_i32_1 : i32, i32, i32
  }
  func.func @transform_4(%arg0: i32, %arg1: i32) -> (i32, i32) {
    %c0_i32 = arith.constant 0 : i32
    %c0_i32_0 = arith.constant 0 : i32
    %c0_i32_1 = arith.constant 0 : i32
    return %c0_i32, %c0_i32_0 : i32, i32
  }
  func.func @transform_5(%arg0: i32, %arg1: i32) -> (i32, i32, i32, i32) {
    %c0_i32 = arith.constant 0 : i32
    %c0_i32_0 = arith.constant 0 : i32
    %c0_i32_1 = arith.constant 0 : i32
    return %arg0, %arg1, %c0_i32, %c0_i32_0 : i32, i32, i32, i32
  }
  func.func @transform_6(%arg0: i32, %arg1: i32) -> (i32, i32, i32, i32, i32) {
    %c0_i32 = arith.constant 0 : i32
    %c0_i32_0 = arith.constant 0 : i32
    %c0_i32_1 = arith.constant 0 : i32
    %c0_i32_2 = arith.constant 0 : i32
    return %arg0, %arg1, %c0_i32, %c0_i32_0, %c0_i32_1 : i32, i32, i32, i32, i32
  }
}

</mosaic_0001>

<llo_original>
// kernel: simple_rb_pallas.5
$region0: #{simple_rb_pallas.5}
  #allocation0 [shape = 'u32[]', space=smem, size = 0x4, offset = 0x4, fixed_abs, tag = 'smem constant byte address 0x4 - core index']
  #allocation1 [shape = 'u32[144,128]{1,0:T(1,128)}', space=vmem, size = 0x12000, scoped, tag = 'internal scratch']
  %s0 = inlined_call_operand.vmem [shape: f32[2,8,4,256], index: 0, kind: input, shape index: {}]
  %s1 = inlined_call_operand.vmem [shape: f32[2,4,1], index: 1, kind: input, shape index: {}]
  %s2 = inlined_call_operand.vmem [shape: f32[2,8,4,256], index: 2, kind: input, shape index: {}]
  %s3 = inlined_call_operand.vmem [shape: f32[2,8,4,256], index: 3, kind: output, shape index: {}]
  %s4 = sld [smem:[#allocation0]]
  $region45: #{simple_rb_pallas.5} parent=0
    _
  %s6 = ssub.s32 1, %s4
  %s7 = scalar_select 0, %s6, %s4
  loop: start=0, step=1, limit=6
  $region2: #{simple_rb_pallas.5} parent=0 // loop_pre_header
    _
  $region3: #{simple_rb_pallas.5} parent=0 // loop_header
    %s9 = sphi 0, %s13
    %p10 = scmp.ge.s32.totalorder %s9, 6
    %s16 = sphi 0, %s28
    %s17 = sphi 0, %s24
    %s18 = sphi 0, %s16
    %s19 = sphi 0, %s17
    %s20 = sphi 0, %s18
    %s21 = sphi 0, %s19
    %s33 = sphi 0, %s35
    %s36 = sphi 0, %s33
    %s37 = sphi 0, %s36
    %s53 = sphi 0, %s37
    %s57 = sphi 0, %s57
    %s59 = sphi 0, %s57
    %s60 = sphi 0, %s59
    %s74 = sphi 0, %s60
    %s82 = sphi 0, %s84
    %s85 = sphi 0, %s82
    %s86 = sphi 0, %s85
    %s102 = sphi 0, %s86
    %s110 = sphi 0, %s112
    %s113 = sphi 0, %s110
    %s114 = sphi 0, %s113
    %s130 = sphi 0, %s114
  $region4: #{simple_rb_pallas.5} parent=0 // loop_header_branch
    %12 = sbr.rel (%p10) target = $region8
  $region5: #{simple_rb_pallas.5} parent=0 // loop_body
    %s14 = ssub.s32 %s9, 1
    %s15 = ssub.s32 %s9, 2
    %s22 = sadd.s32 1, %s17
    %p23 = scmp.ge.s32.totalorder %s22, 2
    %s24 = scalar_select %p23, 0, %s22
    %s25 = sadd.s32 1, %s16
    %s26 = scalar_select %p23, %s25, %s16
    %p27 = scmp.ge.s32.totalorder %s26, 2
    %s28 = scalar_select %p27, 0, %s26
    %s29 = ssub.s32 %s16, %s28
    %s30 = ssub.s32 %s17, %s24
    %s31 = sor.u32 %s29, %s30
    %p32 = scmp.eq.s32.totalorder %s31, 0
    %s34 = sadd.s32 %s33, 1
    %s35 = scalar_select %p32, %s33, %s34
    %p38 = pneg %p32
    %p39 = scmp.eq.s32.totalorder %s9, 3
    %p40 = por %p38, %p39
    %p41 = scmp.ne.s32.totalorder %s33, %s36
    %p42 = scmp.eq.s32.totalorder %s9, 0
    %p43 = por %p41, %p42
    %p44 = scmp.ne.s32.totalorder %s33, %s36
    %p45 = scmp.eq.s32.totalorder %s14, 3
    %p46 = por %p44, %p45
    %p47 = scmp.ne.s32.totalorder %s36, %s37
    %p48 = scmp.eq.s32.totalorder %s14, 0
    %p49 = por %p47, %p48
    %p50 = scmp.ne.s32.totalorder %s36, %s37
    %p51 = scmp.eq.s32.totalorder %s15, 3
    %p52 = por %p50, %p51
    %p54 = scmp.ne.s32.totalorder %s37, %s53
    %p55 = scmp.eq.s32.totalorder %s15, 0
    %p56 = por %p54, %p55
    %s58 = sadd.s32 %s57, 1
    %p61 = scmp.eq.s32.totalorder %s9, 3
    %p62 = scmp.ne.s32.totalorder %s57, %s59
    %p63 = scmp.eq.s32.totalorder %s9, 0
    %p64 = por %p62, %p63
    %p65 = scmp.ne.s32.totalorder %s57, %s59
    %p66 = scmp.eq.s32.totalorder %s14, 3
    %p67 = por %p65, %p66
    %p68 = scmp.ne.s32.totalorder %s59, %s60
    %p69 = scmp.eq.s32.totalorder %s14, 0
    %p70 = por %p68, %p69
    %p71 = scmp.ne.s32.totalorder %s59, %s60
    %p72 = scmp.eq.s32.totalorder %s15, 3
    %p73 = por %p71, %p72
    %p75 = scmp.ne.s32.totalorder %s60, %s74
    %p76 = scmp.eq.s32.totalorder %s15, 0
    %p77 = por %p75, %p76
    %s78 = ssub.s32 %s16, %s28
    %s79 = ssub.s32 %s17, %s24
    %s80 = sor.u32 %s78, %s79
    %p81 = scmp.eq.s32.totalorder %s80, 0
    %s83 = sadd.s32 %s82, 1
    %s84 = scalar_select %p81, %s82, %s83
    %p87 = pneg %p81
    %p88 = scmp.eq.s32.totalorder %s9, 3
    %p89 = por %p87, %p88
    %p90 = scmp.ne.s32.totalorder %s82, %s85
    %p91 = scmp.eq.s32.totalorder %s9, 0
    %p92 = por %p90, %p91
    %p93 = scmp.ne.s32.totalorder %s82, %s85
    %p94 = scmp.eq.s32.totalorder %s14, 3
    %p95 = por %p93, %p94
    %p96 = scmp.ne.s32.totalorder %s85, %s86
    %p97 = scmp.eq.s32.totalorder %s14, 0
    %p98 = por %p96, %p97
    %p99 = scmp.ne.s32.totalorder %s85, %s86
    %p100 = scmp.eq.s32.totalorder %s15, 3
    %p101 = por %p99, %p100
    %p103 = scmp.ne.s32.totalorder %s86, %s102
    %p104 = scmp.eq.s32.totalorder %s15, 0
    %p105 = por %p103, %p104
    %s106 = ssub.s32 %s16, %s28
    %s107 = ssub.s32 %s17, %s24
    %s108 = sor.u32 %s106, %s107
    %p109 = scmp.eq.s32.totalorder %s108, 0
    %s111 = sadd.s32 %s110, 1
    %s112 = scalar_select %p109, %s110, %s111
    %p115 = pneg %p109
    %p116 = scmp.eq.s32.totalorder %s9, 3
    %p117 = por %p115, %p116
    %p118 = scmp.ne.s32.totalorder %s110, %s113
    %p119 = scmp.eq.s32.totalorder %s9, 0
    %p120 = por %p118, %p119
    %p121 = scmp.ne.s32.totalorder %s110, %s113
    %p122 = scmp.eq.s32.totalorder %s14, 3
    %p123 = por %p121, %p122
    %p124 = scmp.ne.s32.totalorder %s113, %s114
    %p125 = scmp.eq.s32.totalorder %s14, 0
    %p126 = por %p124, %p125
    %p127 = scmp.ne.s32.totalorder %s113, %s114
    %p128 = scmp.eq.s32.totalorder %s15, 3
    %p129 = por %p127, %p128
    %p131 = scmp.ne.s32.totalorder %s114, %s130
    %p132 = scmp.eq.s32.totalorder %s15, 0
    %p133 = por %p131, %p132
    %p134 = scmp.le.s32.totalorder 1, %s9
    %p135 = scmp.lt.s32.totalorder %s9, 5
    %p136 = pnand %p134, %p135
    %p137 = pneg %p136
    // Predicated region
    $region9: #{simple_rb_pallas.5} parent=5 // pred_check
      _
    $region10: #{simple_rb_pallas.5} parent=5 // pred_check_branch
      %139 = sbr.rel (%p136) target = $region12
    $region11: #{simple_rb_pallas.5} parent=5 // pred_region
      %s140 = ssub.s32 %s9, 1
      // Predicated region
      $region13: #{simple_rb_pallas.5} parent=11 // pred_check
        %p141 = pneg %p70
      $region14: #{simple_rb_pallas.5} parent=11 // pred_check_branch
        %143 = sbr.rel (%p141) target = $region16
      $region15: #{simple_rb_pallas.5} parent=11 // pred_region
        _
      $region16: #{simple_rb_pallas.5} parent=11 // pred_fallthru
        _
    $region12: #{simple_rb_pallas.5} parent=5 // pred_fallthru
      _
    %p144 = scmp.lt.s32.totalorder %s9, 4
    // Predicated region
    $region17: #{simple_rb_pallas.5} parent=5 // pred_check
      %p145 = pneg %p144
    $region18: #{simple_rb_pallas.5} parent=5 // pred_check_branch
      %147 = sbr.rel (%p145) target = $region20
    $region19: #{simple_rb_pallas.5} parent=5 // pred_region
      // Predicated region
      $region21: #{simple_rb_pallas.5} parent=19 // pred_check
        %p148 = pneg %p43
      $region22: #{simple_rb_pallas.5} parent=19 // pred_check_branch
        %150 = sbr.rel (%p148) target = $region24
      $region23: #{simple_rb_pallas.5} parent=19 // pred_region
        %s151 = smul.u32 4, %s17
        %p152 = scmp.lt.s32.totalorder %s16, 1
        %s153 = scalar_select %p152, %s16, 1
        %p154 = scmp.lt.s32.totalorder %s151, 7
        %s155 = scalar_select %p154, %s151, 7
        %s156 = smul.addr %s155, 2
        %s157 = smul.addr %s153, 16
        %s158 = sadd.s32 %s156, %s157
        %s159 = smul.addr %s158, 4
        %s160 = scalar_lea.vmem %s0, %s159
        %s161 = smul.u32 4, %s17
      $region24: #{simple_rb_pallas.5} parent=19 // pred_fallthru
        _
      // Predicated region
      $region25: #{simple_rb_pallas.5} parent=19 // pred_check
        %p162 = pneg %p92
      $region26: #{simple_rb_pallas.5} parent=19 // pred_check_branch
        %164 = sbr.rel (%p162) target = $region28
      $region27: #{simple_rb_pallas.5} parent=19 // pred_region
        %s165 = smul.u32 4, %s17
        %p166 = scmp.lt.s32.totalorder %s16, 1
        %s167 = scalar_select %p166, %s16, 1
        %p168 = scmp.lt.s32.totalorder %s165, 7
        %s169 = scalar_select %p168, %s165, 7
        %s170 = smul.addr %s169, 2
        %s171 = smul.addr %s167, 16
        %s172 = sadd.s32 %s170, %s171
        %s173 = smul.addr %s172, 4
        %s174 = scalar_lea.vmem %s2, %s173
        %s175 = smul.u32 4, %s17
      $region28: #{simple_rb_pallas.5} parent=19 // pred_fallthru
        _
    $region20: #{simple_rb_pallas.5} parent=5 // pred_fallthru
      _
    %p176 = scmp.le.s32.totalorder 1, %s9
    %p177 = scmp.lt.s32.totalorder %s9, 5
    %p178 = pnand %p176, %p177
    %p179 = pneg %p178
    // Predicated region
    $region29: #{simple_rb_pallas.5} parent=5 // pred_check
      _
    $region30: #{simple_rb_pallas.5} parent=5 // pred_check_branch
      %181 = sbr.rel (%p178) target = $region32
    $region31: #{simple_rb_pallas.5} parent=5 // pred_region
      %s182 = ssub.s32 %s9, 1
      %s183 = smul.u32 4, %s19
      %p184 = scmp.lt.s32.totalorder %s18, 1
      %s185 = scalar_select %p184, %s18, 1
      %p186 = scmp.lt.s32.totalorder %s183, 7
      %s187 = scalar_select %p186, %s183, 7
      %s188 = smul.addr %s187, 2
      %s189 = smul.addr %s185, 16
      %s190 = sadd.s32 %s188, %s189
      %s191 = smul.addr %s190, 4
      %s192 = scalar_lea.vmem %s0, %s191
      %p193 = pneg %p49
      %p194 = pneg %p46
      %p195 = pneg %p70
      %p196 = pneg %p67
      %s197 = smul.u32 4, %s19
      %p198 = scmp.lt.s32.totalorder %s18, 1
      %s199 = scalar_select %p198, %s18, 1
      %p200 = scmp.lt.s32.totalorder %s197, 7
      %s201 = scalar_select %p200, %s197, 7
      %s202 = smul.addr %s201, 2
      %s203 = smul.addr %s199, 16
      %s204 = sadd.s32 %s202, %s203
      %s205 = smul.addr %s204, 4
      %s206 = scalar_lea.vmem %s2, %s205
      %p207 = pneg %p98
      %p208 = pneg %p95
      %p209 = pneg %p126
      %p210 = pneg %p123
      %s211 = smul.u32 4, %s19
      %p212 = scmp.lt.s32.totalorder %s18, 1
      %s213 = scalar_select %p212, %s18, 1
      %p214 = scmp.lt.s32.totalorder %s211, 7
      %s215 = scalar_select %p214, %s211, 7
      %s216 = smul.addr %s215, 2
      %s217 = smul.addr %s213, 16
      %s218 = sadd.s32 %s216, %s217
      %s219 = smul.addr %s218, 4
      %s220 = scalar_lea.vmem %s3, %s219
      %s221 = smul.u32 4, %s19
      %p222 = scmp.lt.s32.totalorder %s18, 1
      %s223 = scalar_select %p222, %s18, 1
      %p224 = scmp.lt.s32.totalorder %s221, 7
      %s225 = scalar_select %p224, %s221, 7
      %s226 = smul.addr %s225, 2
      %s227 = smul.addr %s223, 16
      %s228 = sadd.s32 %s226, %s227
      %s229 = smul.addr %s228, 4
      %s230 = scalar_lea.vmem %s0, %s229
      %s231 = smul.u32 4, %s19
      %s232 = smul.u32 4, %s19
      %p233 = scmp.lt.s32.totalorder %s18, 1
      %s234 = scalar_select %p233, %s18, 1
      %p235 = scmp.lt.s32.totalorder %s232, 7
      %s236 = scalar_select %p235, %s232, 7
      %s237 = smul.addr %s236, 2
      %s238 = smul.addr %s234, 16
      %s239 = sadd.s32 %s237, %s238
      %s240 = smul.addr %s239, 4
      %s241 = scalar_lea.vmem %s2, %s240
      %s242 = smul.u32 4, %s19
      %s243 = smul.u32 4, %s19
      %p244 = scmp.lt.s32.totalorder %s18, 1
      %s245 = scalar_select %p244, %s18, 1
      %p246 = scmp.lt.s32.totalorder %s243, 7
      %s247 = scalar_select %p246, %s243, 7
      %s248 = smul.addr %s247, 2
      %s249 = smul.addr %s245, 16
      %s250 = sadd.s32 %s248, %s249
      %s251 = smul.addr %s250, 4
      %s252 = scalar_lea.vmem %s3, %s251
      %s253 = smul.u32 4, %s19
      %v254 = vld [vmem:[%s1] sm:$0xf]
      %s255 = scalar_lea.vmem %s1, 4
      %v256 = vld [vmem:[%s255] sm:$0xf]
      %v257 = vld [vmem:[%s241] sm:$0xff]
      %v258 = vld [vmem:[%s241 + $0x8] sm:$0xff]
      %v259 = vld [vmem:[%s241 + $0x10] sm:$0xff]
      %v260 = vld [vmem:[%s241 + $0x18] sm:$0xff]
      %v261 = vld [vmem:[%s230] sm:$0xff]
      %v262 = vld [vmem:[%s230 + $0x8] sm:$0xff]
      %v263 = vld [vmem:[%s230 + $0x10] sm:$0xff]
      %v264 = vld [vmem:[%s230 + $0x18] sm:$0xff]
      %266 = vset.pattern.permute.xlu0 0
      %267 = vperm.xlu0 %266, %v254
      %v268 = vpop.permute.xlu0 %267
      %v270 = vunpack.c.l.s4 839922192
      %v271 = vunpack.c.0.s8 %v270
      %v272 = vlaneseq
      %v273 = vshrl.u32 %v272, 7
      %v274 = vsub.s32 %v271, %v273
      %v275 = vrot.slane %v268, %v274
      %v277 = vmul.f32 %v261, %v275
      %v278 = vmul.f32 %v262, %v275
      %v279 = vmul.f32 %v263, %v275
      %v280 = vmul.f32 %v264, %v275
      %v281 = vadd.f32 %v257, %v277
      %v282 = vadd.f32 %v258, %v278
      %v283 = vadd.f32 %v259, %v279
      %v284 = vadd.f32 %v260, %v280
      %286 = vset.pattern.permute.xlu0 0
      %287 = vperm.xlu0 %286, %v256
      %v288 = vpop.permute.xlu0 %287
      %v290 = vunpack.c.l.s4 839922192
      %v291 = vunpack.c.0.s8 %v290
      %v292 = vlaneseq
      %v293 = vshrl.u32 %v292, 7
      %v294 = vsub.s32 %v291, %v293
      %v295 = vrot.slane %v288, %v294
      %v297 = vadd.f32 %v281, %v295
      %v298 = vadd.f32 %v282, %v295
      %v299 = vadd.f32 %v283, %v295
      %v300 = vadd.f32 %v284, %v295
      %v301 = vmax.f32 %v297, 0.0
      %v302 = vmax.f32 %v298, 0.0
      %v303 = vmax.f32 %v299, 0.0
      %v304 = vmax.f32 %v300, 0.0
      %305 = vst [vmem:[%s252] sm:$0xff] %v301
      %306 = vst [vmem:[%s252 + $0x8] sm:$0xff] %v302
      %307 = vst [vmem:[%s252 + $0x10] sm:$0xff] %v303
      %308 = vst [vmem:[%s252 + $0x18] sm:$0xff] %v304
      %s309 = smul.u32 4, %s19
      %p310 = scmp.lt.s32.totalorder %s18, 1
      %s311 = scalar_select %p310, %s18, 1
      %p312 = scmp.lt.s32.totalorder %s309, 7
      %s313 = scalar_select %p312, %s309, 7
      %s314 = smul.addr %s313, 2
      %s315 = smul.addr %s311, 16
      %s316 = sadd.s32 %s314, %s315
      %s317 = smul.addr %s316, 4
      %s318 = scalar_lea.vmem %s3, %s317
      // Predicated region
      $region33: #{simple_rb_pallas.5} parent=31 // pred_check
        %p319 = pneg %p123
      $region34: #{simple_rb_pallas.5} parent=31 // pred_check_branch
        %321 = sbr.rel (%p319) target = $region36
      $region35: #{simple_rb_pallas.5} parent=31 // pred_region
        %s322 = smul.u32 4, %s19
      $region36: #{simple_rb_pallas.5} parent=31 // pred_fallthru
        _
    $region32: #{simple_rb_pallas.5} parent=5 // pred_fallthru
      _
    %p323 = scmp.le.s32.totalorder 2, %s9
    // Predicated region
    $region37: #{simple_rb_pallas.5} parent=5 // pred_check
      %p324 = pneg %p323
    $region38: #{simple_rb_pallas.5} parent=5 // pred_check_branch
      %326 = sbr.rel (%p324) target = $region40
    $region39: #{simple_rb_pallas.5} parent=5 // pred_region
      %s327 = ssub.s32 %s9, 2
      // Predicated region
      $region41: #{simple_rb_pallas.5} parent=39 // pred_check
        %p328 = pneg %p129
      $region42: #{simple_rb_pallas.5} parent=39 // pred_check_branch
        %330 = sbr.rel (%p328) target = $region44
      $region43: #{simple_rb_pallas.5} parent=39 // pred_region
        %s331 = smul.u32 4, %s21
        %p332 = scmp.lt.s32.totalorder %s20, 1
        %s333 = scalar_select %p332, %s20, 1
        %p334 = scmp.lt.s32.totalorder %s331, 7
        %s335 = scalar_select %p334, %s331, 7
        %s336 = smul.addr %s335, 2
        %s337 = smul.addr %s333, 16
        %s338 = sadd.s32 %s336, %s337
        %s339 = smul.addr %s338, 4
        %s340 = scalar_lea.vmem %s3, %s339
      $region44: #{simple_rb_pallas.5} parent=39 // pred_fallthru
        _
    $region40: #{simple_rb_pallas.5} parent=5 // pred_fallthru
      _
  $region6: #{simple_rb_pallas.5} parent=0 // loop_footer
    %s13 = sadd.s32 1, %s9
  $region7: #{simple_rb_pallas.5} parent=0 // loop_footer_branch
    %8 = sbr.rel target = $region3
  $region8: #{simple_rb_pallas.5} parent=0 // loop_exit
    _

// kernel: simple_rb_pallas.3
$region0: #{simple_rb_pallas.3}
  #allocation0 [shape = 'u32[]', space=smem, size = 0x4, offset = 0x4, fixed_abs, tag = 'smem constant byte address 0x4 - core index']
  #allocation1 [shape = 'u32[144,128]{1,0:T(1,128)}', space=vmem, size = 0x12000, scoped, tag = 'internal scratch']
  #allocation2 [shape = 'f32[108,256]{1,0:T(8,128)}', space=vmem, size = 0x1c000, scoped, tag = 'scratch operand']
  %s0 = inlined_call_operand.vmem [shape: f32[2,8,4,256], index: 0, kind: input, shape index: {}, may-alias: {0,1,2}]
  %s1 = inlined_call_operand.vmem [shape: f32[2,8,4,256], index: 1, kind: input, shape index: {}, may-alias: {0,1,2}]
  %s2 = inlined_call_operand.vmem [shape: f32[2,8,4,256], index: 2, kind: input, shape index: {}, may-alias: {0,1,2}]
  %s3 = inlined_call_operand.vmem [shape: f32[4,108], index: 3, kind: input, shape index: {}]
  %s4 = inlined_call_operand.vmem [shape: f32[2,8,4,256], index: 4, kind: output, shape index: {0}]
  %s5 = inlined_call_operand.vmem [shape: f32[2,2,4,4,2], index: 5, kind: output, shape index: {1}]
  %6 = xla_tuple %s4, %s5
  %s7 = sld [smem:[#allocation0]]
  $region57: #{simple_rb_pallas.3} parent=0
    _
  %s9 = ssub.s32 1, %s7
  %s10 = scalar_select 0, %s9, %s7
  loop: start=0, step=1, limit=6
  $region2: #{simple_rb_pallas.3} parent=0 // loop_pre_header
    _
  $region3: #{simple_rb_pallas.3} parent=0 // loop_header
    %s12 = sphi 0, %s16
    %p13 = scmp.ge.s32.totalorder %s12, 6
    %s19 = sphi 0, %s31
    %s20 = sphi 0, %s27
    %s21 = sphi 0, %s19
    %s22 = sphi 0, %s20
    %s23 = sphi 0, %s21
    %s24 = sphi 0, %s22
    %s44 = sphi 0, %s46
    %s47 = sphi 0, %s44
    %s48 = sphi 0, %s47
    %s64 = sphi 0, %s48
    %s72 = sphi 0, %s74
    %s75 = sphi 0, %s72
    %s76 = sphi 0, %s75
    %s92 = sphi 0, %s76
    %s108 = sphi 0, %s110
    %s111 = sphi 0, %s108
    %s112 = sphi 0, %s111
    %s128 = sphi 0, %s112
    %s132 = sphi 0, %s132
    %s134 = sphi 0, %s132
    %s135 = sphi 0, %s134
    %s149 = sphi 0, %s135
    %s157 = sphi 0, %s159
    %s160 = sphi 0, %s157
    %s161 = sphi 0, %s160
    %s177 = sphi 0, %s161
    %s185 = sphi 0, %s187
    %s188 = sphi 0, %s185
    %s189 = sphi 0, %s188
    %s205 = sphi 0, %s189
  $region4: #{simple_rb_pallas.3} parent=0 // loop_header_branch
    %15 = sbr.rel (%p13) target = $region8
  $region5: #{simple_rb_pallas.3} parent=0 // loop_body
    %s17 = ssub.s32 %s12, 1
    %s18 = ssub.s32 %s12, 2
    %s25 = sadd.s32 1, %s20
    %p26 = scmp.ge.s32.totalorder %s25, 2
    %s27 = scalar_select %p26, 0, %s25
    %s28 = sadd.s32 1, %s19
    %s29 = scalar_select %p26, %s28, %s19
    %p30 = scmp.ge.s32.totalorder %s29, 2
    %s31 = scalar_select %p30, 0, %s29
    %s32 = smul.u32 %s20, 4
    %s33 = ssub.s32 %s32, 1
    %p34 = scmp.gt.s32.totalorder %s33, 0
    %s35 = scalar_select %p34, %s33, 0
    %s36 = smul.u32 %s27, 4
    %s37 = ssub.s32 %s36, 1
    %p38 = scmp.gt.s32.totalorder %s37, 0
    %s39 = scalar_select %p38, %s37, 0
    %s40 = ssub.s32 %s19, %s31
    %s41 = ssub.s32 %s35, %s39
    %s42 = sor.u32 %s40, %s41
    %p43 = scmp.eq.s32.totalorder %s42, 0
    %s45 = sadd.s32 %s44, 1
    %s46 = scalar_select %p43, %s44, %s45
    %p49 = pneg %p43
    %p50 = scmp.eq.s32.totalorder %s12, 3
    %p51 = por %p49, %p50
    %p52 = scmp.ne.s32.totalorder %s44, %s47
    %p53 = scmp.eq.s32.totalorder %s12, 0
    %p54 = por %p52, %p53
    %p55 = scmp.ne.s32.totalorder %s44, %s47
    %p56 = scmp.eq.s32.totalorder %s17, 3
    %p57 = por %p55, %p56
    %p58 = scmp.ne.s32.totalorder %s47, %s48
    %p59 = scmp.eq.s32.totalorder %s17, 0
    %p60 = por %p58, %p59
    %p61 = scmp.ne.s32.totalorder %s47, %s48
    %p62 = scmp.eq.s32.totalorder %s18, 3
    %p63 = por %p61, %p62
    %p65 = scmp.ne.s32.totalorder %s48, %s64
    %p66 = scmp.eq.s32.totalorder %s18, 0
    %p67 = por %p65, %p66
    %s68 = ssub.s32 %s19, %s31
    %s69 = ssub.s32 %s20, %s27
    %s70 = sor.u32 %s68, %s69
    %p71 = scmp.eq.s32.totalorder %s70, 0
    %s73 = sadd.s32 %s72, 1
    %s74 = scalar_select %p71, %s72, %s73
    %p77 = pneg %p71
    %p78 = scmp.eq.s32.totalorder %s12, 3
    %p79 = por %p77, %p78
    %p80 = scmp.ne.s32.totalorder %s72, %s75
    %p81 = scmp.eq.s32.totalorder %s12, 0
    %p82 = por %p80, %p81
    %p83 = scmp.ne.s32.totalorder %s72, %s75
    %p84 = scmp.eq.s32.totalorder %s17, 3
    %p85 = por %p83, %p84
    %p86 = scmp.ne.s32.totalorder %s75, %s76
    %p87 = scmp.eq.s32.totalorder %s17, 0
    %p88 = por %p86, %p87
    %p89 = scmp.ne.s32.totalorder %s75, %s76
    %p90 = scmp.eq.s32.totalorder %s18, 3
    %p91 = por %p89, %p90
    %p93 = scmp.ne.s32.totalorder %s76, %s92
    %p94 = scmp.eq.s32.totalorder %s18, 0
    %p95 = por %p93, %p94
    %s96 = smul.u32 %s20, 4
    %s97 = sadd.s32 %s96, 4
    %p98 = scmp.lt.s32.totalorder %s97, 7
    %s99 = scalar_select %p98, %s97, 7
    %s100 = smul.u32 %s27, 4
    %s101 = sadd.s32 %s100, 4
    %p102 = scmp.lt.s32.totalorder %s101, 7
    %s103 = scalar_select %p102, %s101, 7
    %s104 = ssub.s32 %s19, %s31
    %s105 = ssub.s32 %s99, %s103
    %s106 = sor.u32 %s104, %s105
    %p107 = scmp.eq.s32.totalorder %s106, 0
    %s109 = sadd.s32 %s108, 1
    %s110 = scalar_select %p107, %s108, %s109
    %p113 = pneg %p107
    %p114 = scmp.eq.s32.totalorder %s12, 3
    %p115 = por %p113, %p114
    %p116 = scmp.ne.s32.totalorder %s108, %s111
    %p117 = scmp.eq.s32.totalorder %s12, 0
    %p118 = por %p116, %p117
    %p119 = scmp.ne.s32.totalorder %s108, %s111
    %p120 = scmp.eq.s32.totalorder %s17, 3
    %p121 = por %p119, %p120
    %p122 = scmp.ne.s32.totalorder %s111, %s112
    %p123 = scmp.eq.s32.totalorder %s17, 0
    %p124 = por %p122, %p123
    %p125 = scmp.ne.s32.totalorder %s111, %s112
    %p126 = scmp.eq.s32.totalorder %s18, 3
    %p127 = por %p125, %p126
    %p129 = scmp.ne.s32.totalorder %s112, %s128
    %p130 = scmp.eq.s32.totalorder %s18, 0
    %p131 = por %p129, %p130
    %s133 = sadd.s32 %s132, 1
    %p136 = scmp.eq.s32.totalorder %s12, 3
    %p137 = scmp.ne.s32.totalorder %s132, %s134
    %p138 = scmp.eq.s32.totalorder %s12, 0
    %p139 = por %p137, %p138
    %p140 = scmp.ne.s32.totalorder %s132, %s134
    %p141 = scmp.eq.s32.totalorder %s17, 3
    %p142 = por %p140, %p141
    %p143 = scmp.ne.s32.totalorder %s134, %s135
    %p144 = scmp.eq.s32.totalorder %s17, 0
    %p145 = por %p143, %p144
    %p146 = scmp.ne.s32.totalorder %s134, %s135
    %p147 = scmp.eq.s32.totalorder %s18, 3
    %p148 = por %p146, %p147
    %p150 = scmp.ne.s32.totalorder %s135, %s149
    %p151 = scmp.eq.s32.totalorder %s18, 0
    %p152 = por %p150, %p151
    %s153 = ssub.s32 %s19, %s31
    %s154 = ssub.s32 %s20, %s27
    %s155 = sor.u32 %s153, %s154
    %p156 = scmp.eq.s32.totalorder %s155, 0
    %s158 = sadd.s32 %s157, 1
    %s159 = scalar_select %p156, %s157, %s158
    %p162 = pneg %p156
    %p163 = scmp.eq.s32.totalorder %s12, 3
    %p164 = por %p162, %p163
    %p165 = scmp.ne.s32.totalorder %s157, %s160
    %p166 = scmp.eq.s32.totalorder %s12, 0
    %p167 = por %p165, %p166
    %p168 = scmp.ne.s32.totalorder %s157, %s160
    %p169 = scmp.eq.s32.totalorder %s17, 3
    %p170 = por %p168, %p169
    %p171 = scmp.ne.s32.totalorder %s160, %s161
    %p172 = scmp.eq.s32.totalorder %s17, 0
    %p173 = por %p171, %p172
    %p174 = scmp.ne.s32.totalorder %s160, %s161
    %p175 = scmp.eq.s32.totalorder %s18, 3
    %p176 = por %p174, %p175
    %p178 = scmp.ne.s32.totalorder %s161, %s177
    %p179 = scmp.eq.s32.totalorder %s18, 0
    %p180 = por %p178, %p179
    %s181 = ssub.s32 %s19, %s31
    %s182 = ssub.s32 %s20, %s27
    %s183 = sor.u32 %s181, %s182
    %p184 = scmp.eq.s32.totalorder %s183, 0
    %s186 = sadd.s32 %s185, 1
    %s187 = scalar_select %p184, %s185, %s186
    %p190 = pneg %p184
    %p191 = scmp.eq.s32.totalorder %s12, 3
    %p192 = por %p190, %p191
    %p193 = scmp.ne.s32.totalorder %s185, %s188
    %p194 = scmp.eq.s32.totalorder %s12, 0
    %p195 = por %p193, %p194
    %p196 = scmp.ne.s32.totalorder %s185, %s188
    %p197 = scmp.eq.s32.totalorder %s17, 3
    %p198 = por %p196, %p197
    %p199 = scmp.ne.s32.totalorder %s188, %s189
    %p200 = scmp.eq.s32.totalorder %s17, 0
    %p201 = por %p199, %p200
    %p202 = scmp.ne.s32.totalorder %s188, %s189
    %p203 = scmp.eq.s32.totalorder %s18, 3
    %p204 = por %p202, %p203
    %p206 = scmp.ne.s32.totalorder %s189, %s205
    %p207 = scmp.eq.s32.totalorder %s18, 0
    %p208 = por %p206, %p207
    %p209 = scmp.le.s32.totalorder 1, %s12
    %p210 = scmp.lt.s32.totalorder %s12, 5
    %p211 = pnand %p209, %p210
    %p212 = pneg %p211
    // Predicated region
    $region9: #{simple_rb_pallas.3} parent=5 // pred_check
      _
    $region10: #{simple_rb_pallas.3} parent=5 // pred_check_branch
      %214 = sbr.rel (%p211) target = $region12
    $region11: #{simple_rb_pallas.3} parent=5 // pred_region
      %s215 = ssub.s32 %s12, 1
      // Predicated region
      $region13: #{simple_rb_pallas.3} parent=11 // pred_check
        %p216 = pneg %p145
      $region14: #{simple_rb_pallas.3} parent=11 // pred_check_branch
        %218 = sbr.rel (%p216) target = $region16
      $region15: #{simple_rb_pallas.3} parent=11 // pred_region
        _
      $region16: #{simple_rb_pallas.3} parent=11 // pred_fallthru
        _
    $region12: #{simple_rb_pallas.3} parent=5 // pred_fallthru
      _
    %p219 = scmp.lt.s32.totalorder %s12, 4
    // Predicated region
    $region17: #{simple_rb_pallas.3} parent=5 // pred_check
      %p220 = pneg %p219
    $region18: #{simple_rb_pallas.3} parent=5 // pred_check_branch
      %222 = sbr.rel (%p220) target = $region20
    $region19: #{simple_rb_pallas.3} parent=5 // pred_region
      // Predicated region
      $region21: #{simple_rb_pallas.3} parent=19 // pred_check
        %p223 = pneg %p54
      $region22: #{simple_rb_pallas.3} parent=19 // pred_check_branch
        %225 = sbr.rel (%p223) target = $region24
      $region23: #{simple_rb_pallas.3} parent=19 // pred_region
        %s226 = smul.u32 %s20, 4
        %s227 = ssub.s32 %s226, 1
        %p228 = scmp.gt.s32.totalorder %s227, 0
        %s229 = scalar_select %p228, %s227, 0
        %p230 = scmp.lt.s32.totalorder %s19, 1
        %s231 = scalar_select %p230, %s19, 1
        %p232 = scmp.lt.s32.totalorder %s229, 7
        %s233 = scalar_select %p232, %s229, 7
        %s234 = smul.addr %s233, 2
        %s235 = smul.addr %s231, 16
        %s236 = sadd.s32 %s234, %s235
        %s237 = smul.addr %s236, 4
        %s238 = scalar_lea.vmem %s0, %s237
        %s239 = smul.u32 %s20, 4
        %s240 = ssub.s32 %s239, 1
        %p241 = scmp.gt.s32.totalorder %s240, 0
        %s242 = scalar_select %p241, %s240, 0
      $region24: #{simple_rb_pallas.3} parent=19 // pred_fallthru
        _
      // Predicated region
      $region25: #{simple_rb_pallas.3} parent=19 // pred_check
        %p243 = pneg %p82
      $region26: #{simple_rb_pallas.3} parent=19 // pred_check_branch
        %245 = sbr.rel (%p243) target = $region28
      $region27: #{simple_rb_pallas.3} parent=19 // pred_region
        %s246 = smul.u32 4, %s20
        %p247 = scmp.lt.s32.totalorder %s19, 1
        %s248 = scalar_select %p247, %s19, 1
        %p249 = scmp.lt.s32.totalorder %s246, 7
        %s250 = scalar_select %p249, %s246, 7
        %s251 = smul.addr %s250, 2
        %s252 = smul.addr %s248, 16
        %s253 = sadd.s32 %s251, %s252
        %s254 = smul.addr %s253, 4
        %s255 = scalar_lea.vmem %s1, %s254
        %s256 = smul.u32 4, %s20
      $region28: #{simple_rb_pallas.3} parent=19 // pred_fallthru
        _
      // Predicated region
      $region29: #{simple_rb_pallas.3} parent=19 // pred_check
        %p257 = pneg %p118
      $region30: #{simple_rb_pallas.3} parent=19 // pred_check_branch
        %259 = sbr.rel (%p257) target = $region32
      $region31: #{simple_rb_pallas.3} parent=19 // pred_region
        %s260 = smul.u32 %s20, 4
        %s261 = sadd.s32 %s260, 4
        %p262 = scmp.lt.s32.totalorder %s261, 7
        %s263 = scalar_select %p262, %s261, 7
        %p264 = scmp.lt.s32.totalorder %s19, 1
        %s265 = scalar_select %p264, %s19, 1
        %p266 = scmp.lt.s32.totalorder %s263, 7
        %s267 = scalar_select %p266, %s263, 7
        %s268 = smul.addr %s267, 2
        %s269 = smul.addr %s265, 16
        %s270 = sadd.s32 %s268, %s269
        %s271 = smul.addr %s270, 4
        %s272 = scalar_lea.vmem %s2, %s271
        %s273 = smul.u32 %s20, 4
        %s274 = sadd.s32 %s273, 4
        %p275 = scmp.lt.s32.totalorder %s274, 7
        %s276 = scalar_select %p275, %s274, 7
      $region32: #{simple_rb_pallas.3} parent=19 // pred_fallthru
        _
    $region20: #{simple_rb_pallas.3} parent=5 // pred_fallthru
      _
    %p277 = scmp.le.s32.totalorder 1, %s12
    %p278 = scmp.lt.s32.totalorder %s12, 5
    %p279 = pnand %p277, %p278
    %p280 = pneg %p279
    // Predicated region
    $region33: #{simple_rb_pallas.3} parent=5 // pred_check
      _
    $region34: #{simple_rb_pallas.3} parent=5 // pred_check_branch
      %282 = sbr.rel (%p279) target = $region36
    $region35: #{simple_rb_pallas.3} parent=5 // pred_region
      %s283 = ssub.s32 %s12, 1
      %s284 = smul.u32 %s22, 4
      %s285 = ssub.s32 %s284, 1
      %p286 = scmp.gt.s32.totalorder %s285, 0
      %s287 = scalar_select %p286, %s285, 0
      %p288 = scmp.lt.s32.totalorder %s21, 1
      %s289 = scalar_select %p288, %s21, 1
      %p290 = scmp.lt.s32.totalorder %s287, 7
      %s291 = scalar_select %p290, %s287, 7
      %s292 = smul.addr %s291, 2
      %s293 = smul.addr %s289, 16
      %s294 = sadd.s32 %s292, %s293
      %s295 = smul.addr %s294, 4
      %s296 = scalar_lea.vmem %s0, %s295
      %p297 = pneg %p60
      %p298 = pneg %p57
      %s299 = smul.u32 4, %s22
      %p300 = scmp.lt.s32.totalorder %s21, 1
      %s301 = scalar_select %p300, %s21, 1
      %p302 = scmp.lt.s32.totalorder %s299, 7
      %s303 = scalar_select %p302, %s299, 7
      %s304 = smul.addr %s303, 2
      %s305 = smul.addr %s301, 16
      %s306 = sadd.s32 %s304, %s305
      %s307 = smul.addr %s306, 4
      %s308 = scalar_lea.vmem %s1, %s307
      %p309 = pneg %p88
      %p310 = pneg %p85
      %s311 = smul.u32 %s22, 4
      %s312 = sadd.s32 %s311, 4
      %p313 = scmp.lt.s32.totalorder %s312, 7
      %s314 = scalar_select %p313, %s312, 7
      %p315 = scmp.lt.s32.totalorder %s21, 1
      %s316 = scalar_select %p315, %s21, 1
      %p317 = scmp.lt.s32.totalorder %s314, 7
      %s318 = scalar_select %p317, %s314, 7
      %s319 = smul.addr %s318, 2
      %s320 = smul.addr %s316, 16
      %s321 = sadd.s32 %s319, %s320
      %s322 = smul.addr %s321, 4
      %s323 = scalar_lea.vmem %s2, %s322
      %p324 = pneg %p124
      %p325 = pneg %p121
      %p326 = pneg %p145
      %p327 = pneg %p142
      %p328 = pneg %p173
      %p329 = pneg %p170
      %s330 = smul.u32 4, %s22
      %p331 = scmp.lt.s32.totalorder %s21, 1
      %s332 = scalar_select %p331, %s21, 1
      %p333 = scmp.lt.s32.totalorder %s330, 7
      %s334 = scalar_select %p333, %s330, 7
      %s335 = smul.addr %s334, 2
      %s336 = smul.addr %s332, 16
      %s337 = sadd.s32 %s335, %s336
      %s338 = smul.addr %s337, 4
      %s339 = scalar_lea.vmem %s4, %s338
      %p340 = pneg %p201
      %p341 = pneg %p198
      %p342 = scmp.lt.s32.totalorder %s21, 1
      %s343 = scalar_select %p342, %s21, 1
      %p344 = scmp.lt.s32.totalorder %s22, 1
      %s345 = scalar_select %p344, %s22, 1
      %s346 = smul.addr %s345, 4
      %s347 = smul.addr %s343, 8
      %s348 = sadd.s32 %s346, %s347
      %s349 = smul.addr %s348, 4
      %s350 = scalar_lea.vmem %s5, %s349
      %s351 = smul.u32 %s22, 4
      %s352 = ssub.s32 %s351, 1
      %p353 = scmp.gt.s32.totalorder %s352, 0
      %s354 = scalar_select %p353, %s352, 0
      %p355 = scmp.lt.s32.totalorder %s21, 1
      %s356 = scalar_select %p355, %s21, 1
      %p357 = scmp.lt.s32.totalorder %s354, 7
      %s358 = scalar_select %p357, %s354, 7
      %s359 = smul.addr %s358, 2
      %s360 = smul.addr %s356, 16
      %s361 = sadd.s32 %s359, %s360
      %s362 = smul.addr %s361, 4
      %s363 = scalar_lea.vmem %s0, %s362
      %s364 = smul.u32 %s22, 4
      %s365 = ssub.s32 %s364, 1
      %p366 = scmp.gt.s32.totalorder %s365, 0
      %s367 = scalar_select %p366, %s365, 0
      %s368 = smul.u32 4, %s22
      %p369 = scmp.lt.s32.totalorder %s21, 1
      %s370 = scalar_select %p369, %s21, 1
      %p371 = scmp.lt.s32.totalorder %s368, 7
      %s372 = scalar_select %p371, %s368, 7
      %s373 = smul.addr %s372, 2
      %s374 = smul.addr %s370, 16
      %s375 = sadd.s32 %s373, %s374
      %s376 = smul.addr %s375, 4
      %s377 = scalar_lea.vmem %s1, %s376
      %s378 = smul.u32 4, %s22
      %s379 = smul.u32 %s22, 4
      %s380 = sadd.s32 %s379, 4
      %p381 = scmp.lt.s32.totalorder %s380, 7
      %s382 = scalar_select %p381, %s380, 7
      %p383 = scmp.lt.s32.totalorder %s21, 1
      %s384 = scalar_select %p383, %s21, 1
      %p385 = scmp.lt.s32.totalorder %s382, 7
      %s386 = scalar_select %p385, %s382, 7
      %s387 = smul.addr %s386, 2
      %s388 = smul.addr %s384, 16
      %s389 = sadd.s32 %s387, %s388
      %s390 = smul.addr %s389, 4
      %s391 = scalar_lea.vmem %s2, %s390
      %s392 = smul.u32 %s22, 4
      %s393 = sadd.s32 %s392, 4
      %p394 = scmp.lt.s32.totalorder %s393, 7
      %s395 = scalar_select %p394, %s393, 7
      %s396 = smul.u32 4, %s22
      %p397 = scmp.lt.s32.totalorder %s21, 1
      %s398 = scalar_select %p397, %s21, 1
      %p399 = scmp.lt.s32.totalorder %s396, 7
      %s400 = scalar_select %p399, %s396, 7
      %s401 = smul.addr %s400, 2
      %s402 = smul.addr %s398, 16
      %s403 = sadd.s32 %s401, %s402
      %s404 = smul.addr %s403, 4
      %s405 = scalar_lea.vmem %s4, %s404
      %s406 = smul.u32 4, %s22
      %p407 = scmp.lt.s32.totalorder %s21, 1
      %s408 = scalar_select %p407, %s21, 1
      %p409 = scmp.lt.s32.totalorder %s22, 1
      %s410 = scalar_select %p409, %s22, 1
      %s411 = smul.addr %s410, 4
      %s412 = smul.addr %s408, 8
      %s413 = sadd.s32 %s411, %s412
      %s414 = smul.addr %s413, 4
      %s415 = scalar_lea.vmem %s5, %s414
      %p416 = scmp.eq.s32.totalorder %s22, 0
      %p417 = scmp.eq.s32.totalorder %s22, 1
      %v418 = vld [vmem:[%s363] sm:$0xff]
      %s419 = scalar_select %p416, 1, 0
      %v420 = vstv %s419
      %vm421 = vcmp.eq.s32.totalorder %v420, 1
      %v422 = vsel %vm421, 0.0, %v418
      %v423 = vld [vmem:[%s377] sm:$0xff]
      %s424 = scalar_lea.vmem %s377, 8
      %v425 = vld [vmem:[%s424] sm:$0xff]
      %s426 = scalar_lea.vmem %s377, 16
      %v427 = vld [vmem:[%s426] sm:$0xff]
      %s428 = scalar_lea.vmem %s377, 24
      %v429 = vld [vmem:[%s428] sm:$0xff]
      %v430 = vld [vmem:[%s391] sm:$0xff]
      %s431 = scalar_select %p417, 1, 0
      %v432 = vstv %s431
      %vm433 = vcmp.eq.s32.totalorder %v432, 1
      %v434 = vsel %vm433, 0.0, %v430
      %v435 = vlaneseq
      %v436 = vand.u32 %v435, 127
      %v437 = vadd.s32 %v436, 128
      %vm438 = vcmp.lt.s32.totalorder %v436, 0
      %v439 = vsub.s32 0, %v436
      %v440 = vsel %vm438, %v439, %v436
      %v441 = vshrl.u32 %v440, 4
      %v442 = vand.u32 %v440, 15
      %v443 = vsub.s32 0, %v442
      %v444 = vsel %vm438, %v443, %v442
      %vm445 = vcmp.lt.s32.totalorder %v437, 0
      %v446 = vsub.s32 0, %v437
      %v447 = vsel %vm445, %v446, %v437
      %v448 = vshrl.u32 %v447, 4
      %v449 = vand.u32 %v447, 15
      %v450 = vsub.s32 0, %v449
      %v451 = vsel %vm445, %v450, %v449
      %vm452 = vcmp.ne.s32.totalorder %v444, 0
      %vm453 = vcmp.ne.s32.totalorder %v451, 0
      %vm454 = vcmp.lt.s32.totalorder %v444, 0
      %vm455 = vcmp.lt.s32.totalorder %v451, 0
      %vm456 = vmand %vm454, %vm452
      %vm457 = vmand %vm455, %vm453
      %v458 = vadd.s32 %v444, 16
      %v459 = vadd.s32 %v451, 16
      %v460 = vsel %vm456, %v458, %v444
      %v461 = vsel %vm457, %v459, %v451
      %vm462 = vcmp.ge.s32.totalorder %v460, 1
      %vm463 = vcmp.ge.s32.totalorder %v461, 1
      %vm464 = vcmp.le.s32.totalorder %v460, 14
      %vm465 = vcmp.le.s32.totalorder %v461, 14
      %v466 = vld [vmem:[%s3] sm:$0xf]
      %v468 = vcombine.high %v422, %v422
      %469 = vrot.lane.b32.xlu0 %v422, 17
      %v470 = vpop.permute.xlu0 %469
      %471 = vrot.lane.b32.xlu0 %v468, 17
      %v472 = vpop.permute.xlu0 %471
      %vm473 = vcmask 138240
      %v474 = vsel %vm473, %v470, %v472
      %v477 = vsel %vm473, 0.0, %v470
      %v478 = vsel %vm462, 1, 0
      %v479 = vsel %vm463, 1, 0
      %vm480 = vcmp.eq.s32.totalorder %v478, 1
      %vm481 = vcmp.eq.s32.totalorder %v479, 1
      %v482 = vsel %vm480, %v477, 0.0
      %v483 = vsel %vm481, %v474, 0.0
      %484 = vst [vmem:[#allocation2] sm:$0xf] %v482
      %485 = vst [vmem:[#allocation2 + $0x8] sm:$0xf] %v483
      %486 = vrot.lane.b32.xlu0 %v422, 16
      %v487 = vpop.permute.xlu0 %486
      %488 = vrot.lane.b32.xlu0 %v468, 16
      %v489 = vpop.permute.xlu0 %488
      %vm490 = vcmask 130048
      %v491 = vsel %vm490, %v487, %v489
      %v493 = vsel %vm490, 0.0, %v487
      %v495 = vrot.slane %v493, 4
      %v496 = vrot.slane %v491, 4
      %499 = vst [vmem:[#allocation2] sm:$0xf0] %v495
      %500 = vst [vmem:[#allocation2 + $0x8] sm:$0xf0] %v496
      %501 = vrot.lane.b32.xlu0 %v422, 15
      %v502 = vpop.permute.xlu0 %501
      %503 = vrot.lane.b32.xlu0 %v468, 15
      %v504 = vpop.permute.xlu0 %503
      %vm505 = vcmask 121856
      %v506 = vsel %vm505, %v502, %v504
      %v509 = vsel %vm505, 0.0, %v502
      %v510 = vsel %vm464, 1, 0
      %v511 = vsel %vm465, 1, 0
      %vm512 = vcmp.eq.s32.totalorder %v510, 1
      %vm513 = vcmp.eq.s32.totalorder %v511, 1
      %v514 = vsel %vm512, %v509, 0.0
      %v515 = vsel %vm513, %v506, 0.0
      %516 = vst [vmem:[#allocation2 + $0x10] sm:$0xf] %v514
      %517 = vst [vmem:[#allocation2 + $0x18] sm:$0xf] %v515
      %518 = vrot.lane.b32.xlu0 %v422, 1
      %v519 = vpop.permute.xlu0 %518
      %520 = vrot.lane.b32.xlu0 %v468, 1
      %v521 = vpop.permute.xlu0 %520
      %vm522 = vcmask 7168
      %v523 = vsel %vm522, %v519, %v521
      %v526 = vsel %vm522, 0.0, %v519
      %v527 = vsel %vm480, %v526, 0.0
      %v528 = vsel %vm481, %v523, 0.0
      %v531 = vrot.slane %v527, 4
      %v532 = vrot.slane %v528, 4
      %535 = vst [vmem:[#allocation2 + $0x10] sm:$0xf0] %v531
      %536 = vst [vmem:[#allocation2 + $0x18] sm:$0xf0] %v532
      %538 = vst [vmem:[#allocation2 + $0x20] sm:$0xf] %v422
      %539 = vst [vmem:[#allocation2 + $0x28] sm:$0xf] %v468
      %540 = vrot.lane.b32.xlu0 %v422, 127
      %v541 = vpop.permute.xlu0 %540
      %542 = vrot.lane.b32.xlu0 %v468, 127
      %v543 = vpop.permute.xlu0 %542
      %vm544 = vcmask 1039360
      %v545 = vsel %vm544, %v541, %v543
      %v548 = vsel %vm544, %v543, 0.0
      %v549 = vsel %vm512, %v545, 0.0
      %v550 = vsel %vm513, %v548, 0.0
      %v553 = vrot.slane %v549, 4
      %v554 = vrot.slane %v550, 4
      %557 = vst [vmem:[#allocation2 + $0x20] sm:$0xf0] %v553
      %558 = vst [vmem:[#allocation2 + $0x28] sm:$0xf0] %v554
      %559 = vrot.lane.b32.xlu0 %v422, 113
      %v560 = vpop.permute.xlu0 %559
      %561 = vrot.lane.b32.xlu0 %v468, 113
      %v562 = vpop.permute.xlu0 %561
      %vm563 = vcmask 924672
      %v564 = vsel %vm563, %v560, %v562
      %v567 = vsel %vm563, %v562, 0.0
      %v568 = vsel %vm480, %v564, 0.0
      %v569 = vsel %vm481, %v567, 0.0
      %570 = vst [vmem:[#allocation2 + $0x30] sm:$0xf] %v568
      %571 = vst [vmem:[#allocation2 + $0x38] sm:$0xf] %v569
      %572 = vrot.lane.b32.xlu0 %v422, 112
      %v573 = vpop.permute.xlu0 %572
      %574 = vrot.lane.b32.xlu0 %v468, 112
      %v575 = vpop.permute.xlu0 %574
      %vm576 = vcmask 916480
      %v577 = vsel %vm576, %v573, %v575
      %v579 = vsel %vm576, %v575, 0.0
      %v581 = vrot.slane %v577, 4
      %v582 = vrot.slane %v579, 4
      %585 = vst [vmem:[#allocation2 + $0x30] sm:$0xf0] %v581
      %586 = vst [vmem:[#allocation2 + $0x38] sm:$0xf0] %v582
      %587 = vrot.lane.b32.xlu0 %v422, 111
      %v588 = vpop.permute.xlu0 %587
      %589 = vrot.lane.b32.xlu0 %v468, 111
      %v590 = vpop.permute.xlu0 %589
      %vm591 = vcmask 908288
      %v592 = vsel %vm591, %v588, %v590
      %v595 = vsel %vm591, %v590, 0.0
      %v596 = vsel %vm512, %v592, 0.0
      %v597 = vsel %vm513, %v595, 0.0
      %598 = vst [vmem:[#allocation2 + $0x40] sm:$0xf] %v596
      %599 = vst [vmem:[#allocation2 + $0x48] sm:$0xf] %v597
      %v601 = vcombine.high %v423, %v423
      %602 = vrot.lane.b32.xlu0 %v423, 17
      %v603 = vpop.permute.xlu0 %602
      %604 = vrot.lane.b32.xlu0 %v601, 17
      %v605 = vpop.permute.xlu0 %604
      %v606 = vsel %vm473, %v603, %v605
      %v609 = vsel %vm473, 0.0, %v603
      %v610 = vsel %vm480, %v609, 0.0
      %v611 = vsel %vm481, %v606, 0.0
      %v614 = vrot.slane %v610, 4
      %v615 = vrot.slane %v611, 4
      %618 = vst [vmem:[#allocation2 + $0x40] sm:$0xf0] %v614
      %619 = vst [vmem:[#allocation2 + $0x48] sm:$0xf0] %v615
      %620 = vrot.lane.b32.xlu0 %v423, 16
      %v621 = vpop.permute.xlu0 %620
      %622 = vrot.lane.b32.xlu0 %v601, 16
      %v623 = vpop.permute.xlu0 %622
      %v624 = vsel %vm490, %v621, %v623
      %v627 = vsel %vm490, 0.0, %v621
      %628 = vst [vmem:[#allocation2 + $0x50] sm:$0xf] %v627
      %629 = vst [vmem:[#allocation2 + $0x58] sm:$0xf] %v624
      %630 = vrot.lane.b32.xlu0 %v423, 15
      %v631 = vpop.permute.xlu0 %630
      %632 = vrot.lane.b32.xlu0 %v601, 15
      %v633 = vpop.permute.xlu0 %632
      %v634 = vsel %vm505, %v631, %v633
      %v637 = vsel %vm505, 0.0, %v631
      %v638 = vsel %vm512, %v637, 0.0
      %v639 = vsel %vm513, %v634, 0.0
      %v642 = vrot.slane %v638, 4
      %v643 = vrot.slane %v639, 4
      %646 = vst [vmem:[#allocation2 + $0x50] sm:$0xf0] %v642
      %647 = vst [vmem:[#allocation2 + $0x58] sm:$0xf0] %v643
      %648 = vrot.lane.b32.xlu0 %v423, 1
      %v649 = vpop.permute.xlu0 %648
      %650 = vrot.lane.b32.xlu0 %v601, 1
      %v651 = vpop.permute.xlu0 %650
      %v652 = vsel %vm522, %v649, %v651
      %v655 = vsel %vm522, 0.0, %v649
      %v656 = vsel %vm480, %v655, 0.0
      %v657 = vsel %vm481, %v652, 0.0
      %658 = vst [vmem:[#allocation2 + $0x60] sm:$0xf] %v656
      %659 = vst [vmem:[#allocation2 + $0x68] sm:$0xf] %v657
      %v660 = vcombine.low %v423, %v423
      %662 = vst [vmem:[#allocation2 + $0x60] sm:$0xf0] %v660
      %663 = vst [vmem:[#allocation2 + $0x68] sm:$0xf0] %v423
      %664 = vrot.lane.b32.xlu0 %v423, 127
      %v665 = vpop.permute.xlu0 %664
      %666 = vrot.lane.b32.xlu0 %v601, 127
      %v667 = vpop.permute.xlu0 %666
      %v668 = vsel %vm544, %v665, %v667
      %v671 = vsel %vm544, %v667, 0.0
      %v672 = vsel %vm512, %v668, 0.0
      %v673 = vsel %vm513, %v671, 0.0
      %674 = vst [vmem:[#allocation2 + $0x70] sm:$0xf] %v672
      %675 = vst [vmem:[#allocation2 + $0x78] sm:$0xf] %v673
      %676 = vrot.lane.b32.xlu0 %v423, 113
      %v677 = vpop.permute.xlu0 %676
      %678 = vrot.lane.b32.xlu0 %v601, 113
      %v679 = vpop.permute.xlu0 %678
      %v680 = vsel %vm563, %v677, %v679
      %v683 = vsel %vm563, %v679, 0.0
      %v684 = vsel %vm480, %v680, 0.0
      %v685 = vsel %vm481, %v683, 0.0
      %v688 = vrot.slane %v684, 4
      %v689 = vrot.slane %v685, 4
      %692 = vst [vmem:[#allocation2 + $0x70] sm:$0xf0] %v688
      %693 = vst [vmem:[#allocation2 + $0x78] sm:$0xf0] %v689
      %694 = vrot.lane.b32.xlu0 %v423, 112
      %v695 = vpop.permute.xlu0 %694
      %696 = vrot.lane.b32.xlu0 %v601, 112
      %v697 = vpop.permute.xlu0 %696
      %v698 = vsel %vm576, %v695, %v697
      %v701 = vsel %vm576, %v697, 0.0
      %702 = vst [vmem:[#allocation2 + $0x80] sm:$0xf] %v698
      %703 = vst [vmem:[#allocation2 + $0x88] sm:$0xf] %v701
      %704 = vrot.lane.b32.xlu0 %v423, 111
      %v705 = vpop.permute.xlu0 %704
      %706 = vrot.lane.b32.xlu0 %v601, 111
      %v707 = vpop.permute.xlu0 %706
      %v708 = vsel %vm591, %v705, %v707
      %v711 = vsel %vm591, %v707, 0.0
      %v712 = vsel %vm512, %v708, 0.0
      %v713 = vsel %vm513, %v711, 0.0
      %v716 = vrot.slane %v712, 4
      %v717 = vrot.slane %v713, 4
      %720 = vst [vmem:[#allocation2 + $0x80] sm:$0xf0] %v716
      %721 = vst [vmem:[#allocation2 + $0x88] sm:$0xf0] %v717
      %v723 = vcombine.high %v425, %v425
      %724 = vrot.lane.b32.xlu0 %v425, 17
      %v725 = vpop.permute.xlu0 %724
      %726 = vrot.lane.b32.xlu0 %v723, 17
      %v727 = vpop.permute.xlu0 %726
      %v728 = vsel %vm473, %v725, %v727
      %v731 = vsel %vm473, 0.0, %v725
      %v732 = vsel %vm480, %v731, 0.0
      %v733 = vsel %vm481, %v728, 0.0
      %734 = vst [vmem:[#allocation2 + $0x90] sm:$0xf] %v732
      %735 = vst [vmem:[#allocation2 + $0x98] sm:$0xf] %v733
      %736 = vrot.lane.b32.xlu0 %v425, 16
      %v737 = vpop.permute.xlu0 %736
      %738 = vrot.lane.b32.xlu0 %v723, 16
      %v739 = vpop.permute.xlu0 %738
      %v740 = vsel %vm490, %v737, %v739
      %v743 = vsel %vm490, 0.0, %v737
      %v745 = vrot.slane %v743, 4
      %v746 = vrot.slane %v740, 4
      %749 = vst [vmem:[#allocation2 + $0x90] sm:$0xf0] %v745
      %750 = vst [vmem:[#allocation2 + $0x98] sm:$0xf0] %v746
      %751 = vrot.lane.b32.xlu0 %v425, 15
      %v752 = vpop.permute.xlu0 %751
      %753 = vrot.lane.b32.xlu0 %v723, 15
      %v754 = vpop.permute.xlu0 %753
      %v755 = vsel %vm505, %v752, %v754
      %v758 = vsel %vm505, 0.0, %v752
      %v759 = vsel %vm512, %v758, 0.0
      %v760 = vsel %vm513, %v755, 0.0
      %761 = vst [vmem:[#allocation2 + $0xa0] sm:$0xf] %v759
      %762 = vst [vmem:[#allocation2 + $0xa8] sm:$0xf] %v760
      %763 = vrot.lane.b32.xlu0 %v425, 1
      %v764 = vpop.permute.xlu0 %763
      %765 = vrot.lane.b32.xlu0 %v723, 1
      %v766 = vpop.permute.xlu0 %765
      %v767 = vsel %vm522, %v764, %v766
      %v770 = vsel %vm522, 0.0, %v764
      %v771 = vsel %vm480, %v770, 0.0
      %v772 = vsel %vm481, %v767, 0.0
      %v775 = vrot.slane %v771, 4
      %v776 = vrot.slane %v772, 4
      %779 = vst [vmem:[#allocation2 + $0xa0] sm:$0xf0] %v775
      %780 = vst [vmem:[#allocation2 + $0xa8] sm:$0xf0] %v776
      %782 = vst [vmem:[#allocation2 + $0xb0] sm:$0xf] %v425
      %783 = vst [vmem:[#allocation2 + $0xb8] sm:$0xf] %v723
      %784 = vrot.lane.b32.xlu0 %v425, 127
      %v785 = vpop.permute.xlu0 %784
      %786 = vrot.lane.b32.xlu0 %v723, 127
      %v787 = vpop.permute.xlu0 %786
      %v788 = vsel %vm544, %v785, %v787
      %v791 = vsel %vm544, %v787, 0.0
      %v792 = vsel %vm512, %v788, 0.0
      %v793 = vsel %vm513, %v791, 0.0
      %v796 = vrot.slane %v792, 4
      %v797 = vrot.slane %v793, 4
      %800 = vst [vmem:[#allocation2 + $0xb0] sm:$0xf0] %v796
      %801 = vst [vmem:[#allocation2 + $0xb8] sm:$0xf0] %v797
      %802 = vrot.lane.b32.xlu0 %v425, 113
      %v803 = vpop.permute.xlu0 %802
      %804 = vrot.lane.b32.xlu0 %v723, 113
      %v805 = vpop.permute.xlu0 %804
      %v806 = vsel %vm563, %v803, %v805
      %v809 = vsel %vm563, %v805, 0.0
      %v810 = vsel %vm480, %v806, 0.0
      %v811 = vsel %vm481, %v809, 0.0
      %812 = vst [vmem:[#allocation2 + $0xc0] sm:$0xf] %v810
      %813 = vst [vmem:[#allocation2 + $0xc8] sm:$0xf] %v811
      %814 = vrot.lane.b32.xlu0 %v425, 112
      %v815 = vpop.permute.xlu0 %814
      %816 = vrot.lane.b32.xlu0 %v723, 112
      %v817 = vpop.permute.xlu0 %816
      %v818 = vsel %vm576, %v815, %v817
      %v821 = vsel %vm576, %v817, 0.0
      %v823 = vrot.slane %v818, 4
      %v824 = vrot.slane %v821, 4
      %827 = vst [vmem:[#allocation2 + $0xc0] sm:$0xf0] %v823
      %828 = vst [vmem:[#allocation2 + $0xc8] sm:$0xf0] %v824
      %829 = vrot.lane.b32.xlu0 %v425, 111
      %v830 = vpop.permute.xlu0 %829
      %831 = vrot.lane.b32.xlu0 %v723, 111
      %v832 = vpop.permute.xlu0 %831
      %v833 = vsel %vm591, %v830, %v832
      %v836 = vsel %vm591, %v832, 0.0
      %v837 = vsel %vm512, %v833, 0.0
      %v838 = vsel %vm513, %v836, 0.0
      %839 = vst [vmem:[#allocation2 + $0xd0] sm:$0xf] %v837
      %840 = vst [vmem:[#allocation2 + $0xd8] sm:$0xf] %v838
      %v841 = vld [vmem:[#allocation2] sm:$0xff]
      %v842 = vld [vmem:[#allocation2 + $0x8] sm:$0xff]
      %v843 = vld [vmem:[#allocation2 + $0x10] sm:$0xff]
      %v844 = vld [vmem:[#allocation2 + $0x18] sm:$0xff]
      %v845 = vld [vmem:[#allocation2 + $0x20] sm:$0xff]
      %v846 = vld [vmem:[#allocation2 + $0x28] sm:$0xff]
      %v847 = vld [vmem:[#allocation2 + $0x30] sm:$0xff]
      %v848 = vld [vmem:[#allocation2 + $0x38] sm:$0xff]
      %v849 = vld [vmem:[#allocation2 + $0x40] sm:$0xff]
      %v850 = vld [vmem:[#allocation2 + $0x48] sm:$0xff]
      %v851 = vld [vmem:[#allocation2 + $0x50] sm:$0xff]
      %v852 = vld [vmem:[#allocation2 + $0x58] sm:$0xff]
      %v853 = vld [vmem:[#allocation2 + $0x60] sm:$0xff]
      %v854 = vld [vmem:[#allocation2 + $0x68] sm:$0xff]
      %v855 = vld [vmem:[#allocation2 + $0x70] sm:$0xff]
      %v856 = vld [vmem:[#allocation2 + $0x78] sm:$0xff]
      %v857 = vld [vmem:[#allocation2 + $0x80] sm:$0xff]
      %v858 = vld [vmem:[#allocation2 + $0x88] sm:$0xff]
      %v859 = vld [vmem:[#allocation2 + $0x90] sm:$0xff]
      %v860 = vld [vmem:[#allocation2 + $0x98] sm:$0xff]
      %v861 = vld [vmem:[#allocation2 + $0xa0] sm:$0xff]
      %v862 = vld [vmem:[#allocation2 + $0xa8] sm:$0xff]
      %v863 = vld [vmem:[#allocation2 + $0xb0] sm:$0xff]
      %v864 = vld [vmem:[#allocation2 + $0xb8] sm:$0xff]
      %v865 = vld [vmem:[#allocation2 + $0xc0] sm:$0xff]
      %v866 = vld [vmem:[#allocation2 + $0xc8] sm:$0xff]
      %v867 = vld [vmem:[#allocation2 + $0xd0] sm:$0xf]
      %v868 = vld [vmem:[#allocation2 + $0xd8] sm:$0xf]
      %vm869 = vcmask 883712
      %v871 = vsel %vm869, %v466, 0
      %vm873 = vcmask 1043456
      %v875 = vsel %vm873, %v867, 0
      %v878 = vsel %vm873, %v868, 0
      %880 = vmatprep.subr.mxu0 0.0
      %881 = vmatpush1.msra.mxu0 0.0
      %882 = vmatprep.subr.mxu0 0.0
      %883 = vmatpush1.msra.mxu0 0.0
      %884 = vmatprep.subr.mxu0 %v878
      %885 = vmatpush1.msra.mxu0 %v875
      %886 = vmatprep.subr.mxu0 %v866
      %887 = vmatpush1.msra.mxu0 %v865
      %888 = vmatprep.subr.mxu0 %v864
      %889 = vmatpush1.msra.mxu0 %v863
      %890 = vmatprep.subr.mxu0 %v862
      %891 = vmatpush1.msra.mxu0 %v861
      %892 = vmatprep.subr.mxu0 %v860
      %893 = vmatpush1.msra.mxu0 %v859
      %894 = vmatprep.subr.mxu0 %v858
      %895 = vmatpush1.msra.mxu0 %v857
      %896 = vmatprep.subr.mxu0 %v856
      %897 = vmatpush1.msra.mxu0 %v855
      %898 = vmatprep.subr.mxu0 %v854
      %899 = vmatpush1.msra.mxu0 %v853
      %900 = vmatprep.subr.mxu0 %v852
      %901 = vmatpush1.msra.mxu0 %v851
      %902 = vmatprep.subr.mxu0 %v850
      %903 = vmatpush1.msra.mxu0 %v849
      %904 = vmatprep.subr.mxu0 %v848
      %905 = vmatpush1.msra.mxu0 %v847
      %906 = vmatprep.subr.mxu0 %v846
      %907 = vmatpush1.msra.mxu0 %v845
      %908 = vmatprep.subr.mxu0 %v844
      %909 = vmatpush1.msra.mxu0 %v843
      %910 = vmatprep.subr.mxu0 %v842
      %911 = vmatpush1.msra.mxu0 %v841
      %912 = vmatprep.subr.mxu0 0.0
      %913 = vmatpush2.msra.mxu0 0.0
      %914 = vmatprep.subr.mxu0 0.0
      %915 = vmatpush2.msra.mxu0 0.0
      %916 = vmatprep.subr.mxu0 0.0
      %917 = vmatpush2.msra.mxu0 0.0
      %918 = vmatprep.subr.mxu0 0.0
      %919 = vmatpush2.msra.mxu0 0.0
      %920 = vmatprep.subr.mxu0 0.0
      %921 = vmatpush2.msra.mxu0 0.0
      %922 = vmatprep.subr.mxu0 0.0
      %923 = vmatpush2.msra.mxu0 0.0
      %924 = vmatprep.subr.mxu0 0.0
      %925 = vmatpush2.msra.mxu0 0.0
      %926 = vmatprep.subr.mxu0 0.0
      %927 = vmatpush2.msra.mxu0 0.0
      %928 = vmatprep.subr.mxu0 0.0
      %929 = vmatpush2.msra.mxu0 0.0
      %930 = vmatprep.subr.mxu0 0.0
      %931 = vmatpush2.msra.mxu0 0.0
      %932 = vmatprep.subr.mxu0 0.0
      %933 = vmatpush2.msra.mxu0 0.0
      %934 = vmatprep.subr.mxu0 0.0
      %935 = vmatpush2.msra.mxu0 0.0
      %936 = vmatprep.subr.mxu0 0.0
      %937 = vmatpush2.msra.mxu0 0.0
      %938 = vmatprep.subr.mxu0 0.0
      %939 = vmatpush2.msra.mxu0 0.0
      %940 = vmatprep.subr.mxu0 0.0
      %941 = vmatpush2.msra.mxu0 0.0
      %942 = vmatprep.subr.mxu0 0.0
      %943 = vmatpush2.msra.mxu0 0.0
      %944 = vmatprep.mubr.f32.mxu0 0.0
      %945 = vmatmul.mubr.f32.gmra.mxu0 %v871
      %v946 = vpop.f32.mrf.mxu0
      %v947 = vadd.f32 0.0, %v946
      %v948 = vpop.f32.mrf.mxu0
      %v949 = vadd.f32 0.0, %v948
      %950 = vdwg.mxu0
      %v953 = vcombine.low %v947, %v949
      %955 = vst [vmem:[%s405] sm:$0xff] %v953
      %v956 = vsel %vm873, %v947, 0.0
      %v957 = vsel %vm873, %v949, 0.0
      %v958 = vadd.f32 %v956, %v957
      %959 = vadd.xlane.f32.xlu0 %v958
      %v960 = vpop.xlane.xlu0 %959
      %v961 = vmul.f32 %v960, 0.00390625
      %v962 = vsub.f32 %v947, %v961
      %v963 = vsub.f32 %v949, %v961
      %v964 = vmul.f32 %v962, %v962
      %v965 = vmul.f32 %v963, %v963
      %v966 = vsel %vm873, %v964, 0.0
      %v967 = vsel %vm873, %v965, 0.0
      %v968 = vadd.f32 %v966, %v967
      %969 = vadd.xlane.f32.xlu0 %v968
      %v970 = vpop.xlane.xlu0 %969
      %vm971 = vcmask 3072
      %972 = vst.msk [vmem:[%s415] sm:$0xf] %vm971, %v960
      %vm973 = vcmask 11272
      %974 = vst.msk [vmem:[%s415] sm:$0xf] %vm973, %v970
      %975 = vst [vmem:[#allocation2] sm:$0xf] %v610
      %976 = vst [vmem:[#allocation2 + $0x8] sm:$0xf] %v611
      %v978 = vrot.slane %v627, 4
      %v979 = vrot.slane %v624, 4
      %982 = vst [vmem:[#allocation2] sm:$0xf0] %v978
      %983 = vst [vmem:[#allocation2 + $0x8] sm:$0xf0] %v979
      %984 = vst [vmem:[#allocation2 + $0x10] sm:$0xf] %v638
      %985 = vst [vmem:[#allocation2 + $0x18] sm:$0xf] %v639
      %v988 = vrot.slane %v656, 4
      %v989 = vrot.slane %v657, 4
      %992 = vst [vmem:[#allocation2 + $0x10] sm:$0xf0] %v988
      %993 = vst [vmem:[#allocation2 + $0x18] sm:$0xf0] %v989
      %995 = vst [vmem:[#allocation2 + $0x20] sm:$0xf] %v423
      %996 = vst [vmem:[#allocation2 + $0x28] sm:$0xf] %v601
      %v999 = vrot.slane %v672, 4
      %v1000 = vrot.slane %v673, 4
      %1003 = vst [vmem:[#allocation2 + $0x20] sm:$0xf0] %v999
      %1004 = vst [vmem:[#allocation2 + $0x28] sm:$0xf0] %v1000
      %1005 = vst [vmem:[#allocation2 + $0x30] sm:$0xf] %v684
      %1006 = vst [vmem:[#allocation2 + $0x38] sm:$0xf] %v685
      %v1008 = vrot.slane %v698, 4
      %v1009 = vrot.slane %v701, 4
      %1012 = vst [vmem:[#allocation2 + $0x30] sm:$0xf0] %v1008
      %1013 = vst [vmem:[#allocation2 + $0x38] sm:$0xf0] %v1009
      %1014 = vst [vmem:[#allocation2 + $0x40] sm:$0xf] %v712
      %1015 = vst [vmem:[#allocation2 + $0x48] sm:$0xf] %v713
      %v1018 = vrot.slane %v732, 4
      %v1019 = vrot.slane %v733, 4
      %1022 = vst [vmem:[#allocation2 + $0x40] sm:$0xf0] %v1018
      %1023 = vst [vmem:[#allocation2 + $0x48] sm:$0xf0] %v1019
      %1024 = vst [vmem:[#allocation2 + $0x50] sm:$0xf] %v743
      %1025 = vst [vmem:[#allocation2 + $0x58] sm:$0xf] %v740
      %v1028 = vrot.slane %v759, 4
      %v1029 = vrot.slane %v760, 4
      %1032 = vst [vmem:[#allocation2 + $0x50] sm:$0xf0] %v1028
      %1033 = vst [vmem:[#allocation2 + $0x58] sm:$0xf0] %v1029
      %1034 = vst [vmem:[#allocation2 + $0x60] sm:$0xf] %v771
      %1035 = vst [vmem:[#allocation2 + $0x68] sm:$0xf] %v772
      %v1036 = vcombine.low %v425, %v425
      %1038 = vst [vmem:[#allocation2 + $0x60] sm:$0xf0] %v1036
      %1039 = vst [vmem:[#allocation2 + $0x68] sm:$0xf0] %v425
      %1040 = vst [vmem:[#allocation2 + $0x70] sm:$0xf] %v792
      %1041 = vst [vmem:[#allocation2 + $0x78] sm:$0xf] %v793
      %v1044 = vrot.slane %v810, 4
      %v1045 = vrot.slane %v811, 4
      %1048 = vst [vmem:[#allocation2 + $0x70] sm:$0xf0] %v1044
      %1049 = vst [vmem:[#allocation2 + $0x78] sm:$0xf0] %v1045
      %1050 = vst [vmem:[#allocation2 + $0x80] sm:$0xf] %v818
      %1051 = vst [vmem:[#allocation2 + $0x88] sm:$0xf] %v821
      %v1054 = vrot.slane %v837, 4
      %v1055 = vrot.slane %v838, 4
      %1058 = vst [vmem:[#allocation2 + $0x80] sm:$0xf0] %v1054
      %1059 = vst [vmem:[#allocation2 + $0x88] sm:$0xf0] %v1055
      %v1061 = vcombine.high %v427, %v427
      %1062 = vrot.lane.b32.xlu0 %v427, 17
      %v1063 = vpop.permute.xlu0 %1062
      %1064 = vrot.lane.b32.xlu0 %v1061, 17
      %v1065 = vpop.permute.xlu0 %1064
      %v1066 = vsel %vm473, %v1063, %v1065
      %v1069 = vsel %vm473, 0.0, %v1063
      %v1070 = vsel %vm480, %v1069, 0.0
      %v1071 = vsel %vm481, %v1066, 0.0
      %1072 = vst [vmem:[#allocation2 + $0x90] sm:$0xf] %v1070
      %1073 = vst [vmem:[#allocation2 + $0x98] sm:$0xf] %v1071
      %1074 = vrot.lane.b32.xlu0 %v427, 16
      %v1075 = vpop.permute.xlu0 %1074
      %1076 = vrot.lane.b32.xlu0 %v1061, 16
      %v1077 = vpop.permute.xlu0 %1076
      %v1078 = vsel %vm490, %v1075, %v1077
      %v1081 = vsel %vm490, 0.0, %v1075
      %v1083 = vrot.slane %v1081, 4
      %v1084 = vrot.slane %v1078, 4
      %1087 = vst [vmem:[#allocation2 + $0x90] sm:$0xf0] %v1083
      %1088 = vst [vmem:[#allocation2 + $0x98] sm:$0xf0] %v1084
      %1089 = vrot.lane.b32.xlu0 %v427, 15
      %v1090 = vpop.permute.xlu0 %1089
      %1091 = vrot.lane.b32.xlu0 %v1061, 15
      %v1092 = vpop.permute.xlu0 %1091
      %v1093 = vsel %vm505, %v1090, %v1092
      %v1096 = vsel %vm505, 0.0, %v1090
      %v1097 = vsel %vm512, %v1096, 0.0
      %v1098 = vsel %vm513, %v1093, 0.0
      %1099 = vst [vmem:[#allocation2 + $0xa0] sm:$0xf] %v1097
      %1100 = vst [vmem:[#allocation2 + $0xa8] sm:$0xf] %v1098
      %1101 = vrot.lane.b32.xlu0 %v427, 1
      %v1102 = vpop.permute.xlu0 %1101
      %1103 = vrot.lane.b32.xlu0 %v1061, 1
      %v1104 = vpop.permute.xlu0 %1103
      %v1105 = vsel %vm522, %v1102, %v1104
      %v1108 = vsel %vm522, 0.0, %v1102
      %v1109 = vsel %vm480, %v1108, 0.0
      %v1110 = vsel %vm481, %v1105, 0.0
      %v1113 = vrot.slane %v1109, 4
      %v1114 = vrot.slane %v1110, 4
      %1117 = vst [vmem:[#allocation2 + $0xa0] sm:$0xf0] %v1113
      %1118 = vst [vmem:[#allocation2 + $0xa8] sm:$0xf0] %v1114
      %1120 = vst [vmem:[#allocation2 + $0xb0] sm:$0xf] %v427
      %1121 = vst [vmem:[#allocation2 + $0xb8] sm:$0xf] %v1061
      %1122 = vrot.lane.b32.xlu0 %v427, 127
      %v1123 = vpop.permute.xlu0 %1122
      %1124 = vrot.lane.b32.xlu0 %v1061, 127
      %v1125 = vpop.permute.xlu0 %1124
      %v1126 = vsel %vm544, %v1123, %v1125
      %v1129 = vsel %vm544, %v1125, 0.0
      %v1130 = vsel %vm512, %v1126, 0.0
      %v1131 = vsel %vm513, %v1129, 0.0
      %v1134 = vrot.slane %v1130, 4
      %v1135 = vrot.slane %v1131, 4
      %1138 = vst [vmem:[#allocation2 + $0xb0] sm:$0xf0] %v1134
      %1139 = vst [vmem:[#allocation2 + $0xb8] sm:$0xf0] %v1135
      %1140 = vrot.lane.b32.xlu0 %v427, 113
      %v1141 = vpop.permute.xlu0 %1140
      %1142 = vrot.lane.b32.xlu0 %v1061, 113
      %v1143 = vpop.permute.xlu0 %1142
      %v1144 = vsel %vm563, %v1141, %v1143
      %v1147 = vsel %vm563, %v1143, 0.0
      %v1148 = vsel %vm480, %v1144, 0.0
      %v1149 = vsel %vm481, %v1147, 0.0
      %1150 = vst [vmem:[#allocation2 + $0xc0] sm:$0xf] %v1148
      %1151 = vst [vmem:[#allocation2 + $0xc8] sm:$0xf] %v1149
      %1152 = vrot.lane.b32.xlu0 %v427, 112
      %v1153 = vpop.permute.xlu0 %1152
      %1154 = vrot.lane.b32.xlu0 %v1061, 112
      %v1155 = vpop.permute.xlu0 %1154
      %v1156 = vsel %vm576, %v1153, %v1155
      %v1159 = vsel %vm576, %v1155, 0.0
      %v1161 = vrot.slane %v1156, 4
      %v1162 = vrot.slane %v1159, 4
      %1165 = vst [vmem:[#allocation2 + $0xc0] sm:$0xf0] %v1161
      %1166 = vst [vmem:[#allocation2 + $0xc8] sm:$0xf0] %v1162
      %1167 = vrot.lane.b32.xlu0 %v427, 111
      %v1168 = vpop.permute.xlu0 %1167
      %1169 = vrot.lane.b32.xlu0 %v1061, 111
      %v1170 = vpop.permute.xlu0 %1169
      %v1171 = vsel %vm591, %v1168, %v1170
      %v1174 = vsel %vm591, %v1170, 0.0
      %v1175 = vsel %vm512, %v1171, 0.0
      %v1176 = vsel %vm513, %v1174, 0.0
      %1177 = vst [vmem:[#allocation2 + $0xd0] sm:$0xf] %v1175
      %1178 = vst [vmem:[#allocation2 + $0xd8] sm:$0xf] %v1176
      %v1179 = vld [vmem:[#allocation2] sm:$0xff]
      %v1180 = vld [vmem:[#allocation2 + $0x8] sm:$0xff]
      %v1181 = vld [vmem:[#allocation2 + $0x10] sm:$0xff]
      %v1182 = vld [vmem:[#allocation2 + $0x18] sm:$0xff]
      %v1183 = vld [vmem:[#allocation2 + $0x20] sm:$0xff]
      %v1184 = vld [vmem:[#allocation2 + $0x28] sm:$0xff]
      %v1185 = vld [vmem:[#allocation2 + $0x30] sm:$0xff]
      %v1186 = vld [vmem:[#allocation2 + $0x38] sm:$0xff]
      %v1187 = vld [vmem:[#allocation2 + $0x40] sm:$0xff]
      %v1188 = vld [vmem:[#allocation2 + $0x48] sm:$0xff]
      %v1189 = vld [vmem:[#allocation2 + $0x50] sm:$0xff]
      %v1190 = vld [vmem:[#allocation2 + $0x58] sm:$0xff]
      %v1191 = vld [vmem:[#allocation2 + $0x60] sm:$0xff]
      %v1192 = vld [vmem:[#allocation2 + $0x68] sm:$0xff]
      %v1193 = vld [vmem:[#allocation2 + $0x70] sm:$0xff]
      %v1194 = vld [vmem:[#allocation2 + $0x78] sm:$0xff]
      %v1195 = vld [vmem:[#allocation2 + $0x80] sm:$0xff]
      %v1196 = vld [vmem:[#allocation2 + $0x88] sm:$0xff]
      %v1197 = vld [vmem:[#allocation2 + $0x90] sm:$0xff]
      %v1198 = vld [vmem:[#allocation2 + $0x98] sm:$0xff]
      %v1199 = vld [vmem:[#allocation2 + $0xa0] sm:$0xff]
      %v1200 = vld [vmem:[#allocation2 + $0xa8] sm:$0xff]
      %v1201 = vld [vmem:[#allocation2 + $0xb0] sm:$0xff]
      %v1202 = vld [vmem:[#allocation2 + $0xb8] sm:$0xff]
      %v1203 = vld [vmem:[#allocation2 + $0xc0] sm:$0xff]
      %v1204 = vld [vmem:[#allocation2 + $0xc8] sm:$0xff]
      %v1205 = vld [vmem:[#allocation2 + $0xd0] sm:$0xf]
      %v1206 = vld [vmem:[#allocation2 + $0xd8] sm:$0xf]
      %v1208 = vsel %vm873, %v1205, 0
      %v1211 = vsel %vm873, %v1206, 0
      %1213 = vmatprep.subr.mxu0 0.0
      %1214 = vmatpush1.msra.mxu0 0.0
      %1215 = vmatprep.subr.mxu0 0.0
      %1216 = vmatpush1.msra.mxu0 0.0
      %1217 = vmatprep.subr.mxu0 %v1211
      %1218 = vmatpush1.msra.mxu0 %v1208
      %1219 = vmatprep.subr.mxu0 %v1204
      %1220 = vmatpush1.msra.mxu0 %v1203
      %1221 = vmatprep.subr.mxu0 %v1202
      %1222 = vmatpush1.msra.mxu0 %v1201
      %1223 = vmatprep.subr.mxu0 %v1200
      %1224 = vmatpush1.msra.mxu0 %v1199
      %1225 = vmatprep.subr.mxu0 %v1198
      %1226 = vmatpush1.msra.mxu0 %v1197
      %1227 = vmatprep.subr.mxu0 %v1196
      %1228 = vmatpush1.msra.mxu0 %v1195
      %1229 = vmatprep.subr.mxu0 %v1194
      %1230 = vmatpush1.msra.mxu0 %v1193
      %1231 = vmatprep.subr.mxu0 %v1192
      %1232 = vmatpush1.msra.mxu0 %v1191
      %1233 = vmatprep.subr.mxu0 %v1190
      %1234 = vmatpush1.msra.mxu0 %v1189
      %1235 = vmatprep.subr.mxu0 %v1188
      %1236 = vmatpush1.msra.mxu0 %v1187
      %1237 = vmatprep.subr.mxu0 %v1186
      %1238 = vmatpush1.msra.mxu0 %v1185
      %1239 = vmatprep.subr.mxu0 %v1184
      %1240 = vmatpush1.msra.mxu0 %v1183
      %1241 = vmatprep.subr.mxu0 %v1182
      %1242 = vmatpush1.msra.mxu0 %v1181
      %1243 = vmatprep.subr.mxu0 %v1180
      %1244 = vmatpush1.msra.mxu0 %v1179
      %1245 = vmatprep.subr.mxu0 0.0
      %1246 = vmatpush2.msra.mxu0 0.0
      %1247 = vmatprep.subr.mxu0 0.0
      %1248 = vmatpush2.msra.mxu0 0.0
      %1249 = vmatprep.subr.mxu0 0.0
      %1250 = vmatpush2.msra.mxu0 0.0
      %1251 = vmatprep.subr.mxu0 0.0
      %1252 = vmatpush2.msra.mxu0 0.0
      %1253 = vmatprep.subr.mxu0 0.0
      %1254 = vmatpush2.msra.mxu0 0.0
      %1255 = vmatprep.subr.mxu0 0.0
      %1256 = vmatpush2.msra.mxu0 0.0
      %1257 = vmatprep.subr.mxu0 0.0
      %1258 = vmatpush2.msra.mxu0 0.0
      %1259 = vmatprep.subr.mxu0 0.0
      %1260 = vmatpush2.msra.mxu0 0.0
      %1261 = vmatprep.subr.mxu0 0.0
      %1262 = vmatpush2.msra.mxu0 0.0
      %1263 = vmatprep.subr.mxu0 0.0
      %1264 = vmatpush2.msra.mxu0 0.0
      %1265 = vmatprep.subr.mxu0 0.0
      %1266 = vmatpush2.msra.mxu0 0.0
      %1267 = vmatprep.subr.mxu0 0.0
      %1268 = vmatpush2.msra.mxu0 0.0
      %1269 = vmatprep.subr.mxu0 0.0
      %1270 = vmatpush2.msra.mxu0 0.0
      %1271 = vmatprep.subr.mxu0 0.0
      %1272 = vmatpush2.msra.mxu0 0.0
      %1273 = vmatprep.subr.mxu0 0.0
      %1274 = vmatpush2.msra.mxu0 0.0
      %1275 = vmatprep.subr.mxu0 0.0
      %1276 = vmatpush2.msra.mxu0 0.0
      %1277 = vmatprep.mubr.f32.mxu0 0.0
      %1278 = vmatmul.mubr.f32.gmra.mxu0 %v871
      %v1279 = vpop.f32.mrf.mxu0
      %v1280 = vadd.f32 0.0, %v1279
      %v1281 = vpop.f32.mrf.mxu0
      %v1282 = vadd.f32 0.0, %v1281
      %1283 = vdwg.mxu0
      %v1286 = vcombine.low %v1280, %v1282
      %s1288 = scalar_lea.vmem %s405, 8
      %1289 = vst [vmem:[%s1288] sm:$0xff] %v1286
      %v1290 = vsel %vm873, %v1280, 0.0
      %v1291 = vsel %vm873, %v1282, 0.0
      %v1292 = vadd.f32 %v1290, %v1291
      %1293 = vadd.xlane.f32.xlu0 %v1292
      %v1294 = vpop.xlane.xlu0 %1293
      %v1295 = vmul.f32 %v1294, 0.00390625
      %v1296 = vsub.f32 %v1280, %v1295
      %v1297 = vsub.f32 %v1282, %v1295
      %v1298 = vmul.f32 %v1296, %v1296
      %v1299 = vmul.f32 %v1297, %v1297
      %v1300 = vsel %vm873, %v1298, 0.0
      %v1301 = vsel %vm873, %v1299, 0.0
      %v1302 = vadd.f32 %v1300, %v1301
      %1303 = vadd.xlane.f32.xlu0 %v1302
      %v1304 = vpop.xlane.xlu0 %1303
      %s1305 = scalar_lea.vmem %s415, 4
      %1306 = vst.msk [vmem:[%s1305] sm:$0xf] %vm971, %v1294
      %1307 = vst.msk [vmem:[%s1305] sm:$0xf] %vm973, %v1304
      %1308 = vst [vmem:[#allocation2] sm:$0xf] %v732
      %1309 = vst [vmem:[#allocation2 + $0x8] sm:$0xf] %v733
      %1310 = vst [vmem:[#allocation2] sm:$0xf0] %v745
      %1311 = vst [vmem:[#allocation2 + $0x8] sm:$0xf0] %v746
      %1312 = vst [vmem:[#allocation2 + $0x10] sm:$0xf] %v759
      %1313 = vst [vmem:[#allocation2 + $0x18] sm:$0xf] %v760
      %1314 = vst [vmem:[#allocation2 + $0x10] sm:$0xf0] %v775
      %1315 = vst [vmem:[#allocation2 + $0x18] sm:$0xf0] %v776
      %1316 = vst [vmem:[#allocation2 + $0x20] sm:$0xf] %v425
      %1317 = vst [vmem:[#allocation2 + $0x28] sm:$0xf] %v723
      %1318 = vst [vmem:[#allocation2 + $0x20] sm:$0xf0] %v796
      %1319 = vst [vmem:[#allocation2 + $0x28] sm:$0xf0] %v797
      %1320 = vst [vmem:[#allocation2 + $0x30] sm:$0xf] %v810
      %1321 = vst [vmem:[#allocation2 + $0x38] sm:$0xf] %v811
      %1322 = vst [vmem:[#allocation2 + $0x30] sm:$0xf0] %v823
      %1323 = vst [vmem:[#allocation2 + $0x38] sm:$0xf0] %v824
      %1324 = vst [vmem:[#allocation2 + $0x40] sm:$0xf] %v837
      %1325 = vst [vmem:[#allocation2 + $0x48] sm:$0xf] %v838
      %v1328 = vrot.slane %v1070, 4
      %v1329 = vrot.slane %v1071, 4
      %1332 = vst [vmem:[#allocation2 + $0x40] sm:$0xf0] %v1328
      %1333 = vst [vmem:[#allocation2 + $0x48] sm:$0xf0] %v1329
      %1334 = vst [vmem:[#allocation2 + $0x50] sm:$0xf] %v1081
      %1335 = vst [vmem:[#allocation2 + $0x58] sm:$0xf] %v1078
      %v1338 = vrot.slane %v1097, 4
      %v1339 = vrot.slane %v1098, 4
      %1342 = vst [vmem:[#allocation2 + $0x50] sm:$0xf0] %v1338
      %1343 = vst [vmem:[#allocation2 + $0x58] sm:$0xf0] %v1339
      %1344 = vst [vmem:[#allocation2 + $0x60] sm:$0xf] %v1109
      %1345 = vst [vmem:[#allocation2 + $0x68] sm:$0xf] %v1110
      %v1346 = vcombine.low %v427, %v427
      %1348 = vst [vmem:[#allocation2 + $0x60] sm:$0xf0] %v1346
      %1349 = vst [vmem:[#allocation2 + $0x68] sm:$0xf0] %v427
      %1350 = vst [vmem:[#allocation2 + $0x70] sm:$0xf] %v1130
      %1351 = vst [vmem:[#allocation2 + $0x78] sm:$0xf] %v1131
      %v1354 = vrot.slane %v1148, 4
      %v1355 = vrot.slane %v1149, 4
      %1358 = vst [vmem:[#allocation2 + $0x70] sm:$0xf0] %v1354
      %1359 = vst [vmem:[#allocation2 + $0x78] sm:$0xf0] %v1355
      %1360 = vst [vmem:[#allocation2 + $0x80] sm:$0xf] %v1156
      %1361 = vst [vmem:[#allocation2 + $0x88] sm:$0xf] %v1159
      %v1364 = vrot.slane %v1175, 4
      %v1365 = vrot.slane %v1176, 4
      %1368 = vst [vmem:[#allocation2 + $0x80] sm:$0xf0] %v1364
      %1369 = vst [vmem:[#allocation2 + $0x88] sm:$0xf0] %v1365
      %v1371 = vcombine.high %v429, %v429
      %1372 = vrot.lane.b32.xlu0 %v429, 17
      %v1373 = vpop.permute.xlu0 %1372
      %1374 = vrot.lane.b32.xlu0 %v1371, 17
      %v1375 = vpop.permute.xlu0 %1374
      %v1376 = vsel %vm473, %v1373, %v1375
      %v1379 = vsel %vm473, 0.0, %v1373
      %v1380 = vsel %vm480, %v1379, 0.0
      %v1381 = vsel %vm481, %v1376, 0.0
      %1382 = vst [vmem:[#allocation2 + $0x90] sm:$0xf] %v1380
      %1383 = vst [vmem:[#allocation2 + $0x98] sm:$0xf] %v1381
      %1384 = vrot.lane.b32.xlu0 %v429, 16
      %v1385 = vpop.permute.xlu0 %1384
      %1386 = vrot.lane.b32.xlu0 %v1371, 16
      %v1387 = vpop.permute.xlu0 %1386
      %v1388 = vsel %vm490, %v1385, %v1387
      %v1391 = vsel %vm490, 0.0, %v1385
      %v1393 = vrot.slane %v1391, 4
      %v1394 = vrot.slane %v1388, 4
      %1397 = vst [vmem:[#allocation2 + $0x90] sm:$0xf0] %v1393
      %1398 = vst [vmem:[#allocation2 + $0x98] sm:$0xf0] %v1394
      %1399 = vrot.lane.b32.xlu0 %v429, 15
      %v1400 = vpop.permute.xlu0 %1399
      %1401 = vrot.lane.b32.xlu0 %v1371, 15
      %v1402 = vpop.permute.xlu0 %1401
      %v1403 = vsel %vm505, %v1400, %v1402
      %v1406 = vsel %vm505, 0.0, %v1400
      %v1407 = vsel %vm512, %v1406, 0.0
      %v1408 = vsel %vm513, %v1403, 0.0
      %1409 = vst [vmem:[#allocation2 + $0xa0] sm:$0xf] %v1407
      %1410 = vst [vmem:[#allocation2 + $0xa8] sm:$0xf] %v1408
      %1411 = vrot.lane.b32.xlu0 %v429, 1
      %v1412 = vpop.permute.xlu0 %1411
      %1413 = vrot.lane.b32.xlu0 %v1371, 1
      %v1414 = vpop.permute.xlu0 %1413
      %v1415 = vsel %vm522, %v1412, %v1414
      %v1418 = vsel %vm522, 0.0, %v1412
      %v1419 = vsel %vm480, %v1418, 0.0
      %v1420 = vsel %vm481, %v1415, 0.0
      %v1423 = vrot.slane %v1419, 4
      %v1424 = vrot.slane %v1420, 4
      %1427 = vst [vmem:[#allocation2 + $0xa0] sm:$0xf0] %v1423
      %1428 = vst [vmem:[#allocation2 + $0xa8] sm:$0xf0] %v1424
      %1430 = vst [vmem:[#allocation2 + $0xb0] sm:$0xf] %v429
      %1431 = vst [vmem:[#allocation2 + $0xb8] sm:$0xf] %v1371
      %1432 = vrot.lane.b32.xlu0 %v429, 127
      %v1433 = vpop.permute.xlu0 %1432
      %1434 = vrot.lane.b32.xlu0 %v1371, 127
      %v1435 = vpop.permute.xlu0 %1434
      %v1436 = vsel %vm544, %v1433, %v1435
      %v1439 = vsel %vm544, %v1435, 0.0
      %v1440 = vsel %vm512, %v1436, 0.0
      %v1441 = vsel %vm513, %v1439, 0.0
      %v1444 = vrot.slane %v1440, 4
      %v1445 = vrot.slane %v1441, 4
      %1448 = vst [vmem:[#allocation2 + $0xb0] sm:$0xf0] %v1444
      %1449 = vst [vmem:[#allocation2 + $0xb8] sm:$0xf0] %v1445
      %1450 = vrot.lane.b32.xlu0 %v429, 113
      %v1451 = vpop.permute.xlu0 %1450
      %1452 = vrot.lane.b32.xlu0 %v1371, 113
      %v1453 = vpop.permute.xlu0 %1452
      %v1454 = vsel %vm563, %v1451, %v1453
      %v1457 = vsel %vm563, %v1453, 0.0
      %v1458 = vsel %vm480, %v1454, 0.0
      %v1459 = vsel %vm481, %v1457, 0.0
      %1460 = vst [vmem:[#allocation2 + $0xc0] sm:$0xf] %v1458
      %1461 = vst [vmem:[#allocation2 + $0xc8] sm:$0xf] %v1459
      %1462 = vrot.lane.b32.xlu0 %v429, 112
      %v1463 = vpop.permute.xlu0 %1462
      %1464 = vrot.lane.b32.xlu0 %v1371, 112
      %v1465 = vpop.permute.xlu0 %1464
      %v1466 = vsel %vm576, %v1463, %v1465
      %v1469 = vsel %vm576, %v1465, 0.0
      %v1471 = vrot.slane %v1466, 4
      %v1472 = vrot.slane %v1469, 4
      %1475 = vst [vmem:[#allocation2 + $0xc0] sm:$0xf0] %v1471
      %1476 = vst [vmem:[#allocation2 + $0xc8] sm:$0xf0] %v1472
      %1477 = vrot.lane.b32.xlu0 %v429, 111
      %v1478 = vpop.permute.xlu0 %1477
      %1479 = vrot.lane.b32.xlu0 %v1371, 111
      %v1480 = vpop.permute.xlu0 %1479
      %v1481 = vsel %vm591, %v1478, %v1480
      %v1484 = vsel %vm591, %v1480, 0.0
      %v1485 = vsel %vm512, %v1481, 0.0
      %v1486 = vsel %vm513, %v1484, 0.0
      %1487 = vst [vmem:[#allocation2 + $0xd0] sm:$0xf] %v1485
      %1488 = vst [vmem:[#allocation2 + $0xd8] sm:$0xf] %v1486
      %v1489 = vld [vmem:[#allocation2] sm:$0xff]
      %v1490 = vld [vmem:[#allocation2 + $0x8] sm:$0xff]
      %v1491 = vld [vmem:[#allocation2 + $0x10] sm:$0xff]
      %v1492 = vld [vmem:[#allocation2 + $0x18] sm:$0xff]
      %v1493 = vld [vmem:[#allocation2 + $0x20] sm:$0xff]
      %v1494 = vld [vmem:[#allocation2 + $0x28] sm:$0xff]
      %v1495 = vld [vmem:[#allocation2 + $0x30] sm:$0xff]
      %v1496 = vld [vmem:[#allocation2 + $0x38] sm:$0xff]
      %v1497 = vld [vmem:[#allocation2 + $0x40] sm:$0xff]
      %v1498 = vld [vmem:[#allocation2 + $0x48] sm:$0xff]
      %v1499 = vld [vmem:[#allocation2 + $0x50] sm:$0xff]
      %v1500 = vld [vmem:[#allocation2 + $0x58] sm:$0xff]
      %v1501 = vld [vmem:[#allocation2 + $0x60] sm:$0xff]
      %v1502 = vld [vmem:[#allocation2 + $0x68] sm:$0xff]
      %v1503 = vld [vmem:[#allocation2 + $0x70] sm:$0xff]
      %v1504 = vld [vmem:[#allocation2 + $0x78] sm:$0xff]
      %v1505 = vld [vmem:[#allocation2 + $0x80] sm:$0xff]
      %v1506 = vld [vmem:[#allocation2 + $0x88] sm:$0xff]
      %v1507 = vld [vmem:[#allocation2 + $0x90] sm:$0xff]
      %v1508 = vld [vmem:[#allocation2 + $0x98] sm:$0xff]
      %v1509 = vld [vmem:[#allocation2 + $0xa0] sm:$0xff]
      %v1510 = vld [vmem:[#allocation2 + $0xa8] sm:$0xff]
      %v1511 = vld [vmem:[#allocation2 + $0xb0] sm:$0xff]
      %v1512 = vld [vmem:[#allocation2 + $0xb8] sm:$0xff]
      %v1513 = vld [vmem:[#allocation2 + $0xc0] sm:$0xff]
      %v1514 = vld [vmem:[#allocation2 + $0xc8] sm:$0xff]
      %v1515 = vld [vmem:[#allocation2 + $0xd0] sm:$0xf]
      %v1516 = vld [vmem:[#allocation2 + $0xd8] sm:$0xf]
      %v1518 = vsel %vm873, %v1515, 0
      %v1521 = vsel %vm873, %v1516, 0
      %1523 = vmatprep.subr.mxu0 0.0
      %1524 = vmatpush1.msra.mxu0 0.0
      %1525 = vmatprep.subr.mxu0 0.0
      %1526 = vmatpush1.msra.mxu0 0.0
      %1527 = vmatprep.subr.mxu0 %v1521
      %1528 = vmatpush1.msra.mxu0 %v1518
      %1529 = vmatprep.subr.mxu0 %v1514
      %1530 = vmatpush1.msra.mxu0 %v1513
      %1531 = vmatprep.subr.mxu0 %v1512
      %1532 = vmatpush1.msra.mxu0 %v1511
      %1533 = vmatprep.subr.mxu0 %v1510
      %1534 = vmatpush1.msra.mxu0 %v1509
      %1535 = vmatprep.subr.mxu0 %v1508
      %1536 = vmatpush1.msra.mxu0 %v1507
      %1537 = vmatprep.subr.mxu0 %v1506
      %1538 = vmatpush1.msra.mxu0 %v1505
      %1539 = vmatprep.subr.mxu0 %v1504
      %1540 = vmatpush1.msra.mxu0 %v1503
      %1541 = vmatprep.subr.mxu0 %v1502
      %1542 = vmatpush1.msra.mxu0 %v1501
      %1543 = vmatprep.subr.mxu0 %v1500
      %1544 = vmatpush1.msra.mxu0 %v1499
      %1545 = vmatprep.subr.mxu0 %v1498
      %1546 = vmatpush1.msra.mxu0 %v1497
      %1547 = vmatprep.subr.mxu0 %v1496
      %1548 = vmatpush1.msra.mxu0 %v1495
      %1549 = vmatprep.subr.mxu0 %v1494
      %1550 = vmatpush1.msra.mxu0 %v1493
      %1551 = vmatprep.subr.mxu0 %v1492
      %1552 = vmatpush1.msra.mxu0 %v1491
      %1553 = vmatprep.subr.mxu0 %v1490
      %1554 = vmatpush1.msra.mxu0 %v1489
      %1555 = vmatprep.subr.mxu0 0.0
      %1556 = vmatpush2.msra.mxu0 0.0
      %1557 = vmatprep.subr.mxu0 0.0
      %1558 = vmatpush2.msra.mxu0 0.0
      %1559 = vmatprep.subr.mxu0 0.0
      %1560 = vmatpush2.msra.mxu0 0.0
      %1561 = vmatprep.subr.mxu0 0.0
      %1562 = vmatpush2.msra.mxu0 0.0
      %1563 = vmatprep.subr.mxu0 0.0
      %1564 = vmatpush2.msra.mxu0 0.0
      %1565 = vmatprep.subr.mxu0 0.0
      %1566 = vmatpush2.msra.mxu0 0.0
      %1567 = vmatprep.subr.mxu0 0.0
      %1568 = vmatpush2.msra.mxu0 0.0
      %1569 = vmatprep.subr.mxu0 0.0
      %1570 = vmatpush2.msra.mxu0 0.0
      %1571 = vmatprep.subr.mxu0 0.0
      %1572 = vmatpush2.msra.mxu0 0.0
      %1573 = vmatprep.subr.mxu0 0.0
      %1574 = vmatpush2.msra.mxu0 0.0
      %1575 = vmatprep.subr.mxu0 0.0
      %1576 = vmatpush2.msra.mxu0 0.0
      %1577 = vmatprep.subr.mxu0 0.0
      %1578 = vmatpush2.msra.mxu0 0.0
      %1579 = vmatprep.subr.mxu0 0.0
      %1580 = vmatpush2.msra.mxu0 0.0
      %1581 = vmatprep.subr.mxu0 0.0
      %1582 = vmatpush2.msra.mxu0 0.0
      %1583 = vmatprep.subr.mxu0 0.0
      %1584 = vmatpush2.msra.mxu0 0.0
      %1585 = vmatprep.subr.mxu0 0.0
      %1586 = vmatpush2.msra.mxu0 0.0
      %1587 = vmatprep.mubr.f32.mxu0 0.0
      %1588 = vmatmul.mubr.f32.gmra.mxu0 %v871
      %v1589 = vpop.f32.mrf.mxu0
      %v1590 = vadd.f32 0.0, %v1589
      %v1591 = vpop.f32.mrf.mxu0
      %v1592 = vadd.f32 0.0, %v1591
      %1593 = vdwg.mxu0
      %v1596 = vcombine.low %v1590, %v1592
      %s1598 = scalar_lea.vmem %s405, 16
      %1599 = vst [vmem:[%s1598] sm:$0xff] %v1596
      %v1600 = vsel %vm873, %v1590, 0.0
      %v1601 = vsel %vm873, %v1592, 0.0
      %v1602 = vadd.f32 %v1600, %v1601
      %1603 = vadd.xlane.f32.xlu0 %v1602
      %v1604 = vpop.xlane.xlu0 %1603
      %v1605 = vmul.f32 %v1604, 0.00390625
      %v1606 = vsub.f32 %v1590, %v1605
      %v1607 = vsub.f32 %v1592, %v1605
      %v1608 = vmul.f32 %v1606, %v1606
      %v1609 = vmul.f32 %v1607, %v1607
      %v1610 = vsel %vm873, %v1608, 0.0
      %v1611 = vsel %vm873, %v1609, 0.0
      %v1612 = vadd.f32 %v1610, %v1611
      %1613 = vadd.xlane.f32.xlu0 %v1612
      %v1614 = vpop.xlane.xlu0 %1613
      %s1615 = scalar_lea.vmem %s415, 8
      %1616 = vst.msk [vmem:[%s1615] sm:$0xf] %vm971, %v1604
      %1617 = vst.msk [vmem:[%s1615] sm:$0xf] %vm973, %v1614
      %1618 = vst [vmem:[#allocation2] sm:$0xf] %v1070
      %1619 = vst [vmem:[#allocation2 + $0x8] sm:$0xf] %v1071
      %1620 = vst [vmem:[#allocation2] sm:$0xf0] %v1083
      %1621 = vst [vmem:[#allocation2 + $0x8] sm:$0xf0] %v1084
      %1622 = vst [vmem:[#allocation2 + $0x10] sm:$0xf] %v1097
      %1623 = vst [vmem:[#allocation2 + $0x18] sm:$0xf] %v1098
      %1624 = vst [vmem:[#allocation2 + $0x10] sm:$0xf0] %v1113
      %1625 = vst [vmem:[#allocation2 + $0x18] sm:$0xf0] %v1114
      %1626 = vst [vmem:[#allocation2 + $0x20] sm:$0xf] %v427
      %1627 = vst [vmem:[#allocation2 + $0x28] sm:$0xf] %v1061
      %1628 = vst [vmem:[#allocation2 + $0x20] sm:$0xf0] %v1134
      %1629 = vst [vmem:[#allocation2 + $0x28] sm:$0xf0] %v1135
      %1630 = vst [vmem:[#allocation2 + $0x30] sm:$0xf] %v1148
      %1631 = vst [vmem:[#allocation2 + $0x38] sm:$0xf] %v1149
      %1632 = vst [vmem:[#allocation2 + $0x30] sm:$0xf0] %v1161
      %1633 = vst [vmem:[#allocation2 + $0x38] sm:$0xf0] %v1162
      %1634 = vst [vmem:[#allocation2 + $0x40] sm:$0xf] %v1175
      %1635 = vst [vmem:[#allocation2 + $0x48] sm:$0xf] %v1176
      %v1638 = vrot.slane %v1380, 4
      %v1639 = vrot.slane %v1381, 4
      %1642 = vst [vmem:[#allocation2 + $0x40] sm:$0xf0] %v1638
      %1643 = vst [vmem:[#allocation2 + $0x48] sm:$0xf0] %v1639
      %1644 = vst [vmem:[#allocation2 + $0x50] sm:$0xf] %v1391
      %1645 = vst [vmem:[#allocation2 + $0x58] sm:$0xf] %v1388
      %v1648 = vrot.slane %v1407, 4
      %v1649 = vrot.slane %v1408, 4
      %1652 = vst [vmem:[#allocation2 + $0x50] sm:$0xf0] %v1648
      %1653 = vst [vmem:[#allocation2 + $0x58] sm:$0xf0] %v1649
      %1654 = vst [vmem:[#allocation2 + $0x60] sm:$0xf] %v1419
      %1655 = vst [vmem:[#allocation2 + $0x68] sm:$0xf] %v1420
      %v1656 = vcombine.low %v429, %v429
      %1658 = vst [vmem:[#allocation2 + $0x60] sm:$0xf0] %v1656
      %1659 = vst [vmem:[#allocation2 + $0x68] sm:$0xf0] %v429
      %1660 = vst [vmem:[#allocation2 + $0x70] sm:$0xf] %v1440
      %1661 = vst [vmem:[#allocation2 + $0x78] sm:$0xf] %v1441
      %v1664 = vrot.slane %v1458, 4
      %v1665 = vrot.slane %v1459, 4
      %1668 = vst [vmem:[#allocation2 + $0x70] sm:$0xf0] %v1664
      %1669 = vst [vmem:[#allocation2 + $0x78] sm:$0xf0] %v1665
      %1670 = vst [vmem:[#allocation2 + $0x80] sm:$0xf] %v1466
      %1671 = vst [vmem:[#allocation2 + $0x88] sm:$0xf] %v1469
      %v1674 = vrot.slane %v1485, 4
      %v1675 = vrot.slane %v1486, 4
      %1678 = vst [vmem:[#allocation2 + $0x80] sm:$0xf0] %v1674
      %1679 = vst [vmem:[#allocation2 + $0x88] sm:$0xf0] %v1675
      %v1681 = vcombine.high %v434, %v434
      %1682 = vrot.lane.b32.xlu0 %v434, 17
      %v1683 = vpop.permute.xlu0 %1682
      %1684 = vrot.lane.b32.xlu0 %v1681, 17
      %v1685 = vpop.permute.xlu0 %1684
      %v1686 = vsel %vm473, %v1683, %v1685
      %v1689 = vsel %vm473, 0.0, %v1683
      %v1690 = vsel %vm480, %v1689, 0.0
      %v1691 = vsel %vm481, %v1686, 0.0
      %1692 = vst [vmem:[#allocation2 + $0x90] sm:$0xf] %v1690
      %1693 = vst [vmem:[#allocation2 + $0x98] sm:$0xf] %v1691
      %1694 = vrot.lane.b32.xlu0 %v434, 16
      %v1695 = vpop.permute.xlu0 %1694
      %1696 = vrot.lane.b32.xlu0 %v1681, 16
      %v1697 = vpop.permute.xlu0 %1696
      %v1698 = vsel %vm490, %v1695, %v1697
      %v1700 = vsel %vm490, 0.0, %v1695
      %v1702 = vrot.slane %v1700, 4
      %v1703 = vrot.slane %v1698, 4
      %1706 = vst [vmem:[#allocation2 + $0x90] sm:$0xf0] %v1702
      %1707 = vst [vmem:[#allocation2 + $0x98] sm:$0xf0] %v1703
      %1708 = vrot.lane.b32.xlu0 %v434, 15
      %v1709 = vpop.permute.xlu0 %1708
      %1710 = vrot.lane.b32.xlu0 %v1681, 15
      %v1711 = vpop.permute.xlu0 %1710
      %v1712 = vsel %vm505, %v1709, %v1711
      %v1715 = vsel %vm505, 0.0, %v1709
      %v1716 = vsel %vm512, %v1715, 0.0
      %v1717 = vsel %vm513, %v1712, 0.0
      %1718 = vst [vmem:[#allocation2 + $0xa0] sm:$0xf] %v1716
      %1719 = vst [vmem:[#allocation2 + $0xa8] sm:$0xf] %v1717
      %1720 = vrot.lane.b32.xlu0 %v434, 1
      %v1721 = vpop.permute.xlu0 %1720
      %1722 = vrot.lane.b32.xlu0 %v1681, 1
      %v1723 = vpop.permute.xlu0 %1722
      %v1724 = vsel %vm522, %v1721, %v1723
      %v1727 = vsel %vm522, 0.0, %v1721
      %v1728 = vsel %vm480, %v1727, 0.0
      %v1729 = vsel %vm481, %v1724, 0.0
      %v1732 = vrot.slane %v1728, 4
      %v1733 = vrot.slane %v1729, 4
      %1736 = vst [vmem:[#allocation2 + $0xa0] sm:$0xf0] %v1732
      %1737 = vst [vmem:[#allocation2 + $0xa8] sm:$0xf0] %v1733
      %1739 = vst [vmem:[#allocation2 + $0xb0] sm:$0xf] %v434
      %1740 = vst [vmem:[#allocation2 + $0xb8] sm:$0xf] %v1681
      %1741 = vrot.lane.b32.xlu0 %v434, 127
      %v1742 = vpop.permute.xlu0 %1741
      %1743 = vrot.lane.b32.xlu0 %v1681, 127
      %v1744 = vpop.permute.xlu0 %1743
      %v1745 = vsel %vm544, %v1742, %v1744
      %v1748 = vsel %vm544, %v1744, 0.0
      %v1749 = vsel %vm512, %v1745, 0.0
      %v1750 = vsel %vm513, %v1748, 0.0
      %v1753 = vrot.slane %v1749, 4
      %v1754 = vrot.slane %v1750, 4
      %1757 = vst [vmem:[#allocation2 + $0xb0] sm:$0xf0] %v1753
      %1758 = vst [vmem:[#allocation2 + $0xb8] sm:$0xf0] %v1754
      %1759 = vrot.lane.b32.xlu0 %v434, 113
      %v1760 = vpop.permute.xlu0 %1759
      %1761 = vrot.lane.b32.xlu0 %v1681, 113
      %v1762 = vpop.permute.xlu0 %1761
      %v1763 = vsel %vm563, %v1760, %v1762
      %v1766 = vsel %vm563, %v1762, 0.0
      %v1767 = vsel %vm480, %v1763, 0.0
      %v1768 = vsel %vm481, %v1766, 0.0
      %1769 = vst [vmem:[#allocation2 + $0xc0] sm:$0xf] %v1767
      %1770 = vst [vmem:[#allocation2 + $0xc8] sm:$0xf] %v1768
      %1771 = vrot.lane.b32.xlu0 %v434, 112
      %v1772 = vpop.permute.xlu0 %1771
      %1773 = vrot.lane.b32.xlu0 %v1681, 112
      %v1774 = vpop.permute.xlu0 %1773
      %v1775 = vsel %vm576, %v1772, %v1774
      %v1777 = vsel %vm576, %v1774, 0.0
      %v1779 = vrot.slane %v1775, 4
      %v1780 = vrot.slane %v1777, 4
      %1783 = vst [vmem:[#allocation2 + $0xc0] sm:$0xf0] %v1779
      %1784 = vst [vmem:[#allocation2 + $0xc8] sm:$0xf0] %v1780
      %1785 = vrot.lane.b32.xlu0 %v434, 111
      %v1786 = vpop.permute.xlu0 %1785
      %1787 = vrot.lane.b32.xlu0 %v1681, 111
      %v1788 = vpop.permute.xlu0 %1787
      %v1789 = vsel %vm591, %v1786, %v1788
      %v1792 = vsel %vm591, %v1788, 0.0
      %v1793 = vsel %vm512, %v1789, 0.0
      %v1794 = vsel %vm513, %v1792, 0.0
      %1795 = vst [vmem:[#allocation2 + $0xd0] sm:$0xf] %v1793
      %1796 = vst [vmem:[#allocation2 + $0xd8] sm:$0xf] %v1794
      %v1797 = vld [vmem:[#allocation2] sm:$0xff]
      %v1798 = vld [vmem:[#allocation2 + $0x8] sm:$0xff]
      %v1799 = vld [vmem:[#allocation2 + $0x10] sm:$0xff]
      %v1800 = vld [vmem:[#allocation2 + $0x18] sm:$0xff]
      %v1801 = vld [vmem:[#allocation2 + $0x20] sm:$0xff]
      %v1802 = vld [vmem:[#allocation2 + $0x28] sm:$0xff]
      %v1803 = vld [vmem:[#allocation2 + $0x30] sm:$0xff]
      %v1804 = vld [vmem:[#allocation2 + $0x38] sm:$0xff]
      %v1805 = vld [vmem:[#allocation2 + $0x40] sm:$0xff]
      %v1806 = vld [vmem:[#allocation2 + $0x48] sm:$0xff]
      %v1807 = vld [vmem:[#allocation2 + $0x50] sm:$0xff]
      %v1808 = vld [vmem:[#allocation2 + $0x58] sm:$0xff]
      %v1809 = vld [vmem:[#allocation2 + $0x60] sm:$0xff]
      %v1810 = vld [vmem:[#allocation2 + $0x68] sm:$0xff]
      %v1811 = vld [vmem:[#allocation2 + $0x70] sm:$0xff]
      %v1812 = vld [vmem:[#allocation2 + $0x78] sm:$0xff]
      %v1813 = vld [vmem:[#allocation2 + $0x80] sm:$0xff]
      %v1814 = vld [vmem:[#allocation2 + $0x88] sm:$0xff]
      %v1815 = vld [vmem:[#allocation2 + $0x90] sm:$0xff]
      %v1816 = vld [vmem:[#allocation2 + $0x98] sm:$0xff]
      %v1817 = vld [vmem:[#allocation2 + $0xa0] sm:$0xff]
      %v1818 = vld [vmem:[#allocation2 + $0xa8] sm:$0xff]
      %v1819 = vld [vmem:[#allocation2 + $0xb0] sm:$0xff]
      %v1820 = vld [vmem:[#allocation2 + $0xb8] sm:$0xff]
      %v1821 = vld [vmem:[#allocation2 + $0xc0] sm:$0xff]
      %v1822 = vld [vmem:[#allocation2 + $0xc8] sm:$0xff]
      %v1823 = vld [vmem:[#allocation2 + $0xd0] sm:$0xf]
      %v1824 = vld [vmem:[#allocation2 + $0xd8] sm:$0xf]
      %v1826 = vsel %vm873, %v1823, 0
      %v1829 = vsel %vm873, %v1824, 0
      %1831 = vmatprep.subr.mxu0 0.0
      %1832 = vmatpush1.msra.mxu0 0.0
      %1833 = vmatprep.subr.mxu0 0.0
      %1834 = vmatpush1.msra.mxu0 0.0
      %1835 = vmatprep.subr.mxu0 %v1829
      %1836 = vmatpush1.msra.mxu0 %v1826
      %1837 = vmatprep.subr.mxu0 %v1822
      %1838 = vmatpush1.msra.mxu0 %v1821
      %1839 = vmatprep.subr.mxu0 %v1820
      %1840 = vmatpush1.msra.mxu0 %v1819
      %1841 = vmatprep.subr.mxu0 %v1818
      %1842 = vmatpush1.msra.mxu0 %v1817
      %1843 = vmatprep.subr.mxu0 %v1816
      %1844 = vmatpush1.msra.mxu0 %v1815
      %1845 = vmatprep.subr.mxu0 %v1814
      %1846 = vmatpush1.msra.mxu0 %v1813
      %1847 = vmatprep.subr.mxu0 %v1812
      %1848 = vmatpush1.msra.mxu0 %v1811
      %1849 = vmatprep.subr.mxu0 %v1810
      %1850 = vmatpush1.msra.mxu0 %v1809
      %1851 = vmatprep.subr.mxu0 %v1808
      %1852 = vmatpush1.msra.mxu0 %v1807
      %1853 = vmatprep.subr.mxu0 %v1806
      %1854 = vmatpush1.msra.mxu0 %v1805
      %1855 = vmatprep.subr.mxu0 %v1804
      %1856 = vmatpush1.msra.mxu0 %v1803
      %1857 = vmatprep.subr.mxu0 %v1802
      %1858 = vmatpush1.msra.mxu0 %v1801
      %1859 = vmatprep.subr.mxu0 %v1800
      %1860 = vmatpush1.msra.mxu0 %v1799
      %1861 = vmatprep.subr.mxu0 %v1798
      %1862 = vmatpush1.msra.mxu0 %v1797
      %1863 = vmatprep.subr.mxu0 0.0
      %1864 = vmatpush2.msra.mxu0 0.0
      %1865 = vmatprep.subr.mxu0 0.0
      %1866 = vmatpush2.msra.mxu0 0.0
      %1867 = vmatprep.subr.mxu0 0.0
      %1868 = vmatpush2.msra.mxu0 0.0
      %1869 = vmatprep.subr.mxu0 0.0
      %1870 = vmatpush2.msra.mxu0 0.0
      %1871 = vmatprep.subr.mxu0 0.0
      %1872 = vmatpush2.msra.mxu0 0.0
      %1873 = vmatprep.subr.mxu0 0.0
      %1874 = vmatpush2.msra.mxu0 0.0
      %1875 = vmatprep.subr.mxu0 0.0
      %1876 = vmatpush2.msra.mxu0 0.0
      %1877 = vmatprep.subr.mxu0 0.0
      %1878 = vmatpush2.msra.mxu0 0.0
      %1879 = vmatprep.subr.mxu0 0.0
      %1880 = vmatpush2.msra.mxu0 0.0
      %1881 = vmatprep.subr.mxu0 0.0
      %1882 = vmatpush2.msra.mxu0 0.0
      %1883 = vmatprep.subr.mxu0 0.0
      %1884 = vmatpush2.msra.mxu0 0.0
      %1885 = vmatprep.subr.mxu0 0.0
      %1886 = vmatpush2.msra.mxu0 0.0
      %1887 = vmatprep.subr.mxu0 0.0
      %1888 = vmatpush2.msra.mxu0 0.0
      %1889 = vmatprep.subr.mxu0 0.0
      %1890 = vmatpush2.msra.mxu0 0.0
      %1891 = vmatprep.subr.mxu0 0.0
      %1892 = vmatpush2.msra.mxu0 0.0
      %1893 = vmatprep.subr.mxu0 0.0
      %1894 = vmatpush2.msra.mxu0 0.0
      %1895 = vmatprep.mubr.f32.mxu0 0.0
      %1896 = vmatmul.mubr.f32.gmra.mxu0 %v871
      %v1897 = vpop.f32.mrf.mxu0
      %v1898 = vadd.f32 0.0, %v1897
      %v1899 = vpop.f32.mrf.mxu0
      %v1900 = vadd.f32 0.0, %v1899
      %1901 = vdwg.mxu0
      %v1904 = vcombine.low %v1898, %v1900
      %s1906 = scalar_lea.vmem %s405, 24
      %1907 = vst [vmem:[%s1906] sm:$0xff] %v1904
      %v1908 = vsel %vm873, %v1898, 0.0
      %v1909 = vsel %vm873, %v1900, 0.0
      %v1910 = vadd.f32 %v1908, %v1909
      %1911 = vadd.xlane.f32.xlu0 %v1910
      %v1912 = vpop.xlane.xlu0 %1911
      %v1913 = vmul.f32 %v1912, 0.00390625
      %v1914 = vsub.f32 %v1898, %v1913
      %v1915 = vsub.f32 %v1900, %v1913
      %v1916 = vmul.f32 %v1914, %v1914
      %v1917 = vmul.f32 %v1915, %v1915
      %v1918 = vsel %vm873, %v1916, 0.0
      %v1919 = vsel %vm873, %v1917, 0.0
      %v1920 = vadd.f32 %v1918, %v1919
      %1921 = vadd.xlane.f32.xlu0 %v1920
      %v1922 = vpop.xlane.xlu0 %1921
      %s1923 = scalar_lea.vmem %s415, 12
      %1924 = vst.msk [vmem:[%s1923] sm:$0xf] %vm971, %v1912
      %1925 = vst.msk [vmem:[%s1923] sm:$0xf] %vm973, %v1922
      %s1926 = smul.u32 4, %s22
      %p1927 = scmp.lt.s32.totalorder %s21, 1
      %s1928 = scalar_select %p1927, %s21, 1
      %p1929 = scmp.lt.s32.totalorder %s1926, 7
      %s1930 = scalar_select %p1929, %s1926, 7
      %s1931 = smul.addr %s1930, 2
      %s1932 = smul.addr %s1928, 16
      %s1933 = sadd.s32 %s1931, %s1932
      %s1934 = smul.addr %s1933, 4
      %s1935 = scalar_lea.vmem %s4, %s1934
      %p1936 = scmp.lt.s32.totalorder %s21, 1
      %s1937 = scalar_select %p1936, %s21, 1
      %p1938 = scmp.lt.s32.totalorder %s22, 1
      %s1939 = scalar_select %p1938, %s22, 1
      %s1940 = smul.addr %s1939, 4
      %s1941 = smul.addr %s1937, 8
      %s1942 = sadd.s32 %s1940, %s1941
      %s1943 = smul.addr %s1942, 4
      %s1944 = scalar_lea.vmem %s5, %s1943
      // Predicated region
      $region37: #{simple_rb_pallas.3} parent=35 // pred_check
        %p1945 = pneg %p170
      $region38: #{simple_rb_pallas.3} parent=35 // pred_check_branch
        %1947 = sbr.rel (%p1945) target = $region40
      $region39: #{simple_rb_pallas.3} parent=35 // pred_region
        %s1948 = smul.u32 4, %s22
      $region40: #{simple_rb_pallas.3} parent=35 // pred_fallthru
        _
      // Predicated region
      $region41: #{simple_rb_pallas.3} parent=35 // pred_check
        %p1949 = pneg %p198
      $region42: #{simple_rb_pallas.3} parent=35 // pred_check_branch
        %1951 = sbr.rel (%p1949) target = $region44
      $region43: #{simple_rb_pallas.3} parent=35 // pred_region
        _
      $region44: #{simple_rb_pallas.3} parent=35 // pred_fallthru
        _
    $region36: #{simple_rb_pallas.3} parent=5 // pred_fallthru
      _
    %p1952 = scmp.le.s32.totalorder 2, %s12
    // Predicated region
    $region45: #{simple_rb_pallas.3} parent=5 // pred_check
      %p1953 = pneg %p1952
    $region46: #{simple_rb_pallas.3} parent=5 // pred_check_branch
      %1955 = sbr.rel (%p1953) target = $region48
    $region47: #{simple_rb_pallas.3} parent=5 // pred_region
      %s1956 = ssub.s32 %s12, 2
      // Predicated region
      $region49: #{simple_rb_pallas.3} parent=47 // pred_check
        %p1957 = pneg %p176
      $region50: #{simple_rb_pallas.3} parent=47 // pred_check_branch
        %1959 = sbr.rel (%p1957) target = $region52
      $region51: #{simple_rb_pallas.3} parent=47 // pred_region
        %s1960 = smul.u32 4, %s24
        %p1961 = scmp.lt.s32.totalorder %s23, 1
        %s1962 = scalar_select %p1961, %s23, 1
        %p1963 = scmp.lt.s32.totalorder %s1960, 7
        %s1964 = scalar_select %p1963, %s1960, 7
        %s1965 = smul.addr %s1964, 2
        %s1966 = smul.addr %s1962, 16
        %s1967 = sadd.s32 %s1965, %s1966
        %s1968 = smul.addr %s1967, 4
        %s1969 = scalar_lea.vmem %s4, %s1968
      $region52: #{simple_rb_pallas.3} parent=47 // pred_fallthru
        _
      // Predicated region
      $region53: #{simple_rb_pallas.3} parent=47 // pred_check
        %p1970 = pneg %p204
      $region54: #{simple_rb_pallas.3} parent=47 // pred_check_branch
        %1972 = sbr.rel (%p1970) target = $region56
      $region55: #{simple_rb_pallas.3} parent=47 // pred_region
        %p1973 = scmp.lt.s32.totalorder %s23, 1
        %s1974 = scalar_select %p1973, %s23, 1
        %p1975 = scmp.lt.s32.totalorder %s24, 1
        %s1976 = scalar_select %p1975, %s24, 1
        %s1977 = smul.addr %s1976, 4
        %s1978 = smul.addr %s1974, 8
        %s1979 = sadd.s32 %s1977, %s1978
        %s1980 = smul.addr %s1979, 4
        %s1981 = scalar_lea.vmem %s5, %s1980
      $region56: #{simple_rb_pallas.3} parent=47 // pred_fallthru
        _
    $region48: #{simple_rb_pallas.3} parent=5 // pred_fallthru
      _
  $region6: #{simple_rb_pallas.3} parent=0 // loop_footer
    %s16 = sadd.s32 1, %s12
  $region7: #{simple_rb_pallas.3} parent=0 // loop_footer_branch
    %11 = sbr.rel target = $region3
  $region8: #{simple_rb_pallas.3} parent=0 // loop_exit
    _

// kernel: simple_rb_pallas.4
$region0: #{simple_rb_pallas.4}
  #allocation0 [shape = 'u32[]', space=smem, size = 0x4, offset = 0x4, fixed_abs, tag = 'smem constant byte address 0x4 - core index']
  #allocation1 [shape = 'u32[144,128]{1,0:T(1,128)}', space=vmem, size = 0x12000, scoped, tag = 'internal scratch']
  #allocation2 [shape = 'f32[108,256]{1,0:T(8,128)}', space=vmem, size = 0x1c000, scoped, tag = 'scratch operand']
  %s0 = inlined_call_operand.vmem [shape: f32[2,8,4,256], index: 0, kind: input, shape index: {}, may-alias: {0,1,2}]
  %s1 = inlined_call_operand.vmem [shape: f32[2,8,4,256], index: 1, kind: input, shape index: {}, may-alias: {0,1,2}]
  %s2 = inlined_call_operand.vmem [shape: f32[2,8,4,256], index: 2, kind: input, shape index: {}, may-alias: {0,1,2}]
  %s3 = inlined_call_operand.vmem [shape: f32[2,4,1], index: 3, kind: input, shape index: {}]
  %s4 = inlined_call_operand.vmem [shape: f32[4,108], index: 4, kind: input, shape index: {}]
  %s5 = inlined_call_operand.vmem [shape: f32[2,8,4,256], index: 5, kind: output, shape index: {0}]
  %s6 = inlined_call_operand.vmem [shape: f32[2,2,4,4,2], index: 6, kind: output, shape index: {1}]
  %7 = xla_tuple %s5, %s6
  %s8 = sld [smem:[#allocation0]]
  $region61: #{simple_rb_pallas.4} parent=0
    _
  %s10 = ssub.s32 1, %s8
  %s11 = scalar_select 0, %s10, %s8
  loop: start=0, step=1, limit=6
  $region2: #{simple_rb_pallas.4} parent=0 // loop_pre_header
    _
  $region3: #{simple_rb_pallas.4} parent=0 // loop_header
    %s13 = sphi 0, %s17
    %p14 = scmp.ge.s32.totalorder %s13, 6
    %s20 = sphi 0, %s32
    %s21 = sphi 0, %s28
    %s22 = sphi 0, %s20
    %s23 = sphi 0, %s21
    %s24 = sphi 0, %s22
    %s25 = sphi 0, %s23
    %s45 = sphi 0, %s47
    %s48 = sphi 0, %s45
    %s49 = sphi 0, %s48
    %s65 = sphi 0, %s49
    %s73 = sphi 0, %s75
    %s76 = sphi 0, %s73
    %s77 = sphi 0, %s76
    %s93 = sphi 0, %s77
    %s109 = sphi 0, %s111
    %s112 = sphi 0, %s109
    %s113 = sphi 0, %s112
    %s129 = sphi 0, %s113
    %s133 = sphi 0, %s133
    %s135 = sphi 0, %s133
    %s136 = sphi 0, %s135
    %s150 = sphi 0, %s136
    %s154 = sphi 0, %s154
    %s156 = sphi 0, %s154
    %s157 = sphi 0, %s156
    %s171 = sphi 0, %s157
    %s179 = sphi 0, %s181
    %s182 = sphi 0, %s179
    %s183 = sphi 0, %s182
    %s199 = sphi 0, %s183
    %s207 = sphi 0, %s209
    %s210 = sphi 0, %s207
    %s211 = sphi 0, %s210
    %s227 = sphi 0, %s211
  $region4: #{simple_rb_pallas.4} parent=0 // loop_header_branch
    %16 = sbr.rel (%p14) target = $region8
  $region5: #{simple_rb_pallas.4} parent=0 // loop_body
    %s18 = ssub.s32 %s13, 1
    %s19 = ssub.s32 %s13, 2
    %s26 = sadd.s32 1, %s21
    %p27 = scmp.ge.s32.totalorder %s26, 2
    %s28 = scalar_select %p27, 0, %s26
    %s29 = sadd.s32 1, %s20
    %s30 = scalar_select %p27, %s29, %s20
    %p31 = scmp.ge.s32.totalorder %s30, 2
    %s32 = scalar_select %p31, 0, %s30
    %s33 = smul.u32 %s21, 4
    %s34 = ssub.s32 %s33, 1
    %p35 = scmp.gt.s32.totalorder %s34, 0
    %s36 = scalar_select %p35, %s34, 0
    %s37 = smul.u32 %s28, 4
    %s38 = ssub.s32 %s37, 1
    %p39 = scmp.gt.s32.totalorder %s38, 0
    %s40 = scalar_select %p39, %s38, 0
    %s41 = ssub.s32 %s20, %s32
    %s42 = ssub.s32 %s36, %s40
    %s43 = sor.u32 %s41, %s42
    %p44 = scmp.eq.s32.totalorder %s43, 0
    %s46 = sadd.s32 %s45, 1
    %s47 = scalar_select %p44, %s45, %s46
    %p50 = pneg %p44
    %p51 = scmp.eq.s32.totalorder %s13, 3
    %p52 = por %p50, %p51
    %p53 = scmp.ne.s32.totalorder %s45, %s48
    %p54 = scmp.eq.s32.totalorder %s13, 0
    %p55 = por %p53, %p54
    %p56 = scmp.ne.s32.totalorder %s45, %s48
    %p57 = scmp.eq.s32.totalorder %s18, 3
    %p58 = por %p56, %p57
    %p59 = scmp.ne.s32.totalorder %s48, %s49
    %p60 = scmp.eq.s32.totalorder %s18, 0
    %p61 = por %p59, %p60
    %p62 = scmp.ne.s32.totalorder %s48, %s49
    %p63 = scmp.eq.s32.totalorder %s19, 3
    %p64 = por %p62, %p63
    %p66 = scmp.ne.s32.totalorder %s49, %s65
    %p67 = scmp.eq.s32.totalorder %s19, 0
    %p68 = por %p66, %p67
    %s69 = ssub.s32 %s20, %s32
    %s70 = ssub.s32 %s21, %s28
    %s71 = sor.u32 %s69, %s70
    %p72 = scmp.eq.s32.totalorder %s71, 0
    %s74 = sadd.s32 %s73, 1
    %s75 = scalar_select %p72, %s73, %s74
    %p78 = pneg %p72
    %p79 = scmp.eq.s32.totalorder %s13, 3
    %p80 = por %p78, %p79
    %p81 = scmp.ne.s32.totalorder %s73, %s76
    %p82 = scmp.eq.s32.totalorder %s13, 0
    %p83 = por %p81, %p82
    %p84 = scmp.ne.s32.totalorder %s73, %s76
    %p85 = scmp.eq.s32.totalorder %s18, 3
    %p86 = por %p84, %p85
    %p87 = scmp.ne.s32.totalorder %s76, %s77
    %p88 = scmp.eq.s32.totalorder %s18, 0
    %p89 = por %p87, %p88
    %p90 = scmp.ne.s32.totalorder %s76, %s77
    %p91 = scmp.eq.s32.totalorder %s19, 3
    %p92 = por %p90, %p91
    %p94 = scmp.ne.s32.totalorder %s77, %s93
    %p95 = scmp.eq.s32.totalorder %s19, 0
    %p96 = por %p94, %p95
    %s97 = smul.u32 %s21, 4
    %s98 = sadd.s32 %s97, 4
    %p99 = scmp.lt.s32.totalorder %s98, 7
    %s100 = scalar_select %p99, %s98, 7
    %s101 = smul.u32 %s28, 4
    %s102 = sadd.s32 %s101, 4
    %p103 = scmp.lt.s32.totalorder %s102, 7
    %s104 = scalar_select %p103, %s102, 7
    %s105 = ssub.s32 %s20, %s32
    %s106 = ssub.s32 %s100, %s104
    %s107 = sor.u32 %s105, %s106
    %p108 = scmp.eq.s32.totalorder %s107, 0
    %s110 = sadd.s32 %s109, 1
    %s111 = scalar_select %p108, %s109, %s110
    %p114 = pneg %p108
    %p115 = scmp.eq.s32.totalorder %s13, 3
    %p116 = por %p114, %p115
    %p117 = scmp.ne.s32.totalorder %s109, %s112
    %p118 = scmp.eq.s32.totalorder %s13, 0
    %p119 = por %p117, %p118
    %p120 = scmp.ne.s32.totalorder %s109, %s112
    %p121 = scmp.eq.s32.totalorder %s18, 3
    %p122 = por %p120, %p121
    %p123 = scmp.ne.s32.totalorder %s112, %s113
    %p124 = scmp.eq.s32.totalorder %s18, 0
    %p125 = por %p123, %p124
    %p126 = scmp.ne.s32.totalorder %s112, %s113
    %p127 = scmp.eq.s32.totalorder %s19, 3
    %p128 = por %p126, %p127
    %p130 = scmp.ne.s32.totalorder %s113, %s129
    %p131 = scmp.eq.s32.totalorder %s19, 0
    %p132 = por %p130, %p131
    %s134 = sadd.s32 %s133, 1
    %p137 = scmp.eq.s32.totalorder %s13, 3
    %p138 = scmp.ne.s32.totalorder %s133, %s135
    %p139 = scmp.eq.s32.totalorder %s13, 0
    %p140 = por %p138, %p139
    %p141 = scmp.ne.s32.totalorder %s133, %s135
    %p142 = scmp.eq.s32.totalorder %s18, 3
    %p143 = por %p141, %p142
    %p144 = scmp.ne.s32.totalorder %s135, %s136
    %p145 = scmp.eq.s32.totalorder %s18, 0
    %p146 = por %p144, %p145
    %p147 = scmp.ne.s32.totalorder %s135, %s136
    %p148 = scmp.eq.s32.totalorder %s19, 3
    %p149 = por %p147, %p148
    %p151 = scmp.ne.s32.totalorder %s136, %s150
    %p152 = scmp.eq.s32.totalorder %s19, 0
    %p153 = por %p151, %p152
    %s155 = sadd.s32 %s154, 1
    %p158 = scmp.eq.s32.totalorder %s13, 3
    %p159 = scmp.ne.s32.totalorder %s154, %s156
    %p160 = scmp.eq.s32.totalorder %s13, 0
    %p161 = por %p159, %p160
    %p162 = scmp.ne.s32.totalorder %s154, %s156
    %p163 = scmp.eq.s32.totalorder %s18, 3
    %p164 = por %p162, %p163
    %p165 = scmp.ne.s32.totalorder %s156, %s157
    %p166 = scmp.eq.s32.totalorder %s18, 0
    %p167 = por %p165, %p166
    %p168 = scmp.ne.s32.totalorder %s156, %s157
    %p169 = scmp.eq.s32.totalorder %s19, 3
    %p170 = por %p168, %p169
    %p172 = scmp.ne.s32.totalorder %s157, %s171
    %p173 = scmp.eq.s32.totalorder %s19, 0
    %p174 = por %p172, %p173
    %s175 = ssub.s32 %s20, %s32
    %s176 = ssub.s32 %s21, %s28
    %s177 = sor.u32 %s175, %s176
    %p178 = scmp.eq.s32.totalorder %s177, 0
    %s180 = sadd.s32 %s179, 1
    %s181 = scalar_select %p178, %s179, %s180
    %p184 = pneg %p178
    %p185 = scmp.eq.s32.totalorder %s13, 3
    %p186 = por %p184, %p185
    %p187 = scmp.ne.s32.totalorder %s179, %s182
    %p188 = scmp.eq.s32.totalorder %s13, 0
    %p189 = por %p187, %p188
    %p190 = scmp.ne.s32.totalorder %s179, %s182
    %p191 = scmp.eq.s32.totalorder %s18, 3
    %p192 = por %p190, %p191
    %p193 = scmp.ne.s32.totalorder %s182, %s183
    %p194 = scmp.eq.s32.totalorder %s18, 0
    %p195 = por %p193, %p194
    %p196 = scmp.ne.s32.totalorder %s182, %s183
    %p197 = scmp.eq.s32.totalorder %s19, 3
    %p198 = por %p196, %p197
    %p200 = scmp.ne.s32.totalorder %s183, %s199
    %p201 = scmp.eq.s32.totalorder %s19, 0
    %p202 = por %p200, %p201
    %s203 = ssub.s32 %s20, %s32
    %s204 = ssub.s32 %s21, %s28
    %s205 = sor.u32 %s203, %s204
    %p206 = scmp.eq.s32.totalorder %s205, 0
    %s208 = sadd.s32 %s207, 1
    %s209 = scalar_select %p206, %s207, %s208
    %p212 = pneg %p206
    %p213 = scmp.eq.s32.totalorder %s13, 3
    %p214 = por %p212, %p213
    %p215 = scmp.ne.s32.totalorder %s207, %s210
    %p216 = scmp.eq.s32.totalorder %s13, 0
    %p217 = por %p215, %p216
    %p218 = scmp.ne.s32.totalorder %s207, %s210
    %p219 = scmp.eq.s32.totalorder %s18, 3
    %p220 = por %p218, %p219
    %p221 = scmp.ne.s32.totalorder %s210, %s211
    %p222 = scmp.eq.s32.totalorder %s18, 0
    %p223 = por %p221, %p222
    %p224 = scmp.ne.s32.totalorder %s210, %s211
    %p225 = scmp.eq.s32.totalorder %s19, 3
    %p226 = por %p224, %p225
    %p228 = scmp.ne.s32.totalorder %s211, %s227
    %p229 = scmp.eq.s32.totalorder %s19, 0
    %p230 = por %p228, %p229
    %p231 = scmp.le.s32.totalorder 1, %s13
    %p232 = scmp.lt.s32.totalorder %s13, 5
    %p233 = pnand %p231, %p232
    %p234 = pneg %p233
    // Predicated region
    $region9: #{simple_rb_pallas.4} parent=5 // pred_check
      _
    $region10: #{simple_rb_pallas.4} parent=5 // pred_check_branch
      %236 = sbr.rel (%p233) target = $region12
    $region11: #{simple_rb_pallas.4} parent=5 // pred_region
      %s237 = ssub.s32 %s13, 1
      // Predicated region
      $region13: #{simple_rb_pallas.4} parent=11 // pred_check
        %p238 = pneg %p146
      $region14: #{simple_rb_pallas.4} parent=11 // pred_check_branch
        %240 = sbr.rel (%p238) target = $region16
      $region15: #{simple_rb_pallas.4} parent=11 // pred_region
        _
      $region16: #{simple_rb_pallas.4} parent=11 // pred_fallthru
        _
      // Predicated region
      $region17: #{simple_rb_pallas.4} parent=11 // pred_check
        %p241 = pneg %p167
      $region18: #{simple_rb_pallas.4} parent=11 // pred_check_branch
        %243 = sbr.rel (%p241) target = $region20
      $region19: #{simple_rb_pallas.4} parent=11 // pred_region
        _
      $region20: #{simple_rb_pallas.4} parent=11 // pred_fallthru
        _
    $region12: #{simple_rb_pallas.4} parent=5 // pred_fallthru
      _
    %p244 = scmp.lt.s32.totalorder %s13, 4
    // Predicated region
    $region21: #{simple_rb_pallas.4} parent=5 // pred_check
      %p245 = pneg %p244
    $region22: #{simple_rb_pallas.4} parent=5 // pred_check_branch
      %247 = sbr.rel (%p245) target = $region24
    $region23: #{simple_rb_pallas.4} parent=5 // pred_region
      // Predicated region
      $region25: #{simple_rb_pallas.4} parent=23 // pred_check
        %p248 = pneg %p55
      $region26: #{simple_rb_pallas.4} parent=23 // pred_check_branch
        %250 = sbr.rel (%p248) target = $region28
      $region27: #{simple_rb_pallas.4} parent=23 // pred_region
        %s251 = smul.u32 %s21, 4
        %s252 = ssub.s32 %s251, 1
        %p253 = scmp.gt.s32.totalorder %s252, 0
        %s254 = scalar_select %p253, %s252, 0
        %p255 = scmp.lt.s32.totalorder %s20, 1
        %s256 = scalar_select %p255, %s20, 1
        %p257 = scmp.lt.s32.totalorder %s254, 7
        %s258 = scalar_select %p257, %s254, 7
        %s259 = smul.addr %s258, 2
        %s260 = smul.addr %s256, 16
        %s261 = sadd.s32 %s259, %s260
        %s262 = smul.addr %s261, 4
        %s263 = scalar_lea.vmem %s0, %s262
        %s264 = smul.u32 %s21, 4
        %s265 = ssub.s32 %s264, 1
        %p266 = scmp.gt.s32.totalorder %s265, 0
        %s267 = scalar_select %p266, %s265, 0
      $region28: #{simple_rb_pallas.4} parent=23 // pred_fallthru
        _
      // Predicated region
      $region29: #{simple_rb_pallas.4} parent=23 // pred_check
        %p268 = pneg %p83
      $region30: #{simple_rb_pallas.4} parent=23 // pred_check_branch
        %270 = sbr.rel (%p268) target = $region32
      $region31: #{simple_rb_pallas.4} parent=23 // pred_region
        %s271 = smul.u32 4, %s21
        %p272 = scmp.lt.s32.totalorder %s20, 1
        %s273 = scalar_select %p272, %s20, 1
        %p274 = scmp.lt.s32.totalorder %s271, 7
        %s275 = scalar_select %p274, %s271, 7
        %s276 = smul.addr %s275, 2
        %s277 = smul.addr %s273, 16
        %s278 = sadd.s32 %s276, %s277
        %s279 = smul.addr %s278, 4
        %s280 = scalar_lea.vmem %s1, %s279
        %s281 = smul.u32 4, %s21
      $region32: #{simple_rb_pallas.4} parent=23 // pred_fallthru
        _
      // Predicated region
      $region33: #{simple_rb_pallas.4} parent=23 // pred_check
        %p282 = pneg %p119
      $region34: #{simple_rb_pallas.4} parent=23 // pred_check_branch
        %284 = sbr.rel (%p282) target = $region36
      $region35: #{simple_rb_pallas.4} parent=23 // pred_region
        %s285 = smul.u32 %s21, 4
        %s286 = sadd.s32 %s285, 4
        %p287 = scmp.lt.s32.totalorder %s286, 7
        %s288 = scalar_select %p287, %s286, 7
        %p289 = scmp.lt.s32.totalorder %s20, 1
        %s290 = scalar_select %p289, %s20, 1
        %p291 = scmp.lt.s32.totalorder %s288, 7
        %s292 = scalar_select %p291, %s288, 7
        %s293 = smul.addr %s292, 2
        %s294 = smul.addr %s290, 16
        %s295 = sadd.s32 %s293, %s294
        %s296 = smul.addr %s295, 4
        %s297 = scalar_lea.vmem %s2, %s296
        %s298 = smul.u32 %s21, 4
        %s299 = sadd.s32 %s298, 4
        %p300 = scmp.lt.s32.totalorder %s299, 7
        %s301 = scalar_select %p300, %s299, 7
      $region36: #{simple_rb_pallas.4} parent=23 // pred_fallthru
        _
    $region24: #{simple_rb_pallas.4} parent=5 // pred_fallthru
      _
    %p302 = scmp.le.s32.totalorder 1, %s13
    %p303 = scmp.lt.s32.totalorder %s13, 5
    %p304 = pnand %p302, %p303
    %p305 = pneg %p304
    // Predicated region
    $region37: #{simple_rb_pallas.4} parent=5 // pred_check
      _
    $region38: #{simple_rb_pallas.4} parent=5 // pred_check_branch
      %307 = sbr.rel (%p304) target = $region40
    $region39: #{simple_rb_pallas.4} parent=5 // pred_region
      %s308 = ssub.s32 %s13, 1
      %s309 = smul.u32 %s23, 4
      %s310 = ssub.s32 %s309, 1
      %p311 = scmp.gt.s32.totalorder %s310, 0
      %s312 = scalar_select %p311, %s310, 0
      %p313 = scmp.lt.s32.totalorder %s22, 1
      %s314 = scalar_select %p313, %s22, 1
      %p315 = scmp.lt.s32.totalorder %s312, 7
      %s316 = scalar_select %p315, %s312, 7
      %s317 = smul.addr %s316, 2
      %s318 = smul.addr %s314, 16
      %s319 = sadd.s32 %s317, %s318
      %s320 = smul.addr %s319, 4
      %s321 = scalar_lea.vmem %s0, %s320
      %p322 = pneg %p61
      %p323 = pneg %p58
      %s324 = smul.u32 4, %s23
      %p325 = scmp.lt.s32.totalorder %s22, 1
      %s326 = scalar_select %p325, %s22, 1
      %p327 = scmp.lt.s32.totalorder %s324, 7
      %s328 = scalar_select %p327, %s324, 7
      %s329 = smul.addr %s328, 2
      %s330 = smul.addr %s326, 16
      %s331 = sadd.s32 %s329, %s330
      %s332 = smul.addr %s331, 4
      %s333 = scalar_lea.vmem %s1, %s332
      %p334 = pneg %p89
      %p335 = pneg %p86
      %s336 = smul.u32 %s23, 4
      %s337 = sadd.s32 %s336, 4
      %p338 = scmp.lt.s32.totalorder %s337, 7
      %s339 = scalar_select %p338, %s337, 7
      %p340 = scmp.lt.s32.totalorder %s22, 1
      %s341 = scalar_select %p340, %s22, 1
      %p342 = scmp.lt.s32.totalorder %s339, 7
      %s343 = scalar_select %p342, %s339, 7
      %s344 = smul.addr %s343, 2
      %s345 = smul.addr %s341, 16
      %s346 = sadd.s32 %s344, %s345
      %s347 = smul.addr %s346, 4
      %s348 = scalar_lea.vmem %s2, %s347
      %p349 = pneg %p125
      %p350 = pneg %p122
      %p351 = pneg %p146
      %p352 = pneg %p143
      %p353 = pneg %p167
      %p354 = pneg %p164
      %p355 = pneg %p195
      %p356 = pneg %p192
      %s357 = smul.u32 4, %s23
      %p358 = scmp.lt.s32.totalorder %s22, 1
      %s359 = scalar_select %p358, %s22, 1
      %p360 = scmp.lt.s32.totalorder %s357, 7
      %s361 = scalar_select %p360, %s357, 7
      %s362 = smul.addr %s361, 2
      %s363 = smul.addr %s359, 16
      %s364 = sadd.s32 %s362, %s363
      %s365 = smul.addr %s364, 4
      %s366 = scalar_lea.vmem %s5, %s365
      %p367 = pneg %p223
      %p368 = pneg %p220
      %p369 = scmp.lt.s32.totalorder %s22, 1
      %s370 = scalar_select %p369, %s22, 1
      %p371 = scmp.lt.s32.totalorder %s23, 1
      %s372 = scalar_select %p371, %s23, 1
      %s373 = smul.addr %s372, 4
      %s374 = smul.addr %s370, 8
      %s375 = sadd.s32 %s373, %s374
      %s376 = smul.addr %s375, 4
      %s377 = scalar_lea.vmem %s6, %s376
      %s378 = smul.u32 %s23, 4
      %s379 = ssub.s32 %s378, 1
      %p380 = scmp.gt.s32.totalorder %s379, 0
      %s381 = scalar_select %p380, %s379, 0
      %p382 = scmp.lt.s32.totalorder %s22, 1
      %s383 = scalar_select %p382, %s22, 1
      %p384 = scmp.lt.s32.totalorder %s381, 7
      %s385 = scalar_select %p384, %s381, 7
      %s386 = smul.addr %s385, 2
      %s387 = smul.addr %s383, 16
      %s388 = sadd.s32 %s386, %s387
      %s389 = smul.addr %s388, 4
      %s390 = scalar_lea.vmem %s0, %s389
      %s391 = smul.u32 %s23, 4
      %s392 = ssub.s32 %s391, 1
      %p393 = scmp.gt.s32.totalorder %s392, 0
      %s394 = scalar_select %p393, %s392, 0
      %s395 = smul.u32 4, %s23
      %p396 = scmp.lt.s32.totalorder %s22, 1
      %s397 = scalar_select %p396, %s22, 1
      %p398 = scmp.lt.s32.totalorder %s395, 7
      %s399 = scalar_select %p398, %s395, 7
      %s400 = smul.addr %s399, 2
      %s401 = smul.addr %s397, 16
      %s402 = sadd.s32 %s400, %s401
      %s403 = smul.addr %s402, 4
      %s404 = scalar_lea.vmem %s1, %s403
      %s405 = smul.u32 4, %s23
      %s406 = smul.u32 %s23, 4
      %s407 = sadd.s32 %s406, 4
      %p408 = scmp.lt.s32.totalorder %s407, 7
      %s409 = scalar_select %p408, %s407, 7
      %p410 = scmp.lt.s32.totalorder %s22, 1
      %s411 = scalar_select %p410, %s22, 1
      %p412 = scmp.lt.s32.totalorder %s409, 7
      %s413 = scalar_select %p412, %s409, 7
      %s414 = smul.addr %s413, 2
      %s415 = smul.addr %s411, 16
      %s416 = sadd.s32 %s414, %s415
      %s417 = smul.addr %s416, 4
      %s418 = scalar_lea.vmem %s2, %s417
      %s419 = smul.u32 %s23, 4
      %s420 = sadd.s32 %s419, 4
      %p421 = scmp.lt.s32.totalorder %s420, 7
      %s422 = scalar_select %p421, %s420, 7
      %s423 = smul.u32 4, %s23
      %p424 = scmp.lt.s32.totalorder %s22, 1
      %s425 = scalar_select %p424, %s22, 1
      %p426 = scmp.lt.s32.totalorder %s423, 7
      %s427 = scalar_select %p426, %s423, 7
      %s428 = smul.addr %s427, 2
      %s429 = smul.addr %s425, 16
      %s430 = sadd.s32 %s428, %s429
      %s431 = smul.addr %s430, 4
      %s432 = scalar_lea.vmem %s5, %s431
      %s433 = smul.u32 4, %s23
      %p434 = scmp.lt.s32.totalorder %s22, 1
      %s435 = scalar_select %p434, %s22, 1
      %p436 = scmp.lt.s32.totalorder %s23, 1
      %s437 = scalar_select %p436, %s23, 1
      %s438 = smul.addr %s437, 4
      %s439 = smul.addr %s435, 8
      %s440 = sadd.s32 %s438, %s439
      %s441 = smul.addr %s440, 4
      %s442 = scalar_lea.vmem %s6, %s441
      %p443 = scmp.eq.s32.totalorder %s23, 0
      %p444 = scmp.eq.s32.totalorder %s23, 1
      %v445 = vld [vmem:[%s3] sm:$0xf]
      %s446 = scalar_lea.vmem %s3, 4
      %v447 = vld [vmem:[%s446] sm:$0xf]
      %v448 = vld [vmem:[%s390] sm:$0xff]
      %450 = vset.pattern.permute.xlu0 0
      %451 = vperm.xlu0 %450, %v445
      %v452 = vpop.permute.xlu0 %451
      %v454 = vunpack.c.l.s4 839922192
      %v455 = vunpack.c.0.s8 %v454
      %v456 = vlaneseq
      %v457 = vshrl.u32 %v456, 7
      %v458 = vsub.s32 %v455, %v457
      %v459 = vrot.slane %v452, %v458
      %v461 = vmul.f32 %v448, %v459
      %463 = vset.pattern.permute.xlu0 0
      %464 = vperm.xlu0 %463, %v447
      %v465 = vpop.permute.xlu0 %464
      %v467 = vunpack.c.l.s4 839922192
      %v468 = vunpack.c.0.s8 %v467
      %v469 = vlaneseq
      %v470 = vshrl.u32 %v469, 7
      %v471 = vsub.s32 %v468, %v470
      %v472 = vrot.slane %v465, %v471
      %v474 = vadd.f32 %v461, %v472
      %v475 = vmax.f32 %v474, 0.0
      %s476 = scalar_select %p443, 1, 0
      %v477 = vstv %s476
      %vm478 = vcmp.eq.s32.totalorder %v477, 1
      %v479 = vsel %vm478, 0.0, %v475
      %v480 = vld [vmem:[%s404] sm:$0xff]
      %v481 = vmul.f32 %v480, %v459
      %v482 = vadd.f32 %v481, %v472
      %v483 = vmax.f32 %v482, 0.0
      %s484 = scalar_lea.vmem %s404, 8
      %v485 = vld [vmem:[%s484] sm:$0xff]
      %v486 = vmul.f32 %v485, %v459
      %v487 = vadd.f32 %v486, %v472
      %v488 = vmax.f32 %v487, 0.0
      %s489 = scalar_lea.vmem %s404, 16
      %v490 = vld [vmem:[%s489] sm:$0xff]
      %v491 = vmul.f32 %v490, %v459
      %v492 = vadd.f32 %v491, %v472
      %v493 = vmax.f32 %v492, 0.0
      %s494 = scalar_lea.vmem %s404, 24
      %v495 = vld [vmem:[%s494] sm:$0xff]
      %v496 = vmul.f32 %v495, %v459
      %v497 = vadd.f32 %v496, %v472
      %v498 = vmax.f32 %v497, 0.0
      %v499 = vld [vmem:[%s418] sm:$0xff]
      %v500 = vmul.f32 %v499, %v459
      %v501 = vadd.f32 %v500, %v472
      %v502 = vmax.f32 %v501, 0.0
      %s503 = scalar_select %p444, 1, 0
      %v504 = vstv %s503
      %vm505 = vcmp.eq.s32.totalorder %v504, 1
      %v506 = vsel %vm505, 0.0, %v502
      %v507 = vlaneseq
      %v508 = vand.u32 %v507, 127
      %v509 = vadd.s32 %v508, 128
      %vm510 = vcmp.lt.s32.totalorder %v508, 0
      %v511 = vsub.s32 0, %v508
      %v512 = vsel %vm510, %v511, %v508
      %v513 = vshrl.u32 %v512, 4
      %v514 = vand.u32 %v512, 15
      %v515 = vsub.s32 0, %v514
      %v516 = vsel %vm510, %v515, %v514
      %vm517 = vcmp.lt.s32.totalorder %v509, 0
      %v518 = vsub.s32 0, %v509
      %v519 = vsel %vm517, %v518, %v509
      %v520 = vshrl.u32 %v519, 4
      %v521 = vand.u32 %v519, 15
      %v522 = vsub.s32 0, %v521
      %v523 = vsel %vm517, %v522, %v521
      %vm524 = vcmp.ne.s32.totalorder %v516, 0
      %vm525 = vcmp.ne.s32.totalorder %v523, 0
      %vm526 = vcmp.lt.s32.totalorder %v516, 0
      %vm527 = vcmp.lt.s32.totalorder %v523, 0
      %vm528 = vmand %vm526, %vm524
      %vm529 = vmand %vm527, %vm525
      %v530 = vadd.s32 %v516, 16
      %v531 = vadd.s32 %v523, 16
      %v532 = vsel %vm528, %v530, %v516
      %v533 = vsel %vm529, %v531, %v523
      %vm534 = vcmp.ge.s32.totalorder %v532, 1
      %vm535 = vcmp.ge.s32.totalorder %v533, 1
      %vm536 = vcmp.le.s32.totalorder %v532, 14
      %vm537 = vcmp.le.s32.totalorder %v533, 14
      %v538 = vld [vmem:[%s4] sm:$0xf]
      %v540 = vcombine.high %v479, %v479
      %541 = vrot.lane.b32.xlu0 %v479, 17
      %v542 = vpop.permute.xlu0 %541
      %543 = vrot.lane.b32.xlu0 %v540, 17
      %v544 = vpop.permute.xlu0 %543
      %vm545 = vcmask 138240
      %v546 = vsel %vm545, %v542, %v544
      %v549 = vsel %vm545, 0.0, %v542
      %v550 = vsel %vm534, 1, 0
      %v551 = vsel %vm535, 1, 0
      %vm552 = vcmp.eq.s32.totalorder %v550, 1
      %vm553 = vcmp.eq.s32.totalorder %v551, 1
      %v554 = vsel %vm552, %v549, 0.0
      %v555 = vsel %vm553, %v546, 0.0
      %556 = vst [vmem:[#allocation2] sm:$0xf] %v554
      %557 = vst [vmem:[#allocation2 + $0x8] sm:$0xf] %v555
      %558 = vrot.lane.b32.xlu0 %v479, 16
      %v559 = vpop.permute.xlu0 %558
      %560 = vrot.lane.b32.xlu0 %v540, 16
      %v561 = vpop.permute.xlu0 %560
      %vm562 = vcmask 130048
      %v563 = vsel %vm562, %v559, %v561
      %v565 = vsel %vm562, 0.0, %v559
      %v567 = vrot.slane %v565, 4
      %v568 = vrot.slane %v563, 4
      %571 = vst [vmem:[#allocation2] sm:$0xf0] %v567
      %572 = vst [vmem:[#allocation2 + $0x8] sm:$0xf0] %v568
      %573 = vrot.lane.b32.xlu0 %v479, 15
      %v574 = vpop.permute.xlu0 %573
      %575 = vrot.lane.b32.xlu0 %v540, 15
      %v576 = vpop.permute.xlu0 %575
      %vm577 = vcmask 121856
      %v578 = vsel %vm577, %v574, %v576
      %v581 = vsel %vm577, 0.0, %v574
      %v582 = vsel %vm536, 1, 0
      %v583 = vsel %vm537, 1, 0
      %vm584 = vcmp.eq.s32.totalorder %v582, 1
      %vm585 = vcmp.eq.s32.totalorder %v583, 1
      %v586 = vsel %vm584, %v581, 0.0
      %v587 = vsel %vm585, %v578, 0.0
      %588 = vst [vmem:[#allocation2 + $0x10] sm:$0xf] %v586
      %589 = vst [vmem:[#allocation2 + $0x18] sm:$0xf] %v587
      %590 = vrot.lane.b32.xlu0 %v479, 1
      %v591 = vpop.permute.xlu0 %590
      %592 = vrot.lane.b32.xlu0 %v540, 1
      %v593 = vpop.permute.xlu0 %592
      %vm594 = vcmask 7168
      %v595 = vsel %vm594, %v591, %v593
      %v598 = vsel %vm594, 0.0, %v591
      %v599 = vsel %vm552, %v598, 0.0
      %v600 = vsel %vm553, %v595, 0.0
      %v603 = vrot.slane %v599, 4
      %v604 = vrot.slane %v600, 4
      %607 = vst [vmem:[#allocation2 + $0x10] sm:$0xf0] %v603
      %608 = vst [vmem:[#allocation2 + $0x18] sm:$0xf0] %v604
      %610 = vst [vmem:[#allocation2 + $0x20] sm:$0xf] %v479
      %611 = vst [vmem:[#allocation2 + $0x28] sm:$0xf] %v540
      %612 = vrot.lane.b32.xlu0 %v479, 127
      %v613 = vpop.permute.xlu0 %612
      %614 = vrot.lane.b32.xlu0 %v540, 127
      %v615 = vpop.permute.xlu0 %614
      %vm616 = vcmask 1039360
      %v617 = vsel %vm616, %v613, %v615
      %v620 = vsel %vm616, %v615, 0.0
      %v621 = vsel %vm584, %v617, 0.0
      %v622 = vsel %vm585, %v620, 0.0
      %v625 = vrot.slane %v621, 4
      %v626 = vrot.slane %v622, 4
      %629 = vst [vmem:[#allocation2 + $0x20] sm:$0xf0] %v625
      %630 = vst [vmem:[#allocation2 + $0x28] sm:$0xf0] %v626
      %631 = vrot.lane.b32.xlu0 %v479, 113
      %v632 = vpop.permute.xlu0 %631
      %633 = vrot.lane.b32.xlu0 %v540, 113
      %v634 = vpop.permute.xlu0 %633
      %vm635 = vcmask 924672
      %v636 = vsel %vm635, %v632, %v634
      %v639 = vsel %vm635, %v634, 0.0
      %v640 = vsel %vm552, %v636, 0.0
      %v641 = vsel %vm553, %v639, 0.0
      %642 = vst [vmem:[#allocation2 + $0x30] sm:$0xf] %v640
      %643 = vst [vmem:[#allocation2 + $0x38] sm:$0xf] %v641
      %644 = vrot.lane.b32.xlu0 %v479, 112
      %v645 = vpop.permute.xlu0 %644
      %646 = vrot.lane.b32.xlu0 %v540, 112
      %v647 = vpop.permute.xlu0 %646
      %vm648 = vcmask 916480
      %v649 = vsel %vm648, %v645, %v647
      %v651 = vsel %vm648, %v647, 0.0
      %v653 = vrot.slane %v649, 4
      %v654 = vrot.slane %v651, 4
      %657 = vst [vmem:[#allocation2 + $0x30] sm:$0xf0] %v653
      %658 = vst [vmem:[#allocation2 + $0x38] sm:$0xf0] %v654
      %659 = vrot.lane.b32.xlu0 %v479, 111
      %v660 = vpop.permute.xlu0 %659
      %661 = vrot.lane.b32.xlu0 %v540, 111
      %v662 = vpop.permute.xlu0 %661
      %vm663 = vcmask 908288
      %v664 = vsel %vm663, %v660, %v662
      %v667 = vsel %vm663, %v662, 0.0
      %v668 = vsel %vm584, %v664, 0.0
      %v669 = vsel %vm585, %v667, 0.0
      %670 = vst [vmem:[#allocation2 + $0x40] sm:$0xf] %v668
      %671 = vst [vmem:[#allocation2 + $0x48] sm:$0xf] %v669
      %v673 = vcombine.high %v483, %v483
      %674 = vrot.lane.b32.xlu0 %v483, 17
      %v675 = vpop.permute.xlu0 %674
      %676 = vrot.lane.b32.xlu0 %v673, 17
      %v677 = vpop.permute.xlu0 %676
      %v678 = vsel %vm545, %v675, %v677
      %v681 = vsel %vm545, 0.0, %v675
      %v682 = vsel %vm552, %v681, 0.0
      %v683 = vsel %vm553, %v678, 0.0
      %v686 = vrot.slane %v682, 4
      %v687 = vrot.slane %v683, 4
      %690 = vst [vmem:[#allocation2 + $0x40] sm:$0xf0] %v686
      %691 = vst [vmem:[#allocation2 + $0x48] sm:$0xf0] %v687
      %692 = vrot.lane.b32.xlu0 %v483, 16
      %v693 = vpop.permute.xlu0 %692
      %694 = vrot.lane.b32.xlu0 %v673, 16
      %v695 = vpop.permute.xlu0 %694
      %v696 = vsel %vm562, %v693, %v695
      %v699 = vsel %vm562, 0.0, %v693
      %700 = vst [vmem:[#allocation2 + $0x50] sm:$0xf] %v699
      %701 = vst [vmem:[#allocation2 + $0x58] sm:$0xf] %v696
      %702 = vrot.lane.b32.xlu0 %v483, 15
      %v703 = vpop.permute.xlu0 %702
      %704 = vrot.lane.b32.xlu0 %v673, 15
      %v705 = vpop.permute.xlu0 %704
      %v706 = vsel %vm577, %v703, %v705
      %v709 = vsel %vm577, 0.0, %v703
      %v710 = vsel %vm584, %v709, 0.0
      %v711 = vsel %vm585, %v706, 0.0
      %v714 = vrot.slane %v710, 4
      %v715 = vrot.slane %v711, 4
      %718 = vst [vmem:[#allocation2 + $0x50] sm:$0xf0] %v714
      %719 = vst [vmem:[#allocation2 + $0x58] sm:$0xf0] %v715
      %720 = vrot.lane.b32.xlu0 %v483, 1
      %v721 = vpop.permute.xlu0 %720
      %722 = vrot.lane.b32.xlu0 %v673, 1
      %v723 = vpop.permute.xlu0 %722
      %v724 = vsel %vm594, %v721, %v723
      %v727 = vsel %vm594, 0.0, %v721
      %v728 = vsel %vm552, %v727, 0.0
      %v729 = vsel %vm553, %v724, 0.0
      %730 = vst [vmem:[#allocation2 + $0x60] sm:$0xf] %v728
      %731 = vst [vmem:[#allocation2 + $0x68] sm:$0xf] %v729
      %v732 = vcombine.low %v483, %v483
      %734 = vst [vmem:[#allocation2 + $0x60] sm:$0xf0] %v732
      %735 = vst [vmem:[#allocation2 + $0x68] sm:$0xf0] %v483
      %736 = vrot.lane.b32.xlu0 %v483, 127
      %v737 = vpop.permute.xlu0 %736
      %738 = vrot.lane.b32.xlu0 %v673, 127
      %v739 = vpop.permute.xlu0 %738
      %v740 = vsel %vm616, %v737, %v739
      %v743 = vsel %vm616, %v739, 0.0
      %v744 = vsel %vm584, %v740, 0.0
      %v745 = vsel %vm585, %v743, 0.0
      %746 = vst [vmem:[#allocation2 + $0x70] sm:$0xf] %v744
      %747 = vst [vmem:[#allocation2 + $0x78] sm:$0xf] %v745
      %748 = vrot.lane.b32.xlu0 %v483, 113
      %v749 = vpop.permute.xlu0 %748
      %750 = vrot.lane.b32.xlu0 %v673, 113
      %v751 = vpop.permute.xlu0 %750
      %v752 = vsel %vm635, %v749, %v751
      %v755 = vsel %vm635, %v751, 0.0
      %v756 = vsel %vm552, %v752, 0.0
      %v757 = vsel %vm553, %v755, 0.0
      %v760 = vrot.slane %v756, 4
      %v761 = vrot.slane %v757, 4
      %764 = vst [vmem:[#allocation2 + $0x70] sm:$0xf0] %v760
      %765 = vst [vmem:[#allocation2 + $0x78] sm:$0xf0] %v761
      %766 = vrot.lane.b32.xlu0 %v483, 112
      %v767 = vpop.permute.xlu0 %766
      %768 = vrot.lane.b32.xlu0 %v673, 112
      %v769 = vpop.permute.xlu0 %768
      %v770 = vsel %vm648, %v767, %v769
      %v773 = vsel %vm648, %v769, 0.0
      %774 = vst [vmem:[#allocation2 + $0x80] sm:$0xf] %v770
      %775 = vst [vmem:[#allocation2 + $0x88] sm:$0xf] %v773
      %776 = vrot.lane.b32.xlu0 %v483, 111
      %v777 = vpop.permute.xlu0 %776
      %778 = vrot.lane.b32.xlu0 %v673, 111
      %v779 = vpop.permute.xlu0 %778
      %v780 = vsel %vm663, %v777, %v779
      %v783 = vsel %vm663, %v779, 0.0
      %v784 = vsel %vm584, %v780, 0.0
      %v785 = vsel %vm585, %v783, 0.0
      %v788 = vrot.slane %v784, 4
      %v789 = vrot.slane %v785, 4
      %792 = vst [vmem:[#allocation2 + $0x80] sm:$0xf0] %v788
      %793 = vst [vmem:[#allocation2 + $0x88] sm:$0xf0] %v789
      %v795 = vcombine.high %v488, %v488
      %796 = vrot.lane.b32.xlu0 %v488, 17
      %v797 = vpop.permute.xlu0 %796
      %798 = vrot.lane.b32.xlu0 %v795, 17
      %v799 = vpop.permute.xlu0 %798
      %v800 = vsel %vm545, %v797, %v799
      %v803 = vsel %vm545, 0.0, %v797
      %v804 = vsel %vm552, %v803, 0.0
      %v805 = vsel %vm553, %v800, 0.0
      %806 = vst [vmem:[#allocation2 + $0x90] sm:$0xf] %v804
      %807 = vst [vmem:[#allocation2 + $0x98] sm:$0xf] %v805
      %808 = vrot.lane.b32.xlu0 %v488, 16
      %v809 = vpop.permute.xlu0 %808
      %810 = vrot.lane.b32.xlu0 %v795, 16
      %v811 = vpop.permute.xlu0 %810
      %v812 = vsel %vm562, %v809, %v811
      %v815 = vsel %vm562, 0.0, %v809
      %v817 = vrot.slane %v815, 4
      %v818 = vrot.slane %v812, 4
      %821 = vst [vmem:[#allocation2 + $0x90] sm:$0xf0] %v817
      %822 = vst [vmem:[#allocation2 + $0x98] sm:$0xf0] %v818
      %823 = vrot.lane.b32.xlu0 %v488, 15
      %v824 = vpop.permute.xlu0 %823
      %825 = vrot.lane.b32.xlu0 %v795, 15
      %v826 = vpop.permute.xlu0 %825
      %v827 = vsel %vm577, %v824, %v826
      %v830 = vsel %vm577, 0.0, %v824
      %v831 = vsel %vm584, %v830, 0.0
      %v832 = vsel %vm585, %v827, 0.0
      %833 = vst [vmem:[#allocation2 + $0xa0] sm:$0xf] %v831
      %834 = vst [vmem:[#allocation2 + $0xa8] sm:$0xf] %v832
      %835 = vrot.lane.b32.xlu0 %v488, 1
      %v836 = vpop.permute.xlu0 %835
      %837 = vrot.lane.b32.xlu0 %v795, 1
      %v838 = vpop.permute.xlu0 %837
      %v839 = vsel %vm594, %v836, %v838
      %v842 = vsel %vm594, 0.0, %v836
      %v843 = vsel %vm552, %v842, 0.0
      %v844 = vsel %vm553, %v839, 0.0
      %v847 = vrot.slane %v843, 4
      %v848 = vrot.slane %v844, 4
      %851 = vst [vmem:[#allocation2 + $0xa0] sm:$0xf0] %v847
      %852 = vst [vmem:[#allocation2 + $0xa8] sm:$0xf0] %v848
      %854 = vst [vmem:[#allocation2 + $0xb0] sm:$0xf] %v488
      %855 = vst [vmem:[#allocation2 + $0xb8] sm:$0xf] %v795
      %856 = vrot.lane.b32.xlu0 %v488, 127
      %v857 = vpop.permute.xlu0 %856
      %858 = vrot.lane.b32.xlu0 %v795, 127
      %v859 = vpop.permute.xlu0 %858
      %v860 = vsel %vm616, %v857, %v859
      %v863 = vsel %vm616, %v859, 0.0
      %v864 = vsel %vm584, %v860, 0.0
      %v865 = vsel %vm585, %v863, 0.0
      %v868 = vrot.slane %v864, 4
      %v869 = vrot.slane %v865, 4
      %872 = vst [vmem:[#allocation2 + $0xb0] sm:$0xf0] %v868
      %873 = vst [vmem:[#allocation2 + $0xb8] sm:$0xf0] %v869
      %874 = vrot.lane.b32.xlu0 %v488, 113
      %v875 = vpop.permute.xlu0 %874
      %876 = vrot.lane.b32.xlu0 %v795, 113
      %v877 = vpop.permute.xlu0 %876
      %v878 = vsel %vm635, %v875, %v877
      %v881 = vsel %vm635, %v877, 0.0
      %v882 = vsel %vm552, %v878, 0.0
      %v883 = vsel %vm553, %v881, 0.0
      %884 = vst [vmem:[#allocation2 + $0xc0] sm:$0xf] %v882
      %885 = vst [vmem:[#allocation2 + $0xc8] sm:$0xf] %v883
      %886 = vrot.lane.b32.xlu0 %v488, 112
      %v887 = vpop.permute.xlu0 %886
      %888 = vrot.lane.b32.xlu0 %v795, 112
      %v889 = vpop.permute.xlu0 %888
      %v890 = vsel %vm648, %v887, %v889
      %v893 = vsel %vm648, %v889, 0.0
      %v895 = vrot.slane %v890, 4
      %v896 = vrot.slane %v893, 4
      %899 = vst [vmem:[#allocation2 + $0xc0] sm:$0xf0] %v895
      %900 = vst [vmem:[#allocation2 + $0xc8] sm:$0xf0] %v896
      %901 = vrot.lane.b32.xlu0 %v488, 111
      %v902 = vpop.permute.xlu0 %901
      %903 = vrot.lane.b32.xlu0 %v795, 111
      %v904 = vpop.permute.xlu0 %903
      %v905 = vsel %vm663, %v902, %v904
      %v908 = vsel %vm663, %v904, 0.0
      %v909 = vsel %vm584, %v905, 0.0
      %v910 = vsel %vm585, %v908, 0.0
      %911 = vst [vmem:[#allocation2 + $0xd0] sm:$0xf] %v909
      %912 = vst [vmem:[#allocation2 + $0xd8] sm:$0xf] %v910
      %v913 = vld [vmem:[#allocation2] sm:$0xff]
      %v914 = vld [vmem:[#allocation2 + $0x8] sm:$0xff]
      %v915 = vld [vmem:[#allocation2 + $0x10] sm:$0xff]
      %v916 = vld [vmem:[#allocation2 + $0x18] sm:$0xff]
      %v917 = vld [vmem:[#allocation2 + $0x20] sm:$0xff]
      %v918 = vld [vmem:[#allocation2 + $0x28] sm:$0xff]
      %v919 = vld [vmem:[#allocation2 + $0x30] sm:$0xff]
      %v920 = vld [vmem:[#allocation2 + $0x38] sm:$0xff]
      %v921 = vld [vmem:[#allocation2 + $0x40] sm:$0xff]
      %v922 = vld [vmem:[#allocation2 + $0x48] sm:$0xff]
      %v923 = vld [vmem:[#allocation2 + $0x50] sm:$0xff]
      %v924 = vld [vmem:[#allocation2 + $0x58] sm:$0xff]
      %v925 = vld [vmem:[#allocation2 + $0x60] sm:$0xff]
      %v926 = vld [vmem:[#allocation2 + $0x68] sm:$0xff]
      %v927 = vld [vmem:[#allocation2 + $0x70] sm:$0xff]
      %v928 = vld [vmem:[#allocation2 + $0x78] sm:$0xff]
      %v929 = vld [vmem:[#allocation2 + $0x80] sm:$0xff]
      %v930 = vld [vmem:[#allocation2 + $0x88] sm:$0xff]
      %v931 = vld [vmem:[#allocation2 + $0x90] sm:$0xff]
      %v932 = vld [vmem:[#allocation2 + $0x98] sm:$0xff]
      %v933 = vld [vmem:[#allocation2 + $0xa0] sm:$0xff]
      %v934 = vld [vmem:[#allocation2 + $0xa8] sm:$0xff]
      %v935 = vld [vmem:[#allocation2 + $0xb0] sm:$0xff]
      %v936 = vld [vmem:[#allocation2 + $0xb8] sm:$0xff]
      %v937 = vld [vmem:[#allocation2 + $0xc0] sm:$0xff]
      %v938 = vld [vmem:[#allocation2 + $0xc8] sm:$0xff]
      %v939 = vld [vmem:[#allocation2 + $0xd0] sm:$0xf]
      %v940 = vld [vmem:[#allocation2 + $0xd8] sm:$0xf]
      %vm941 = vcmask 883712
      %v943 = vsel %vm941, %v538, 0
      %vm945 = vcmask 1043456
      %v947 = vsel %vm945, %v939, 0
      %v950 = vsel %vm945, %v940, 0
      %952 = vmatprep.subr.mxu0 0.0
      %953 = vmatpush1.msra.mxu0 0.0
      %954 = vmatprep.subr.mxu0 0.0
      %955 = vmatpush1.msra.mxu0 0.0
      %956 = vmatprep.subr.mxu0 %v950
      %957 = vmatpush1.msra.mxu0 %v947
      %958 = vmatprep.subr.mxu0 %v938
      %959 = vmatpush1.msra.mxu0 %v937
      %960 = vmatprep.subr.mxu0 %v936
      %961 = vmatpush1.msra.mxu0 %v935
      %962 = vmatprep.subr.mxu0 %v934
      %963 = vmatpush1.msra.mxu0 %v933
      %964 = vmatprep.subr.mxu0 %v932
      %965 = vmatpush1.msra.mxu0 %v931
      %966 = vmatprep.subr.mxu0 %v930
      %967 = vmatpush1.msra.mxu0 %v929
      %968 = vmatprep.subr.mxu0 %v928
      %969 = vmatpush1.msra.mxu0 %v927
      %970 = vmatprep.subr.mxu0 %v926
      %971 = vmatpush1.msra.mxu0 %v925
      %972 = vmatprep.subr.mxu0 %v924
      %973 = vmatpush1.msra.mxu0 %v923
      %974 = vmatprep.subr.mxu0 %v922
      %975 = vmatpush1.msra.mxu0 %v921
      %976 = vmatprep.subr.mxu0 %v920
      %977 = vmatpush1.msra.mxu0 %v919
      %978 = vmatprep.subr.mxu0 %v918
      %979 = vmatpush1.msra.mxu0 %v917
      %980 = vmatprep.subr.mxu0 %v916
      %981 = vmatpush1.msra.mxu0 %v915
      %982 = vmatprep.subr.mxu0 %v914
      %983 = vmatpush1.msra.mxu0 %v913
      %984 = vmatprep.subr.mxu0 0.0
      %985 = vmatpush2.msra.mxu0 0.0
      %986 = vmatprep.subr.mxu0 0.0
      %987 = vmatpush2.msra.mxu0 0.0
      %988 = vmatprep.subr.mxu0 0.0
      %989 = vmatpush2.msra.mxu0 0.0
      %990 = vmatprep.subr.mxu0 0.0
      %991 = vmatpush2.msra.mxu0 0.0
      %992 = vmatprep.subr.mxu0 0.0
      %993 = vmatpush2.msra.mxu0 0.0
      %994 = vmatprep.subr.mxu0 0.0
      %995 = vmatpush2.msra.mxu0 0.0
      %996 = vmatprep.subr.mxu0 0.0
      %997 = vmatpush2.msra.mxu0 0.0
      %998 = vmatprep.subr.mxu0 0.0
      %999 = vmatpush2.msra.mxu0 0.0
      %1000 = vmatprep.subr.mxu0 0.0
      %1001 = vmatpush2.msra.mxu0 0.0
      %1002 = vmatprep.subr.mxu0 0.0
      %1003 = vmatpush2.msra.mxu0 0.0
      %1004 = vmatprep.subr.mxu0 0.0
      %1005 = vmatpush2.msra.mxu0 0.0
      %1006 = vmatprep.subr.mxu0 0.0
      %1007 = vmatpush2.msra.mxu0 0.0
      %1008 = vmatprep.subr.mxu0 0.0
      %1009 = vmatpush2.msra.mxu0 0.0
      %1010 = vmatprep.subr.mxu0 0.0
      %1011 = vmatpush2.msra.mxu0 0.0
      %1012 = vmatprep.subr.mxu0 0.0
      %1013 = vmatpush2.msra.mxu0 0.0
      %1014 = vmatprep.subr.mxu0 0.0
      %1015 = vmatpush2.msra.mxu0 0.0
      %1016 = vmatprep.mubr.f32.mxu0 0.0
      %1017 = vmatmul.mubr.f32.gmra.mxu0 %v943
      %v1018 = vpop.f32.mrf.mxu0
      %v1019 = vadd.f32 0.0, %v1018
      %v1020 = vpop.f32.mrf.mxu0
      %v1021 = vadd.f32 0.0, %v1020
      %1022 = vdwg.mxu0
      %v1025 = vcombine.low %v1019, %v1021
      %1027 = vst [vmem:[%s432] sm:$0xff] %v1025
      %v1028 = vsel %vm945, %v1019, 0.0
      %v1029 = vsel %vm945, %v1021, 0.0
      %v1030 = vadd.f32 %v1028, %v1029
      %1031 = vadd.xlane.f32.xlu0 %v1030
      %v1032 = vpop.xlane.xlu0 %1031
      %v1033 = vmul.f32 %v1032, 0.00390625
      %v1034 = vsub.f32 %v1019, %v1033
      %v1035 = vsub.f32 %v1021, %v1033
      %v1036 = vmul.f32 %v1034, %v1034
      %v1037 = vmul.f32 %v1035, %v1035
      %v1038 = vsel %vm945, %v1036, 0.0
      %v1039 = vsel %vm945, %v1037, 0.0
      %v1040 = vadd.f32 %v1038, %v1039
      %1041 = vadd.xlane.f32.xlu0 %v1040
      %v1042 = vpop.xlane.xlu0 %1041
      %vm1043 = vcmask 3072
      %1044 = vst.msk [vmem:[%s442] sm:$0xf] %vm1043, %v1032
      %vm1045 = vcmask 11272
      %1046 = vst.msk [vmem:[%s442] sm:$0xf] %vm1045, %v1042
      %1047 = vst [vmem:[#allocation2] sm:$0xf] %v682
      %1048 = vst [vmem:[#allocation2 + $0x8] sm:$0xf] %v683
      %v1050 = vrot.slane %v699, 4
      %v1051 = vrot.slane %v696, 4
      %1054 = vst [vmem:[#allocation2] sm:$0xf0] %v1050
      %1055 = vst [vmem:[#allocation2 + $0x8] sm:$0xf0] %v1051
      %1056 = vst [vmem:[#allocation2 + $0x10] sm:$0xf] %v710
      %1057 = vst [vmem:[#allocation2 + $0x18] sm:$0xf] %v711
      %v1060 = vrot.slane %v728, 4
      %v1061 = vrot.slane %v729, 4
      %1064 = vst [vmem:[#allocation2 + $0x10] sm:$0xf0] %v1060
      %1065 = vst [vmem:[#allocation2 + $0x18] sm:$0xf0] %v1061
      %1067 = vst [vmem:[#allocation2 + $0x20] sm:$0xf] %v483
      %1068 = vst [vmem:[#allocation2 + $0x28] sm:$0xf] %v673
      %v1071 = vrot.slane %v744, 4
      %v1072 = vrot.slane %v745, 4
      %1075 = vst [vmem:[#allocation2 + $0x20] sm:$0xf0] %v1071
      %1076 = vst [vmem:[#allocation2 + $0x28] sm:$0xf0] %v1072
      %1077 = vst [vmem:[#allocation2 + $0x30] sm:$0xf] %v756
      %1078 = vst [vmem:[#allocation2 + $0x38] sm:$0xf] %v757
      %v1080 = vrot.slane %v770, 4
      %v1081 = vrot.slane %v773, 4
      %1084 = vst [vmem:[#allocation2 + $0x30] sm:$0xf0] %v1080
      %1085 = vst [vmem:[#allocation2 + $0x38] sm:$0xf0] %v1081
      %1086 = vst [vmem:[#allocation2 + $0x40] sm:$0xf] %v784
      %1087 = vst [vmem:[#allocation2 + $0x48] sm:$0xf] %v785
      %v1090 = vrot.slane %v804, 4
      %v1091 = vrot.slane %v805, 4
      %1094 = vst [vmem:[#allocation2 + $0x40] sm:$0xf0] %v1090
      %1095 = vst [vmem:[#allocation2 + $0x48] sm:$0xf0] %v1091
      %1096 = vst [vmem:[#allocation2 + $0x50] sm:$0xf] %v815
      %1097 = vst [vmem:[#allocation2 + $0x58] sm:$0xf] %v812
      %v1100 = vrot.slane %v831, 4
      %v1101 = vrot.slane %v832, 4
      %1104 = vst [vmem:[#allocation2 + $0x50] sm:$0xf0] %v1100
      %1105 = vst [vmem:[#allocation2 + $0x58] sm:$0xf0] %v1101
      %1106 = vst [vmem:[#allocation2 + $0x60] sm:$0xf] %v843
      %1107 = vst [vmem:[#allocation2 + $0x68] sm:$0xf] %v844
      %v1108 = vcombine.low %v488, %v488
      %1110 = vst [vmem:[#allocation2 + $0x60] sm:$0xf0] %v1108
      %1111 = vst [vmem:[#allocation2 + $0x68] sm:$0xf0] %v488
      %1112 = vst [vmem:[#allocation2 + $0x70] sm:$0xf] %v864
      %1113 = vst [vmem:[#allocation2 + $0x78] sm:$0xf] %v865
      %v1116 = vrot.slane %v882, 4
      %v1117 = vrot.slane %v883, 4
      %1120 = vst [vmem:[#allocation2 + $0x70] sm:$0xf0] %v1116
      %1121 = vst [vmem:[#allocation2 + $0x78] sm:$0xf0] %v1117
      %1122 = vst [vmem:[#allocation2 + $0x80] sm:$0xf] %v890
      %1123 = vst [vmem:[#allocation2 + $0x88] sm:$0xf] %v893
      %v1126 = vrot.slane %v909, 4
      %v1127 = vrot.slane %v910, 4
      %1130 = vst [vmem:[#allocation2 + $0x80] sm:$0xf0] %v1126
      %1131 = vst [vmem:[#allocation2 + $0x88] sm:$0xf0] %v1127
      %v1133 = vcombine.high %v493, %v493
      %1134 = vrot.lane.b32.xlu0 %v493, 17
      %v1135 = vpop.permute.xlu0 %1134
      %1136 = vrot.lane.b32.xlu0 %v1133, 17
      %v1137 = vpop.permute.xlu0 %1136
      %v1138 = vsel %vm545, %v1135, %v1137
      %v1141 = vsel %vm545, 0.0, %v1135
      %v1142 = vsel %vm552, %v1141, 0.0
      %v1143 = vsel %vm553, %v1138, 0.0
      %1144 = vst [vmem:[#allocation2 + $0x90] sm:$0xf] %v1142
      %1145 = vst [vmem:[#allocation2 + $0x98] sm:$0xf] %v1143
      %1146 = vrot.lane.b32.xlu0 %v493, 16
      %v1147 = vpop.permute.xlu0 %1146
      %1148 = vrot.lane.b32.xlu0 %v1133, 16
      %v1149 = vpop.permute.xlu0 %1148
      %v1150 = vsel %vm562, %v1147, %v1149
      %v1153 = vsel %vm562, 0.0, %v1147
      %v1155 = vrot.slane %v1153, 4
      %v1156 = vrot.slane %v1150, 4
      %1159 = vst [vmem:[#allocation2 + $0x90] sm:$0xf0] %v1155
      %1160 = vst [vmem:[#allocation2 + $0x98] sm:$0xf0] %v1156
      %1161 = vrot.lane.b32.xlu0 %v493, 15
      %v1162 = vpop.permute.xlu0 %1161
      %1163 = vrot.lane.b32.xlu0 %v1133, 15
      %v1164 = vpop.permute.xlu0 %1163
      %v1165 = vsel %vm577, %v1162, %v1164
      %v1168 = vsel %vm577, 0.0, %v1162
      %v1169 = vsel %vm584, %v1168, 0.0
      %v1170 = vsel %vm585, %v1165, 0.0
      %1171 = vst [vmem:[#allocation2 + $0xa0] sm:$0xf] %v1169
      %1172 = vst [vmem:[#allocation2 + $0xa8] sm:$0xf] %v1170
      %1173 = vrot.lane.b32.xlu0 %v493, 1
      %v1174 = vpop.permute.xlu0 %1173
      %1175 = vrot.lane.b32.xlu0 %v1133, 1
      %v1176 = vpop.permute.xlu0 %1175
      %v1177 = vsel %vm594, %v1174, %v1176
      %v1180 = vsel %vm594, 0.0, %v1174
      %v1181 = vsel %vm552, %v1180, 0.0
      %v1182 = vsel %vm553, %v1177, 0.0
      %v1185 = vrot.slane %v1181, 4
      %v1186 = vrot.slane %v1182, 4
      %1189 = vst [vmem:[#allocation2 + $0xa0] sm:$0xf0] %v1185
      %1190 = vst [vmem:[#allocation2 + $0xa8] sm:$0xf0] %v1186
      %1192 = vst [vmem:[#allocation2 + $0xb0] sm:$0xf] %v493
      %1193 = vst [vmem:[#allocation2 + $0xb8] sm:$0xf] %v1133
      %1194 = vrot.lane.b32.xlu0 %v493, 127
      %v1195 = vpop.permute.xlu0 %1194
      %1196 = vrot.lane.b32.xlu0 %v1133, 127
      %v1197 = vpop.permute.xlu0 %1196
      %v1198 = vsel %vm616, %v1195, %v1197
      %v1201 = vsel %vm616, %v1197, 0.0
      %v1202 = vsel %vm584, %v1198, 0.0
      %v1203 = vsel %vm585, %v1201, 0.0
      %v1206 = vrot.slane %v1202, 4
      %v1207 = vrot.slane %v1203, 4
      %1210 = vst [vmem:[#allocation2 + $0xb0] sm:$0xf0] %v1206
      %1211 = vst [vmem:[#allocation2 + $0xb8] sm:$0xf0] %v1207
      %1212 = vrot.lane.b32.xlu0 %v493, 113
      %v1213 = vpop.permute.xlu0 %1212
      %1214 = vrot.lane.b32.xlu0 %v1133, 113
      %v1215 = vpop.permute.xlu0 %1214
      %v1216 = vsel %vm635, %v1213, %v1215
      %v1219 = vsel %vm635, %v1215, 0.0
      %v1220 = vsel %vm552, %v1216, 0.0
      %v1221 = vsel %vm553, %v1219, 0.0
      %1222 = vst [vmem:[#allocation2 + $0xc0] sm:$0xf] %v1220
      %1223 = vst [vmem:[#allocation2 + $0xc8] sm:$0xf] %v1221
      %1224 = vrot.lane.b32.xlu0 %v493, 112
      %v1225 = vpop.permute.xlu0 %1224
      %1226 = vrot.lane.b32.xlu0 %v1133, 112
      %v1227 = vpop.permute.xlu0 %1226
      %v1228 = vsel %vm648, %v1225, %v1227
      %v1231 = vsel %vm648, %v1227, 0.0
      %v1233 = vrot.slane %v1228, 4
      %v1234 = vrot.slane %v1231, 4
      %1237 = vst [vmem:[#allocation2 + $0xc0] sm:$0xf0] %v1233
      %1238 = vst [vmem:[#allocation2 + $0xc8] sm:$0xf0] %v1234
      %1239 = vrot.lane.b32.xlu0 %v493, 111
      %v1240 = vpop.permute.xlu0 %1239
      %1241 = vrot.lane.b32.xlu0 %v1133, 111
      %v1242 = vpop.permute.xlu0 %1241
      %v1243 = vsel %vm663, %v1240, %v1242
      %v1246 = vsel %vm663, %v1242, 0.0
      %v1247 = vsel %vm584, %v1243, 0.0
      %v1248 = vsel %vm585, %v1246, 0.0
      %1249 = vst [vmem:[#allocation2 + $0xd0] sm:$0xf] %v1247
      %1250 = vst [vmem:[#allocation2 + $0xd8] sm:$0xf] %v1248
      %v1251 = vld [vmem:[#allocation2] sm:$0xff]
      %v1252 = vld [vmem:[#allocation2 + $0x8] sm:$0xff]
      %v1253 = vld [vmem:[#allocation2 + $0x10] sm:$0xff]
      %v1254 = vld [vmem:[#allocation2 + $0x18] sm:$0xff]
      %v1255 = vld [vmem:[#allocation2 + $0x20] sm:$0xff]
      %v1256 = vld [vmem:[#allocation2 + $0x28] sm:$0xff]
      %v1257 = vld [vmem:[#allocation2 + $0x30] sm:$0xff]
      %v1258 = vld [vmem:[#allocation2 + $0x38] sm:$0xff]
      %v1259 = vld [vmem:[#allocation2 + $0x40] sm:$0xff]
      %v1260 = vld [vmem:[#allocation2 + $0x48] sm:$0xff]
      %v1261 = vld [vmem:[#allocation2 + $0x50] sm:$0xff]
      %v1262 = vld [vmem:[#allocation2 + $0x58] sm:$0xff]
      %v1263 = vld [vmem:[#allocation2 + $0x60] sm:$0xff]
      %v1264 = vld [vmem:[#allocation2 + $0x68] sm:$0xff]
      %v1265 = vld [vmem:[#allocation2 + $0x70] sm:$0xff]
      %v1266 = vld [vmem:[#allocation2 + $0x78] sm:$0xff]
      %v1267 = vld [vmem:[#allocation2 + $0x80] sm:$0xff]
      %v1268 = vld [vmem:[#allocation2 + $0x88] sm:$0xff]
      %v1269 = vld [vmem:[#allocation2 + $0x90] sm:$0xff]
      %v1270 = vld [vmem:[#allocation2 + $0x98] sm:$0xff]
      %v1271 = vld [vmem:[#allocation2 + $0xa0] sm:$0xff]
      %v1272 = vld [vmem:[#allocation2 + $0xa8] sm:$0xff]
      %v1273 = vld [vmem:[#allocation2 + $0xb0] sm:$0xff]
      %v1274 = vld [vmem:[#allocation2 + $0xb8] sm:$0xff]
      %v1275 = vld [vmem:[#allocation2 + $0xc0] sm:$0xff]
      %v1276 = vld [vmem:[#allocation2 + $0xc8] sm:$0xff]
      %v1277 = vld [vmem:[#allocation2 + $0xd0] sm:$0xf]
      %v1278 = vld [vmem:[#allocation2 + $0xd8] sm:$0xf]
      %v1280 = vsel %vm945, %v1277, 0
      %v1283 = vsel %vm945, %v1278, 0
      %1285 = vmatprep.subr.mxu0 0.0
      %1286 = vmatpush1.msra.mxu0 0.0
      %1287 = vmatprep.subr.mxu0 0.0
      %1288 = vmatpush1.msra.mxu0 0.0
      %1289 = vmatprep.subr.mxu0 %v1283
      %1290 = vmatpush1.msra.mxu0 %v1280
      %1291 = vmatprep.subr.mxu0 %v1276
      %1292 = vmatpush1.msra.mxu0 %v1275
      %1293 = vmatprep.subr.mxu0 %v1274
      %1294 = vmatpush1.msra.mxu0 %v1273
      %1295 = vmatprep.subr.mxu0 %v1272
      %1296 = vmatpush1.msra.mxu0 %v1271
      %1297 = vmatprep.subr.mxu0 %v1270
      %1298 = vmatpush1.msra.mxu0 %v1269
      %1299 = vmatprep.subr.mxu0 %v1268
      %1300 = vmatpush1.msra.mxu0 %v1267
      %1301 = vmatprep.subr.mxu0 %v1266
      %1302 = vmatpush1.msra.mxu0 %v1265
      %1303 = vmatprep.subr.mxu0 %v1264
      %1304 = vmatpush1.msra.mxu0 %v1263
      %1305 = vmatprep.subr.mxu0 %v1262
      %1306 = vmatpush1.msra.mxu0 %v1261
      %1307 = vmatprep.subr.mxu0 %v1260
      %1308 = vmatpush1.msra.mxu0 %v1259
      %1309 = vmatprep.subr.mxu0 %v1258
      %1310 = vmatpush1.msra.mxu0 %v1257
      %1311 = vmatprep.subr.mxu0 %v1256
      %1312 = vmatpush1.msra.mxu0 %v1255
      %1313 = vmatprep.subr.mxu0 %v1254
      %1314 = vmatpush1.msra.mxu0 %v1253
      %1315 = vmatprep.subr.mxu0 %v1252
      %1316 = vmatpush1.msra.mxu0 %v1251
      %1317 = vmatprep.subr.mxu0 0.0
      %1318 = vmatpush2.msra.mxu0 0.0
      %1319 = vmatprep.subr.mxu0 0.0
      %1320 = vmatpush2.msra.mxu0 0.0
      %1321 = vmatprep.subr.mxu0 0.0
      %1322 = vmatpush2.msra.mxu0 0.0
      %1323 = vmatprep.subr.mxu0 0.0
      %1324 = vmatpush2.msra.mxu0 0.0
      %1325 = vmatprep.subr.mxu0 0.0
      %1326 = vmatpush2.msra.mxu0 0.0
      %1327 = vmatprep.subr.mxu0 0.0
      %1328 = vmatpush2.msra.mxu0 0.0
      %1329 = vmatprep.subr.mxu0 0.0
      %1330 = vmatpush2.msra.mxu0 0.0
      %1331 = vmatprep.subr.mxu0 0.0
      %1332 = vmatpush2.msra.mxu0 0.0
      %1333 = vmatprep.subr.mxu0 0.0
      %1334 = vmatpush2.msra.mxu0 0.0
      %1335 = vmatprep.subr.mxu0 0.0
      %1336 = vmatpush2.msra.mxu0 0.0
      %1337 = vmatprep.subr.mxu0 0.0
      %1338 = vmatpush2.msra.mxu0 0.0
      %1339 = vmatprep.subr.mxu0 0.0
      %1340 = vmatpush2.msra.mxu0 0.0
      %1341 = vmatprep.subr.mxu0 0.0
      %1342 = vmatpush2.msra.mxu0 0.0
      %1343 = vmatprep.subr.mxu0 0.0
      %1344 = vmatpush2.msra.mxu0 0.0
      %1345 = vmatprep.subr.mxu0 0.0
      %1346 = vmatpush2.msra.mxu0 0.0
      %1347 = vmatprep.subr.mxu0 0.0
      %1348 = vmatpush2.msra.mxu0 0.0
      %1349 = vmatprep.mubr.f32.mxu0 0.0
      %1350 = vmatmul.mubr.f32.gmra.mxu0 %v943
      %v1351 = vpop.f32.mrf.mxu0
      %v1352 = vadd.f32 0.0, %v1351
      %v1353 = vpop.f32.mrf.mxu0
      %v1354 = vadd.f32 0.0, %v1353
      %1355 = vdwg.mxu0
      %v1358 = vcombine.low %v1352, %v1354
      %s1360 = scalar_lea.vmem %s432, 8
      %1361 = vst [vmem:[%s1360] sm:$0xff] %v1358
      %v1362 = vsel %vm945, %v1352, 0.0
      %v1363 = vsel %vm945, %v1354, 0.0
      %v1364 = vadd.f32 %v1362, %v1363
      %1365 = vadd.xlane.f32.xlu0 %v1364
      %v1366 = vpop.xlane.xlu0 %1365
      %v1367 = vmul.f32 %v1366, 0.00390625
      %v1368 = vsub.f32 %v1352, %v1367
      %v1369 = vsub.f32 %v1354, %v1367
      %v1370 = vmul.f32 %v1368, %v1368
      %v1371 = vmul.f32 %v1369, %v1369
      %v1372 = vsel %vm945, %v1370, 0.0
      %v1373 = vsel %vm945, %v1371, 0.0
      %v1374 = vadd.f32 %v1372, %v1373
      %1375 = vadd.xlane.f32.xlu0 %v1374
      %v1376 = vpop.xlane.xlu0 %1375
      %s1377 = scalar_lea.vmem %s442, 4
      %1378 = vst.msk [vmem:[%s1377] sm:$0xf] %vm1043, %v1366
      %1379 = vst.msk [vmem:[%s1377] sm:$0xf] %vm1045, %v1376
      %1380 = vst [vmem:[#allocation2] sm:$0xf] %v804
      %1381 = vst [vmem:[#allocation2 + $0x8] sm:$0xf] %v805
      %1382 = vst [vmem:[#allocation2] sm:$0xf0] %v817
      %1383 = vst [vmem:[#allocation2 + $0x8] sm:$0xf0] %v818
      %1384 = vst [vmem:[#allocation2 + $0x10] sm:$0xf] %v831
      %1385 = vst [vmem:[#allocation2 + $0x18] sm:$0xf] %v832
      %1386 = vst [vmem:[#allocation2 + $0x10] sm:$0xf0] %v847
      %1387 = vst [vmem:[#allocation2 + $0x18] sm:$0xf0] %v848
      %1388 = vst [vmem:[#allocation2 + $0x20] sm:$0xf] %v488
      %1389 = vst [vmem:[#allocation2 + $0x28] sm:$0xf] %v795
      %1390 = vst [vmem:[#allocation2 + $0x20] sm:$0xf0] %v868
      %1391 = vst [vmem:[#allocation2 + $0x28] sm:$0xf0] %v869
      %1392 = vst [vmem:[#allocation2 + $0x30] sm:$0xf] %v882
      %1393 = vst [vmem:[#allocation2 + $0x38] sm:$0xf] %v883
      %1394 = vst [vmem:[#allocation2 + $0x30] sm:$0xf0] %v895
      %1395 = vst [vmem:[#allocation2 + $0x38] sm:$0xf0] %v896
      %1396 = vst [vmem:[#allocation2 + $0x40] sm:$0xf] %v909
      %1397 = vst [vmem:[#allocation2 + $0x48] sm:$0xf] %v910
      %v1400 = vrot.slane %v1142, 4
      %v1401 = vrot.slane %v1143, 4
      %1404 = vst [vmem:[#allocation2 + $0x40] sm:$0xf0] %v1400
      %1405 = vst [vmem:[#allocation2 + $0x48] sm:$0xf0] %v1401
      %1406 = vst [vmem:[#allocation2 + $0x50] sm:$0xf] %v1153
      %1407 = vst [vmem:[#allocation2 + $0x58] sm:$0xf] %v1150
      %v1410 = vrot.slane %v1169, 4
      %v1411 = vrot.slane %v1170, 4
      %1414 = vst [vmem:[#allocation2 + $0x50] sm:$0xf0] %v1410
      %1415 = vst [vmem:[#allocation2 + $0x58] sm:$0xf0] %v1411
      %1416 = vst [vmem:[#allocation2 + $0x60] sm:$0xf] %v1181
      %1417 = vst [vmem:[#allocation2 + $0x68] sm:$0xf] %v1182
      %v1418 = vcombine.low %v493, %v493
      %1420 = vst [vmem:[#allocation2 + $0x60] sm:$0xf0] %v1418
      %1421 = vst [vmem:[#allocation2 + $0x68] sm:$0xf0] %v493
      %1422 = vst [vmem:[#allocation2 + $0x70] sm:$0xf] %v1202
      %1423 = vst [vmem:[#allocation2 + $0x78] sm:$0xf] %v1203
      %v1426 = vrot.slane %v1220, 4
      %v1427 = vrot.slane %v1221, 4
      %1430 = vst [vmem:[#allocation2 + $0x70] sm:$0xf0] %v1426
      %1431 = vst [vmem:[#allocation2 + $0x78] sm:$0xf0] %v1427
      %1432 = vst [vmem:[#allocation2 + $0x80] sm:$0xf] %v1228
      %1433 = vst [vmem:[#allocation2 + $0x88] sm:$0xf] %v1231
      %v1436 = vrot.slane %v1247, 4
      %v1437 = vrot.slane %v1248, 4
      %1440 = vst [vmem:[#allocation2 + $0x80] sm:$0xf0] %v1436
      %1441 = vst [vmem:[#allocation2 + $0x88] sm:$0xf0] %v1437
      %v1443 = vcombine.high %v498, %v498
      %1444 = vrot.lane.b32.xlu0 %v498, 17
      %v1445 = vpop.permute.xlu0 %1444
      %1446 = vrot.lane.b32.xlu0 %v1443, 17
      %v1447 = vpop.permute.xlu0 %1446
      %v1448 = vsel %vm545, %v1445, %v1447
      %v1451 = vsel %vm545, 0.0, %v1445
      %v1452 = vsel %vm552, %v1451, 0.0
      %v1453 = vsel %vm553, %v1448, 0.0
      %1454 = vst [vmem:[#allocation2 + $0x90] sm:$0xf] %v1452
      %1455 = vst [vmem:[#allocation2 + $0x98] sm:$0xf] %v1453
      %1456 = vrot.lane.b32.xlu0 %v498, 16
      %v1457 = vpop.permute.xlu0 %1456
      %1458 = vrot.lane.b32.xlu0 %v1443, 16
      %v1459 = vpop.permute.xlu0 %1458
      %v1460 = vsel %vm562, %v1457, %v1459
      %v1463 = vsel %vm562, 0.0, %v1457
      %v1465 = vrot.slane %v1463, 4
      %v1466 = vrot.slane %v1460, 4
      %1469 = vst [vmem:[#allocation2 + $0x90] sm:$0xf0] %v1465
      %1470 = vst [vmem:[#allocation2 + $0x98] sm:$0xf0] %v1466
      %1471 = vrot.lane.b32.xlu0 %v498, 15
      %v1472 = vpop.permute.xlu0 %1471
      %1473 = vrot.lane.b32.xlu0 %v1443, 15
      %v1474 = vpop.permute.xlu0 %1473
      %v1475 = vsel %vm577, %v1472, %v1474
      %v1478 = vsel %vm577, 0.0, %v1472
      %v1479 = vsel %vm584, %v1478, 0.0
      %v1480 = vsel %vm585, %v1475, 0.0
      %1481 = vst [vmem:[#allocation2 + $0xa0] sm:$0xf] %v1479
      %1482 = vst [vmem:[#allocation2 + $0xa8] sm:$0xf] %v1480
      %1483 = vrot.lane.b32.xlu0 %v498, 1
      %v1484 = vpop.permute.xlu0 %1483
      %1485 = vrot.lane.b32.xlu0 %v1443, 1
      %v1486 = vpop.permute.xlu0 %1485
      %v1487 = vsel %vm594, %v1484, %v1486
      %v1490 = vsel %vm594, 0.0, %v1484
      %v1491 = vsel %vm552, %v1490, 0.0
      %v1492 = vsel %vm553, %v1487, 0.0
      %v1495 = vrot.slane %v1491, 4
      %v1496 = vrot.slane %v1492, 4
      %1499 = vst [vmem:[#allocation2 + $0xa0] sm:$0xf0] %v1495
      %1500 = vst [vmem:[#allocation2 + $0xa8] sm:$0xf0] %v1496
      %1502 = vst [vmem:[#allocation2 + $0xb0] sm:$0xf] %v498
      %1503 = vst [vmem:[#allocation2 + $0xb8] sm:$0xf] %v1443
      %1504 = vrot.lane.b32.xlu0 %v498, 127
      %v1505 = vpop.permute.xlu0 %1504
      %1506 = vrot.lane.b32.xlu0 %v1443, 127
      %v1507 = vpop.permute.xlu0 %1506
      %v1508 = vsel %vm616, %v1505, %v1507
      %v1511 = vsel %vm616, %v1507, 0.0
      %v1512 = vsel %vm584, %v1508, 0.0
      %v1513 = vsel %vm585, %v1511, 0.0
      %v1516 = vrot.slane %v1512, 4
      %v1517 = vrot.slane %v1513, 4
      %1520 = vst [vmem:[#allocation2 + $0xb0] sm:$0xf0] %v1516
      %1521 = vst [vmem:[#allocation2 + $0xb8] sm:$0xf0] %v1517
      %1522 = vrot.lane.b32.xlu0 %v498, 113
      %v1523 = vpop.permute.xlu0 %1522
      %1524 = vrot.lane.b32.xlu0 %v1443, 113
      %v1525 = vpop.permute.xlu0 %1524
      %v1526 = vsel %vm635, %v1523, %v1525
      %v1529 = vsel %vm635, %v1525, 0.0
      %v1530 = vsel %vm552, %v1526, 0.0
      %v1531 = vsel %vm553, %v1529, 0.0
      %1532 = vst [vmem:[#allocation2 + $0xc0] sm:$0xf] %v1530
      %1533 = vst [vmem:[#allocation2 + $0xc8] sm:$0xf] %v1531
      %1534 = vrot.lane.b32.xlu0 %v498, 112
      %v1535 = vpop.permute.xlu0 %1534
      %1536 = vrot.lane.b32.xlu0 %v1443, 112
      %v1537 = vpop.permute.xlu0 %1536
      %v1538 = vsel %vm648, %v1535, %v1537
      %v1541 = vsel %vm648, %v1537, 0.0
      %v1543 = vrot.slane %v1538, 4
      %v1544 = vrot.slane %v1541, 4
      %1547 = vst [vmem:[#allocation2 + $0xc0] sm:$0xf0] %v1543
      %1548 = vst [vmem:[#allocation2 + $0xc8] sm:$0xf0] %v1544
      %1549 = vrot.lane.b32.xlu0 %v498, 111
      %v1550 = vpop.permute.xlu0 %1549
      %1551 = vrot.lane.b32.xlu0 %v1443, 111
      %v1552 = vpop.permute.xlu0 %1551
      %v1553 = vsel %vm663, %v1550, %v1552
      %v1556 = vsel %vm663, %v1552, 0.0
      %v1557 = vsel %vm584, %v1553, 0.0
      %v1558 = vsel %vm585, %v1556, 0.0
      %1559 = vst [vmem:[#allocation2 + $0xd0] sm:$0xf] %v1557
      %1560 = vst [vmem:[#allocation2 + $0xd8] sm:$0xf] %v1558
      %v1561 = vld [vmem:[#allocation2] sm:$0xff]
      %v1562 = vld [vmem:[#allocation2 + $0x8] sm:$0xff]
      %v1563 = vld [vmem:[#allocation2 + $0x10] sm:$0xff]
      %v1564 = vld [vmem:[#allocation2 + $0x18] sm:$0xff]
      %v1565 = vld [vmem:[#allocation2 + $0x20] sm:$0xff]
      %v1566 = vld [vmem:[#allocation2 + $0x28] sm:$0xff]
      %v1567 = vld [vmem:[#allocation2 + $0x30] sm:$0xff]
      %v1568 = vld [vmem:[#allocation2 + $0x38] sm:$0xff]
      %v1569 = vld [vmem:[#allocation2 + $0x40] sm:$0xff]
      %v1570 = vld [vmem:[#allocation2 + $0x48] sm:$0xff]
      %v1571 = vld [vmem:[#allocation2 + $0x50] sm:$0xff]
      %v1572 = vld [vmem:[#allocation2 + $0x58] sm:$0xff]
      %v1573 = vld [vmem:[#allocation2 + $0x60] sm:$0xff]
      %v1574 = vld [vmem:[#allocation2 + $0x68] sm:$0xff]
      %v1575 = vld [vmem:[#allocation2 + $0x70] sm:$0xff]
      %v1576 = vld [vmem:[#allocation2 + $0x78] sm:$0xff]
      %v1577 = vld [vmem:[#allocation2 + $0x80] sm:$0xff]
      %v1578 = vld [vmem:[#allocation2 + $0x88] sm:$0xff]
      %v1579 = vld [vmem:[#allocation2 + $0x90] sm:$0xff]
      %v1580 = vld [vmem:[#allocation2 + $0x98] sm:$0xff]
      %v1581 = vld [vmem:[#allocation2 + $0xa0] sm:$0xff]
      %v1582 = vld [vmem:[#allocation2 + $0xa8] sm:$0xff]
      %v1583 = vld [vmem:[#allocation2 + $0xb0] sm:$0xff]
      %v1584 = vld [vmem:[#allocation2 + $0xb8] sm:$0xff]
      %v1585 = vld [vmem:[#allocation2 + $0xc0] sm:$0xff]
      %v1586 = vld [vmem:[#allocation2 + $0xc8] sm:$0xff]
      %v1587 = vld [vmem:[#allocation2 + $0xd0] sm:$0xf]
      %v1588 = vld [vmem:[#allocation2 + $0xd8] sm:$0xf]
      %v1590 = vsel %vm945, %v1587, 0
      %v1593 = vsel %vm945, %v1588, 0
      %1595 = vmatprep.subr.mxu0 0.0
      %1596 = vmatpush1.msra.mxu0 0.0
      %1597 = vmatprep.subr.mxu0 0.0
      %1598 = vmatpush1.msra.mxu0 0.0
      %1599 = vmatprep.subr.mxu0 %v1593
      %1600 = vmatpush1.msra.mxu0 %v1590
      %1601 = vmatprep.subr.mxu0 %v1586
      %1602 = vmatpush1.msra.mxu0 %v1585
      %1603 = vmatprep.subr.mxu0 %v1584
      %1604 = vmatpush1.msra.mxu0 %v1583
      %1605 = vmatprep.subr.mxu0 %v1582
      %1606 = vmatpush1.msra.mxu0 %v1581
      %1607 = vmatprep.subr.mxu0 %v1580
      %1608 = vmatpush1.msra.mxu0 %v1579
      %1609 = vmatprep.subr.mxu0 %v1578
      %1610 = vmatpush1.msra.mxu0 %v1577
      %1611 = vmatprep.subr.mxu0 %v1576
      %1612 = vmatpush1.msra.mxu0 %v1575
      %1613 = vmatprep.subr.mxu0 %v1574
      %1614 = vmatpush1.msra.mxu0 %v1573
      %1615 = vmatprep.subr.mxu0 %v1572
      %1616 = vmatpush1.msra.mxu0 %v1571
      %1617 = vmatprep.subr.mxu0 %v1570
      %1618 = vmatpush1.msra.mxu0 %v1569
      %1619 = vmatprep.subr.mxu0 %v1568
      %1620 = vmatpush1.msra.mxu0 %v1567
      %1621 = vmatprep.subr.mxu0 %v1566
      %1622 = vmatpush1.msra.mxu0 %v1565
      %1623 = vmatprep.subr.mxu0 %v1564
      %1624 = vmatpush1.msra.mxu0 %v1563
      %1625 = vmatprep.subr.mxu0 %v1562
      %1626 = vmatpush1.msra.mxu0 %v1561
      %1627 = vmatprep.subr.mxu0 0.0
      %1628 = vmatpush2.msra.mxu0 0.0
      %1629 = vmatprep.subr.mxu0 0.0
      %1630 = vmatpush2.msra.mxu0 0.0
      %1631 = vmatprep.subr.mxu0 0.0
      %1632 = vmatpush2.msra.mxu0 0.0
      %1633 = vmatprep.subr.mxu0 0.0
      %1634 = vmatpush2.msra.mxu0 0.0
      %1635 = vmatprep.subr.mxu0 0.0
      %1636 = vmatpush2.msra.mxu0 0.0
      %1637 = vmatprep.subr.mxu0 0.0
      %1638 = vmatpush2.msra.mxu0 0.0
      %1639 = vmatprep.subr.mxu0 0.0
      %1640 = vmatpush2.msra.mxu0 0.0
      %1641 = vmatprep.subr.mxu0 0.0
      %1642 = vmatpush2.msra.mxu0 0.0
      %1643 = vmatprep.subr.mxu0 0.0
      %1644 = vmatpush2.msra.mxu0 0.0
      %1645 = vmatprep.subr.mxu0 0.0
      %1646 = vmatpush2.msra.mxu0 0.0
      %1647 = vmatprep.subr.mxu0 0.0
      %1648 = vmatpush2.msra.mxu0 0.0
      %1649 = vmatprep.subr.mxu0 0.0
      %1650 = vmatpush2.msra.mxu0 0.0
      %1651 = vmatprep.subr.mxu0 0.0
      %1652 = vmatpush2.msra.mxu0 0.0
      %1653 = vmatprep.subr.mxu0 0.0
      %1654 = vmatpush2.msra.mxu0 0.0
      %1655 = vmatprep.subr.mxu0 0.0
      %1656 = vmatpush2.msra.mxu0 0.0
      %1657 = vmatprep.subr.mxu0 0.0
      %1658 = vmatpush2.msra.mxu0 0.0
      %1659 = vmatprep.mubr.f32.mxu0 0.0
      %1660 = vmatmul.mubr.f32.gmra.mxu0 %v943
      %v1661 = vpop.f32.mrf.mxu0
      %v1662 = vadd.f32 0.0, %v1661
      %v1663 = vpop.f32.mrf.mxu0
      %v1664 = vadd.f32 0.0, %v1663
      %1665 = vdwg.mxu0
      %v1668 = vcombine.low %v1662, %v1664
      %s1670 = scalar_lea.vmem %s432, 16
      %1671 = vst [vmem:[%s1670] sm:$0xff] %v1668
      %v1672 = vsel %vm945, %v1662, 0.0
      %v1673 = vsel %vm945, %v1664, 0.0
      %v1674 = vadd.f32 %v1672, %v1673
      %1675 = vadd.xlane.f32.xlu0 %v1674
      %v1676 = vpop.xlane.xlu0 %1675
      %v1677 = vmul.f32 %v1676, 0.00390625
      %v1678 = vsub.f32 %v1662, %v1677
      %v1679 = vsub.f32 %v1664, %v1677
      %v1680 = vmul.f32 %v1678, %v1678
      %v1681 = vmul.f32 %v1679, %v1679
      %v1682 = vsel %vm945, %v1680, 0.0
      %v1683 = vsel %vm945, %v1681, 0.0
      %v1684 = vadd.f32 %v1682, %v1683
      %1685 = vadd.xlane.f32.xlu0 %v1684
      %v1686 = vpop.xlane.xlu0 %1685
      %s1687 = scalar_lea.vmem %s442, 8
      %1688 = vst.msk [vmem:[%s1687] sm:$0xf] %vm1043, %v1676
      %1689 = vst.msk [vmem:[%s1687] sm:$0xf] %vm1045, %v1686
      %1690 = vst [vmem:[#allocation2] sm:$0xf] %v1142
      %1691 = vst [vmem:[#allocation2 + $0x8] sm:$0xf] %v1143
      %1692 = vst [vmem:[#allocation2] sm:$0xf0] %v1155
      %1693 = vst [vmem:[#allocation2 + $0x8] sm:$0xf0] %v1156
      %1694 = vst [vmem:[#allocation2 + $0x10] sm:$0xf] %v1169
      %1695 = vst [vmem:[#allocation2 + $0x18] sm:$0xf] %v1170
      %1696 = vst [vmem:[#allocation2 + $0x10] sm:$0xf0] %v1185
      %1697 = vst [vmem:[#allocation2 + $0x18] sm:$0xf0] %v1186
      %1698 = vst [vmem:[#allocation2 + $0x20] sm:$0xf] %v493
      %1699 = vst [vmem:[#allocation2 + $0x28] sm:$0xf] %v1133
      %1700 = vst [vmem:[#allocation2 + $0x20] sm:$0xf0] %v1206
      %1701 = vst [vmem:[#allocation2 + $0x28] sm:$0xf0] %v1207
      %1702 = vst [vmem:[#allocation2 + $0x30] sm:$0xf] %v1220
      %1703 = vst [vmem:[#allocation2 + $0x38] sm:$0xf] %v1221
      %1704 = vst [vmem:[#allocation2 + $0x30] sm:$0xf0] %v1233
      %1705 = vst [vmem:[#allocation2 + $0x38] sm:$0xf0] %v1234
      %1706 = vst [vmem:[#allocation2 + $0x40] sm:$0xf] %v1247
      %1707 = vst [vmem:[#allocation2 + $0x48] sm:$0xf] %v1248
      %v1710 = vrot.slane %v1452, 4
      %v1711 = vrot.slane %v1453, 4
      %1714 = vst [vmem:[#allocation2 + $0x40] sm:$0xf0] %v1710
      %1715 = vst [vmem:[#allocation2 + $0x48] sm:$0xf0] %v1711
      %1716 = vst [vmem:[#allocation2 + $0x50] sm:$0xf] %v1463
      %1717 = vst [vmem:[#allocation2 + $0x58] sm:$0xf] %v1460
      %v1720 = vrot.slane %v1479, 4
      %v1721 = vrot.slane %v1480, 4
      %1724 = vst [vmem:[#allocation2 + $0x50] sm:$0xf0] %v1720
      %1725 = vst [vmem:[#allocation2 + $0x58] sm:$0xf0] %v1721
      %1726 = vst [vmem:[#allocation2 + $0x60] sm:$0xf] %v1491
      %1727 = vst [vmem:[#allocation2 + $0x68] sm:$0xf] %v1492
      %v1728 = vcombine.low %v498, %v498
      %1730 = vst [vmem:[#allocation2 + $0x60] sm:$0xf0] %v1728
      %1731 = vst [vmem:[#allocation2 + $0x68] sm:$0xf0] %v498
      %1732 = vst [vmem:[#allocation2 + $0x70] sm:$0xf] %v1512
      %1733 = vst [vmem:[#allocation2 + $0x78] sm:$0xf] %v1513
      %v1736 = vrot.slane %v1530, 4
      %v1737 = vrot.slane %v1531, 4
      %1740 = vst [vmem:[#allocation2 + $0x70] sm:$0xf0] %v1736
      %1741 = vst [vmem:[#allocation2 + $0x78] sm:$0xf0] %v1737
      %1742 = vst [vmem:[#allocation2 + $0x80] sm:$0xf] %v1538
      %1743 = vst [vmem:[#allocation2 + $0x88] sm:$0xf] %v1541
      %v1746 = vrot.slane %v1557, 4
      %v1747 = vrot.slane %v1558, 4
      %1750 = vst [vmem:[#allocation2 + $0x80] sm:$0xf0] %v1746
      %1751 = vst [vmem:[#allocation2 + $0x88] sm:$0xf0] %v1747
      %v1753 = vcombine.high %v506, %v506
      %1754 = vrot.lane.b32.xlu0 %v506, 17
      %v1755 = vpop.permute.xlu0 %1754
      %1756 = vrot.lane.b32.xlu0 %v1753, 17
      %v1757 = vpop.permute.xlu0 %1756
      %v1758 = vsel %vm545, %v1755, %v1757
      %v1761 = vsel %vm545, 0.0, %v1755
      %v1762 = vsel %vm552, %v1761, 0.0
      %v1763 = vsel %vm553, %v1758, 0.0
      %1764 = vst [vmem:[#allocation2 + $0x90] sm:$0xf] %v1762
      %1765 = vst [vmem:[#allocation2 + $0x98] sm:$0xf] %v1763
      %1766 = vrot.lane.b32.xlu0 %v506, 16
      %v1767 = vpop.permute.xlu0 %1766
      %1768 = vrot.lane.b32.xlu0 %v1753, 16
      %v1769 = vpop.permute.xlu0 %1768
      %v1770 = vsel %vm562, %v1767, %v1769
      %v1772 = vsel %vm562, 0.0, %v1767
      %v1774 = vrot.slane %v1772, 4
      %v1775 = vrot.slane %v1770, 4
      %1778 = vst [vmem:[#allocation2 + $0x90] sm:$0xf0] %v1774
      %1779 = vst [vmem:[#allocation2 + $0x98] sm:$0xf0] %v1775
      %1780 = vrot.lane.b32.xlu0 %v506, 15
      %v1781 = vpop.permute.xlu0 %1780
      %1782 = vrot.lane.b32.xlu0 %v1753, 15
      %v1783 = vpop.permute.xlu0 %1782
      %v1784 = vsel %vm577, %v1781, %v1783
      %v1787 = vsel %vm577, 0.0, %v1781
      %v1788 = vsel %vm584, %v1787, 0.0
      %v1789 = vsel %vm585, %v1784, 0.0
      %1790 = vst [vmem:[#allocation2 + $0xa0] sm:$0xf] %v1788
      %1791 = vst [vmem:[#allocation2 + $0xa8] sm:$0xf] %v1789
      %1792 = vrot.lane.b32.xlu0 %v506, 1
      %v1793 = vpop.permute.xlu0 %1792
      %1794 = vrot.lane.b32.xlu0 %v1753, 1
      %v1795 = vpop.permute.xlu0 %1794
      %v1796 = vsel %vm594, %v1793, %v1795
      %v1799 = vsel %vm594, 0.0, %v1793
      %v1800 = vsel %vm552, %v1799, 0.0
      %v1801 = vsel %vm553, %v1796, 0.0
      %v1804 = vrot.slane %v1800, 4
      %v1805 = vrot.slane %v1801, 4
      %1808 = vst [vmem:[#allocation2 + $0xa0] sm:$0xf0] %v1804
      %1809 = vst [vmem:[#allocation2 + $0xa8] sm:$0xf0] %v1805
      %1811 = vst [vmem:[#allocation2 + $0xb0] sm:$0xf] %v506
      %1812 = vst [vmem:[#allocation2 + $0xb8] sm:$0xf] %v1753
      %1813 = vrot.lane.b32.xlu0 %v506, 127
      %v1814 = vpop.permute.xlu0 %1813
      %1815 = vrot.lane.b32.xlu0 %v1753, 127
      %v1816 = vpop.permute.xlu0 %1815
      %v1817 = vsel %vm616, %v1814, %v1816
      %v1820 = vsel %vm616, %v1816, 0.0
      %v1821 = vsel %vm584, %v1817, 0.0
      %v1822 = vsel %vm585, %v1820, 0.0
      %v1825 = vrot.slane %v1821, 4
      %v1826 = vrot.slane %v1822, 4
      %1829 = vst [vmem:[#allocation2 + $0xb0] sm:$0xf0] %v1825
      %1830 = vst [vmem:[#allocation2 + $0xb8] sm:$0xf0] %v1826
      %1831 = vrot.lane.b32.xlu0 %v506, 113
      %v1832 = vpop.permute.xlu0 %1831
      %1833 = vrot.lane.b32.xlu0 %v1753, 113
      %v1834 = vpop.permute.xlu0 %1833
      %v1835 = vsel %vm635, %v1832, %v1834
      %v1838 = vsel %vm635, %v1834, 0.0
      %v1839 = vsel %vm552, %v1835, 0.0
      %v1840 = vsel %vm553, %v1838, 0.0
      %1841 = vst [vmem:[#allocation2 + $0xc0] sm:$0xf] %v1839
      %1842 = vst [vmem:[#allocation2 + $0xc8] sm:$0xf] %v1840
      %1843 = vrot.lane.b32.xlu0 %v506, 112
      %v1844 = vpop.permute.xlu0 %1843
      %1845 = vrot.lane.b32.xlu0 %v1753, 112
      %v1846 = vpop.permute.xlu0 %1845
      %v1847 = vsel %vm648, %v1844, %v1846
      %v1849 = vsel %vm648, %v1846, 0.0
      %v1851 = vrot.slane %v1847, 4
      %v1852 = vrot.slane %v1849, 4
      %1855 = vst [vmem:[#allocation2 + $0xc0] sm:$0xf0] %v1851
      %1856 = vst [vmem:[#allocation2 + $0xc8] sm:$0xf0] %v1852
      %1857 = vrot.lane.b32.xlu0 %v506, 111
      %v1858 = vpop.permute.xlu0 %1857
      %1859 = vrot.lane.b32.xlu0 %v1753, 111
      %v1860 = vpop.permute.xlu0 %1859
      %v1861 = vsel %vm663, %v1858, %v1860
      %v1864 = vsel %vm663, %v1860, 0.0
      %v1865 = vsel %vm584, %v1861, 0.0
      %v1866 = vsel %vm585, %v1864, 0.0
      %1867 = vst [vmem:[#allocation2 + $0xd0] sm:$0xf] %v1865
      %1868 = vst [vmem:[#allocation2 + $0xd8] sm:$0xf] %v1866
      %v1869 = vld [vmem:[#allocation2] sm:$0xff]
      %v1870 = vld [vmem:[#allocation2 + $0x8] sm:$0xff]
      %v1871 = vld [vmem:[#allocation2 + $0x10] sm:$0xff]
      %v1872 = vld [vmem:[#allocation2 + $0x18] sm:$0xff]
      %v1873 = vld [vmem:[#allocation2 + $0x20] sm:$0xff]
      %v1874 = vld [vmem:[#allocation2 + $0x28] sm:$0xff]
      %v1875 = vld [vmem:[#allocation2 + $0x30] sm:$0xff]
      %v1876 = vld [vmem:[#allocation2 + $0x38] sm:$0xff]
      %v1877 = vld [vmem:[#allocation2 + $0x40] sm:$0xff]
      %v1878 = vld [vmem:[#allocation2 + $0x48] sm:$0xff]
      %v1879 = vld [vmem:[#allocation2 + $0x50] sm:$0xff]
      %v1880 = vld [vmem:[#allocation2 + $0x58] sm:$0xff]
      %v1881 = vld [vmem:[#allocation2 + $0x60] sm:$0xff]
      %v1882 = vld [vmem:[#allocation2 + $0x68] sm:$0xff]
      %v1883 = vld [vmem:[#allocation2 + $0x70] sm:$0xff]
      %v1884 = vld [vmem:[#allocation2 + $0x78] sm:$0xff]
      %v1885 = vld [vmem:[#allocation2 + $0x80] sm:$0xff]
      %v1886 = vld [vmem:[#allocation2 + $0x88] sm:$0xff]
      %v1887 = vld [vmem:[#allocation2 + $0x90] sm:$0xff]
      %v1888 = vld [vmem:[#allocation2 + $0x98] sm:$0xff]
      %v1889 = vld [vmem:[#allocation2 + $0xa0] sm:$0xff]
      %v1890 = vld [vmem:[#allocation2 + $0xa8] sm:$0xff]
      %v1891 = vld [vmem:[#allocation2 + $0xb0] sm:$0xff]
      %v1892 = vld [vmem:[#allocation2 + $0xb8] sm:$0xff]
      %v1893 = vld [vmem:[#allocation2 + $0xc0] sm:$0xff]
      %v1894 = vld [vmem:[#allocation2 + $0xc8] sm:$0xff]
      %v1895 = vld [vmem:[#allocation2 + $0xd0] sm:$0xf]
      %v1896 = vld [vmem:[#allocation2 + $0xd8] sm:$0xf]
      %v1898 = vsel %vm945, %v1895, 0
      %v1901 = vsel %vm945, %v1896, 0
      %1903 = vmatprep.subr.mxu0 0.0
      %1904 = vmatpush1.msra.mxu0 0.0
      %1905 = vmatprep.subr.mxu0 0.0
      %1906 = vmatpush1.msra.mxu0 0.0
      %1907 = vmatprep.subr.mxu0 %v1901
      %1908 = vmatpush1.msra.mxu0 %v1898
      %1909 = vmatprep.subr.mxu0 %v1894
      %1910 = vmatpush1.msra.mxu0 %v1893
      %1911 = vmatprep.subr.mxu0 %v1892
      %1912 = vmatpush1.msra.mxu0 %v1891
      %1913 = vmatprep.subr.mxu0 %v1890
      %1914 = vmatpush1.msra.mxu0 %v1889
      %1915 = vmatprep.subr.mxu0 %v1888
      %1916 = vmatpush1.msra.mxu0 %v1887
      %1917 = vmatprep.subr.mxu0 %v1886
      %1918 = vmatpush1.msra.mxu0 %v1885
      %1919 = vmatprep.subr.mxu0 %v1884
      %1920 = vmatpush1.msra.mxu0 %v1883
      %1921 = vmatprep.subr.mxu0 %v1882
      %1922 = vmatpush1.msra.mxu0 %v1881
      %1923 = vmatprep.subr.mxu0 %v1880
      %1924 = vmatpush1.msra.mxu0 %v1879
      %1925 = vmatprep.subr.mxu0 %v1878
      %1926 = vmatpush1.msra.mxu0 %v1877
      %1927 = vmatprep.subr.mxu0 %v1876
      %1928 = vmatpush1.msra.mxu0 %v1875
      %1929 = vmatprep.subr.mxu0 %v1874
      %1930 = vmatpush1.msra.mxu0 %v1873
      %1931 = vmatprep.subr.mxu0 %v1872
      %1932 = vmatpush1.msra.mxu0 %v1871
      %1933 = vmatprep.subr.mxu0 %v1870
      %1934 = vmatpush1.msra.mxu0 %v1869
      %1935 = vmatprep.subr.mxu0 0.0
      %1936 = vmatpush2.msra.mxu0 0.0
      %1937 = vmatprep.subr.mxu0 0.0
      %1938 = vmatpush2.msra.mxu0 0.0
      %1939 = vmatprep.subr.mxu0 0.0
      %1940 = vmatpush2.msra.mxu0 0.0
      %1941 = vmatprep.subr.mxu0 0.0
      %1942 = vmatpush2.msra.mxu0 0.0
      %1943 = vmatprep.subr.mxu0 0.0
      %1944 = vmatpush2.msra.mxu0 0.0
      %1945 = vmatprep.subr.mxu0 0.0
      %1946 = vmatpush2.msra.mxu0 0.0
      %1947 = vmatprep.subr.mxu0 0.0
      %1948 = vmatpush2.msra.mxu0 0.0
      %1949 = vmatprep.subr.mxu0 0.0
      %1950 = vmatpush2.msra.mxu0 0.0
      %1951 = vmatprep.subr.mxu0 0.0
      %1952 = vmatpush2.msra.mxu0 0.0
      %1953 = vmatprep.subr.mxu0 0.0
      %1954 = vmatpush2.msra.mxu0 0.0
      %1955 = vmatprep.subr.mxu0 0.0
      %1956 = vmatpush2.msra.mxu0 0.0
      %1957 = vmatprep.subr.mxu0 0.0
      %1958 = vmatpush2.msra.mxu0 0.0
      %1959 = vmatprep.subr.mxu0 0.0
      %1960 = vmatpush2.msra.mxu0 0.0
      %1961 = vmatprep.subr.mxu0 0.0
      %1962 = vmatpush2.msra.mxu0 0.0
      %1963 = vmatprep.subr.mxu0 0.0
      %1964 = vmatpush2.msra.mxu0 0.0
      %1965 = vmatprep.subr.mxu0 0.0
      %1966 = vmatpush2.msra.mxu0 0.0
      %1967 = vmatprep.mubr.f32.mxu0 0.0
      %1968 = vmatmul.mubr.f32.gmra.mxu0 %v943
      %v1969 = vpop.f32.mrf.mxu0
      %v1970 = vadd.f32 0.0, %v1969
      %v1971 = vpop.f32.mrf.mxu0
      %v1972 = vadd.f32 0.0, %v1971
      %1973 = vdwg.mxu0
      %v1976 = vcombine.low %v1970, %v1972
      %s1978 = scalar_lea.vmem %s432, 24
      %1979 = vst [vmem:[%s1978] sm:$0xff] %v1976
      %v1980 = vsel %vm945, %v1970, 0.0
      %v1981 = vsel %vm945, %v1972, 0.0
      %v1982 = vadd.f32 %v1980, %v1981
      %1983 = vadd.xlane.f32.xlu0 %v1982
      %v1984 = vpop.xlane.xlu0 %1983
      %v1985 = vmul.f32 %v1984, 0.00390625
      %v1986 = vsub.f32 %v1970, %v1985
      %v1987 = vsub.f32 %v1972, %v1985
      %v1988 = vmul.f32 %v1986, %v1986
      %v1989 = vmul.f32 %v1987, %v1987
      %v1990 = vsel %vm945, %v1988, 0.0
      %v1991 = vsel %vm945, %v1989, 0.0
      %v1992 = vadd.f32 %v1990, %v1991
      %1993 = vadd.xlane.f32.xlu0 %v1992
      %v1994 = vpop.xlane.xlu0 %1993
      %s1995 = scalar_lea.vmem %s442, 12
      %1996 = vst.msk [vmem:[%s1995] sm:$0xf] %vm1043, %v1984
      %1997 = vst.msk [vmem:[%s1995] sm:$0xf] %vm1045, %v1994
      %s1998 = smul.u32 4, %s23
      %p1999 = scmp.lt.s32.totalorder %s22, 1
      %s2000 = scalar_select %p1999, %s22, 1
      %p2001 = scmp.lt.s32.totalorder %s1998, 7
      %s2002 = scalar_select %p2001, %s1998, 7
      %s2003 = smul.addr %s2002, 2
      %s2004 = smul.addr %s2000, 16
      %s2005 = sadd.s32 %s2003, %s2004
      %s2006 = smul.addr %s2005, 4
      %s2007 = scalar_lea.vmem %s5, %s2006
      %p2008 = scmp.lt.s32.totalorder %s22, 1
      %s2009 = scalar_select %p2008, %s22, 1
      %p2010 = scmp.lt.s32.totalorder %s23, 1
      %s2011 = scalar_select %p2010, %s23, 1
      %s2012 = smul.addr %s2011, 4
      %s2013 = smul.addr %s2009, 8
      %s2014 = sadd.s32 %s2012, %s2013
      %s2015 = smul.addr %s2014, 4
      %s2016 = scalar_lea.vmem %s6, %s2015
      // Predicated region
      $region41: #{simple_rb_pallas.4} parent=39 // pred_check
        %p2017 = pneg %p192
      $region42: #{simple_rb_pallas.4} parent=39 // pred_check_branch
        %2019 = sbr.rel (%p2017) target = $region44
      $region43: #{simple_rb_pallas.4} parent=39 // pred_region
        %s2020 = smul.u32 4, %s23
      $region44: #{simple_rb_pallas.4} parent=39 // pred_fallthru
        _
      // Predicated region
      $region45: #{simple_rb_pallas.4} parent=39 // pred_check
        %p2021 = pneg %p220
      $region46: #{simple_rb_pallas.4} parent=39 // pred_check_branch
        %2023 = sbr.rel (%p2021) target = $region48
      $region47: #{simple_rb_pallas.4} parent=39 // pred_region
        _
      $region48: #{simple_rb_pallas.4} parent=39 // pred_fallthru
        _
    $region40: #{simple_rb_pallas.4} parent=5 // pred_fallthru
      _
    %p2024 = scmp.le.s32.totalorder 2, %s13
    // Predicated region
    $region49: #{simple_rb_pallas.4} parent=5 // pred_check
      %p2025 = pneg %p2024
    $region50: #{simple_rb_pallas.4} parent=5 // pred_check_branch
      %2027 = sbr.rel (%p2025) target = $region52
    $region51: #{simple_rb_pallas.4} parent=5 // pred_region
      %s2028 = ssub.s32 %s13, 2
      // Predicated region
      $region53: #{simple_rb_pallas.4} parent=51 // pred_check
        %p2029 = pneg %p198
      $region54: #{simple_rb_pallas.4} parent=51 // pred_check_branch
        %2031 = sbr.rel (%p2029) target = $region56
      $region55: #{simple_rb_pallas.4} parent=51 // pred_region
        %s2032 = smul.u32 4, %s25
        %p2033 = scmp.lt.s32.totalorder %s24, 1
        %s2034 = scalar_select %p2033, %s24, 1
        %p2035 = scmp.lt.s32.totalorder %s2032, 7
        %s2036 = scalar_select %p2035, %s2032, 7
        %s2037 = smul.addr %s2036, 2
        %s2038 = smul.addr %s2034, 16
        %s2039 = sadd.s32 %s2037, %s2038
        %s2040 = smul.addr %s2039, 4
        %s2041 = scalar_lea.vmem %s5, %s2040
      $region56: #{simple_rb_pallas.4} parent=51 // pred_fallthru
        _
      // Predicated region
      $region57: #{simple_rb_pallas.4} parent=51 // pred_check
        %p2042 = pneg %p226
      $region58: #{simple_rb_pallas.4} parent=51 // pred_check_branch
        %2044 = sbr.rel (%p2042) target = $region60
      $region59: #{simple_rb_pallas.4} parent=51 // pred_region
        %p2045 = scmp.lt.s32.totalorder %s24, 1
        %s2046 = scalar_select %p2045, %s24, 1
        %p2047 = scmp.lt.s32.totalorder %s25, 1
        %s2048 = scalar_select %p2047, %s25, 1
        %s2049 = smul.addr %s2048, 4
        %s2050 = smul.addr %s2046, 8
        %s2051 = sadd.s32 %s2049, %s2050
        %s2052 = smul.addr %s2051, 4
        %s2053 = scalar_lea.vmem %s6, %s2052
      $region60: #{simple_rb_pallas.4} parent=51 // pred_fallthru
        _
    $region52: #{simple_rb_pallas.4} parent=5 // pred_fallthru
      _
  $region6: #{simple_rb_pallas.4} parent=0 // loop_footer
    %s17 = sadd.s32 1, %s13
  $region7: #{simple_rb_pallas.4} parent=0 // loop_footer_branch
    %12 = sbr.rel target = $region3
  $region8: #{simple_rb_pallas.4} parent=0 // loop_exit
    _

</llo_original>
